<compile_context>
chip_gen: v7x
topology: tpu7x:2x2x1
jax: 0.10.0
libtpu: 0.0.40
codegen_flags: <defaults>
</compile_context>

<pallas_src>
import jax
import jax.numpy as jnp
from jax import lax
from jax.experimental import pallas as pl
from jax.experimental.pallas import tpu as pltpu


# ---------------------------------------------------------------------------
# Stage geometry.
# A feature map of size (H, W, C) is stored in VMEM as a flattened 2-D buffer:
#   row = y_pad * Wp + x_pad   (zero halo of 2 rows/cols; Wp = W + 8 keeps rows
#   8-aligned), plus `margin = 2*Wp + 2` zero rows on both ends so that every
#   5x5 tap (kh, kw) is the SAME buffer shifted by (kh-2)*Wp + (kw-2) rows.
# ---------------------------------------------------------------------------
def _stage_geom(H, W):
    Hp, Wp = H + 4, W + 8
    Mfull = Hp * Wp
    margin = 2 * Wp + 2
    rows = Mfull + 2 * margin
    return Hp, Wp, Mfull, margin, rows


# ---------------------------------------------------------------------------
# In-kernel helpers
# ---------------------------------------------------------------------------
def _fill_margin(xm_ref, row_fn, H, W):
    """Zero the halo/margin buffer and write image row y at padded (y+2, x+2)."""
    _, Wp, _, margin, _ = _stage_geom(H, W)
    xm_ref[...] = jnp.zeros(xm_ref.shape, xm_ref.dtype)
    for y in range(H):
        xm_ref[pl.ds(margin + (y + 2) * Wp + 2, W), :] = row_fn(y)


def _conv5x5_pool(xm_ref, w_ref, b_ref, accflat_ref, acc3d_ref, H, W, Cout):
    """Fused Conv2d(k=5, s=1, p=2) + MaxPool2d(2), entirely in VMEM.

    xm_ref      : (Mfull + 2*margin, Cin) f32  halo-padded input rows
    w_ref       : (25, Cin, Cout)        bf16  one (Cin, Cout) block per tap
    b_ref       : (1, Cout)              f32
    accflat_ref : (Mfull, Cout)          f32   conv accumulator (padded grid)
    acc3d_ref   : (H, Wp, Cout)          f32   valid conv rows (3-D for pooling)
    returns     : (H//2, W//2, Cout)     f32   pooled output (value)
    """
    _, Wp, Mfull, margin, _ = _stage_geom(H, W)

    # Bias-initialised f32 accumulator; 25 shifted bf16 MXU matmuls.
    accflat_ref[...] = jnp.broadcast_to(b_ref[...], (Mfull, Cout))

    def kh_body(kh, carry):
        def kw_body(kw, carry):
            start = margin + (kh - 2) * Wp + (kw - 2)
            lhs = xm_ref[pl.ds(start, Mfull), :].astype(jnp.bfloat16)
            accflat_ref[...] += jnp.dot(lhs, w_ref[kh * 5 + kw],
                                        preferred_element_type=jnp.float32)
            return carry
        return lax.fori_loop(0, 5, kw_body, carry)

    lax.fori_loop(0, 5, kh_body, 0)

    # Valid conv rows: image row y lives at padded row y+2.
    for y in range(H):
        acc3d_ref[y] = accflat_ref[pl.ds((y + 2) * Wp, Wp), :]

    # Fused 2x2 / stride-2 max pool: image col x lives at padded col x+2.
    H2, W2 = H // 2, W // 2
    p00 = acc3d_ref[pl.ds(0, H2, 2), pl.ds(2, W2, 2), :]
    p01 = acc3d_ref[pl.ds(0, H2, 2), pl.ds(3, W2, 2), :]
    p10 = acc3d_ref[pl.ds(1, H2, 2), pl.ds(2, W2, 2), :]
    p11 = acc3d_ref[pl.ds(1, H2, 2), pl.ds(3, W2, 2), :]
    return jnp.maximum(jnp.maximum(p00, p01), jnp.maximum(p10, p11))


# ---------------------------------------------------------------------------
# The whole-network kernel (one image per grid step)
# ---------------------------------------------------------------------------
def _tudui_kernel(x_ref, w1_ref, b1_ref, w2_ref, b2_ref, w3_ref, b3_ref,
                  wl1_ref, bl1_ref, wl2_ref, bl2_ref, o_ref,
                  xm1, accflat1, acc3d1,
                  xm2, accflat2, acc3d2,
                  xm3, accflat3, acc3d3):
    # Stage 1: Conv(3->32) + pool : 32x32 -> 16x16
    _fill_margin(xm1, lambda y: x_ref[0, y], 32, 32)
    pooled1 = _conv5x5_pool(xm1, w1_ref, b1_ref, accflat1, acc3d1, 32, 32, 32)

    # Stage 2: Conv(32->32) + pool : 16x16 -> 8x8
    _fill_margin(xm2, lambda y: pooled1[y], 16, 16)
    pooled2 = _conv5x5_pool(xm2, w2_ref, b2_ref, accflat2, acc3d2, 16, 16, 32)

    # Stage 3: Conv(32->64) + pool : 8x8 -> 4x4
    _fill_margin(xm3, lambda y: pooled2[y], 8, 8)
    pooled3 = _conv5x5_pool(xm3, w3_ref, b3_ref, accflat3, acc3d3, 8, 8, 64)

    # Fused classifier.  PyTorch's NCHW flatten is folded into wl1 (one
    # (64, 64) block per spatial position), so no in-kernel transpose is needed.
    hidden = bl1_ref[...]                                   # (1, 64) f32
    for h in range(4):
        row = pooled3[h]                                    # (4, 64)
        for w in range(4):
            v = row[w:w + 1, :].astype(jnp.bfloat16)        # (1, 64)
            hidden = hidden + jnp.dot(v, wl1_ref[h * 4 + w],
                                      preferred_element_type=jnp.float32)
    logits = jnp.dot(hidden.astype(jnp.bfloat16), wl2_ref[...],
                     preferred_element_type=jnp.float32) + bl2_ref[...]  # (1, 10)
    o_ref[0] = logits


# ---------------------------------------------------------------------------
# Wrapper
# ---------------------------------------------------------------------------
def _full_spec(shape):
    n = len(shape)
    return pl.BlockSpec(shape, lambda i, n=n: (0,) * n)


def _tudui_forward(x_nchw, params):
    N = x_nchw.shape[0]
    x = jnp.transpose(x_nchw, (0, 2, 3, 1)).astype(jnp.float32)       # (N,32,32,3)

    # Conv weights as (25, Cin, Cout) bf16 blocks (one per 5x5 tap), f32 biases.
    w1 = params["w1"].reshape(25, 3, 32).astype(jnp.bfloat16)
    w2 = params["w2"].reshape(25, 32, 32).astype(jnp.bfloat16)
    w3 = params["w3"].reshape(25, 32, 64).astype(jnp.bfloat16)
    b1 = params["b1"].reshape(1, 32).astype(jnp.float32)
    b2 = params["b2"].reshape(1, 32).astype(jnp.float32)
    b3 = params["b3"].reshape(1, 64).astype(jnp.float32)
    # Linear(1024, 64): rows are in PyTorch flatten order (c, h, w).  Regroup to
    # one (Cin=64, out=64) block per spatial position p = h*4 + w.
    wl1 = (params["wl1"].reshape(64, 4, 4, 64)
           .transpose(1, 2, 0, 3).reshape(16, 64, 64).astype(jnp.bfloat16))
    bl1 = params["bl1"].reshape(1, 64).astype(jnp.float32)
    wl2 = params["wl2"].astype(jnp.bfloat16)                           # (64, 10)
    bl2 = params["bl2"].reshape(1, 10).astype(jnp.float32)

    # VMEM scratch for the three fused conv+pool stages (~4 MiB total).
    scratch = []
    for (H, W, Cin, Cout) in ((32, 32, 3, 32), (16, 16, 32, 32), (8, 8, 32, 64)):
        _, Wp, Mfull, _, rows = _stage_geom(H, W)
        scratch += [
            pltpu.VMEM((rows, Cin), jnp.float32),      # halo/margin input rows
            pltpu.VMEM((Mfull, Cout), jnp.float32),    # flat conv accumulator
            pltpu.VMEM((H, Wp, Cout), jnp.float32),    # valid rows for pooling
        ]

    grid_spec = pltpu.PrefetchScalarGridSpec(
        num_scalar_prefetch=0,
        grid=(N,),
        in_specs=[
            pl.BlockSpec((1, 32, 32, 3), lambda i: (i, 0, 0, 0)),
            _full_spec((25, 3, 32)), _full_spec((1, 32)),
            _full_spec((25, 32, 32)), _full_spec((1, 32)),
            _full_spec((25, 32, 64)), _full_spec((1, 64)),
            _full_spec((16, 64, 64)), _full_spec((1, 64)),
            _full_spec((64, 10)), _full_spec((1, 10)),
        ],
        out_specs=pl.BlockSpec((1, 1, 10), lambda i: (i, 0, 0)),
        scratch_shapes=scratch,
    )

    out = pl.pallas_call(
        _tudui_kernel,
        out_shape=jax.ShapeDtypeStruct((N, 1, 10), jnp.float32),
        grid_spec=grid_spec,
        compiler_params=pltpu.CompilerParams(
            dimension_semantics=("parallel",),        # megacore over the batch
            vmem_limit_bytes=32 * 1024 * 1024,        # safe on v5e/v6e/v7x
        ),
    )(x, w1, b1, w2, b2, w3, b3, wl1, bl1, wl2, bl2)
    return out.reshape(N, 10)


tudui_forward = jax.jit(_tudui_forward)


# ---------------------------------------------------------------------------
# Parameters
# ---------------------------------------------------------------------------
def init_params(key):
    ks = jax.random.split(key, 10)
    s = 0.05
    return {
        # conv weights stored as (KH, KW, Cin, Cout)
        "w1": s * jax.random.normal(ks[0], (5, 5, 3, 32), jnp.float32),
        "b1": s * jax.random.normal(ks[1], (32,), jnp.float32),
        "w2": s * jax.random.normal(ks[2], (5, 5, 32, 32), jnp.float32),
        "b2": s * jax.random.normal(ks[3], (32,), jnp.float32),
        "w3": s * jax.random.normal(ks[4], (5, 5, 32, 64), jnp.float32),
        "b3": s * jax.random.normal(ks[5], (64,), jnp.float32),
        # linear weights stored as (in_features, out_features);
        # wl1 rows follow PyTorch's NCHW flatten order (c, h, w).
        "wl1": s * jax.random.normal(ks[6], (64 * 4 * 4, 64), jnp.float32),
        "bl1": s * jax.random.normal(ks[7], (64,), jnp.float32),
        "wl2": s * jax.random.normal(ks[8], (64, 10), jnp.float32),
        "bl2": s * jax.random.normal(ks[9], (10,), jnp.float32),
    }


if __name__ == "__main__":
    key = jax.random.PRNGKey(0)
    kx, kp = jax.random.split(key)
    # Spatial size must be 32x32 because the model hard-codes Linear(64*4*4, 64).
    x = jax.random.normal(kx, (2, 3, 32, 32), jnp.float32)
    params = init_params(kp)

    out = tudui_forward(x, params)
    out = jax.block_until_ready(out)
    assert out.shape == (2, 10), out.shape
    assert out.dtype == jnp.float32
    print("KERNEL_OK")
</pallas_src>

<mosaic_0001>
module attributes {stable_mosaic.version = 11 : i64} {
  func.func @_tudui_kernel(%arg0: i32, %arg1: memref<1x32x32x3xf32, #tpu.memory_space<vmem>>, %arg2: memref<25x3x32xbf16, #tpu.memory_space<vmem>>, %arg3: memref<1x32xf32, #tpu.memory_space<vmem>>, %arg4: memref<25x32x32xbf16, #tpu.memory_space<vmem>>, %arg5: memref<1x32xf32, #tpu.memory_space<vmem>>, %arg6: memref<25x32x64xbf16, #tpu.memory_space<vmem>>, %arg7: memref<1x64xf32, #tpu.memory_space<vmem>>, %arg8: memref<16x64x64xbf16, #tpu.memory_space<vmem>>, %arg9: memref<1x64xf32, #tpu.memory_space<vmem>>, %arg10: memref<64x10xbf16, #tpu.memory_space<vmem>>, %arg11: memref<1x10xf32, #tpu.memory_space<vmem>>, %arg12: memref<1x1x10xf32, #tpu.memory_space<vmem>>, %arg13: memref<1604x3xf32, #tpu.memory_space<vmem>>, %arg14: memref<1440x32xf32, #tpu.memory_space<vmem>>, %arg15: memref<32x40x32xf32, #tpu.memory_space<vmem>>, %arg16: memref<580x32xf32, #tpu.memory_space<vmem>>, %arg17: memref<480x32xf32, #tpu.memory_space<vmem>>, %arg18: memref<16x24x32xf32, #tpu.memory_space<vmem>>, %arg19: memref<260x32xf32, #tpu.memory_space<vmem>>, %arg20: memref<192x64xf32, #tpu.memory_space<vmem>>, %arg21: memref<8x16x64xf32, #tpu.memory_space<vmem>>) attributes {dimension_semantics = [#tpu.dimension_semantics<parallel>], iteration_bounds = array<i64: 2>, scalar_prefetch = 0 : i64, scratch_operands = 9 : i64, tpu.core_type = #tpu.core_type<tc>, window_params = [{transform_indices = @transform_0, window_bounds = array<i64: 1, 32, 32, 3>}, {pipeline_mode = #tpu.pipeline_mode<synchronous>, transform_indices = @transform_1, window_bounds = array<i64: 25, 3, 32>}, {pipeline_mode = #tpu.pipeline_mode<synchronous>, transform_indices = @transform_2, window_bounds = array<i64: 1, 32>}, {pipeline_mode = #tpu.pipeline_mode<synchronous>, transform_indices = @transform_3, window_bounds = array<i64: 25, 32, 32>}, {pipeline_mode = #tpu.pipeline_mode<synchronous>, transform_indices = @transform_4, window_bounds = array<i64: 1, 32>}, {pipeline_mode = #tpu.pipeline_mode<synchronous>, transform_indices = @transform_5, window_bounds = array<i64: 25, 32, 64>}, {pipeline_mode = #tpu.pipeline_mode<synchronous>, transform_indices = @transform_6, window_bounds = array<i64: 1, 64>}, {pipeline_mode = #tpu.pipeline_mode<synchronous>, transform_indices = @transform_7, window_bounds = array<i64: 16, 64, 64>}, {pipeline_mode = #tpu.pipeline_mode<synchronous>, transform_indices = @transform_8, window_bounds = array<i64: 1, 64>}, {pipeline_mode = #tpu.pipeline_mode<synchronous>, transform_indices = @transform_9, window_bounds = array<i64: 64, 10>}, {pipeline_mode = #tpu.pipeline_mode<synchronous>, transform_indices = @transform_10, window_bounds = array<i64: 1, 10>}, {transform_indices = @transform_11, window_bounds = array<i64: 1, 1, 10>}]} {
    %cst = arith.constant 0.000000e+00 : f32
    %0 = vector.broadcast %cst : f32 to vector<1604x3xf32>
    %c0 = arith.constant 0 : index
    %c0_0 = arith.constant 0 : index
    %1 = vector.load %arg13[%c0, %c0_0] : memref<1604x3xf32, #tpu.memory_space<vmem>>, vector<1604x3xf32>
    tpu.vector_store %arg13[%c0, %c0_0], %0 {strides = array<i32>} : memref<1604x3xf32, #tpu.memory_space<vmem>>, vector<1604x3xf32>,
    %c0_1 = arith.constant 0 : index
    %c0_2 = arith.constant 0 : index
    %c0_3 = arith.constant 0 : index
    %c0_4 = arith.constant 0 : index
    %2 = vector.load %arg1[%c0_1, %c0_2, %c0_3, %c0_4] : memref<1x32x32x3xf32, #tpu.memory_space<vmem>>, vector<1x1x32x3xf32>
    %3 = vector.shape_cast %2 : vector<1x1x32x3xf32> to vector<32x3xf32>
    %c164 = arith.constant 164 : index
    %c0_5 = arith.constant 0 : index
    %4 = vector.load %arg13[%c164, %c0_5] : memref<1604x3xf32, #tpu.memory_space<vmem>>, vector<32x3xf32>
    tpu.vector_store %arg13[%c164, %c0_5], %3 {strides = array<i32>} : memref<1604x3xf32, #tpu.memory_space<vmem>>, vector<32x3xf32>,
    %c0_6 = arith.constant 0 : index
    %c1 = arith.constant 1 : index
    %c0_7 = arith.constant 0 : index
    %c0_8 = arith.constant 0 : index
    %5 = vector.load %arg1[%c0_6, %c1, %c0_7, %c0_8] : memref<1x32x32x3xf32, #tpu.memory_space<vmem>>, vector<1x1x32x3xf32>
    %6 = vector.shape_cast %5 : vector<1x1x32x3xf32> to vector<32x3xf32>
    %c204 = arith.constant 204 : index
    %c0_9 = arith.constant 0 : index
    %7 = vector.load %arg13[%c204, %c0_9] : memref<1604x3xf32, #tpu.memory_space<vmem>>, vector<32x3xf32>
    tpu.vector_store %arg13[%c204, %c0_9], %6 {strides = array<i32>} : memref<1604x3xf32, #tpu.memory_space<vmem>>, vector<32x3xf32>,
    %c0_10 = arith.constant 0 : index
    %c2 = arith.constant 2 : index
    %c0_11 = arith.constant 0 : index
    %c0_12 = arith.constant 0 : index
    %8 = vector.load %arg1[%c0_10, %c2, %c0_11, %c0_12] : memref<1x32x32x3xf32, #tpu.memory_space<vmem>>, vector<1x1x32x3xf32>
    %9 = vector.shape_cast %8 : vector<1x1x32x3xf32> to vector<32x3xf32>
    %c244 = arith.constant 244 : index
    %c0_13 = arith.constant 0 : index
    %10 = vector.load %arg13[%c244, %c0_13] : memref<1604x3xf32, #tpu.memory_space<vmem>>, vector<32x3xf32>
    tpu.vector_store %arg13[%c244, %c0_13], %9 {strides = array<i32>} : memref<1604x3xf32, #tpu.memory_space<vmem>>, vector<32x3xf32>,
    %c0_14 = arith.constant 0 : index
    %c3 = arith.constant 3 : index
    %c0_15 = arith.constant 0 : index
    %c0_16 = arith.constant 0 : index
    %11 = vector.load %arg1[%c0_14, %c3, %c0_15, %c0_16] : memref<1x32x32x3xf32, #tpu.memory_space<vmem>>, vector<1x1x32x3xf32>
    %12 = vector.shape_cast %11 : vector<1x1x32x3xf32> to vector<32x3xf32>
    %c284 = arith.constant 284 : index
    %c0_17 = arith.constant 0 : index
    %13 = vector.load %arg13[%c284, %c0_17] : memref<1604x3xf32, #tpu.memory_space<vmem>>, vector<32x3xf32>
    tpu.vector_store %arg13[%c284, %c0_17], %12 {strides = array<i32>} : memref<1604x3xf32, #tpu.memory_space<vmem>>, vector<32x3xf32>,
    %c0_18 = arith.constant 0 : index
    %c4 = arith.constant 4 : index
    %c0_19 = arith.constant 0 : index
    %c0_20 = arith.constant 0 : index
    %14 = vector.load %arg1[%c0_18, %c4, %c0_19, %c0_20] : memref<1x32x32x3xf32, #tpu.memory_space<vmem>>, vector<1x1x32x3xf32>
    %15 = vector.shape_cast %14 : vector<1x1x32x3xf32> to vector<32x3xf32>
    %c324 = arith.constant 324 : index
    %c0_21 = arith.constant 0 : index
    %16 = vector.load %arg13[%c324, %c0_21] : memref<1604x3xf32, #tpu.memory_space<vmem>>, vector<32x3xf32>
    tpu.vector_store %arg13[%c324, %c0_21], %15 {strides = array<i32>} : memref<1604x3xf32, #tpu.memory_space<vmem>>, vector<32x3xf32>,
    %c0_22 = arith.constant 0 : index
    %c5 = arith.constant 5 : index
    %c0_23 = arith.constant 0 : index
    %c0_24 = arith.constant 0 : index
    %17 = vector.load %arg1[%c0_22, %c5, %c0_23, %c0_24] : memref<1x32x32x3xf32, #tpu.memory_space<vmem>>, vector<1x1x32x3xf32>
    %18 = vector.shape_cast %17 : vector<1x1x32x3xf32> to vector<32x3xf32>
    %c364 = arith.constant 364 : index
    %c0_25 = arith.constant 0 : index
    %19 = vector.load %arg13[%c364, %c0_25] : memref<1604x3xf32, #tpu.memory_space<vmem>>, vector<32x3xf32>
    tpu.vector_store %arg13[%c364, %c0_25], %18 {strides = array<i32>} : memref<1604x3xf32, #tpu.memory_space<vmem>>, vector<32x3xf32>,
    %c0_26 = arith.constant 0 : index
    %c6 = arith.constant 6 : index
    %c0_27 = arith.constant 0 : index
    %c0_28 = arith.constant 0 : index
    %20 = vector.load %arg1[%c0_26, %c6, %c0_27, %c0_28] : memref<1x32x32x3xf32, #tpu.memory_space<vmem>>, vector<1x1x32x3xf32>
    %21 = vector.shape_cast %20 : vector<1x1x32x3xf32> to vector<32x3xf32>
    %c404 = arith.constant 404 : index
    %c0_29 = arith.constant 0 : index
    %22 = vector.load %arg13[%c404, %c0_29] : memref<1604x3xf32, #tpu.memory_space<vmem>>, vector<32x3xf32>
    tpu.vector_store %arg13[%c404, %c0_29], %21 {strides = array<i32>} : memref<1604x3xf32, #tpu.memory_space<vmem>>, vector<32x3xf32>,
    %c0_30 = arith.constant 0 : index
    %c7 = arith.constant 7 : index
    %c0_31 = arith.constant 0 : index
    %c0_32 = arith.constant 0 : index
    %23 = vector.load %arg1[%c0_30, %c7, %c0_31, %c0_32] : memref<1x32x32x3xf32, #tpu.memory_space<vmem>>, vector<1x1x32x3xf32>
    %24 = vector.shape_cast %23 : vector<1x1x32x3xf32> to vector<32x3xf32>
    %c444 = arith.constant 444 : index
    %c0_33 = arith.constant 0 : index
    %25 = vector.load %arg13[%c444, %c0_33] : memref<1604x3xf32, #tpu.memory_space<vmem>>, vector<32x3xf32>
    tpu.vector_store %arg13[%c444, %c0_33], %24 {strides = array<i32>} : memref<1604x3xf32, #tpu.memory_space<vmem>>, vector<32x3xf32>,
    %c0_34 = arith.constant 0 : index
    %c8 = arith.constant 8 : index
    %c0_35 = arith.constant 0 : index
    %c0_36 = arith.constant 0 : index
    %26 = vector.load %arg1[%c0_34, %c8, %c0_35, %c0_36] : memref<1x32x32x3xf32, #tpu.memory_space<vmem>>, vector<1x1x32x3xf32>
    %27 = vector.shape_cast %26 : vector<1x1x32x3xf32> to vector<32x3xf32>
    %c484 = arith.constant 484 : index
    %c0_37 = arith.constant 0 : index
    %28 = vector.load %arg13[%c484, %c0_37] : memref<1604x3xf32, #tpu.memory_space<vmem>>, vector<32x3xf32>
    tpu.vector_store %arg13[%c484, %c0_37], %27 {strides = array<i32>} : memref<1604x3xf32, #tpu.memory_space<vmem>>, vector<32x3xf32>,
    %c0_38 = arith.constant 0 : index
    %c9 = arith.constant 9 : index
    %c0_39 = arith.constant 0 : index
    %c0_40 = arith.constant 0 : index
    %29 = vector.load %arg1[%c0_38, %c9, %c0_39, %c0_40] : memref<1x32x32x3xf32, #tpu.memory_space<vmem>>, vector<1x1x32x3xf32>
    %30 = vector.shape_cast %29 : vector<1x1x32x3xf32> to vector<32x3xf32>
    %c524 = arith.constant 524 : index
    %c0_41 = arith.constant 0 : index
    %31 = vector.load %arg13[%c524, %c0_41] : memref<1604x3xf32, #tpu.memory_space<vmem>>, vector<32x3xf32>
    tpu.vector_store %arg13[%c524, %c0_41], %30 {strides = array<i32>} : memref<1604x3xf32, #tpu.memory_space<vmem>>, vector<32x3xf32>,
    %c0_42 = arith.constant 0 : index
    %c10 = arith.constant 10 : index
    %c0_43 = arith.constant 0 : index
    %c0_44 = arith.constant 0 : index
    %32 = vector.load %arg1[%c0_42, %c10, %c0_43, %c0_44] : memref<1x32x32x3xf32, #tpu.memory_space<vmem>>, vector<1x1x32x3xf32>
    %33 = vector.shape_cast %32 : vector<1x1x32x3xf32> to vector<32x3xf32>
    %c564 = arith.constant 564 : index
    %c0_45 = arith.constant 0 : index
    %34 = vector.load %arg13[%c564, %c0_45] : memref<1604x3xf32, #tpu.memory_space<vmem>>, vector<32x3xf32>
    tpu.vector_store %arg13[%c564, %c0_45], %33 {strides = array<i32>} : memref<1604x3xf32, #tpu.memory_space<vmem>>, vector<32x3xf32>,
    %c0_46 = arith.constant 0 : index
    %c11 = arith.constant 11 : index
    %c0_47 = arith.constant 0 : index
    %c0_48 = arith.constant 0 : index
    %35 = vector.load %arg1[%c0_46, %c11, %c0_47, %c0_48] : memref<1x32x32x3xf32, #tpu.memory_space<vmem>>, vector<1x1x32x3xf32>
    %36 = vector.shape_cast %35 : vector<1x1x32x3xf32> to vector<32x3xf32>
    %c604 = arith.constant 604 : index
    %c0_49 = arith.constant 0 : index
    %37 = vector.load %arg13[%c604, %c0_49] : memref<1604x3xf32, #tpu.memory_space<vmem>>, vector<32x3xf32>
    tpu.vector_store %arg13[%c604, %c0_49], %36 {strides = array<i32>} : memref<1604x3xf32, #tpu.memory_space<vmem>>, vector<32x3xf32>,
    %c0_50 = arith.constant 0 : index
    %c12 = arith.constant 12 : index
    %c0_51 = arith.constant 0 : index
    %c0_52 = arith.constant 0 : index
    %38 = vector.load %arg1[%c0_50, %c12, %c0_51, %c0_52] : memref<1x32x32x3xf32, #tpu.memory_space<vmem>>, vector<1x1x32x3xf32>
    %39 = vector.shape_cast %38 : vector<1x1x32x3xf32> to vector<32x3xf32>
    %c644 = arith.constant 644 : index
    %c0_53 = arith.constant 0 : index
    %40 = vector.load %arg13[%c644, %c0_53] : memref<1604x3xf32, #tpu.memory_space<vmem>>, vector<32x3xf32>
    tpu.vector_store %arg13[%c644, %c0_53], %39 {strides = array<i32>} : memref<1604x3xf32, #tpu.memory_space<vmem>>, vector<32x3xf32>,
    %c0_54 = arith.constant 0 : index
    %c13 = arith.constant 13 : index
    %c0_55 = arith.constant 0 : index
    %c0_56 = arith.constant 0 : index
    %41 = vector.load %arg1[%c0_54, %c13, %c0_55, %c0_56] : memref<1x32x32x3xf32, #tpu.memory_space<vmem>>, vector<1x1x32x3xf32>
    %42 = vector.shape_cast %41 : vector<1x1x32x3xf32> to vector<32x3xf32>
    %c684 = arith.constant 684 : index
    %c0_57 = arith.constant 0 : index
    %43 = vector.load %arg13[%c684, %c0_57] : memref<1604x3xf32, #tpu.memory_space<vmem>>, vector<32x3xf32>
    tpu.vector_store %arg13[%c684, %c0_57], %42 {strides = array<i32>} : memref<1604x3xf32, #tpu.memory_space<vmem>>, vector<32x3xf32>,
    %c0_58 = arith.constant 0 : index
    %c14 = arith.constant 14 : index
    %c0_59 = arith.constant 0 : index
    %c0_60 = arith.constant 0 : index
    %44 = vector.load %arg1[%c0_58, %c14, %c0_59, %c0_60] : memref<1x32x32x3xf32, #tpu.memory_space<vmem>>, vector<1x1x32x3xf32>
    %45 = vector.shape_cast %44 : vector<1x1x32x3xf32> to vector<32x3xf32>
    %c724 = arith.constant 724 : index
    %c0_61 = arith.constant 0 : index
    %46 = vector.load %arg13[%c724, %c0_61] : memref<1604x3xf32, #tpu.memory_space<vmem>>, vector<32x3xf32>
    tpu.vector_store %arg13[%c724, %c0_61], %45 {strides = array<i32>} : memref<1604x3xf32, #tpu.memory_space<vmem>>, vector<32x3xf32>,
    %c0_62 = arith.constant 0 : index
    %c15 = arith.constant 15 : index
    %c0_63 = arith.constant 0 : index
    %c0_64 = arith.constant 0 : index
    %47 = vector.load %arg1[%c0_62, %c15, %c0_63, %c0_64] : memref<1x32x32x3xf32, #tpu.memory_space<vmem>>, vector<1x1x32x3xf32>
    %48 = vector.shape_cast %47 : vector<1x1x32x3xf32> to vector<32x3xf32>
    %c764 = arith.constant 764 : index
    %c0_65 = arith.constant 0 : index
    %49 = vector.load %arg13[%c764, %c0_65] : memref<1604x3xf32, #tpu.memory_space<vmem>>, vector<32x3xf32>
    tpu.vector_store %arg13[%c764, %c0_65], %48 {strides = array<i32>} : memref<1604x3xf32, #tpu.memory_space<vmem>>, vector<32x3xf32>,
    %c0_66 = arith.constant 0 : index
    %c16 = arith.constant 16 : index
    %c0_67 = arith.constant 0 : index
    %c0_68 = arith.constant 0 : index
    %50 = vector.load %arg1[%c0_66, %c16, %c0_67, %c0_68] : memref<1x32x32x3xf32, #tpu.memory_space<vmem>>, vector<1x1x32x3xf32>
    %51 = vector.shape_cast %50 : vector<1x1x32x3xf32> to vector<32x3xf32>
    %c804 = arith.constant 804 : index
    %c0_69 = arith.constant 0 : index
    %52 = vector.load %arg13[%c804, %c0_69] : memref<1604x3xf32, #tpu.memory_space<vmem>>, vector<32x3xf32>
    tpu.vector_store %arg13[%c804, %c0_69], %51 {strides = array<i32>} : memref<1604x3xf32, #tpu.memory_space<vmem>>, vector<32x3xf32>,
    %c0_70 = arith.constant 0 : index
    %c17 = arith.constant 17 : index
    %c0_71 = arith.constant 0 : index
    %c0_72 = arith.constant 0 : index
    %53 = vector.load %arg1[%c0_70, %c17, %c0_71, %c0_72] : memref<1x32x32x3xf32, #tpu.memory_space<vmem>>, vector<1x1x32x3xf32>
    %54 = vector.shape_cast %53 : vector<1x1x32x3xf32> to vector<32x3xf32>
    %c844 = arith.constant 844 : index
    %c0_73 = arith.constant 0 : index
    %55 = vector.load %arg13[%c844, %c0_73] : memref<1604x3xf32, #tpu.memory_space<vmem>>, vector<32x3xf32>
    tpu.vector_store %arg13[%c844, %c0_73], %54 {strides = array<i32>} : memref<1604x3xf32, #tpu.memory_space<vmem>>, vector<32x3xf32>,
    %c0_74 = arith.constant 0 : index
    %c18 = arith.constant 18 : index
    %c0_75 = arith.constant 0 : index
    %c0_76 = arith.constant 0 : index
    %56 = vector.load %arg1[%c0_74, %c18, %c0_75, %c0_76] : memref<1x32x32x3xf32, #tpu.memory_space<vmem>>, vector<1x1x32x3xf32>
    %57 = vector.shape_cast %56 : vector<1x1x32x3xf32> to vector<32x3xf32>
    %c884 = arith.constant 884 : index
    %c0_77 = arith.constant 0 : index
    %58 = vector.load %arg13[%c884, %c0_77] : memref<1604x3xf32, #tpu.memory_space<vmem>>, vector<32x3xf32>
    tpu.vector_store %arg13[%c884, %c0_77], %57 {strides = array<i32>} : memref<1604x3xf32, #tpu.memory_space<vmem>>, vector<32x3xf32>,
    %c0_78 = arith.constant 0 : index
    %c19 = arith.constant 19 : index
    %c0_79 = arith.constant 0 : index
    %c0_80 = arith.constant 0 : index
    %59 = vector.load %arg1[%c0_78, %c19, %c0_79, %c0_80] : memref<1x32x32x3xf32, #tpu.memory_space<vmem>>, vector<1x1x32x3xf32>
    %60 = vector.shape_cast %59 : vector<1x1x32x3xf32> to vector<32x3xf32>
    %c924 = arith.constant 924 : index
    %c0_81 = arith.constant 0 : index
    %61 = vector.load %arg13[%c924, %c0_81] : memref<1604x3xf32, #tpu.memory_space<vmem>>, vector<32x3xf32>
    tpu.vector_store %arg13[%c924, %c0_81], %60 {strides = array<i32>} : memref<1604x3xf32, #tpu.memory_space<vmem>>, vector<32x3xf32>,
    %c0_82 = arith.constant 0 : index
    %c20 = arith.constant 20 : index
    %c0_83 = arith.constant 0 : index
    %c0_84 = arith.constant 0 : index
    %62 = vector.load %arg1[%c0_82, %c20, %c0_83, %c0_84] : memref<1x32x32x3xf32, #tpu.memory_space<vmem>>, vector<1x1x32x3xf32>
    %63 = vector.shape_cast %62 : vector<1x1x32x3xf32> to vector<32x3xf32>
    %c964 = arith.constant 964 : index
    %c0_85 = arith.constant 0 : index
    %64 = vector.load %arg13[%c964, %c0_85] : memref<1604x3xf32, #tpu.memory_space<vmem>>, vector<32x3xf32>
    tpu.vector_store %arg13[%c964, %c0_85], %63 {strides = array<i32>} : memref<1604x3xf32, #tpu.memory_space<vmem>>, vector<32x3xf32>,
    %c0_86 = arith.constant 0 : index
    %c21 = arith.constant 21 : index
    %c0_87 = arith.constant 0 : index
    %c0_88 = arith.constant 0 : index
    %65 = vector.load %arg1[%c0_86, %c21, %c0_87, %c0_88] : memref<1x32x32x3xf32, #tpu.memory_space<vmem>>, vector<1x1x32x3xf32>
    %66 = vector.shape_cast %65 : vector<1x1x32x3xf32> to vector<32x3xf32>
    %c1004 = arith.constant 1004 : index
    %c0_89 = arith.constant 0 : index
    %67 = vector.load %arg13[%c1004, %c0_89] : memref<1604x3xf32, #tpu.memory_space<vmem>>, vector<32x3xf32>
    tpu.vector_store %arg13[%c1004, %c0_89], %66 {strides = array<i32>} : memref<1604x3xf32, #tpu.memory_space<vmem>>, vector<32x3xf32>,
    %c0_90 = arith.constant 0 : index
    %c22 = arith.constant 22 : index
    %c0_91 = arith.constant 0 : index
    %c0_92 = arith.constant 0 : index
    %68 = vector.load %arg1[%c0_90, %c22, %c0_91, %c0_92] : memref<1x32x32x3xf32, #tpu.memory_space<vmem>>, vector<1x1x32x3xf32>
    %69 = vector.shape_cast %68 : vector<1x1x32x3xf32> to vector<32x3xf32>
    %c1044 = arith.constant 1044 : index
    %c0_93 = arith.constant 0 : index
    %70 = vector.load %arg13[%c1044, %c0_93] : memref<1604x3xf32, #tpu.memory_space<vmem>>, vector<32x3xf32>
    tpu.vector_store %arg13[%c1044, %c0_93], %69 {strides = array<i32>} : memref<1604x3xf32, #tpu.memory_space<vmem>>, vector<32x3xf32>,
    %c0_94 = arith.constant 0 : index
    %c23 = arith.constant 23 : index
    %c0_95 = arith.constant 0 : index
    %c0_96 = arith.constant 0 : index
    %71 = vector.load %arg1[%c0_94, %c23, %c0_95, %c0_96] : memref<1x32x32x3xf32, #tpu.memory_space<vmem>>, vector<1x1x32x3xf32>
    %72 = vector.shape_cast %71 : vector<1x1x32x3xf32> to vector<32x3xf32>
    %c1084 = arith.constant 1084 : index
    %c0_97 = arith.constant 0 : index
    %73 = vector.load %arg13[%c1084, %c0_97] : memref<1604x3xf32, #tpu.memory_space<vmem>>, vector<32x3xf32>
    tpu.vector_store %arg13[%c1084, %c0_97], %72 {strides = array<i32>} : memref<1604x3xf32, #tpu.memory_space<vmem>>, vector<32x3xf32>,
    %c0_98 = arith.constant 0 : index
    %c24 = arith.constant 24 : index
    %c0_99 = arith.constant 0 : index
    %c0_100 = arith.constant 0 : index
    %74 = vector.load %arg1[%c0_98, %c24, %c0_99, %c0_100] : memref<1x32x32x3xf32, #tpu.memory_space<vmem>>, vector<1x1x32x3xf32>
    %75 = vector.shape_cast %74 : vector<1x1x32x3xf32> to vector<32x3xf32>
    %c1124 = arith.constant 1124 : index
    %c0_101 = arith.constant 0 : index
    %76 = vector.load %arg13[%c1124, %c0_101] : memref<1604x3xf32, #tpu.memory_space<vmem>>, vector<32x3xf32>
    tpu.vector_store %arg13[%c1124, %c0_101], %75 {strides = array<i32>} : memref<1604x3xf32, #tpu.memory_space<vmem>>, vector<32x3xf32>,
    %c0_102 = arith.constant 0 : index
    %c25 = arith.constant 25 : index
    %c0_103 = arith.constant 0 : index
    %c0_104 = arith.constant 0 : index
    %77 = vector.load %arg1[%c0_102, %c25, %c0_103, %c0_104] : memref<1x32x32x3xf32, #tpu.memory_space<vmem>>, vector<1x1x32x3xf32>
    %78 = vector.shape_cast %77 : vector<1x1x32x3xf32> to vector<32x3xf32>
    %c1164 = arith.constant 1164 : index
    %c0_105 = arith.constant 0 : index
    %79 = vector.load %arg13[%c1164, %c0_105] : memref<1604x3xf32, #tpu.memory_space<vmem>>, vector<32x3xf32>
    tpu.vector_store %arg13[%c1164, %c0_105], %78 {strides = array<i32>} : memref<1604x3xf32, #tpu.memory_space<vmem>>, vector<32x3xf32>,
    %c0_106 = arith.constant 0 : index
    %c26 = arith.constant 26 : index
    %c0_107 = arith.constant 0 : index
    %c0_108 = arith.constant 0 : index
    %80 = vector.load %arg1[%c0_106, %c26, %c0_107, %c0_108] : memref<1x32x32x3xf32, #tpu.memory_space<vmem>>, vector<1x1x32x3xf32>
    %81 = vector.shape_cast %80 : vector<1x1x32x3xf32> to vector<32x3xf32>
    %c1204 = arith.constant 1204 : index
    %c0_109 = arith.constant 0 : index
    %82 = vector.load %arg13[%c1204, %c0_109] : memref<1604x3xf32, #tpu.memory_space<vmem>>, vector<32x3xf32>
    tpu.vector_store %arg13[%c1204, %c0_109], %81 {strides = array<i32>} : memref<1604x3xf32, #tpu.memory_space<vmem>>, vector<32x3xf32>,
    %c0_110 = arith.constant 0 : index
    %c27 = arith.constant 27 : index
    %c0_111 = arith.constant 0 : index
    %c0_112 = arith.constant 0 : index
    %83 = vector.load %arg1[%c0_110, %c27, %c0_111, %c0_112] : memref<1x32x32x3xf32, #tpu.memory_space<vmem>>, vector<1x1x32x3xf32>
    %84 = vector.shape_cast %83 : vector<1x1x32x3xf32> to vector<32x3xf32>
    %c1244 = arith.constant 1244 : index
    %c0_113 = arith.constant 0 : index
    %85 = vector.load %arg13[%c1244, %c0_113] : memref<1604x3xf32, #tpu.memory_space<vmem>>, vector<32x3xf32>
    tpu.vector_store %arg13[%c1244, %c0_113], %84 {strides = array<i32>} : memref<1604x3xf32, #tpu.memory_space<vmem>>, vector<32x3xf32>,
    %c0_114 = arith.constant 0 : index
    %c28 = arith.constant 28 : index
    %c0_115 = arith.constant 0 : index
    %c0_116 = arith.constant 0 : index
    %86 = vector.load %arg1[%c0_114, %c28, %c0_115, %c0_116] : memref<1x32x32x3xf32, #tpu.memory_space<vmem>>, vector<1x1x32x3xf32>
    %87 = vector.shape_cast %86 : vector<1x1x32x3xf32> to vector<32x3xf32>
    %c1284 = arith.constant 1284 : index
    %c0_117 = arith.constant 0 : index
    %88 = vector.load %arg13[%c1284, %c0_117] : memref<1604x3xf32, #tpu.memory_space<vmem>>, vector<32x3xf32>
    tpu.vector_store %arg13[%c1284, %c0_117], %87 {strides = array<i32>} : memref<1604x3xf32, #tpu.memory_space<vmem>>, vector<32x3xf32>,
    %c0_118 = arith.constant 0 : index
    %c29 = arith.constant 29 : index
    %c0_119 = arith.constant 0 : index
    %c0_120 = arith.constant 0 : index
    %89 = vector.load %arg1[%c0_118, %c29, %c0_119, %c0_120] : memref<1x32x32x3xf32, #tpu.memory_space<vmem>>, vector<1x1x32x3xf32>
    %90 = vector.shape_cast %89 : vector<1x1x32x3xf32> to vector<32x3xf32>
    %c1324 = arith.constant 1324 : index
    %c0_121 = arith.constant 0 : index
    %91 = vector.load %arg13[%c1324, %c0_121] : memref<1604x3xf32, #tpu.memory_space<vmem>>, vector<32x3xf32>
    tpu.vector_store %arg13[%c1324, %c0_121], %90 {strides = array<i32>} : memref<1604x3xf32, #tpu.memory_space<vmem>>, vector<32x3xf32>,
    %c0_122 = arith.constant 0 : index
    %c30 = arith.constant 30 : index
    %c0_123 = arith.constant 0 : index
    %c0_124 = arith.constant 0 : index
    %92 = vector.load %arg1[%c0_122, %c30, %c0_123, %c0_124] : memref<1x32x32x3xf32, #tpu.memory_space<vmem>>, vector<1x1x32x3xf32>
    %93 = vector.shape_cast %92 : vector<1x1x32x3xf32> to vector<32x3xf32>
    %c1364 = arith.constant 1364 : index
    %c0_125 = arith.constant 0 : index
    %94 = vector.load %arg13[%c1364, %c0_125] : memref<1604x3xf32, #tpu.memory_space<vmem>>, vector<32x3xf32>
    tpu.vector_store %arg13[%c1364, %c0_125], %93 {strides = array<i32>} : memref<1604x3xf32, #tpu.memory_space<vmem>>, vector<32x3xf32>,
    %c0_126 = arith.constant 0 : index
    %c31 = arith.constant 31 : index
    %c0_127 = arith.constant 0 : index
    %c0_128 = arith.constant 0 : index
    %95 = vector.load %arg1[%c0_126, %c31, %c0_127, %c0_128] : memref<1x32x32x3xf32, #tpu.memory_space<vmem>>, vector<1x1x32x3xf32>
    %96 = vector.shape_cast %95 : vector<1x1x32x3xf32> to vector<32x3xf32>
    %c1404 = arith.constant 1404 : index
    %c0_129 = arith.constant 0 : index
    %97 = vector.load %arg13[%c1404, %c0_129] : memref<1604x3xf32, #tpu.memory_space<vmem>>, vector<32x3xf32>
    tpu.vector_store %arg13[%c1404, %c0_129], %96 {strides = array<i32>} : memref<1604x3xf32, #tpu.memory_space<vmem>>, vector<32x3xf32>,
    %c0_130 = arith.constant 0 : index
    %c0_131 = arith.constant 0 : index
    %98 = vector.load %arg3[%c0_130, %c0_131] : memref<1x32xf32, #tpu.memory_space<vmem>>, vector<1x32xf32>
    %99 = vector.shape_cast %98 : vector<1x32xf32> to vector<1x32xf32>
    %100 = vector.broadcast %99 : vector<1x32xf32> to vector<1440x32xf32>
    %c0_132 = arith.constant 0 : index
    %c0_133 = arith.constant 0 : index
    %101 = vector.load %arg14[%c0_132, %c0_133] : memref<1440x32xf32, #tpu.memory_space<vmem>>, vector<1440x32xf32>
    tpu.vector_store %arg14[%c0_132, %c0_133], %100 {strides = array<i32>} : memref<1440x32xf32, #tpu.memory_space<vmem>>, vector<1440x32xf32>,
    %c0_i32 = arith.constant 0 : i32
    %c5_i32 = arith.constant 5 : i32
    %102 = arith.addi %c0_i32, %c5_i32 : i32
    %c1_i32 = arith.constant 1 : i32
    scf.for %arg22 = %c0_i32 to %102 step %c1_i32  : i32 {
      %c0_i32_527 = arith.constant 0 : i32
      %c5_i32_528 = arith.constant 5 : i32
      %547 = arith.addi %c0_i32_527, %c5_i32_528 : i32
      %c1_i32_529 = arith.constant 1 : i32
      scf.for %arg23 = %c0_i32_527 to %547 step %c1_i32_529  : i32 {
        %c2_i32 = arith.constant 2 : i32
        %548 = arith.subi %arg22, %c2_i32 : i32
        %c40_i32 = arith.constant 40 : i32
        %549 = arith.muli %548, %c40_i32 : i32
        %c82_i32 = arith.constant 82 : i32
        %550 = arith.addi %c82_i32, %549 : i32
        %c2_i32_531 = arith.constant 2 : i32
        %551 = arith.subi %arg23, %c2_i32_531 : i32
        %552 = arith.addi %550, %551 : i32
        %553 = arith.index_cast %552 : i32 to index
        %c0_532 = arith.constant 0 : index
        %554 = vector.load %arg13[%553, %c0_532] : memref<1604x3xf32, #tpu.memory_space<vmem>>, vector<1440x3xf32>
        %555 = arith.truncf %554 : vector<1440x3xf32> to vector<1440x3xbf16>
        %c0_533 = arith.constant 0 : index
        %c0_534 = arith.constant 0 : index
        %556 = vector.load %arg14[%c0_533, %c0_534] : memref<1440x32xf32, #tpu.memory_space<vmem>>, vector<1440x32xf32>
        %c5_i32_535 = arith.constant 5 : i32
        %557 = arith.muli %arg22, %c5_i32_535 : i32
        %558 = arith.addi %557, %arg23 : i32
        %559 = arith.index_cast %558 : i32 to index
        %c0_536 = arith.constant 0 : index
        %c0_537 = arith.constant 0 : index
        %560 = vector.load %arg2[%559, %c0_536, %c0_537] : memref<25x3x32xbf16, #tpu.memory_space<vmem>>, vector<1x3x32xbf16>
        %561 = vector.shape_cast %560 : vector<1x3x32xbf16> to vector<3x32xbf16>
        %cst_538 = arith.constant dense<0.000000e+00> : vector<1440x32xf32>
        %562 = tpu.matmul %555, %561, %cst_538 {dimension_numbers = #tpu.dot_dimension_numbers<[1], [0], [0], [1], [0, 0, 1, 1], [], []>} : vector<1440x3xbf16>, vector<3x32xbf16>, vector<1440x32xf32> -> vector<1440x32xf32>
        %563 = arith.addf %556, %562 : vector<1440x32xf32>
        %c0_539 = arith.constant 0 : index
        %c0_540 = arith.constant 0 : index
        %564 = vector.load %arg14[%c0_539, %c0_540] : memref<1440x32xf32, #tpu.memory_space<vmem>>, vector<1440x32xf32>
        tpu.vector_store %arg14[%c0_539, %c0_540], %563 {strides = array<i32>} : memref<1440x32xf32, #tpu.memory_space<vmem>>, vector<1440x32xf32>,
      }
      %c5_i32_530 = arith.constant 5 : i32
    }
    %c5_i32_134 = arith.constant 5 : i32
    %c80 = arith.constant 80 : index
    %c0_135 = arith.constant 0 : index
    %103 = vector.load %arg14[%c80, %c0_135] : memref<1440x32xf32, #tpu.memory_space<vmem>>, vector<40x32xf32>
    %c0_136 = arith.constant 0 : index
    %c0_137 = arith.constant 0 : index
    %c0_138 = arith.constant 0 : index
    %104 = vector.load %arg15[%c0_136, %c0_137, %c0_138] : memref<32x40x32xf32, #tpu.memory_space<vmem>>, vector<1x40x32xf32>
    %105 = vector.shape_cast %104 : vector<1x40x32xf32> to vector<40x32xf32>
    %106 = vector.shape_cast %103 : vector<40x32xf32> to vector<1x40x32xf32>
    tpu.vector_store %arg15[%c0_136, %c0_137, %c0_138], %106 {strides = array<i32>} : memref<32x40x32xf32, #tpu.memory_space<vmem>>, vector<1x40x32xf32>,
    %c120 = arith.constant 120 : index
    %c0_139 = arith.constant 0 : index
    %107 = vector.load %arg14[%c120, %c0_139] : memref<1440x32xf32, #tpu.memory_space<vmem>>, vector<40x32xf32>
    %c1_140 = arith.constant 1 : index
    %c0_141 = arith.constant 0 : index
    %c0_142 = arith.constant 0 : index
    %108 = vector.load %arg15[%c1_140, %c0_141, %c0_142] : memref<32x40x32xf32, #tpu.memory_space<vmem>>, vector<1x40x32xf32>
    %109 = vector.shape_cast %108 : vector<1x40x32xf32> to vector<40x32xf32>
    %110 = vector.shape_cast %107 : vector<40x32xf32> to vector<1x40x32xf32>
    tpu.vector_store %arg15[%c1_140, %c0_141, %c0_142], %110 {strides = array<i32>} : memref<32x40x32xf32, #tpu.memory_space<vmem>>, vector<1x40x32xf32>,
    %c160 = arith.constant 160 : index
    %c0_143 = arith.constant 0 : index
    %111 = vector.load %arg14[%c160, %c0_143] : memref<1440x32xf32, #tpu.memory_space<vmem>>, vector<40x32xf32>
    %c2_144 = arith.constant 2 : index
    %c0_145 = arith.constant 0 : index
    %c0_146 = arith.constant 0 : index
    %112 = vector.load %arg15[%c2_144, %c0_145, %c0_146] : memref<32x40x32xf32, #tpu.memory_space<vmem>>, vector<1x40x32xf32>
    %113 = vector.shape_cast %112 : vector<1x40x32xf32> to vector<40x32xf32>
    %114 = vector.shape_cast %111 : vector<40x32xf32> to vector<1x40x32xf32>
    tpu.vector_store %arg15[%c2_144, %c0_145, %c0_146], %114 {strides = array<i32>} : memref<32x40x32xf32, #tpu.memory_space<vmem>>, vector<1x40x32xf32>,
    %c200 = arith.constant 200 : index
    %c0_147 = arith.constant 0 : index
    %115 = vector.load %arg14[%c200, %c0_147] : memref<1440x32xf32, #tpu.memory_space<vmem>>, vector<40x32xf32>
    %c3_148 = arith.constant 3 : index
    %c0_149 = arith.constant 0 : index
    %c0_150 = arith.constant 0 : index
    %116 = vector.load %arg15[%c3_148, %c0_149, %c0_150] : memref<32x40x32xf32, #tpu.memory_space<vmem>>, vector<1x40x32xf32>
    %117 = vector.shape_cast %116 : vector<1x40x32xf32> to vector<40x32xf32>
    %118 = vector.shape_cast %115 : vector<40x32xf32> to vector<1x40x32xf32>
    tpu.vector_store %arg15[%c3_148, %c0_149, %c0_150], %118 {strides = array<i32>} : memref<32x40x32xf32, #tpu.memory_space<vmem>>, vector<1x40x32xf32>,
    %c240 = arith.constant 240 : index
    %c0_151 = arith.constant 0 : index
    %119 = vector.load %arg14[%c240, %c0_151] : memref<1440x32xf32, #tpu.memory_space<vmem>>, vector<40x32xf32>
    %c4_152 = arith.constant 4 : index
    %c0_153 = arith.constant 0 : index
    %c0_154 = arith.constant 0 : index
    %120 = vector.load %arg15[%c4_152, %c0_153, %c0_154] : memref<32x40x32xf32, #tpu.memory_space<vmem>>, vector<1x40x32xf32>
    %121 = vector.shape_cast %120 : vector<1x40x32xf32> to vector<40x32xf32>
    %122 = vector.shape_cast %119 : vector<40x32xf32> to vector<1x40x32xf32>
    tpu.vector_store %arg15[%c4_152, %c0_153, %c0_154], %122 {strides = array<i32>} : memref<32x40x32xf32, #tpu.memory_space<vmem>>, vector<1x40x32xf32>,
    %c280 = arith.constant 280 : index
    %c0_155 = arith.constant 0 : index
    %123 = vector.load %arg14[%c280, %c0_155] : memref<1440x32xf32, #tpu.memory_space<vmem>>, vector<40x32xf32>
    %c5_156 = arith.constant 5 : index
    %c0_157 = arith.constant 0 : index
    %c0_158 = arith.constant 0 : index
    %124 = vector.load %arg15[%c5_156, %c0_157, %c0_158] : memref<32x40x32xf32, #tpu.memory_space<vmem>>, vector<1x40x32xf32>
    %125 = vector.shape_cast %124 : vector<1x40x32xf32> to vector<40x32xf32>
    %126 = vector.shape_cast %123 : vector<40x32xf32> to vector<1x40x32xf32>
    tpu.vector_store %arg15[%c5_156, %c0_157, %c0_158], %126 {strides = array<i32>} : memref<32x40x32xf32, #tpu.memory_space<vmem>>, vector<1x40x32xf32>,
    %c320 = arith.constant 320 : index
    %c0_159 = arith.constant 0 : index
    %127 = vector.load %arg14[%c320, %c0_159] : memref<1440x32xf32, #tpu.memory_space<vmem>>, vector<40x32xf32>
    %c6_160 = arith.constant 6 : index
    %c0_161 = arith.constant 0 : index
    %c0_162 = arith.constant 0 : index
    %128 = vector.load %arg15[%c6_160, %c0_161, %c0_162] : memref<32x40x32xf32, #tpu.memory_space<vmem>>, vector<1x40x32xf32>
    %129 = vector.shape_cast %128 : vector<1x40x32xf32> to vector<40x32xf32>
    %130 = vector.shape_cast %127 : vector<40x32xf32> to vector<1x40x32xf32>
    tpu.vector_store %arg15[%c6_160, %c0_161, %c0_162], %130 {strides = array<i32>} : memref<32x40x32xf32, #tpu.memory_space<vmem>>, vector<1x40x32xf32>,
    %c360 = arith.constant 360 : index
    %c0_163 = arith.constant 0 : index
    %131 = vector.load %arg14[%c360, %c0_163] : memref<1440x32xf32, #tpu.memory_space<vmem>>, vector<40x32xf32>
    %c7_164 = arith.constant 7 : index
    %c0_165 = arith.constant 0 : index
    %c0_166 = arith.constant 0 : index
    %132 = vector.load %arg15[%c7_164, %c0_165, %c0_166] : memref<32x40x32xf32, #tpu.memory_space<vmem>>, vector<1x40x32xf32>
    %133 = vector.shape_cast %132 : vector<1x40x32xf32> to vector<40x32xf32>
    %134 = vector.shape_cast %131 : vector<40x32xf32> to vector<1x40x32xf32>
    tpu.vector_store %arg15[%c7_164, %c0_165, %c0_166], %134 {strides = array<i32>} : memref<32x40x32xf32, #tpu.memory_space<vmem>>, vector<1x40x32xf32>,
    %c400 = arith.constant 400 : index
    %c0_167 = arith.constant 0 : index
    %135 = vector.load %arg14[%c400, %c0_167] : memref<1440x32xf32, #tpu.memory_space<vmem>>, vector<40x32xf32>
    %c8_168 = arith.constant 8 : index
    %c0_169 = arith.constant 0 : index
    %c0_170 = arith.constant 0 : index
    %136 = vector.load %arg15[%c8_168, %c0_169, %c0_170] : memref<32x40x32xf32, #tpu.memory_space<vmem>>, vector<1x40x32xf32>
    %137 = vector.shape_cast %136 : vector<1x40x32xf32> to vector<40x32xf32>
    %138 = vector.shape_cast %135 : vector<40x32xf32> to vector<1x40x32xf32>
    tpu.vector_store %arg15[%c8_168, %c0_169, %c0_170], %138 {strides = array<i32>} : memref<32x40x32xf32, #tpu.memory_space<vmem>>, vector<1x40x32xf32>,
    %c440 = arith.constant 440 : index
    %c0_171 = arith.constant 0 : index
    %139 = vector.load %arg14[%c440, %c0_171] : memref<1440x32xf32, #tpu.memory_space<vmem>>, vector<40x32xf32>
    %c9_172 = arith.constant 9 : index
    %c0_173 = arith.constant 0 : index
    %c0_174 = arith.constant 0 : index
    %140 = vector.load %arg15[%c9_172, %c0_173, %c0_174] : memref<32x40x32xf32, #tpu.memory_space<vmem>>, vector<1x40x32xf32>
    %141 = vector.shape_cast %140 : vector<1x40x32xf32> to vector<40x32xf32>
    %142 = vector.shape_cast %139 : vector<40x32xf32> to vector<1x40x32xf32>
    tpu.vector_store %arg15[%c9_172, %c0_173, %c0_174], %142 {strides = array<i32>} : memref<32x40x32xf32, #tpu.memory_space<vmem>>, vector<1x40x32xf32>,
    %c480 = arith.constant 480 : index
    %c0_175 = arith.constant 0 : index
    %143 = vector.load %arg14[%c480, %c0_175] : memref<1440x32xf32, #tpu.memory_space<vmem>>, vector<40x32xf32>
    %c10_176 = arith.constant 10 : index
    %c0_177 = arith.constant 0 : index
    %c0_178 = arith.constant 0 : index
    %144 = vector.load %arg15[%c10_176, %c0_177, %c0_178] : memref<32x40x32xf32, #tpu.memory_space<vmem>>, vector<1x40x32xf32>
    %145 = vector.shape_cast %144 : vector<1x40x32xf32> to vector<40x32xf32>
    %146 = vector.shape_cast %143 : vector<40x32xf32> to vector<1x40x32xf32>
    tpu.vector_store %arg15[%c10_176, %c0_177, %c0_178], %146 {strides = array<i32>} : memref<32x40x32xf32, #tpu.memory_space<vmem>>, vector<1x40x32xf32>,
    %c520 = arith.constant 520 : index
    %c0_179 = arith.constant 0 : index
    %147 = vector.load %arg14[%c520, %c0_179] : memref<1440x32xf32, #tpu.memory_space<vmem>>, vector<40x32xf32>
    %c11_180 = arith.constant 11 : index
    %c0_181 = arith.constant 0 : index
    %c0_182 = arith.constant 0 : index
    %148 = vector.load %arg15[%c11_180, %c0_181, %c0_182] : memref<32x40x32xf32, #tpu.memory_space<vmem>>, vector<1x40x32xf32>
    %149 = vector.shape_cast %148 : vector<1x40x32xf32> to vector<40x32xf32>
    %150 = vector.shape_cast %147 : vector<40x32xf32> to vector<1x40x32xf32>
    tpu.vector_store %arg15[%c11_180, %c0_181, %c0_182], %150 {strides = array<i32>} : memref<32x40x32xf32, #tpu.memory_space<vmem>>, vector<1x40x32xf32>,
    %c560 = arith.constant 560 : index
    %c0_183 = arith.constant 0 : index
    %151 = vector.load %arg14[%c560, %c0_183] : memref<1440x32xf32, #tpu.memory_space<vmem>>, vector<40x32xf32>
    %c12_184 = arith.constant 12 : index
    %c0_185 = arith.constant 0 : index
    %c0_186 = arith.constant 0 : index
    %152 = vector.load %arg15[%c12_184, %c0_185, %c0_186] : memref<32x40x32xf32, #tpu.memory_space<vmem>>, vector<1x40x32xf32>
    %153 = vector.shape_cast %152 : vector<1x40x32xf32> to vector<40x32xf32>
    %154 = vector.shape_cast %151 : vector<40x32xf32> to vector<1x40x32xf32>
    tpu.vector_store %arg15[%c12_184, %c0_185, %c0_186], %154 {strides = array<i32>} : memref<32x40x32xf32, #tpu.memory_space<vmem>>, vector<1x40x32xf32>,
    %c600 = arith.constant 600 : index
    %c0_187 = arith.constant 0 : index
    %155 = vector.load %arg14[%c600, %c0_187] : memref<1440x32xf32, #tpu.memory_space<vmem>>, vector<40x32xf32>
    %c13_188 = arith.constant 13 : index
    %c0_189 = arith.constant 0 : index
    %c0_190 = arith.constant 0 : index
    %156 = vector.load %arg15[%c13_188, %c0_189, %c0_190] : memref<32x40x32xf32, #tpu.memory_space<vmem>>, vector<1x40x32xf32>
    %157 = vector.shape_cast %156 : vector<1x40x32xf32> to vector<40x32xf32>
    %158 = vector.shape_cast %155 : vector<40x32xf32> to vector<1x40x32xf32>
    tpu.vector_store %arg15[%c13_188, %c0_189, %c0_190], %158 {strides = array<i32>} : memref<32x40x32xf32, #tpu.memory_space<vmem>>, vector<1x40x32xf32>,
    %c640 = arith.constant 640 : index
    %c0_191 = arith.constant 0 : index
    %159 = vector.load %arg14[%c640, %c0_191] : memref<1440x32xf32, #tpu.memory_space<vmem>>, vector<40x32xf32>
    %c14_192 = arith.constant 14 : index
    %c0_193 = arith.constant 0 : index
    %c0_194 = arith.constant 0 : index
    %160 = vector.load %arg15[%c14_192, %c0_193, %c0_194] : memref<32x40x32xf32, #tpu.memory_space<vmem>>, vector<1x40x32xf32>
    %161 = vector.shape_cast %160 : vector<1x40x32xf32> to vector<40x32xf32>
    %162 = vector.shape_cast %159 : vector<40x32xf32> to vector<1x40x32xf32>
    tpu.vector_store %arg15[%c14_192, %c0_193, %c0_194], %162 {strides = array<i32>} : memref<32x40x32xf32, #tpu.memory_space<vmem>>, vector<1x40x32xf32>,
    %c680 = arith.constant 680 : index
    %c0_195 = arith.constant 0 : index
    %163 = vector.load %arg14[%c680, %c0_195] : memref<1440x32xf32, #tpu.memory_space<vmem>>, vector<40x32xf32>
    %c15_196 = arith.constant 15 : index
    %c0_197 = arith.constant 0 : index
    %c0_198 = arith.constant 0 : index
    %164 = vector.load %arg15[%c15_196, %c0_197, %c0_198] : memref<32x40x32xf32, #tpu.memory_space<vmem>>, vector<1x40x32xf32>
    %165 = vector.shape_cast %164 : vector<1x40x32xf32> to vector<40x32xf32>
    %166 = vector.shape_cast %163 : vector<40x32xf32> to vector<1x40x32xf32>
    tpu.vector_store %arg15[%c15_196, %c0_197, %c0_198], %166 {strides = array<i32>} : memref<32x40x32xf32, #tpu.memory_space<vmem>>, vector<1x40x32xf32>,
    %c720 = arith.constant 720 : index
    %c0_199 = arith.constant 0 : index
    %167 = vector.load %arg14[%c720, %c0_199] : memref<1440x32xf32, #tpu.memory_space<vmem>>, vector<40x32xf32>
    %c16_200 = arith.constant 16 : index
    %c0_201 = arith.constant 0 : index
    %c0_202 = arith.constant 0 : index
    %168 = vector.load %arg15[%c16_200, %c0_201, %c0_202] : memref<32x40x32xf32, #tpu.memory_space<vmem>>, vector<1x40x32xf32>
    %169 = vector.shape_cast %168 : vector<1x40x32xf32> to vector<40x32xf32>
    %170 = vector.shape_cast %167 : vector<40x32xf32> to vector<1x40x32xf32>
    tpu.vector_store %arg15[%c16_200, %c0_201, %c0_202], %170 {strides = array<i32>} : memref<32x40x32xf32, #tpu.memory_space<vmem>>, vector<1x40x32xf32>,
    %c760 = arith.constant 760 : index
    %c0_203 = arith.constant 0 : index
    %171 = vector.load %arg14[%c760, %c0_203] : memref<1440x32xf32, #tpu.memory_space<vmem>>, vector<40x32xf32>
    %c17_204 = arith.constant 17 : index
    %c0_205 = arith.constant 0 : index
    %c0_206 = arith.constant 0 : index
    %172 = vector.load %arg15[%c17_204, %c0_205, %c0_206] : memref<32x40x32xf32, #tpu.memory_space<vmem>>, vector<1x40x32xf32>
    %173 = vector.shape_cast %172 : vector<1x40x32xf32> to vector<40x32xf32>
    %174 = vector.shape_cast %171 : vector<40x32xf32> to vector<1x40x32xf32>
    tpu.vector_store %arg15[%c17_204, %c0_205, %c0_206], %174 {strides = array<i32>} : memref<32x40x32xf32, #tpu.memory_space<vmem>>, vector<1x40x32xf32>,
    %c800 = arith.constant 800 : index
    %c0_207 = arith.constant 0 : index
    %175 = vector.load %arg14[%c800, %c0_207] : memref<1440x32xf32, #tpu.memory_space<vmem>>, vector<40x32xf32>
    %c18_208 = arith.constant 18 : index
    %c0_209 = arith.constant 0 : index
    %c0_210 = arith.constant 0 : index
    %176 = vector.load %arg15[%c18_208, %c0_209, %c0_210] : memref<32x40x32xf32, #tpu.memory_space<vmem>>, vector<1x40x32xf32>
    %177 = vector.shape_cast %176 : vector<1x40x32xf32> to vector<40x32xf32>
    %178 = vector.shape_cast %175 : vector<40x32xf32> to vector<1x40x32xf32>
    tpu.vector_store %arg15[%c18_208, %c0_209, %c0_210], %178 {strides = array<i32>} : memref<32x40x32xf32, #tpu.memory_space<vmem>>, vector<1x40x32xf32>,
    %c840 = arith.constant 840 : index
    %c0_211 = arith.constant 0 : index
    %179 = vector.load %arg14[%c840, %c0_211] : memref<1440x32xf32, #tpu.memory_space<vmem>>, vector<40x32xf32>
    %c19_212 = arith.constant 19 : index
    %c0_213 = arith.constant 0 : index
    %c0_214 = arith.constant 0 : index
    %180 = vector.load %arg15[%c19_212, %c0_213, %c0_214] : memref<32x40x32xf32, #tpu.memory_space<vmem>>, vector<1x40x32xf32>
    %181 = vector.shape_cast %180 : vector<1x40x32xf32> to vector<40x32xf32>
    %182 = vector.shape_cast %179 : vector<40x32xf32> to vector<1x40x32xf32>
    tpu.vector_store %arg15[%c19_212, %c0_213, %c0_214], %182 {strides = array<i32>} : memref<32x40x32xf32, #tpu.memory_space<vmem>>, vector<1x40x32xf32>,
    %c880 = arith.constant 880 : index
    %c0_215 = arith.constant 0 : index
    %183 = vector.load %arg14[%c880, %c0_215] : memref<1440x32xf32, #tpu.memory_space<vmem>>, vector<40x32xf32>
    %c20_216 = arith.constant 20 : index
    %c0_217 = arith.constant 0 : index
    %c0_218 = arith.constant 0 : index
    %184 = vector.load %arg15[%c20_216, %c0_217, %c0_218] : memref<32x40x32xf32, #tpu.memory_space<vmem>>, vector<1x40x32xf32>
    %185 = vector.shape_cast %184 : vector<1x40x32xf32> to vector<40x32xf32>
    %186 = vector.shape_cast %183 : vector<40x32xf32> to vector<1x40x32xf32>
    tpu.vector_store %arg15[%c20_216, %c0_217, %c0_218], %186 {strides = array<i32>} : memref<32x40x32xf32, #tpu.memory_space<vmem>>, vector<1x40x32xf32>,
    %c920 = arith.constant 920 : index
    %c0_219 = arith.constant 0 : index
    %187 = vector.load %arg14[%c920, %c0_219] : memref<1440x32xf32, #tpu.memory_space<vmem>>, vector<40x32xf32>
    %c21_220 = arith.constant 21 : index
    %c0_221 = arith.constant 0 : index
    %c0_222 = arith.constant 0 : index
    %188 = vector.load %arg15[%c21_220, %c0_221, %c0_222] : memref<32x40x32xf32, #tpu.memory_space<vmem>>, vector<1x40x32xf32>
    %189 = vector.shape_cast %188 : vector<1x40x32xf32> to vector<40x32xf32>
    %190 = vector.shape_cast %187 : vector<40x32xf32> to vector<1x40x32xf32>
    tpu.vector_store %arg15[%c21_220, %c0_221, %c0_222], %190 {strides = array<i32>} : memref<32x40x32xf32, #tpu.memory_space<vmem>>, vector<1x40x32xf32>,
    %c960 = arith.constant 960 : index
    %c0_223 = arith.constant 0 : index
    %191 = vector.load %arg14[%c960, %c0_223] : memref<1440x32xf32, #tpu.memory_space<vmem>>, vector<40x32xf32>
    %c22_224 = arith.constant 22 : index
    %c0_225 = arith.constant 0 : index
    %c0_226 = arith.constant 0 : index
    %192 = vector.load %arg15[%c22_224, %c0_225, %c0_226] : memref<32x40x32xf32, #tpu.memory_space<vmem>>, vector<1x40x32xf32>
    %193 = vector.shape_cast %192 : vector<1x40x32xf32> to vector<40x32xf32>
    %194 = vector.shape_cast %191 : vector<40x32xf32> to vector<1x40x32xf32>
    tpu.vector_store %arg15[%c22_224, %c0_225, %c0_226], %194 {strides = array<i32>} : memref<32x40x32xf32, #tpu.memory_space<vmem>>, vector<1x40x32xf32>,
    %c1000 = arith.constant 1000 : index
    %c0_227 = arith.constant 0 : index
    %195 = vector.load %arg14[%c1000, %c0_227] : memref<1440x32xf32, #tpu.memory_space<vmem>>, vector<40x32xf32>
    %c23_228 = arith.constant 23 : index
    %c0_229 = arith.constant 0 : index
    %c0_230 = arith.constant 0 : index
    %196 = vector.load %arg15[%c23_228, %c0_229, %c0_230] : memref<32x40x32xf32, #tpu.memory_space<vmem>>, vector<1x40x32xf32>
    %197 = vector.shape_cast %196 : vector<1x40x32xf32> to vector<40x32xf32>
    %198 = vector.shape_cast %195 : vector<40x32xf32> to vector<1x40x32xf32>
    tpu.vector_store %arg15[%c23_228, %c0_229, %c0_230], %198 {strides = array<i32>} : memref<32x40x32xf32, #tpu.memory_space<vmem>>, vector<1x40x32xf32>,
    %c1040 = arith.constant 1040 : index
    %c0_231 = arith.constant 0 : index
    %199 = vector.load %arg14[%c1040, %c0_231] : memref<1440x32xf32, #tpu.memory_space<vmem>>, vector<40x32xf32>
    %c24_232 = arith.constant 24 : index
    %c0_233 = arith.constant 0 : index
    %c0_234 = arith.constant 0 : index
    %200 = vector.load %arg15[%c24_232, %c0_233, %c0_234] : memref<32x40x32xf32, #tpu.memory_space<vmem>>, vector<1x40x32xf32>
    %201 = vector.shape_cast %200 : vector<1x40x32xf32> to vector<40x32xf32>
    %202 = vector.shape_cast %199 : vector<40x32xf32> to vector<1x40x32xf32>
    tpu.vector_store %arg15[%c24_232, %c0_233, %c0_234], %202 {strides = array<i32>} : memref<32x40x32xf32, #tpu.memory_space<vmem>>, vector<1x40x32xf32>,
    %c1080 = arith.constant 1080 : index
    %c0_235 = arith.constant 0 : index
    %203 = vector.load %arg14[%c1080, %c0_235] : memref<1440x32xf32, #tpu.memory_space<vmem>>, vector<40x32xf32>
    %c25_236 = arith.constant 25 : index
    %c0_237 = arith.constant 0 : index
    %c0_238 = arith.constant 0 : index
    %204 = vector.load %arg15[%c25_236, %c0_237, %c0_238] : memref<32x40x32xf32, #tpu.memory_space<vmem>>, vector<1x40x32xf32>
    %205 = vector.shape_cast %204 : vector<1x40x32xf32> to vector<40x32xf32>
    %206 = vector.shape_cast %203 : vector<40x32xf32> to vector<1x40x32xf32>
    tpu.vector_store %arg15[%c25_236, %c0_237, %c0_238], %206 {strides = array<i32>} : memref<32x40x32xf32, #tpu.memory_space<vmem>>, vector<1x40x32xf32>,
    %c1120 = arith.constant 1120 : index
    %c0_239 = arith.constant 0 : index
    %207 = vector.load %arg14[%c1120, %c0_239] : memref<1440x32xf32, #tpu.memory_space<vmem>>, vector<40x32xf32>
    %c26_240 = arith.constant 26 : index
    %c0_241 = arith.constant 0 : index
    %c0_242 = arith.constant 0 : index
    %208 = vector.load %arg15[%c26_240, %c0_241, %c0_242] : memref<32x40x32xf32, #tpu.memory_space<vmem>>, vector<1x40x32xf32>
    %209 = vector.shape_cast %208 : vector<1x40x32xf32> to vector<40x32xf32>
    %210 = vector.shape_cast %207 : vector<40x32xf32> to vector<1x40x32xf32>
    tpu.vector_store %arg15[%c26_240, %c0_241, %c0_242], %210 {strides = array<i32>} : memref<32x40x32xf32, #tpu.memory_space<vmem>>, vector<1x40x32xf32>,
    %c1160 = arith.constant 1160 : index
    %c0_243 = arith.constant 0 : index
    %211 = vector.load %arg14[%c1160, %c0_243] : memref<1440x32xf32, #tpu.memory_space<vmem>>, vector<40x32xf32>
    %c27_244 = arith.constant 27 : index
    %c0_245 = arith.constant 0 : index
    %c0_246 = arith.constant 0 : index
    %212 = vector.load %arg15[%c27_244, %c0_245, %c0_246] : memref<32x40x32xf32, #tpu.memory_space<vmem>>, vector<1x40x32xf32>
    %213 = vector.shape_cast %212 : vector<1x40x32xf32> to vector<40x32xf32>
    %214 = vector.shape_cast %211 : vector<40x32xf32> to vector<1x40x32xf32>
    tpu.vector_store %arg15[%c27_244, %c0_245, %c0_246], %214 {strides = array<i32>} : memref<32x40x32xf32, #tpu.memory_space<vmem>>, vector<1x40x32xf32>,
    %c1200 = arith.constant 1200 : index
    %c0_247 = arith.constant 0 : index
    %215 = vector.load %arg14[%c1200, %c0_247] : memref<1440x32xf32, #tpu.memory_space<vmem>>, vector<40x32xf32>
    %c28_248 = arith.constant 28 : index
    %c0_249 = arith.constant 0 : index
    %c0_250 = arith.constant 0 : index
    %216 = vector.load %arg15[%c28_248, %c0_249, %c0_250] : memref<32x40x32xf32, #tpu.memory_space<vmem>>, vector<1x40x32xf32>
    %217 = vector.shape_cast %216 : vector<1x40x32xf32> to vector<40x32xf32>
    %218 = vector.shape_cast %215 : vector<40x32xf32> to vector<1x40x32xf32>
    tpu.vector_store %arg15[%c28_248, %c0_249, %c0_250], %218 {strides = array<i32>} : memref<32x40x32xf32, #tpu.memory_space<vmem>>, vector<1x40x32xf32>,
    %c1240 = arith.constant 1240 : index
    %c0_251 = arith.constant 0 : index
    %219 = vector.load %arg14[%c1240, %c0_251] : memref<1440x32xf32, #tpu.memory_space<vmem>>, vector<40x32xf32>
    %c29_252 = arith.constant 29 : index
    %c0_253 = arith.constant 0 : index
    %c0_254 = arith.constant 0 : index
    %220 = vector.load %arg15[%c29_252, %c0_253, %c0_254] : memref<32x40x32xf32, #tpu.memory_space<vmem>>, vector<1x40x32xf32>
    %221 = vector.shape_cast %220 : vector<1x40x32xf32> to vector<40x32xf32>
    %222 = vector.shape_cast %219 : vector<40x32xf32> to vector<1x40x32xf32>
    tpu.vector_store %arg15[%c29_252, %c0_253, %c0_254], %222 {strides = array<i32>} : memref<32x40x32xf32, #tpu.memory_space<vmem>>, vector<1x40x32xf32>,
    %c1280 = arith.constant 1280 : index
    %c0_255 = arith.constant 0 : index
    %223 = vector.load %arg14[%c1280, %c0_255] : memref<1440x32xf32, #tpu.memory_space<vmem>>, vector<40x32xf32>
    %c30_256 = arith.constant 30 : index
    %c0_257 = arith.constant 0 : index
    %c0_258 = arith.constant 0 : index
    %224 = vector.load %arg15[%c30_256, %c0_257, %c0_258] : memref<32x40x32xf32, #tpu.memory_space<vmem>>, vector<1x40x32xf32>
    %225 = vector.shape_cast %224 : vector<1x40x32xf32> to vector<40x32xf32>
    %226 = vector.shape_cast %223 : vector<40x32xf32> to vector<1x40x32xf32>
    tpu.vector_store %arg15[%c30_256, %c0_257, %c0_258], %226 {strides = array<i32>} : memref<32x40x32xf32, #tpu.memory_space<vmem>>, vector<1x40x32xf32>,
    %c1320 = arith.constant 1320 : index
    %c0_259 = arith.constant 0 : index
    %227 = vector.load %arg14[%c1320, %c0_259] : memref<1440x32xf32, #tpu.memory_space<vmem>>, vector<40x32xf32>
    %c31_260 = arith.constant 31 : index
    %c0_261 = arith.constant 0 : index
    %c0_262 = arith.constant 0 : index
    %228 = vector.load %arg15[%c31_260, %c0_261, %c0_262] : memref<32x40x32xf32, #tpu.memory_space<vmem>>, vector<1x40x32xf32>
    %229 = vector.shape_cast %228 : vector<1x40x32xf32> to vector<40x32xf32>
    %230 = vector.shape_cast %227 : vector<40x32xf32> to vector<1x40x32xf32>
    tpu.vector_store %arg15[%c31_260, %c0_261, %c0_262], %230 {strides = array<i32>} : memref<32x40x32xf32, #tpu.memory_space<vmem>>, vector<1x40x32xf32>,
    %c0_263 = arith.constant 0 : index
    %c2_264 = arith.constant 2 : index
    %c0_265 = arith.constant 0 : index
    %231 = tpu.strided_load %arg15[%c0_263, %c2_264, %c0_265] {strides = array<i32: 2, 2, 1>} : memref<32x40x32xf32, #tpu.memory_space<vmem>>, vector<16x16x32xf32>
    %c0_266 = arith.constant 0 : index
    %c3_267 = arith.constant 3 : index
    %c0_268 = arith.constant 0 : index
    %232 = tpu.strided_load %arg15[%c0_266, %c3_267, %c0_268] {strides = array<i32: 2, 2, 1>} : memref<32x40x32xf32, #tpu.memory_space<vmem>>, vector<16x16x32xf32>
    %c1_269 = arith.constant 1 : index
    %c2_270 = arith.constant 2 : index
    %c0_271 = arith.constant 0 : index
    %233 = tpu.strided_load %arg15[%c1_269, %c2_270, %c0_271] {strides = array<i32: 2, 2, 1>} : memref<32x40x32xf32, #tpu.memory_space<vmem>>, vector<16x16x32xf32>
    %c1_272 = arith.constant 1 : index
    %c3_273 = arith.constant 3 : index
    %c0_274 = arith.constant 0 : index
    %234 = tpu.strided_load %arg15[%c1_272, %c3_273, %c0_274] {strides = array<i32: 2, 2, 1>} : memref<32x40x32xf32, #tpu.memory_space<vmem>>, vector<16x16x32xf32>
    %235 = arith.maximumf %231, %232 : vector<16x16x32xf32>
    %236 = arith.maximumf %233, %234 : vector<16x16x32xf32>
    %237 = arith.maximumf %235, %236 : vector<16x16x32xf32>
    %cst_275 = arith.constant 0.000000e+00 : f32
    %238 = vector.broadcast %cst_275 : f32 to vector<580x32xf32>
    %c0_276 = arith.constant 0 : index
    %c0_277 = arith.constant 0 : index
    %239 = vector.load %arg16[%c0_276, %c0_277] : memref<580x32xf32, #tpu.memory_space<vmem>>, vector<580x32xf32>
    tpu.vector_store %arg16[%c0_276, %c0_277], %238 {strides = array<i32>} : memref<580x32xf32, #tpu.memory_space<vmem>>, vector<580x32xf32>,
    %240 = vector.extract_strided_slice %237 {offsets = [0, 0, 0], sizes = [1, 16, 32], strides = [1, 1, 1]} : vector<16x16x32xf32> to vector<1x16x32xf32>
    %241 = vector.shape_cast %240 : vector<1x16x32xf32> to vector<16x32xf32>
    %c100 = arith.constant 100 : index
    %c0_278 = arith.constant 0 : index
    %242 = vector.load %arg16[%c100, %c0_278] : memref<580x32xf32, #tpu.memory_space<vmem>>, vector<16x32xf32>
    tpu.vector_store %arg16[%c100, %c0_278], %241 {strides = array<i32>} : memref<580x32xf32, #tpu.memory_space<vmem>>, vector<16x32xf32>,
    %243 = vector.extract_strided_slice %237 {offsets = [1, 0, 0], sizes = [1, 16, 32], strides = [1, 1, 1]} : vector<16x16x32xf32> to vector<1x16x32xf32>
    %244 = vector.shape_cast %243 : vector<1x16x32xf32> to vector<16x32xf32>
    %c124 = arith.constant 124 : index
    %c0_279 = arith.constant 0 : index
    %245 = vector.load %arg16[%c124, %c0_279] : memref<580x32xf32, #tpu.memory_space<vmem>>, vector<16x32xf32>
    tpu.vector_store %arg16[%c124, %c0_279], %244 {strides = array<i32>} : memref<580x32xf32, #tpu.memory_space<vmem>>, vector<16x32xf32>,
    %246 = vector.extract_strided_slice %237 {offsets = [2, 0, 0], sizes = [1, 16, 32], strides = [1, 1, 1]} : vector<16x16x32xf32> to vector<1x16x32xf32>
    %247 = vector.shape_cast %246 : vector<1x16x32xf32> to vector<16x32xf32>
    %c148 = arith.constant 148 : index
    %c0_280 = arith.constant 0 : index
    %248 = vector.load %arg16[%c148, %c0_280] : memref<580x32xf32, #tpu.memory_space<vmem>>, vector<16x32xf32>
    tpu.vector_store %arg16[%c148, %c0_280], %247 {strides = array<i32>} : memref<580x32xf32, #tpu.memory_space<vmem>>, vector<16x32xf32>,
    %249 = vector.extract_strided_slice %237 {offsets = [3, 0, 0], sizes = [1, 16, 32], strides = [1, 1, 1]} : vector<16x16x32xf32> to vector<1x16x32xf32>
    %250 = vector.shape_cast %249 : vector<1x16x32xf32> to vector<16x32xf32>
    %c172 = arith.constant 172 : index
    %c0_281 = arith.constant 0 : index
    %251 = vector.load %arg16[%c172, %c0_281] : memref<580x32xf32, #tpu.memory_space<vmem>>, vector<16x32xf32>
    tpu.vector_store %arg16[%c172, %c0_281], %250 {strides = array<i32>} : memref<580x32xf32, #tpu.memory_space<vmem>>, vector<16x32xf32>,
    %252 = vector.extract_strided_slice %237 {offsets = [4, 0, 0], sizes = [1, 16, 32], strides = [1, 1, 1]} : vector<16x16x32xf32> to vector<1x16x32xf32>
    %253 = vector.shape_cast %252 : vector<1x16x32xf32> to vector<16x32xf32>
    %c196 = arith.constant 196 : index
    %c0_282 = arith.constant 0 : index
    %254 = vector.load %arg16[%c196, %c0_282] : memref<580x32xf32, #tpu.memory_space<vmem>>, vector<16x32xf32>
    tpu.vector_store %arg16[%c196, %c0_282], %253 {strides = array<i32>} : memref<580x32xf32, #tpu.memory_space<vmem>>, vector<16x32xf32>,
    %255 = vector.extract_strided_slice %237 {offsets = [5, 0, 0], sizes = [1, 16, 32], strides = [1, 1, 1]} : vector<16x16x32xf32> to vector<1x16x32xf32>
    %256 = vector.shape_cast %255 : vector<1x16x32xf32> to vector<16x32xf32>
    %c220 = arith.constant 220 : index
    %c0_283 = arith.constant 0 : index
    %257 = vector.load %arg16[%c220, %c0_283] : memref<580x32xf32, #tpu.memory_space<vmem>>, vector<16x32xf32>
    tpu.vector_store %arg16[%c220, %c0_283], %256 {strides = array<i32>} : memref<580x32xf32, #tpu.memory_space<vmem>>, vector<16x32xf32>,
    %258 = vector.extract_strided_slice %237 {offsets = [6, 0, 0], sizes = [1, 16, 32], strides = [1, 1, 1]} : vector<16x16x32xf32> to vector<1x16x32xf32>
    %259 = vector.shape_cast %258 : vector<1x16x32xf32> to vector<16x32xf32>
    %c244_284 = arith.constant 244 : index
    %c0_285 = arith.constant 0 : index
    %260 = vector.load %arg16[%c244_284, %c0_285] : memref<580x32xf32, #tpu.memory_space<vmem>>, vector<16x32xf32>
    tpu.vector_store %arg16[%c244_284, %c0_285], %259 {strides = array<i32>} : memref<580x32xf32, #tpu.memory_space<vmem>>, vector<16x32xf32>,
    %261 = vector.extract_strided_slice %237 {offsets = [7, 0, 0], sizes = [1, 16, 32], strides = [1, 1, 1]} : vector<16x16x32xf32> to vector<1x16x32xf32>
    %262 = vector.shape_cast %261 : vector<1x16x32xf32> to vector<16x32xf32>
    %c268 = arith.constant 268 : index
    %c0_286 = arith.constant 0 : index
    %263 = vector.load %arg16[%c268, %c0_286] : memref<580x32xf32, #tpu.memory_space<vmem>>, vector<16x32xf32>
    tpu.vector_store %arg16[%c268, %c0_286], %262 {strides = array<i32>} : memref<580x32xf32, #tpu.memory_space<vmem>>, vector<16x32xf32>,
    %264 = vector.extract_strided_slice %237 {offsets = [8, 0, 0], sizes = [1, 16, 32], strides = [1, 1, 1]} : vector<16x16x32xf32> to vector<1x16x32xf32>
    %265 = vector.shape_cast %264 : vector<1x16x32xf32> to vector<16x32xf32>
    %c292 = arith.constant 292 : index
    %c0_287 = arith.constant 0 : index
    %266 = vector.load %arg16[%c292, %c0_287] : memref<580x32xf32, #tpu.memory_space<vmem>>, vector<16x32xf32>
    tpu.vector_store %arg16[%c292, %c0_287], %265 {strides = array<i32>} : memref<580x32xf32, #tpu.memory_space<vmem>>, vector<16x32xf32>,
    %267 = vector.extract_strided_slice %237 {offsets = [9, 0, 0], sizes = [1, 16, 32], strides = [1, 1, 1]} : vector<16x16x32xf32> to vector<1x16x32xf32>
    %268 = vector.shape_cast %267 : vector<1x16x32xf32> to vector<16x32xf32>
    %c316 = arith.constant 316 : index
    %c0_288 = arith.constant 0 : index
    %269 = vector.load %arg16[%c316, %c0_288] : memref<580x32xf32, #tpu.memory_space<vmem>>, vector<16x32xf32>
    tpu.vector_store %arg16[%c316, %c0_288], %268 {strides = array<i32>} : memref<580x32xf32, #tpu.memory_space<vmem>>, vector<16x32xf32>,
    %270 = vector.extract_strided_slice %237 {offsets = [10, 0, 0], sizes = [1, 16, 32], strides = [1, 1, 1]} : vector<16x16x32xf32> to vector<1x16x32xf32>
    %271 = vector.shape_cast %270 : vector<1x16x32xf32> to vector<16x32xf32>
    %c340 = arith.constant 340 : index
    %c0_289 = arith.constant 0 : index
    %272 = vector.load %arg16[%c340, %c0_289] : memref<580x32xf32, #tpu.memory_space<vmem>>, vector<16x32xf32>
    tpu.vector_store %arg16[%c340, %c0_289], %271 {strides = array<i32>} : memref<580x32xf32, #tpu.memory_space<vmem>>, vector<16x32xf32>,
    %273 = vector.extract_strided_slice %237 {offsets = [11, 0, 0], sizes = [1, 16, 32], strides = [1, 1, 1]} : vector<16x16x32xf32> to vector<1x16x32xf32>
    %274 = vector.shape_cast %273 : vector<1x16x32xf32> to vector<16x32xf32>
    %c364_290 = arith.constant 364 : index
    %c0_291 = arith.constant 0 : index
    %275 = vector.load %arg16[%c364_290, %c0_291] : memref<580x32xf32, #tpu.memory_space<vmem>>, vector<16x32xf32>
    tpu.vector_store %arg16[%c364_290, %c0_291], %274 {strides = array<i32>} : memref<580x32xf32, #tpu.memory_space<vmem>>, vector<16x32xf32>,
    %276 = vector.extract_strided_slice %237 {offsets = [12, 0, 0], sizes = [1, 16, 32], strides = [1, 1, 1]} : vector<16x16x32xf32> to vector<1x16x32xf32>
    %277 = vector.shape_cast %276 : vector<1x16x32xf32> to vector<16x32xf32>
    %c388 = arith.constant 388 : index
    %c0_292 = arith.constant 0 : index
    %278 = vector.load %arg16[%c388, %c0_292] : memref<580x32xf32, #tpu.memory_space<vmem>>, vector<16x32xf32>
    tpu.vector_store %arg16[%c388, %c0_292], %277 {strides = array<i32>} : memref<580x32xf32, #tpu.memory_space<vmem>>, vector<16x32xf32>,
    %279 = vector.extract_strided_slice %237 {offsets = [13, 0, 0], sizes = [1, 16, 32], strides = [1, 1, 1]} : vector<16x16x32xf32> to vector<1x16x32xf32>
    %280 = vector.shape_cast %279 : vector<1x16x32xf32> to vector<16x32xf32>
    %c412 = arith.constant 412 : index
    %c0_293 = arith.constant 0 : index
    %281 = vector.load %arg16[%c412, %c0_293] : memref<580x32xf32, #tpu.memory_space<vmem>>, vector<16x32xf32>
    tpu.vector_store %arg16[%c412, %c0_293], %280 {strides = array<i32>} : memref<580x32xf32, #tpu.memory_space<vmem>>, vector<16x32xf32>,
    %282 = vector.extract_strided_slice %237 {offsets = [14, 0, 0], sizes = [1, 16, 32], strides = [1, 1, 1]} : vector<16x16x32xf32> to vector<1x16x32xf32>
    %283 = vector.shape_cast %282 : vector<1x16x32xf32> to vector<16x32xf32>
    %c436 = arith.constant 436 : index
    %c0_294 = arith.constant 0 : index
    %284 = vector.load %arg16[%c436, %c0_294] : memref<580x32xf32, #tpu.memory_space<vmem>>, vector<16x32xf32>
    tpu.vector_store %arg16[%c436, %c0_294], %283 {strides = array<i32>} : memref<580x32xf32, #tpu.memory_space<vmem>>, vector<16x32xf32>,
    %285 = vector.extract_strided_slice %237 {offsets = [15, 0, 0], sizes = [1, 16, 32], strides = [1, 1, 1]} : vector<16x16x32xf32> to vector<1x16x32xf32>
    %286 = vector.shape_cast %285 : vector<1x16x32xf32> to vector<16x32xf32>
    %c460 = arith.constant 460 : index
    %c0_295 = arith.constant 0 : index
    %287 = vector.load %arg16[%c460, %c0_295] : memref<580x32xf32, #tpu.memory_space<vmem>>, vector<16x32xf32>
    tpu.vector_store %arg16[%c460, %c0_295], %286 {strides = array<i32>} : memref<580x32xf32, #tpu.memory_space<vmem>>, vector<16x32xf32>,
    %c0_296 = arith.constant 0 : index
    %c0_297 = arith.constant 0 : index
    %288 = vector.load %arg5[%c0_296, %c0_297] : memref<1x32xf32, #tpu.memory_space<vmem>>, vector<1x32xf32>
    %289 = vector.shape_cast %288 : vector<1x32xf32> to vector<1x32xf32>
    %290 = vector.broadcast %289 : vector<1x32xf32> to vector<480x32xf32>
    %c0_298 = arith.constant 0 : index
    %c0_299 = arith.constant 0 : index
    %291 = vector.load %arg17[%c0_298, %c0_299] : memref<480x32xf32, #tpu.memory_space<vmem>>, vector<480x32xf32>
    tpu.vector_store %arg17[%c0_298, %c0_299], %290 {strides = array<i32>} : memref<480x32xf32, #tpu.memory_space<vmem>>, vector<480x32xf32>,
    %c0_i32_300 = arith.constant 0 : i32
    %c5_i32_301 = arith.constant 5 : i32
    %292 = arith.addi %c0_i32_300, %c5_i32_301 : i32
    %c1_i32_302 = arith.constant 1 : i32
    scf.for %arg22 = %c0_i32_300 to %292 step %c1_i32_302  : i32 {
      %c0_i32_527 = arith.constant 0 : i32
      %c5_i32_528 = arith.constant 5 : i32
      %547 = arith.addi %c0_i32_527, %c5_i32_528 : i32
      %c1_i32_529 = arith.constant 1 : i32
      scf.for %arg23 = %c0_i32_527 to %547 step %c1_i32_529  : i32 {
        %c2_i32 = arith.constant 2 : i32
        %548 = arith.subi %arg22, %c2_i32 : i32
        %c24_i32 = arith.constant 24 : i32
        %549 = arith.muli %548, %c24_i32 : i32
        %c50_i32 = arith.constant 50 : i32
        %550 = arith.addi %c50_i32, %549 : i32
        %c2_i32_531 = arith.constant 2 : i32
        %551 = arith.subi %arg23, %c2_i32_531 : i32
        %552 = arith.addi %550, %551 : i32
        %553 = arith.index_cast %552 : i32 to index
        %c0_532 = arith.constant 0 : index
        %554 = vector.load %arg16[%553, %c0_532] : memref<580x32xf32, #tpu.memory_space<vmem>>, vector<480x32xf32>
        %555 = arith.truncf %554 : vector<480x32xf32> to vector<480x32xbf16>
        %c0_533 = arith.constant 0 : index
        %c0_534 = arith.constant 0 : index
        %556 = vector.load %arg17[%c0_533, %c0_534] : memref<480x32xf32, #tpu.memory_space<vmem>>, vector<480x32xf32>
        %c5_i32_535 = arith.constant 5 : i32
        %557 = arith.muli %arg22, %c5_i32_535 : i32
        %558 = arith.addi %557, %arg23 : i32
        %559 = arith.index_cast %558 : i32 to index
        %c0_536 = arith.constant 0 : index
        %c0_537 = arith.constant 0 : index
        %560 = vector.load %arg4[%559, %c0_536, %c0_537] : memref<25x32x32xbf16, #tpu.memory_space<vmem>>, vector<1x32x32xbf16>
        %561 = vector.shape_cast %560 : vector<1x32x32xbf16> to vector<32x32xbf16>
        %cst_538 = arith.constant dense<0.000000e+00> : vector<480x32xf32>
        %562 = tpu.matmul %555, %561, %cst_538 {dimension_numbers = #tpu.dot_dimension_numbers<[1], [0], [0], [1], [0, 0, 1, 1], [], []>} : vector<480x32xbf16>, vector<32x32xbf16>, vector<480x32xf32> -> vector<480x32xf32>
        %563 = arith.addf %556, %562 : vector<480x32xf32>
        %c0_539 = arith.constant 0 : index
        %c0_540 = arith.constant 0 : index
        %564 = vector.load %arg17[%c0_539, %c0_540] : memref<480x32xf32, #tpu.memory_space<vmem>>, vector<480x32xf32>
        tpu.vector_store %arg17[%c0_539, %c0_540], %563 {strides = array<i32>} : memref<480x32xf32, #tpu.memory_space<vmem>>, vector<480x32xf32>,
      }
      %c5_i32_530 = arith.constant 5 : i32
    }
    %c5_i32_303 = arith.constant 5 : i32
    %c48 = arith.constant 48 : index
    %c0_304 = arith.constant 0 : index
    %293 = vector.load %arg17[%c48, %c0_304] : memref<480x32xf32, #tpu.memory_space<vmem>>, vector<24x32xf32>
    %c0_305 = arith.constant 0 : index
    %c0_306 = arith.constant 0 : index
    %c0_307 = arith.constant 0 : index
    %294 = vector.load %arg18[%c0_305, %c0_306, %c0_307] : memref<16x24x32xf32, #tpu.memory_space<vmem>>, vector<1x24x32xf32>
    %295 = vector.shape_cast %294 : vector<1x24x32xf32> to vector<24x32xf32>
    %296 = vector.shape_cast %293 : vector<24x32xf32> to vector<1x24x32xf32>
    tpu.vector_store %arg18[%c0_305, %c0_306, %c0_307], %296 {strides = array<i32>} : memref<16x24x32xf32, #tpu.memory_space<vmem>>, vector<1x24x32xf32>,
    %c72 = arith.constant 72 : index
    %c0_308 = arith.constant 0 : index
    %297 = vector.load %arg17[%c72, %c0_308] : memref<480x32xf32, #tpu.memory_space<vmem>>, vector<24x32xf32>
    %c1_309 = arith.constant 1 : index
    %c0_310 = arith.constant 0 : index
    %c0_311 = arith.constant 0 : index
    %298 = vector.load %arg18[%c1_309, %c0_310, %c0_311] : memref<16x24x32xf32, #tpu.memory_space<vmem>>, vector<1x24x32xf32>
    %299 = vector.shape_cast %298 : vector<1x24x32xf32> to vector<24x32xf32>
    %300 = vector.shape_cast %297 : vector<24x32xf32> to vector<1x24x32xf32>
    tpu.vector_store %arg18[%c1_309, %c0_310, %c0_311], %300 {strides = array<i32>} : memref<16x24x32xf32, #tpu.memory_space<vmem>>, vector<1x24x32xf32>,
    %c96 = arith.constant 96 : index
    %c0_312 = arith.constant 0 : index
    %301 = vector.load %arg17[%c96, %c0_312] : memref<480x32xf32, #tpu.memory_space<vmem>>, vector<24x32xf32>
    %c2_313 = arith.constant 2 : index
    %c0_314 = arith.constant 0 : index
    %c0_315 = arith.constant 0 : index
    %302 = vector.load %arg18[%c2_313, %c0_314, %c0_315] : memref<16x24x32xf32, #tpu.memory_space<vmem>>, vector<1x24x32xf32>
    %303 = vector.shape_cast %302 : vector<1x24x32xf32> to vector<24x32xf32>
    %304 = vector.shape_cast %301 : vector<24x32xf32> to vector<1x24x32xf32>
    tpu.vector_store %arg18[%c2_313, %c0_314, %c0_315], %304 {strides = array<i32>} : memref<16x24x32xf32, #tpu.memory_space<vmem>>, vector<1x24x32xf32>,
    %c120_316 = arith.constant 120 : index
    %c0_317 = arith.constant 0 : index
    %305 = vector.load %arg17[%c120_316, %c0_317] : memref<480x32xf32, #tpu.memory_space<vmem>>, vector<24x32xf32>
    %c3_318 = arith.constant 3 : index
    %c0_319 = arith.constant 0 : index
    %c0_320 = arith.constant 0 : index
    %306 = vector.load %arg18[%c3_318, %c0_319, %c0_320] : memref<16x24x32xf32, #tpu.memory_space<vmem>>, vector<1x24x32xf32>
    %307 = vector.shape_cast %306 : vector<1x24x32xf32> to vector<24x32xf32>
    %308 = vector.shape_cast %305 : vector<24x32xf32> to vector<1x24x32xf32>
    tpu.vector_store %arg18[%c3_318, %c0_319, %c0_320], %308 {strides = array<i32>} : memref<16x24x32xf32, #tpu.memory_space<vmem>>, vector<1x24x32xf32>,
    %c144 = arith.constant 144 : index
    %c0_321 = arith.constant 0 : index
    %309 = vector.load %arg17[%c144, %c0_321] : memref<480x32xf32, #tpu.memory_space<vmem>>, vector<24x32xf32>
    %c4_322 = arith.constant 4 : index
    %c0_323 = arith.constant 0 : index
    %c0_324 = arith.constant 0 : index
    %310 = vector.load %arg18[%c4_322, %c0_323, %c0_324] : memref<16x24x32xf32, #tpu.memory_space<vmem>>, vector<1x24x32xf32>
    %311 = vector.shape_cast %310 : vector<1x24x32xf32> to vector<24x32xf32>
    %312 = vector.shape_cast %309 : vector<24x32xf32> to vector<1x24x32xf32>
    tpu.vector_store %arg18[%c4_322, %c0_323, %c0_324], %312 {strides = array<i32>} : memref<16x24x32xf32, #tpu.memory_space<vmem>>, vector<1x24x32xf32>,
    %c168 = arith.constant 168 : index
    %c0_325 = arith.constant 0 : index
    %313 = vector.load %arg17[%c168, %c0_325] : memref<480x32xf32, #tpu.memory_space<vmem>>, vector<24x32xf32>
    %c5_326 = arith.constant 5 : index
    %c0_327 = arith.constant 0 : index
    %c0_328 = arith.constant 0 : index
    %314 = vector.load %arg18[%c5_326, %c0_327, %c0_328] : memref<16x24x32xf32, #tpu.memory_space<vmem>>, vector<1x24x32xf32>
    %315 = vector.shape_cast %314 : vector<1x24x32xf32> to vector<24x32xf32>
    %316 = vector.shape_cast %313 : vector<24x32xf32> to vector<1x24x32xf32>
    tpu.vector_store %arg18[%c5_326, %c0_327, %c0_328], %316 {strides = array<i32>} : memref<16x24x32xf32, #tpu.memory_space<vmem>>, vector<1x24x32xf32>,
    %c192 = arith.constant 192 : index
    %c0_329 = arith.constant 0 : index
    %317 = vector.load %arg17[%c192, %c0_329] : memref<480x32xf32, #tpu.memory_space<vmem>>, vector<24x32xf32>
    %c6_330 = arith.constant 6 : index
    %c0_331 = arith.constant 0 : index
    %c0_332 = arith.constant 0 : index
    %318 = vector.load %arg18[%c6_330, %c0_331, %c0_332] : memref<16x24x32xf32, #tpu.memory_space<vmem>>, vector<1x24x32xf32>
    %319 = vector.shape_cast %318 : vector<1x24x32xf32> to vector<24x32xf32>
    %320 = vector.shape_cast %317 : vector<24x32xf32> to vector<1x24x32xf32>
    tpu.vector_store %arg18[%c6_330, %c0_331, %c0_332], %320 {strides = array<i32>} : memref<16x24x32xf32, #tpu.memory_space<vmem>>, vector<1x24x32xf32>,
    %c216 = arith.constant 216 : index
    %c0_333 = arith.constant 0 : index
    %321 = vector.load %arg17[%c216, %c0_333] : memref<480x32xf32, #tpu.memory_space<vmem>>, vector<24x32xf32>
    %c7_334 = arith.constant 7 : index
    %c0_335 = arith.constant 0 : index
    %c0_336 = arith.constant 0 : index
    %322 = vector.load %arg18[%c7_334, %c0_335, %c0_336] : memref<16x24x32xf32, #tpu.memory_space<vmem>>, vector<1x24x32xf32>
    %323 = vector.shape_cast %322 : vector<1x24x32xf32> to vector<24x32xf32>
    %324 = vector.shape_cast %321 : vector<24x32xf32> to vector<1x24x32xf32>
    tpu.vector_store %arg18[%c7_334, %c0_335, %c0_336], %324 {strides = array<i32>} : memref<16x24x32xf32, #tpu.memory_space<vmem>>, vector<1x24x32xf32>,
    %c240_337 = arith.constant 240 : index
    %c0_338 = arith.constant 0 : index
    %325 = vector.load %arg17[%c240_337, %c0_338] : memref<480x32xf32, #tpu.memory_space<vmem>>, vector<24x32xf32>
    %c8_339 = arith.constant 8 : index
    %c0_340 = arith.constant 0 : index
    %c0_341 = arith.constant 0 : index
    %326 = vector.load %arg18[%c8_339, %c0_340, %c0_341] : memref<16x24x32xf32, #tpu.memory_space<vmem>>, vector<1x24x32xf32>
    %327 = vector.shape_cast %326 : vector<1x24x32xf32> to vector<24x32xf32>
    %328 = vector.shape_cast %325 : vector<24x32xf32> to vector<1x24x32xf32>
    tpu.vector_store %arg18[%c8_339, %c0_340, %c0_341], %328 {strides = array<i32>} : memref<16x24x32xf32, #tpu.memory_space<vmem>>, vector<1x24x32xf32>,
    %c264 = arith.constant 264 : index
    %c0_342 = arith.constant 0 : index
    %329 = vector.load %arg17[%c264, %c0_342] : memref<480x32xf32, #tpu.memory_space<vmem>>, vector<24x32xf32>
    %c9_343 = arith.constant 9 : index
    %c0_344 = arith.constant 0 : index
    %c0_345 = arith.constant 0 : index
    %330 = vector.load %arg18[%c9_343, %c0_344, %c0_345] : memref<16x24x32xf32, #tpu.memory_space<vmem>>, vector<1x24x32xf32>
    %331 = vector.shape_cast %330 : vector<1x24x32xf32> to vector<24x32xf32>
    %332 = vector.shape_cast %329 : vector<24x32xf32> to vector<1x24x32xf32>
    tpu.vector_store %arg18[%c9_343, %c0_344, %c0_345], %332 {strides = array<i32>} : memref<16x24x32xf32, #tpu.memory_space<vmem>>, vector<1x24x32xf32>,
    %c288 = arith.constant 288 : index
    %c0_346 = arith.constant 0 : index
    %333 = vector.load %arg17[%c288, %c0_346] : memref<480x32xf32, #tpu.memory_space<vmem>>, vector<24x32xf32>
    %c10_347 = arith.constant 10 : index
    %c0_348 = arith.constant 0 : index
    %c0_349 = arith.constant 0 : index
    %334 = vector.load %arg18[%c10_347, %c0_348, %c0_349] : memref<16x24x32xf32, #tpu.memory_space<vmem>>, vector<1x24x32xf32>
    %335 = vector.shape_cast %334 : vector<1x24x32xf32> to vector<24x32xf32>
    %336 = vector.shape_cast %333 : vector<24x32xf32> to vector<1x24x32xf32>
    tpu.vector_store %arg18[%c10_347, %c0_348, %c0_349], %336 {strides = array<i32>} : memref<16x24x32xf32, #tpu.memory_space<vmem>>, vector<1x24x32xf32>,
    %c312 = arith.constant 312 : index
    %c0_350 = arith.constant 0 : index
    %337 = vector.load %arg17[%c312, %c0_350] : memref<480x32xf32, #tpu.memory_space<vmem>>, vector<24x32xf32>
    %c11_351 = arith.constant 11 : index
    %c0_352 = arith.constant 0 : index
    %c0_353 = arith.constant 0 : index
    %338 = vector.load %arg18[%c11_351, %c0_352, %c0_353] : memref<16x24x32xf32, #tpu.memory_space<vmem>>, vector<1x24x32xf32>
    %339 = vector.shape_cast %338 : vector<1x24x32xf32> to vector<24x32xf32>
    %340 = vector.shape_cast %337 : vector<24x32xf32> to vector<1x24x32xf32>
    tpu.vector_store %arg18[%c11_351, %c0_352, %c0_353], %340 {strides = array<i32>} : memref<16x24x32xf32, #tpu.memory_space<vmem>>, vector<1x24x32xf32>,
    %c336 = arith.constant 336 : index
    %c0_354 = arith.constant 0 : index
    %341 = vector.load %arg17[%c336, %c0_354] : memref<480x32xf32, #tpu.memory_space<vmem>>, vector<24x32xf32>
    %c12_355 = arith.constant 12 : index
    %c0_356 = arith.constant 0 : index
    %c0_357 = arith.constant 0 : index
    %342 = vector.load %arg18[%c12_355, %c0_356, %c0_357] : memref<16x24x32xf32, #tpu.memory_space<vmem>>, vector<1x24x32xf32>
    %343 = vector.shape_cast %342 : vector<1x24x32xf32> to vector<24x32xf32>
    %344 = vector.shape_cast %341 : vector<24x32xf32> to vector<1x24x32xf32>
    tpu.vector_store %arg18[%c12_355, %c0_356, %c0_357], %344 {strides = array<i32>} : memref<16x24x32xf32, #tpu.memory_space<vmem>>, vector<1x24x32xf32>,
    %c360_358 = arith.constant 360 : index
    %c0_359 = arith.constant 0 : index
    %345 = vector.load %arg17[%c360_358, %c0_359] : memref<480x32xf32, #tpu.memory_space<vmem>>, vector<24x32xf32>
    %c13_360 = arith.constant 13 : index
    %c0_361 = arith.constant 0 : index
    %c0_362 = arith.constant 0 : index
    %346 = vector.load %arg18[%c13_360, %c0_361, %c0_362] : memref<16x24x32xf32, #tpu.memory_space<vmem>>, vector<1x24x32xf32>
    %347 = vector.shape_cast %346 : vector<1x24x32xf32> to vector<24x32xf32>
    %348 = vector.shape_cast %345 : vector<24x32xf32> to vector<1x24x32xf32>
    tpu.vector_store %arg18[%c13_360, %c0_361, %c0_362], %348 {strides = array<i32>} : memref<16x24x32xf32, #tpu.memory_space<vmem>>, vector<1x24x32xf32>,
    %c384 = arith.constant 384 : index
    %c0_363 = arith.constant 0 : index
    %349 = vector.load %arg17[%c384, %c0_363] : memref<480x32xf32, #tpu.memory_space<vmem>>, vector<24x32xf32>
    %c14_364 = arith.constant 14 : index
    %c0_365 = arith.constant 0 : index
    %c0_366 = arith.constant 0 : index
    %350 = vector.load %arg18[%c14_364, %c0_365, %c0_366] : memref<16x24x32xf32, #tpu.memory_space<vmem>>, vector<1x24x32xf32>
    %351 = vector.shape_cast %350 : vector<1x24x32xf32> to vector<24x32xf32>
    %352 = vector.shape_cast %349 : vector<24x32xf32> to vector<1x24x32xf32>
    tpu.vector_store %arg18[%c14_364, %c0_365, %c0_366], %352 {strides = array<i32>} : memref<16x24x32xf32, #tpu.memory_space<vmem>>, vector<1x24x32xf32>,
    %c408 = arith.constant 408 : index
    %c0_367 = arith.constant 0 : index
    %353 = vector.load %arg17[%c408, %c0_367] : memref<480x32xf32, #tpu.memory_space<vmem>>, vector<24x32xf32>
    %c15_368 = arith.constant 15 : index
    %c0_369 = arith.constant 0 : index
    %c0_370 = arith.constant 0 : index
    %354 = vector.load %arg18[%c15_368, %c0_369, %c0_370] : memref<16x24x32xf32, #tpu.memory_space<vmem>>, vector<1x24x32xf32>
    %355 = vector.shape_cast %354 : vector<1x24x32xf32> to vector<24x32xf32>
    %356 = vector.shape_cast %353 : vector<24x32xf32> to vector<1x24x32xf32>
    tpu.vector_store %arg18[%c15_368, %c0_369, %c0_370], %356 {strides = array<i32>} : memref<16x24x32xf32, #tpu.memory_space<vmem>>, vector<1x24x32xf32>,
    %c0_371 = arith.constant 0 : index
    %c2_372 = arith.constant 2 : index
    %c0_373 = arith.constant 0 : index
    %357 = tpu.strided_load %arg18[%c0_371, %c2_372, %c0_373] {strides = array<i32: 2, 2, 1>} : memref<16x24x32xf32, #tpu.memory_space<vmem>>, vector<8x8x32xf32>
    %c0_374 = arith.constant 0 : index
    %c3_375 = arith.constant 3 : index
    %c0_376 = arith.constant 0 : index
    %358 = tpu.strided_load %arg18[%c0_374, %c3_375, %c0_376] {strides = array<i32: 2, 2, 1>} : memref<16x24x32xf32, #tpu.memory_space<vmem>>, vector<8x8x32xf32>
    %c1_377 = arith.constant 1 : index
    %c2_378 = arith.constant 2 : index
    %c0_379 = arith.constant 0 : index
    %359 = tpu.strided_load %arg18[%c1_377, %c2_378, %c0_379] {strides = array<i32: 2, 2, 1>} : memref<16x24x32xf32, #tpu.memory_space<vmem>>, vector<8x8x32xf32>
    %c1_380 = arith.constant 1 : index
    %c3_381 = arith.constant 3 : index
    %c0_382 = arith.constant 0 : index
    %360 = tpu.strided_load %arg18[%c1_380, %c3_381, %c0_382] {strides = array<i32: 2, 2, 1>} : memref<16x24x32xf32, #tpu.memory_space<vmem>>, vector<8x8x32xf32>
    %361 = arith.maximumf %357, %358 : vector<8x8x32xf32>
    %362 = arith.maximumf %359, %360 : vector<8x8x32xf32>
    %363 = arith.maximumf %361, %362 : vector<8x8x32xf32>
    %cst_383 = arith.constant 0.000000e+00 : f32
    %364 = vector.broadcast %cst_383 : f32 to vector<260x32xf32>
    %c0_384 = arith.constant 0 : index
    %c0_385 = arith.constant 0 : index
    %365 = vector.load %arg19[%c0_384, %c0_385] : memref<260x32xf32, #tpu.memory_space<vmem>>, vector<260x32xf32>
    tpu.vector_store %arg19[%c0_384, %c0_385], %364 {strides = array<i32>} : memref<260x32xf32, #tpu.memory_space<vmem>>, vector<260x32xf32>,
    %366 = vector.extract_strided_slice %363 {offsets = [0, 0, 0], sizes = [1, 8, 32], strides = [1, 1, 1]} : vector<8x8x32xf32> to vector<1x8x32xf32>
    %367 = vector.shape_cast %366 : vector<1x8x32xf32> to vector<8x32xf32>
    %c68 = arith.constant 68 : index
    %c0_386 = arith.constant 0 : index
    %368 = vector.load %arg19[%c68, %c0_386] : memref<260x32xf32, #tpu.memory_space<vmem>>, vector<8x32xf32>
    tpu.vector_store %arg19[%c68, %c0_386], %367 {strides = array<i32>} : memref<260x32xf32, #tpu.memory_space<vmem>>, vector<8x32xf32>,
    %369 = vector.extract_strided_slice %363 {offsets = [1, 0, 0], sizes = [1, 8, 32], strides = [1, 1, 1]} : vector<8x8x32xf32> to vector<1x8x32xf32>
    %370 = vector.shape_cast %369 : vector<1x8x32xf32> to vector<8x32xf32>
    %c84 = arith.constant 84 : index
    %c0_387 = arith.constant 0 : index
    %371 = vector.load %arg19[%c84, %c0_387] : memref<260x32xf32, #tpu.memory_space<vmem>>, vector<8x32xf32>
    tpu.vector_store %arg19[%c84, %c0_387], %370 {strides = array<i32>} : memref<260x32xf32, #tpu.memory_space<vmem>>, vector<8x32xf32>,
    %372 = vector.extract_strided_slice %363 {offsets = [2, 0, 0], sizes = [1, 8, 32], strides = [1, 1, 1]} : vector<8x8x32xf32> to vector<1x8x32xf32>
    %373 = vector.shape_cast %372 : vector<1x8x32xf32> to vector<8x32xf32>
    %c100_388 = arith.constant 100 : index
    %c0_389 = arith.constant 0 : index
    %374 = vector.load %arg19[%c100_388, %c0_389] : memref<260x32xf32, #tpu.memory_space<vmem>>, vector<8x32xf32>
    tpu.vector_store %arg19[%c100_388, %c0_389], %373 {strides = array<i32>} : memref<260x32xf32, #tpu.memory_space<vmem>>, vector<8x32xf32>,
    %375 = vector.extract_strided_slice %363 {offsets = [3, 0, 0], sizes = [1, 8, 32], strides = [1, 1, 1]} : vector<8x8x32xf32> to vector<1x8x32xf32>
    %376 = vector.shape_cast %375 : vector<1x8x32xf32> to vector<8x32xf32>
    %c116 = arith.constant 116 : index
    %c0_390 = arith.constant 0 : index
    %377 = vector.load %arg19[%c116, %c0_390] : memref<260x32xf32, #tpu.memory_space<vmem>>, vector<8x32xf32>
    tpu.vector_store %arg19[%c116, %c0_390], %376 {strides = array<i32>} : memref<260x32xf32, #tpu.memory_space<vmem>>, vector<8x32xf32>,
    %378 = vector.extract_strided_slice %363 {offsets = [4, 0, 0], sizes = [1, 8, 32], strides = [1, 1, 1]} : vector<8x8x32xf32> to vector<1x8x32xf32>
    %379 = vector.shape_cast %378 : vector<1x8x32xf32> to vector<8x32xf32>
    %c132 = arith.constant 132 : index
    %c0_391 = arith.constant 0 : index
    %380 = vector.load %arg19[%c132, %c0_391] : memref<260x32xf32, #tpu.memory_space<vmem>>, vector<8x32xf32>
    tpu.vector_store %arg19[%c132, %c0_391], %379 {strides = array<i32>} : memref<260x32xf32, #tpu.memory_space<vmem>>, vector<8x32xf32>,
    %381 = vector.extract_strided_slice %363 {offsets = [5, 0, 0], sizes = [1, 8, 32], strides = [1, 1, 1]} : vector<8x8x32xf32> to vector<1x8x32xf32>
    %382 = vector.shape_cast %381 : vector<1x8x32xf32> to vector<8x32xf32>
    %c148_392 = arith.constant 148 : index
    %c0_393 = arith.constant 0 : index
    %383 = vector.load %arg19[%c148_392, %c0_393] : memref<260x32xf32, #tpu.memory_space<vmem>>, vector<8x32xf32>
    tpu.vector_store %arg19[%c148_392, %c0_393], %382 {strides = array<i32>} : memref<260x32xf32, #tpu.memory_space<vmem>>, vector<8x32xf32>,
    %384 = vector.extract_strided_slice %363 {offsets = [6, 0, 0], sizes = [1, 8, 32], strides = [1, 1, 1]} : vector<8x8x32xf32> to vector<1x8x32xf32>
    %385 = vector.shape_cast %384 : vector<1x8x32xf32> to vector<8x32xf32>
    %c164_394 = arith.constant 164 : index
    %c0_395 = arith.constant 0 : index
    %386 = vector.load %arg19[%c164_394, %c0_395] : memref<260x32xf32, #tpu.memory_space<vmem>>, vector<8x32xf32>
    tpu.vector_store %arg19[%c164_394, %c0_395], %385 {strides = array<i32>} : memref<260x32xf32, #tpu.memory_space<vmem>>, vector<8x32xf32>,
    %387 = vector.extract_strided_slice %363 {offsets = [7, 0, 0], sizes = [1, 8, 32], strides = [1, 1, 1]} : vector<8x8x32xf32> to vector<1x8x32xf32>
    %388 = vector.shape_cast %387 : vector<1x8x32xf32> to vector<8x32xf32>
    %c180 = arith.constant 180 : index
    %c0_396 = arith.constant 0 : index
    %389 = vector.load %arg19[%c180, %c0_396] : memref<260x32xf32, #tpu.memory_space<vmem>>, vector<8x32xf32>
    tpu.vector_store %arg19[%c180, %c0_396], %388 {strides = array<i32>} : memref<260x32xf32, #tpu.memory_space<vmem>>, vector<8x32xf32>,
    %c0_397 = arith.constant 0 : index
    %c0_398 = arith.constant 0 : index
    %390 = vector.load %arg7[%c0_397, %c0_398] : memref<1x64xf32, #tpu.memory_space<vmem>>, vector<1x64xf32>
    %391 = vector.shape_cast %390 : vector<1x64xf32> to vector<1x64xf32>
    %392 = vector.broadcast %391 : vector<1x64xf32> to vector<192x64xf32>
    %c0_399 = arith.constant 0 : index
    %c0_400 = arith.constant 0 : index
    %393 = vector.load %arg20[%c0_399, %c0_400] : memref<192x64xf32, #tpu.memory_space<vmem>>, vector<192x64xf32>
    tpu.vector_store %arg20[%c0_399, %c0_400], %392 {strides = array<i32>} : memref<192x64xf32, #tpu.memory_space<vmem>>, vector<192x64xf32>,
    %c0_i32_401 = arith.constant 0 : i32
    %c5_i32_402 = arith.constant 5 : i32
    %394 = arith.addi %c0_i32_401, %c5_i32_402 : i32
    %c1_i32_403 = arith.constant 1 : i32
    scf.for %arg22 = %c0_i32_401 to %394 step %c1_i32_403  : i32 {
      %c0_i32_527 = arith.constant 0 : i32
      %c5_i32_528 = arith.constant 5 : i32
      %547 = arith.addi %c0_i32_527, %c5_i32_528 : i32
      %c1_i32_529 = arith.constant 1 : i32
      scf.for %arg23 = %c0_i32_527 to %547 step %c1_i32_529  : i32 {
        %c2_i32 = arith.constant 2 : i32
        %548 = arith.subi %arg22, %c2_i32 : i32
        %c16_i32 = arith.constant 16 : i32
        %549 = arith.muli %548, %c16_i32 : i32
        %c34_i32 = arith.constant 34 : i32
        %550 = arith.addi %c34_i32, %549 : i32
        %c2_i32_531 = arith.constant 2 : i32
        %551 = arith.subi %arg23, %c2_i32_531 : i32
        %552 = arith.addi %550, %551 : i32
        %553 = arith.index_cast %552 : i32 to index
        %c0_532 = arith.constant 0 : index
        %554 = vector.load %arg19[%553, %c0_532] : memref<260x32xf32, #tpu.memory_space<vmem>>, vector<192x32xf32>
        %555 = arith.truncf %554 : vector<192x32xf32> to vector<192x32xbf16>
        %c0_533 = arith.constant 0 : index
        %c0_534 = arith.constant 0 : index
        %556 = vector.load %arg20[%c0_533, %c0_534] : memref<192x64xf32, #tpu.memory_space<vmem>>, vector<192x64xf32>
        %c5_i32_535 = arith.constant 5 : i32
        %557 = arith.muli %arg22, %c5_i32_535 : i32
        %558 = arith.addi %557, %arg23 : i32
        %559 = arith.index_cast %558 : i32 to index
        %c0_536 = arith.constant 0 : index
        %c0_537 = arith.constant 0 : index
        %560 = vector.load %arg6[%559, %c0_536, %c0_537] : memref<25x32x64xbf16, #tpu.memory_space<vmem>>, vector<1x32x64xbf16>
        %561 = vector.shape_cast %560 : vector<1x32x64xbf16> to vector<32x64xbf16>
        %cst_538 = arith.constant dense<0.000000e+00> : vector<192x64xf32>
        %562 = tpu.matmul %555, %561, %cst_538 {dimension_numbers = #tpu.dot_dimension_numbers<[1], [0], [0], [1], [0, 0, 1, 1], [], []>} : vector<192x32xbf16>, vector<32x64xbf16>, vector<192x64xf32> -> vector<192x64xf32>
        %563 = arith.addf %556, %562 : vector<192x64xf32>
        %c0_539 = arith.constant 0 : index
        %c0_540 = arith.constant 0 : index
        %564 = vector.load %arg20[%c0_539, %c0_540] : memref<192x64xf32, #tpu.memory_space<vmem>>, vector<192x64xf32>
        tpu.vector_store %arg20[%c0_539, %c0_540], %563 {strides = array<i32>} : memref<192x64xf32, #tpu.memory_space<vmem>>, vector<192x64xf32>,
      }
      %c5_i32_530 = arith.constant 5 : i32
    }
    %c5_i32_404 = arith.constant 5 : i32
    %c32 = arith.constant 32 : index
    %c0_405 = arith.constant 0 : index
    %395 = vector.load %arg20[%c32, %c0_405] : memref<192x64xf32, #tpu.memory_space<vmem>>, vector<16x64xf32>
    %c0_406 = arith.constant 0 : index
    %c0_407 = arith.constant 0 : index
    %c0_408 = arith.constant 0 : index
    %396 = vector.load %arg21[%c0_406, %c0_407, %c0_408] : memref<8x16x64xf32, #tpu.memory_space<vmem>>, vector<1x16x64xf32>
    %397 = vector.shape_cast %396 : vector<1x16x64xf32> to vector<16x64xf32>
    %398 = vector.shape_cast %395 : vector<16x64xf32> to vector<1x16x64xf32>
    tpu.vector_store %arg21[%c0_406, %c0_407, %c0_408], %398 {strides = array<i32>} : memref<8x16x64xf32, #tpu.memory_space<vmem>>, vector<1x16x64xf32>,
    %c48_409 = arith.constant 48 : index
    %c0_410 = arith.constant 0 : index
    %399 = vector.load %arg20[%c48_409, %c0_410] : memref<192x64xf32, #tpu.memory_space<vmem>>, vector<16x64xf32>
    %c1_411 = arith.constant 1 : index
    %c0_412 = arith.constant 0 : index
    %c0_413 = arith.constant 0 : index
    %400 = vector.load %arg21[%c1_411, %c0_412, %c0_413] : memref<8x16x64xf32, #tpu.memory_space<vmem>>, vector<1x16x64xf32>
    %401 = vector.shape_cast %400 : vector<1x16x64xf32> to vector<16x64xf32>
    %402 = vector.shape_cast %399 : vector<16x64xf32> to vector<1x16x64xf32>
    tpu.vector_store %arg21[%c1_411, %c0_412, %c0_413], %402 {strides = array<i32>} : memref<8x16x64xf32, #tpu.memory_space<vmem>>, vector<1x16x64xf32>,
    %c64 = arith.constant 64 : index
    %c0_414 = arith.constant 0 : index
    %403 = vector.load %arg20[%c64, %c0_414] : memref<192x64xf32, #tpu.memory_space<vmem>>, vector<16x64xf32>
    %c2_415 = arith.constant 2 : index
    %c0_416 = arith.constant 0 : index
    %c0_417 = arith.constant 0 : index
    %404 = vector.load %arg21[%c2_415, %c0_416, %c0_417] : memref<8x16x64xf32, #tpu.memory_space<vmem>>, vector<1x16x64xf32>
    %405 = vector.shape_cast %404 : vector<1x16x64xf32> to vector<16x64xf32>
    %406 = vector.shape_cast %403 : vector<16x64xf32> to vector<1x16x64xf32>
    tpu.vector_store %arg21[%c2_415, %c0_416, %c0_417], %406 {strides = array<i32>} : memref<8x16x64xf32, #tpu.memory_space<vmem>>, vector<1x16x64xf32>,
    %c80_418 = arith.constant 80 : index
    %c0_419 = arith.constant 0 : index
    %407 = vector.load %arg20[%c80_418, %c0_419] : memref<192x64xf32, #tpu.memory_space<vmem>>, vector<16x64xf32>
    %c3_420 = arith.constant 3 : index
    %c0_421 = arith.constant 0 : index
    %c0_422 = arith.constant 0 : index
    %408 = vector.load %arg21[%c3_420, %c0_421, %c0_422] : memref<8x16x64xf32, #tpu.memory_space<vmem>>, vector<1x16x64xf32>
    %409 = vector.shape_cast %408 : vector<1x16x64xf32> to vector<16x64xf32>
    %410 = vector.shape_cast %407 : vector<16x64xf32> to vector<1x16x64xf32>
    tpu.vector_store %arg21[%c3_420, %c0_421, %c0_422], %410 {strides = array<i32>} : memref<8x16x64xf32, #tpu.memory_space<vmem>>, vector<1x16x64xf32>,
    %c96_423 = arith.constant 96 : index
    %c0_424 = arith.constant 0 : index
    %411 = vector.load %arg20[%c96_423, %c0_424] : memref<192x64xf32, #tpu.memory_space<vmem>>, vector<16x64xf32>
    %c4_425 = arith.constant 4 : index
    %c0_426 = arith.constant 0 : index
    %c0_427 = arith.constant 0 : index
    %412 = vector.load %arg21[%c4_425, %c0_426, %c0_427] : memref<8x16x64xf32, #tpu.memory_space<vmem>>, vector<1x16x64xf32>
    %413 = vector.shape_cast %412 : vector<1x16x64xf32> to vector<16x64xf32>
    %414 = vector.shape_cast %411 : vector<16x64xf32> to vector<1x16x64xf32>
    tpu.vector_store %arg21[%c4_425, %c0_426, %c0_427], %414 {strides = array<i32>} : memref<8x16x64xf32, #tpu.memory_space<vmem>>, vector<1x16x64xf32>,
    %c112 = arith.constant 112 : index
    %c0_428 = arith.constant 0 : index
    %415 = vector.load %arg20[%c112, %c0_428] : memref<192x64xf32, #tpu.memory_space<vmem>>, vector<16x64xf32>
    %c5_429 = arith.constant 5 : index
    %c0_430 = arith.constant 0 : index
    %c0_431 = arith.constant 0 : index
    %416 = vector.load %arg21[%c5_429, %c0_430, %c0_431] : memref<8x16x64xf32, #tpu.memory_space<vmem>>, vector<1x16x64xf32>
    %417 = vector.shape_cast %416 : vector<1x16x64xf32> to vector<16x64xf32>
    %418 = vector.shape_cast %415 : vector<16x64xf32> to vector<1x16x64xf32>
    tpu.vector_store %arg21[%c5_429, %c0_430, %c0_431], %418 {strides = array<i32>} : memref<8x16x64xf32, #tpu.memory_space<vmem>>, vector<1x16x64xf32>,
    %c128 = arith.constant 128 : index
    %c0_432 = arith.constant 0 : index
    %419 = vector.load %arg20[%c128, %c0_432] : memref<192x64xf32, #tpu.memory_space<vmem>>, vector<16x64xf32>
    %c6_433 = arith.constant 6 : index
    %c0_434 = arith.constant 0 : index
    %c0_435 = arith.constant 0 : index
    %420 = vector.load %arg21[%c6_433, %c0_434, %c0_435] : memref<8x16x64xf32, #tpu.memory_space<vmem>>, vector<1x16x64xf32>
    %421 = vector.shape_cast %420 : vector<1x16x64xf32> to vector<16x64xf32>
    %422 = vector.shape_cast %419 : vector<16x64xf32> to vector<1x16x64xf32>
    tpu.vector_store %arg21[%c6_433, %c0_434, %c0_435], %422 {strides = array<i32>} : memref<8x16x64xf32, #tpu.memory_space<vmem>>, vector<1x16x64xf32>,
    %c144_436 = arith.constant 144 : index
    %c0_437 = arith.constant 0 : index
    %423 = vector.load %arg20[%c144_436, %c0_437] : memref<192x64xf32, #tpu.memory_space<vmem>>, vector<16x64xf32>
    %c7_438 = arith.constant 7 : index
    %c0_439 = arith.constant 0 : index
    %c0_440 = arith.constant 0 : index
    %424 = vector.load %arg21[%c7_438, %c0_439, %c0_440] : memref<8x16x64xf32, #tpu.memory_space<vmem>>, vector<1x16x64xf32>
    %425 = vector.shape_cast %424 : vector<1x16x64xf32> to vector<16x64xf32>
    %426 = vector.shape_cast %423 : vector<16x64xf32> to vector<1x16x64xf32>
    tpu.vector_store %arg21[%c7_438, %c0_439, %c0_440], %426 {strides = array<i32>} : memref<8x16x64xf32, #tpu.memory_space<vmem>>, vector<1x16x64xf32>,
    %c0_441 = arith.constant 0 : index
    %c2_442 = arith.constant 2 : index
    %c0_443 = arith.constant 0 : index
    %427 = tpu.strided_load %arg21[%c0_441, %c2_442, %c0_443] {strides = array<i32: 2, 2, 1>} : memref<8x16x64xf32, #tpu.memory_space<vmem>>, vector<4x4x64xf32>
    %c0_444 = arith.constant 0 : index
    %c3_445 = arith.constant 3 : index
    %c0_446 = arith.constant 0 : index
    %428 = tpu.strided_load %arg21[%c0_444, %c3_445, %c0_446] {strides = array<i32: 2, 2, 1>} : memref<8x16x64xf32, #tpu.memory_space<vmem>>, vector<4x4x64xf32>
    %c1_447 = arith.constant 1 : index
    %c2_448 = arith.constant 2 : index
    %c0_449 = arith.constant 0 : index
    %429 = tpu.strided_load %arg21[%c1_447, %c2_448, %c0_449] {strides = array<i32: 2, 2, 1>} : memref<8x16x64xf32, #tpu.memory_space<vmem>>, vector<4x4x64xf32>
    %c1_450 = arith.constant 1 : index
    %c3_451 = arith.constant 3 : index
    %c0_452 = arith.constant 0 : index
    %430 = tpu.strided_load %arg21[%c1_450, %c3_451, %c0_452] {strides = array<i32: 2, 2, 1>} : memref<8x16x64xf32, #tpu.memory_space<vmem>>, vector<4x4x64xf32>
    %431 = arith.maximumf %427, %428 : vector<4x4x64xf32>
    %432 = arith.maximumf %429, %430 : vector<4x4x64xf32>
    %433 = arith.maximumf %431, %432 : vector<4x4x64xf32>
    %c0_453 = arith.constant 0 : index
    %c0_454 = arith.constant 0 : index
    %434 = vector.load %arg9[%c0_453, %c0_454] : memref<1x64xf32, #tpu.memory_space<vmem>>, vector<1x64xf32>
    %435 = vector.extract_strided_slice %433 {offsets = [0, 0, 0], sizes = [1, 4, 64], strides = [1, 1, 1]} : vector<4x4x64xf32> to vector<1x4x64xf32>
    %436 = vector.shape_cast %435 : vector<1x4x64xf32> to vector<4x64xf32>
    %437 = vector.extract_strided_slice %436 {offsets = [0, 0], sizes = [1, 64], strides = [1, 1]} : vector<4x64xf32> to vector<1x64xf32>
    %438 = arith.truncf %437 : vector<1x64xf32> to vector<1x64xbf16>
    %c0_455 = arith.constant 0 : index
    %c0_456 = arith.constant 0 : index
    %c0_457 = arith.constant 0 : index
    %439 = vector.load %arg8[%c0_455, %c0_456, %c0_457] : memref<16x64x64xbf16, #tpu.memory_space<vmem>>, vector<1x64x64xbf16>
    %440 = vector.shape_cast %439 : vector<1x64x64xbf16> to vector<64x64xbf16>
    %cst_458 = arith.constant dense<0.000000e+00> : vector<1x64xf32>
    %441 = tpu.matmul %438, %440, %cst_458 {dimension_numbers = #tpu.dot_dimension_numbers<[1], [0], [0], [1], [0, 0, 1, 1], [], []>} : vector<1x64xbf16>, vector<64x64xbf16>, vector<1x64xf32> -> vector<1x64xf32>
    %442 = arith.addf %434, %441 : vector<1x64xf32>
    %443 = vector.extract_strided_slice %436 {offsets = [1, 0], sizes = [1, 64], strides = [1, 1]} : vector<4x64xf32> to vector<1x64xf32>
    %444 = arith.truncf %443 : vector<1x64xf32> to vector<1x64xbf16>
    %c1_459 = arith.constant 1 : index
    %c0_460 = arith.constant 0 : index
    %c0_461 = arith.constant 0 : index
    %445 = vector.load %arg8[%c1_459, %c0_460, %c0_461] : memref<16x64x64xbf16, #tpu.memory_space<vmem>>, vector<1x64x64xbf16>
    %446 = vector.shape_cast %445 : vector<1x64x64xbf16> to vector<64x64xbf16>
    %cst_462 = arith.constant dense<0.000000e+00> : vector<1x64xf32>
    %447 = tpu.matmul %444, %446, %cst_462 {dimension_numbers = #tpu.dot_dimension_numbers<[1], [0], [0], [1], [0, 0, 1, 1], [], []>} : vector<1x64xbf16>, vector<64x64xbf16>, vector<1x64xf32> -> vector<1x64xf32>
    %448 = arith.addf %442, %447 : vector<1x64xf32>
    %449 = vector.extract_strided_slice %436 {offsets = [2, 0], sizes = [1, 64], strides = [1, 1]} : vector<4x64xf32> to vector<1x64xf32>
    %450 = arith.truncf %449 : vector<1x64xf32> to vector<1x64xbf16>
    %c2_463 = arith.constant 2 : index
    %c0_464 = arith.constant 0 : index
    %c0_465 = arith.constant 0 : index
    %451 = vector.load %arg8[%c2_463, %c0_464, %c0_465] : memref<16x64x64xbf16, #tpu.memory_space<vmem>>, vector<1x64x64xbf16>
    %452 = vector.shape_cast %451 : vector<1x64x64xbf16> to vector<64x64xbf16>
    %cst_466 = arith.constant dense<0.000000e+00> : vector<1x64xf32>
    %453 = tpu.matmul %450, %452, %cst_466 {dimension_numbers = #tpu.dot_dimension_numbers<[1], [0], [0], [1], [0, 0, 1, 1], [], []>} : vector<1x64xbf16>, vector<64x64xbf16>, vector<1x64xf32> -> vector<1x64xf32>
    %454 = arith.addf %448, %453 : vector<1x64xf32>
    %455 = vector.extract_strided_slice %436 {offsets = [3, 0], sizes = [1, 64], strides = [1, 1]} : vector<4x64xf32> to vector<1x64xf32>
    %456 = arith.truncf %455 : vector<1x64xf32> to vector<1x64xbf16>
    %c3_467 = arith.constant 3 : index
    %c0_468 = arith.constant 0 : index
    %c0_469 = arith.constant 0 : index
    %457 = vector.load %arg8[%c3_467, %c0_468, %c0_469] : memref<16x64x64xbf16, #tpu.memory_space<vmem>>, vector<1x64x64xbf16>
    %458 = vector.shape_cast %457 : vector<1x64x64xbf16> to vector<64x64xbf16>
    %cst_470 = arith.constant dense<0.000000e+00> : vector<1x64xf32>
    %459 = tpu.matmul %456, %458, %cst_470 {dimension_numbers = #tpu.dot_dimension_numbers<[1], [0], [0], [1], [0, 0, 1, 1], [], []>} : vector<1x64xbf16>, vector<64x64xbf16>, vector<1x64xf32> -> vector<1x64xf32>
    %460 = arith.addf %454, %459 : vector<1x64xf32>
    %461 = vector.extract_strided_slice %433 {offsets = [1, 0, 0], sizes = [1, 4, 64], strides = [1, 1, 1]} : vector<4x4x64xf32> to vector<1x4x64xf32>
    %462 = vector.shape_cast %461 : vector<1x4x64xf32> to vector<4x64xf32>
    %463 = vector.extract_strided_slice %462 {offsets = [0, 0], sizes = [1, 64], strides = [1, 1]} : vector<4x64xf32> to vector<1x64xf32>
    %464 = arith.truncf %463 : vector<1x64xf32> to vector<1x64xbf16>
    %c4_471 = arith.constant 4 : index
    %c0_472 = arith.constant 0 : index
    %c0_473 = arith.constant 0 : index
    %465 = vector.load %arg8[%c4_471, %c0_472, %c0_473] : memref<16x64x64xbf16, #tpu.memory_space<vmem>>, vector<1x64x64xbf16>
    %466 = vector.shape_cast %465 : vector<1x64x64xbf16> to vector<64x64xbf16>
    %cst_474 = arith.constant dense<0.000000e+00> : vector<1x64xf32>
    %467 = tpu.matmul %464, %466, %cst_474 {dimension_numbers = #tpu.dot_dimension_numbers<[1], [0], [0], [1], [0, 0, 1, 1], [], []>} : vector<1x64xbf16>, vector<64x64xbf16>, vector<1x64xf32> -> vector<1x64xf32>
    %468 = arith.addf %460, %467 : vector<1x64xf32>
    %469 = vector.extract_strided_slice %462 {offsets = [1, 0], sizes = [1, 64], strides = [1, 1]} : vector<4x64xf32> to vector<1x64xf32>
    %470 = arith.truncf %469 : vector<1x64xf32> to vector<1x64xbf16>
    %c5_475 = arith.constant 5 : index
    %c0_476 = arith.constant 0 : index
    %c0_477 = arith.constant 0 : index
    %471 = vector.load %arg8[%c5_475, %c0_476, %c0_477] : memref<16x64x64xbf16, #tpu.memory_space<vmem>>, vector<1x64x64xbf16>
    %472 = vector.shape_cast %471 : vector<1x64x64xbf16> to vector<64x64xbf16>
    %cst_478 = arith.constant dense<0.000000e+00> : vector<1x64xf32>
    %473 = tpu.matmul %470, %472, %cst_478 {dimension_numbers = #tpu.dot_dimension_numbers<[1], [0], [0], [1], [0, 0, 1, 1], [], []>} : vector<1x64xbf16>, vector<64x64xbf16>, vector<1x64xf32> -> vector<1x64xf32>
    %474 = arith.addf %468, %473 : vector<1x64xf32>
    %475 = vector.extract_strided_slice %462 {offsets = [2, 0], sizes = [1, 64], strides = [1, 1]} : vector<4x64xf32> to vector<1x64xf32>
    %476 = arith.truncf %475 : vector<1x64xf32> to vector<1x64xbf16>
    %c6_479 = arith.constant 6 : index
    %c0_480 = arith.constant 0 : index
    %c0_481 = arith.constant 0 : index
    %477 = vector.load %arg8[%c6_479, %c0_480, %c0_481] : memref<16x64x64xbf16, #tpu.memory_space<vmem>>, vector<1x64x64xbf16>
    %478 = vector.shape_cast %477 : vector<1x64x64xbf16> to vector<64x64xbf16>
    %cst_482 = arith.constant dense<0.000000e+00> : vector<1x64xf32>
    %479 = tpu.matmul %476, %478, %cst_482 {dimension_numbers = #tpu.dot_dimension_numbers<[1], [0], [0], [1], [0, 0, 1, 1], [], []>} : vector<1x64xbf16>, vector<64x64xbf16>, vector<1x64xf32> -> vector<1x64xf32>
    %480 = arith.addf %474, %479 : vector<1x64xf32>
    %481 = vector.extract_strided_slice %462 {offsets = [3, 0], sizes = [1, 64], strides = [1, 1]} : vector<4x64xf32> to vector<1x64xf32>
    %482 = arith.truncf %481 : vector<1x64xf32> to vector<1x64xbf16>
    %c7_483 = arith.constant 7 : index
    %c0_484 = arith.constant 0 : index
    %c0_485 = arith.constant 0 : index
    %483 = vector.load %arg8[%c7_483, %c0_484, %c0_485] : memref<16x64x64xbf16, #tpu.memory_space<vmem>>, vector<1x64x64xbf16>
    %484 = vector.shape_cast %483 : vector<1x64x64xbf16> to vector<64x64xbf16>
    %cst_486 = arith.constant dense<0.000000e+00> : vector<1x64xf32>
    %485 = tpu.matmul %482, %484, %cst_486 {dimension_numbers = #tpu.dot_dimension_numbers<[1], [0], [0], [1], [0, 0, 1, 1], [], []>} : vector<1x64xbf16>, vector<64x64xbf16>, vector<1x64xf32> -> vector<1x64xf32>
    %486 = arith.addf %480, %485 : vector<1x64xf32>
    %487 = vector.extract_strided_slice %433 {offsets = [2, 0, 0], sizes = [1, 4, 64], strides = [1, 1, 1]} : vector<4x4x64xf32> to vector<1x4x64xf32>
    %488 = vector.shape_cast %487 : vector<1x4x64xf32> to vector<4x64xf32>
    %489 = vector.extract_strided_slice %488 {offsets = [0, 0], sizes = [1, 64], strides = [1, 1]} : vector<4x64xf32> to vector<1x64xf32>
    %490 = arith.truncf %489 : vector<1x64xf32> to vector<1x64xbf16>
    %c8_487 = arith.constant 8 : index
    %c0_488 = arith.constant 0 : index
    %c0_489 = arith.constant 0 : index
    %491 = vector.load %arg8[%c8_487, %c0_488, %c0_489] : memref<16x64x64xbf16, #tpu.memory_space<vmem>>, vector<1x64x64xbf16>
    %492 = vector.shape_cast %491 : vector<1x64x64xbf16> to vector<64x64xbf16>
    %cst_490 = arith.constant dense<0.000000e+00> : vector<1x64xf32>
    %493 = tpu.matmul %490, %492, %cst_490 {dimension_numbers = #tpu.dot_dimension_numbers<[1], [0], [0], [1], [0, 0, 1, 1], [], []>} : vector<1x64xbf16>, vector<64x64xbf16>, vector<1x64xf32> -> vector<1x64xf32>
    %494 = arith.addf %486, %493 : vector<1x64xf32>
    %495 = vector.extract_strided_slice %488 {offsets = [1, 0], sizes = [1, 64], strides = [1, 1]} : vector<4x64xf32> to vector<1x64xf32>
    %496 = arith.truncf %495 : vector<1x64xf32> to vector<1x64xbf16>
    %c9_491 = arith.constant 9 : index
    %c0_492 = arith.constant 0 : index
    %c0_493 = arith.constant 0 : index
    %497 = vector.load %arg8[%c9_491, %c0_492, %c0_493] : memref<16x64x64xbf16, #tpu.memory_space<vmem>>, vector<1x64x64xbf16>
    %498 = vector.shape_cast %497 : vector<1x64x64xbf16> to vector<64x64xbf16>
    %cst_494 = arith.constant dense<0.000000e+00> : vector<1x64xf32>
    %499 = tpu.matmul %496, %498, %cst_494 {dimension_numbers = #tpu.dot_dimension_numbers<[1], [0], [0], [1], [0, 0, 1, 1], [], []>} : vector<1x64xbf16>, vector<64x64xbf16>, vector<1x64xf32> -> vector<1x64xf32>
    %500 = arith.addf %494, %499 : vector<1x64xf32>
    %501 = vector.extract_strided_slice %488 {offsets = [2, 0], sizes = [1, 64], strides = [1, 1]} : vector<4x64xf32> to vector<1x64xf32>
    %502 = arith.truncf %501 : vector<1x64xf32> to vector<1x64xbf16>
    %c10_495 = arith.constant 10 : index
    %c0_496 = arith.constant 0 : index
    %c0_497 = arith.constant 0 : index
    %503 = vector.load %arg8[%c10_495, %c0_496, %c0_497] : memref<16x64x64xbf16, #tpu.memory_space<vmem>>, vector<1x64x64xbf16>
    %504 = vector.shape_cast %503 : vector<1x64x64xbf16> to vector<64x64xbf16>
    %cst_498 = arith.constant dense<0.000000e+00> : vector<1x64xf32>
    %505 = tpu.matmul %502, %504, %cst_498 {dimension_numbers = #tpu.dot_dimension_numbers<[1], [0], [0], [1], [0, 0, 1, 1], [], []>} : vector<1x64xbf16>, vector<64x64xbf16>, vector<1x64xf32> -> vector<1x64xf32>
    %506 = arith.addf %500, %505 : vector<1x64xf32>
    %507 = vector.extract_strided_slice %488 {offsets = [3, 0], sizes = [1, 64], strides = [1, 1]} : vector<4x64xf32> to vector<1x64xf32>
    %508 = arith.truncf %507 : vector<1x64xf32> to vector<1x64xbf16>
    %c11_499 = arith.constant 11 : index
    %c0_500 = arith.constant 0 : index
    %c0_501 = arith.constant 0 : index
    %509 = vector.load %arg8[%c11_499, %c0_500, %c0_501] : memref<16x64x64xbf16, #tpu.memory_space<vmem>>, vector<1x64x64xbf16>
    %510 = vector.shape_cast %509 : vector<1x64x64xbf16> to vector<64x64xbf16>
    %cst_502 = arith.constant dense<0.000000e+00> : vector<1x64xf32>
    %511 = tpu.matmul %508, %510, %cst_502 {dimension_numbers = #tpu.dot_dimension_numbers<[1], [0], [0], [1], [0, 0, 1, 1], [], []>} : vector<1x64xbf16>, vector<64x64xbf16>, vector<1x64xf32> -> vector<1x64xf32>
    %512 = arith.addf %506, %511 : vector<1x64xf32>
    %513 = vector.extract_strided_slice %433 {offsets = [3, 0, 0], sizes = [1, 4, 64], strides = [1, 1, 1]} : vector<4x4x64xf32> to vector<1x4x64xf32>
    %514 = vector.shape_cast %513 : vector<1x4x64xf32> to vector<4x64xf32>
    %515 = vector.extract_strided_slice %514 {offsets = [0, 0], sizes = [1, 64], strides = [1, 1]} : vector<4x64xf32> to vector<1x64xf32>
    %516 = arith.truncf %515 : vector<1x64xf32> to vector<1x64xbf16>
    %c12_503 = arith.constant 12 : index
    %c0_504 = arith.constant 0 : index
    %c0_505 = arith.constant 0 : index
    %517 = vector.load %arg8[%c12_503, %c0_504, %c0_505] : memref<16x64x64xbf16, #tpu.memory_space<vmem>>, vector<1x64x64xbf16>
    %518 = vector.shape_cast %517 : vector<1x64x64xbf16> to vector<64x64xbf16>
    %cst_506 = arith.constant dense<0.000000e+00> : vector<1x64xf32>
    %519 = tpu.matmul %516, %518, %cst_506 {dimension_numbers = #tpu.dot_dimension_numbers<[1], [0], [0], [1], [0, 0, 1, 1], [], []>} : vector<1x64xbf16>, vector<64x64xbf16>, vector<1x64xf32> -> vector<1x64xf32>
    %520 = arith.addf %512, %519 : vector<1x64xf32>
    %521 = vector.extract_strided_slice %514 {offsets = [1, 0], sizes = [1, 64], strides = [1, 1]} : vector<4x64xf32> to vector<1x64xf32>
    %522 = arith.truncf %521 : vector<1x64xf32> to vector<1x64xbf16>
    %c13_507 = arith.constant 13 : index
    %c0_508 = arith.constant 0 : index
    %c0_509 = arith.constant 0 : index
    %523 = vector.load %arg8[%c13_507, %c0_508, %c0_509] : memref<16x64x64xbf16, #tpu.memory_space<vmem>>, vector<1x64x64xbf16>
    %524 = vector.shape_cast %523 : vector<1x64x64xbf16> to vector<64x64xbf16>
    %cst_510 = arith.constant dense<0.000000e+00> : vector<1x64xf32>
    %525 = tpu.matmul %522, %524, %cst_510 {dimension_numbers = #tpu.dot_dimension_numbers<[1], [0], [0], [1], [0, 0, 1, 1], [], []>} : vector<1x64xbf16>, vector<64x64xbf16>, vector<1x64xf32> -> vector<1x64xf32>
    %526 = arith.addf %520, %525 : vector<1x64xf32>
    %527 = vector.extract_strided_slice %514 {offsets = [2, 0], sizes = [1, 64], strides = [1, 1]} : vector<4x64xf32> to vector<1x64xf32>
    %528 = arith.truncf %527 : vector<1x64xf32> to vector<1x64xbf16>
    %c14_511 = arith.constant 14 : index
    %c0_512 = arith.constant 0 : index
    %c0_513 = arith.constant 0 : index
    %529 = vector.load %arg8[%c14_511, %c0_512, %c0_513] : memref<16x64x64xbf16, #tpu.memory_space<vmem>>, vector<1x64x64xbf16>
    %530 = vector.shape_cast %529 : vector<1x64x64xbf16> to vector<64x64xbf16>
    %cst_514 = arith.constant dense<0.000000e+00> : vector<1x64xf32>
    %531 = tpu.matmul %528, %530, %cst_514 {dimension_numbers = #tpu.dot_dimension_numbers<[1], [0], [0], [1], [0, 0, 1, 1], [], []>} : vector<1x64xbf16>, vector<64x64xbf16>, vector<1x64xf32> -> vector<1x64xf32>
    %532 = arith.addf %526, %531 : vector<1x64xf32>
    %533 = vector.extract_strided_slice %514 {offsets = [3, 0], sizes = [1, 64], strides = [1, 1]} : vector<4x64xf32> to vector<1x64xf32>
    %534 = arith.truncf %533 : vector<1x64xf32> to vector<1x64xbf16>
    %c15_515 = arith.constant 15 : index
    %c0_516 = arith.constant 0 : index
    %c0_517 = arith.constant 0 : index
    %535 = vector.load %arg8[%c15_515, %c0_516, %c0_517] : memref<16x64x64xbf16, #tpu.memory_space<vmem>>, vector<1x64x64xbf16>
    %536 = vector.shape_cast %535 : vector<1x64x64xbf16> to vector<64x64xbf16>
    %cst_518 = arith.constant dense<0.000000e+00> : vector<1x64xf32>
    %537 = tpu.matmul %534, %536, %cst_518 {dimension_numbers = #tpu.dot_dimension_numbers<[1], [0], [0], [1], [0, 0, 1, 1], [], []>} : vector<1x64xbf16>, vector<64x64xbf16>, vector<1x64xf32> -> vector<1x64xf32>
    %538 = arith.addf %532, %537 : vector<1x64xf32>
    %539 = arith.truncf %538 : vector<1x64xf32> to vector<1x64xbf16>
    %c0_519 = arith.constant 0 : index
    %c0_520 = arith.constant 0 : index
    %540 = vector.load %arg10[%c0_519, %c0_520] : memref<64x10xbf16, #tpu.memory_space<vmem>>, vector<64x10xbf16>
    %cst_521 = arith.constant dense<0.000000e+00> : vector<1x10xf32>
    %541 = tpu.matmul %539, %540, %cst_521 {dimension_numbers = #tpu.dot_dimension_numbers<[1], [0], [0], [1], [0, 0, 1, 1], [], []>} : vector<1x64xbf16>, vector<64x10xbf16>, vector<1x10xf32> -> vector<1x10xf32>
    %c0_522 = arith.constant 0 : index
    %c0_523 = arith.constant 0 : index
    %542 = vector.load %arg11[%c0_522, %c0_523] : memref<1x10xf32, #tpu.memory_space<vmem>>, vector<1x10xf32>
    %543 = arith.addf %541, %542 : vector<1x10xf32>
    %c0_524 = arith.constant 0 : index
    %c0_525 = arith.constant 0 : index
    %c0_526 = arith.constant 0 : index
    %544 = vector.load %arg12[%c0_524, %c0_525, %c0_526] : memref<1x1x10xf32, #tpu.memory_space<vmem>>, vector<1x1x10xf32>
    %545 = vector.shape_cast %544 : vector<1x1x10xf32> to vector<1x10xf32>
    %546 = vector.shape_cast %543 : vector<1x10xf32> to vector<1x1x10xf32>
    tpu.vector_store %arg12[%c0_524, %c0_525, %c0_526], %546 {strides = array<i32>} : memref<1x1x10xf32, #tpu.memory_space<vmem>>, vector<1x1x10xf32>,
    return
  }
  func.func @transform_0(%arg0: i32) -> (i32, i32, i32, i32) {
    %c0_i32 = arith.constant 0 : i32
    %c0_i32_0 = arith.constant 0 : i32
    %c0_i32_1 = arith.constant 0 : i32
    %c0_i32_2 = arith.constant 0 : i32
    return %arg0, %c0_i32, %c0_i32_0, %c0_i32_1 : i32, i32, i32, i32
  }
  func.func @transform_1(%arg0: i32) -> (i32, i32, i32) {
    %c0_i32 = arith.constant 0 : i32
    %c0_i32_0 = arith.constant 0 : i32
    %c0_i32_1 = arith.constant 0 : i32
    %c0_i32_2 = arith.constant 0 : i32
    return %c0_i32, %c0_i32_0, %c0_i32_1 : i32, i32, i32
  }
  func.func @transform_2(%arg0: i32) -> (i32, i32) {
    %c0_i32 = arith.constant 0 : i32
    %c0_i32_0 = arith.constant 0 : i32
    %c0_i32_1 = arith.constant 0 : i32
    return %c0_i32, %c0_i32_0 : i32, i32
  }
  func.func @transform_3(%arg0: i32) -> (i32, i32, i32) {
    %c0_i32 = arith.constant 0 : i32
    %c0_i32_0 = arith.constant 0 : i32
    %c0_i32_1 = arith.constant 0 : i32
    %c0_i32_2 = arith.constant 0 : i32
    return %c0_i32, %c0_i32_0, %c0_i32_1 : i32, i32, i32
  }
  func.func @transform_4(%arg0: i32) -> (i32, i32) {
    %c0_i32 = arith.constant 0 : i32
    %c0_i32_0 = arith.constant 0 : i32
    %c0_i32_1 = arith.constant 0 : i32
    return %c0_i32, %c0_i32_0 : i32, i32
  }
  func.func @transform_5(%arg0: i32) -> (i32, i32, i32) {
    %c0_i32 = arith.constant 0 : i32
    %c0_i32_0 = arith.constant 0 : i32
    %c0_i32_1 = arith.constant 0 : i32
    %c0_i32_2 = arith.constant 0 : i32
    return %c0_i32, %c0_i32_0, %c0_i32_1 : i32, i32, i32
  }
  func.func @transform_6(%arg0: i32) -> (i32, i32) {
    %c0_i32 = arith.constant 0 : i32
    %c0_i32_0 = arith.constant 0 : i32
    %c0_i32_1 = arith.constant 0 : i32
    return %c0_i32, %c0_i32_0 : i32, i32
  }
  func.func @transform_7(%arg0: i32) -> (i32, i32, i32) {
    %c0_i32 = arith.constant 0 : i32
    %c0_i32_0 = arith.constant 0 : i32
    %c0_i32_1 = arith.constant 0 : i32
    %c0_i32_2 = arith.constant 0 : i32
    return %c0_i32, %c0_i32_0, %c0_i32_1 : i32, i32, i32
  }
  func.func @transform_8(%arg0: i32) -> (i32, i32) {
    %c0_i32 = arith.constant 0 : i32
    %c0_i32_0 = arith.constant 0 : i32
    %c0_i32_1 = arith.constant 0 : i32
    return %c0_i32, %c0_i32_0 : i32, i32
  }
  func.func @transform_9(%arg0: i32) -> (i32, i32) {
    %c0_i32 = arith.constant 0 : i32
    %c0_i32_0 = arith.constant 0 : i32
    %c0_i32_1 = arith.constant 0 : i32
    return %c0_i32, %c0_i32_0 : i32, i32
  }
  func.func @transform_10(%arg0: i32) -> (i32, i32) {
    %c0_i32 = arith.constant 0 : i32
    %c0_i32_0 = arith.constant 0 : i32
    %c0_i32_1 = arith.constant 0 : i32
    return %c0_i32, %c0_i32_0 : i32, i32
  }
  func.func @transform_11(%arg0: i32) -> (i32, i32, i32) {
    %c0_i32 = arith.constant 0 : i32
    %c0_i32_0 = arith.constant 0 : i32
    %c0_i32_1 = arith.constant 0 : i32
    return %arg0, %c0_i32, %c0_i32_0 : i32, i32, i32
  }
}

</mosaic_0001>

<llo_original>
// kernel: _tudui_forward.1
$region0: #{_tudui_forward.1}
  #allocation0 [shape = 'u32[]', space=smem, size = 0x4, offset = 0x4, fixed_abs, tag = 'smem constant byte address 0x4 - core index']
  #allocation1 [shape = 'u32[144,128]{1,0:T(1,128)}', space=vmem, size = 0x12000, scoped, tag = 'internal scratch']
  #allocation2 [shape = 'f32[1604,3]{1,0:T(8,128)}', space=vmem, size = 0xc9000, scoped, tag = 'scratch operand']
  #allocation3 [shape = 'f32[1440,32]{1,0:T(8,128)}', space=vmem, size = 0xb4000, scoped, tag = 'scratch operand']
  #allocation4 [shape = 'f32[32,40,32]{2,1,0:T(8,128)}', space=vmem, size = 0xa0000, scoped, tag = 'scratch operand']
  #allocation5 [shape = 'f32[580,32]{1,0:T(8,128)}', space=vmem, size = 0x49000, scoped, tag = 'scratch operand']
  #allocation6 [shape = 'f32[480,32]{1,0:T(8,128)}', space=vmem, size = 0x3c000, scoped, tag = 'scratch operand']
  #allocation7 [shape = 'f32[16,24,32]{2,1,0:T(8,128)}', space=vmem, size = 0x30000, scoped, tag = 'scratch operand']
  #allocation8 [shape = 'f32[260,32]{1,0:T(8,128)}', space=vmem, size = 0x21000, scoped, tag = 'scratch operand']
  #allocation9 [shape = 'f32[192,64]{1,0:T(8,128)}', space=vmem, size = 0x18000, scoped, tag = 'scratch operand']
  #allocation10 [shape = 'f32[8,16,64]{2,1,0:T(8,128)}', space=vmem, size = 0x10000, scoped, tag = 'scratch operand']
  %s0 = inlined_call_operand.vmem [shape: f32[2,32,32,3], index: 0, kind: input, shape index: {}]
  %s1 = inlined_call_operand.vmem [shape: bf16[25,3,32], index: 1, kind: input, shape index: {}]
  %s2 = inlined_call_operand.vmem [shape: f32[1,32], index: 2, kind: input, shape index: {}]
  %s3 = inlined_call_operand.vmem [shape: bf16[25,32,32], index: 3, kind: input, shape index: {}]
  %s4 = inlined_call_operand.vmem [shape: f32[1,32], index: 4, kind: input, shape index: {}]
  %s5 = inlined_call_operand.vmem [shape: bf16[25,32,64], index: 5, kind: input, shape index: {}]
  %s6 = inlined_call_operand.vmem [shape: f32[1,64], index: 6, kind: input, shape index: {}]
  %s7 = inlined_call_operand.vmem [shape: bf16[16,64,64], index: 7, kind: input, shape index: {}]
  %s8 = inlined_call_operand.vmem [shape: f32[1,64], index: 8, kind: input, shape index: {}]
  %s9 = inlined_call_operand.vmem [shape: bf16[64,10], index: 9, kind: input, shape index: {}]
  %s10 = inlined_call_operand.vmem [shape: f32[1,10], index: 10, kind: input, shape index: {}]
  %s11 = inlined_call_operand.hbm [shape: f32[2,1,10], index: 11, kind: output, shape index: {}]
  %s12 = sld [smem:[#allocation0]]
  $region119: #{_tudui_forward.1} parent=0
    _
  %s14 = ssub.s32 1, %s12
  %s15 = scalar_select 0, %s14, %s12
  $region1: #{_tudui_forward.1} parent=0
    #allocation11 [shape = 'u8[1024]{0}', space=vmem, size = 0x400, scoped, tag = 'output window, operand 0']
    #allocation12 [shape = 's32[2]{0}', space=sflag, size = 0x8, scoped, tag = 'scoped memory for _tudui_forward.1']
    %16 = vsyncpa [#allocation12], 0
    %s17 = scalar_lea.sflag [#allocation12], 1
    %18 = vsyncpa %s17, 0
    loop: start=0, step=1, limit=4
    $region2: #{_tudui_forward.1} parent=1 // loop_pre_header
      _
    $region3: #{_tudui_forward.1} parent=1 // loop_header
      %s20 = sphi 0, %s24
      %p21 = scmp.ge.s32.totalorder %s20, 4
      %s30 = sphi 0, %s32
      %s33 = sphi 0, %s30
      %s34 = sphi 0, %s33
      %s50 = sphi 0, %s34
      %s54 = sphi 0, %s54
      %s56 = sphi 0, %s54
      %s57 = sphi 0, %s56
      %s71 = sphi 0, %s57
      %s75 = sphi 0, %s75
      %s77 = sphi 0, %s75
      %s78 = sphi 0, %s77
      %s92 = sphi 0, %s78
      %s96 = sphi 0, %s96
      %s98 = sphi 0, %s96
      %s99 = sphi 0, %s98
      %s113 = sphi 0, %s99
      %s117 = sphi 0, %s117
      %s119 = sphi 0, %s117
      %s120 = sphi 0, %s119
      %s134 = sphi 0, %s120
      %s138 = sphi 0, %s138
      %s140 = sphi 0, %s138
      %s141 = sphi 0, %s140
      %s155 = sphi 0, %s141
      %s159 = sphi 0, %s159
      %s161 = sphi 0, %s159
      %s162 = sphi 0, %s161
      %s176 = sphi 0, %s162
      %s180 = sphi 0, %s180
      %s182 = sphi 0, %s180
      %s183 = sphi 0, %s182
      %s197 = sphi 0, %s183
      %s201 = sphi 0, %s201
      %s203 = sphi 0, %s201
      %s204 = sphi 0, %s203
      %s218 = sphi 0, %s204
      %s222 = sphi 0, %s222
      %s224 = sphi 0, %s222
      %s225 = sphi 0, %s224
      %s239 = sphi 0, %s225
      %s243 = sphi 0, %s243
      %s245 = sphi 0, %s243
      %s246 = sphi 0, %s245
      %s260 = sphi 0, %s246
      %s266 = sphi 0, %s268
      %s269 = sphi 0, %s266
      %s270 = sphi 0, %s269
      %s286 = sphi 0, %s270
    $region4: #{_tudui_forward.1} parent=1 // loop_header_branch
      %23 = sbr.rel (%p21) target = $region8
    $region5: #{_tudui_forward.1} parent=1 // loop_body
      %s25 = ssub.s32 %s20, 1
      %s26 = ssub.s32 %s20, 2
      %s27 = sadd.s32 %s20, 1
      %s28 = ssub.s32 %s20, %s27
      %p29 = scmp.eq.s32.totalorder %s28, 0
      %s31 = sadd.s32 %s30, 1
      %s32 = scalar_select %p29, %s30, %s31
      %p35 = pneg %p29
      %p36 = scmp.eq.s32.totalorder %s20, 1
      %p37 = por %p35, %p36
      %p38 = scmp.ne.s32.totalorder %s30, %s33
      %p39 = scmp.eq.s32.totalorder %s20, 0
      %p40 = por %p38, %p39
      %p41 = scmp.ne.s32.totalorder %s30, %s33
      %p42 = scmp.eq.s32.totalorder %s25, 1
      %p43 = por %p41, %p42
      %p44 = scmp.ne.s32.totalorder %s33, %s34
      %p45 = scmp.eq.s32.totalorder %s25, 0
      %p46 = por %p44, %p45
      %p47 = scmp.ne.s32.totalorder %s33, %s34
      %p48 = scmp.eq.s32.totalorder %s26, 1
      %p49 = por %p47, %p48
      %p51 = scmp.ne.s32.totalorder %s34, %s50
      %p52 = scmp.eq.s32.totalorder %s26, 0
      %p53 = por %p51, %p52
      %s55 = sadd.s32 %s54, 1
      %p58 = scmp.eq.s32.totalorder %s20, 1
      %p59 = scmp.ne.s32.totalorder %s54, %s56
      %p60 = scmp.eq.s32.totalorder %s20, 0
      %p61 = por %p59, %p60
      %p62 = scmp.ne.s32.totalorder %s54, %s56
      %p63 = scmp.eq.s32.totalorder %s25, 1
      %p64 = por %p62, %p63
      %p65 = scmp.ne.s32.totalorder %s56, %s57
      %p66 = scmp.eq.s32.totalorder %s25, 0
      %p67 = por %p65, %p66
      %p68 = scmp.ne.s32.totalorder %s56, %s57
      %p69 = scmp.eq.s32.totalorder %s26, 1
      %p70 = por %p68, %p69
      %p72 = scmp.ne.s32.totalorder %s57, %s71
      %p73 = scmp.eq.s32.totalorder %s26, 0
      %p74 = por %p72, %p73
      %s76 = sadd.s32 %s75, 1
      %p79 = scmp.eq.s32.totalorder %s20, 1
      %p80 = scmp.ne.s32.totalorder %s75, %s77
      %p81 = scmp.eq.s32.totalorder %s20, 0
      %p82 = por %p80, %p81
      %p83 = scmp.ne.s32.totalorder %s75, %s77
      %p84 = scmp.eq.s32.totalorder %s25, 1
      %p85 = por %p83, %p84
      %p86 = scmp.ne.s32.totalorder %s77, %s78
      %p87 = scmp.eq.s32.totalorder %s25, 0
      %p88 = por %p86, %p87
      %p89 = scmp.ne.s32.totalorder %s77, %s78
      %p90 = scmp.eq.s32.totalorder %s26, 1
      %p91 = por %p89, %p90
      %p93 = scmp.ne.s32.totalorder %s78, %s92
      %p94 = scmp.eq.s32.totalorder %s26, 0
      %p95 = por %p93, %p94
      %s97 = sadd.s32 %s96, 1
      %p100 = scmp.eq.s32.totalorder %s20, 1
      %p101 = scmp.ne.s32.totalorder %s96, %s98
      %p102 = scmp.eq.s32.totalorder %s20, 0
      %p103 = por %p101, %p102
      %p104 = scmp.ne.s32.totalorder %s96, %s98
      %p105 = scmp.eq.s32.totalorder %s25, 1
      %p106 = por %p104, %p105
      %p107 = scmp.ne.s32.totalorder %s98, %s99
      %p108 = scmp.eq.s32.totalorder %s25, 0
      %p109 = por %p107, %p108
      %p110 = scmp.ne.s32.totalorder %s98, %s99
      %p111 = scmp.eq.s32.totalorder %s26, 1
      %p112 = por %p110, %p111
      %p114 = scmp.ne.s32.totalorder %s99, %s113
      %p115 = scmp.eq.s32.totalorder %s26, 0
      %p116 = por %p114, %p115
      %s118 = sadd.s32 %s117, 1
      %p121 = scmp.eq.s32.totalorder %s20, 1
      %p122 = scmp.ne.s32.totalorder %s117, %s119
      %p123 = scmp.eq.s32.totalorder %s20, 0
      %p124 = por %p122, %p123
      %p125 = scmp.ne.s32.totalorder %s117, %s119
      %p126 = scmp.eq.s32.totalorder %s25, 1
      %p127 = por %p125, %p126
      %p128 = scmp.ne.s32.totalorder %s119, %s120
      %p129 = scmp.eq.s32.totalorder %s25, 0
      %p130 = por %p128, %p129
      %p131 = scmp.ne.s32.totalorder %s119, %s120
      %p132 = scmp.eq.s32.totalorder %s26, 1
      %p133 = por %p131, %p132
      %p135 = scmp.ne.s32.totalorder %s120, %s134
      %p136 = scmp.eq.s32.totalorder %s26, 0
      %p137 = por %p135, %p136
      %s139 = sadd.s32 %s138, 1
      %p142 = scmp.eq.s32.totalorder %s20, 1
      %p143 = scmp.ne.s32.totalorder %s138, %s140
      %p144 = scmp.eq.s32.totalorder %s20, 0
      %p145 = por %p143, %p144
      %p146 = scmp.ne.s32.totalorder %s138, %s140
      %p147 = scmp.eq.s32.totalorder %s25, 1
      %p148 = por %p146, %p147
      %p149 = scmp.ne.s32.totalorder %s140, %s141
      %p150 = scmp.eq.s32.totalorder %s25, 0
      %p151 = por %p149, %p150
      %p152 = scmp.ne.s32.totalorder %s140, %s141
      %p153 = scmp.eq.s32.totalorder %s26, 1
      %p154 = por %p152, %p153
      %p156 = scmp.ne.s32.totalorder %s141, %s155
      %p157 = scmp.eq.s32.totalorder %s26, 0
      %p158 = por %p156, %p157
      %s160 = sadd.s32 %s159, 1
      %p163 = scmp.eq.s32.totalorder %s20, 1
      %p164 = scmp.ne.s32.totalorder %s159, %s161
      %p165 = scmp.eq.s32.totalorder %s20, 0
      %p166 = por %p164, %p165
      %p167 = scmp.ne.s32.totalorder %s159, %s161
      %p168 = scmp.eq.s32.totalorder %s25, 1
      %p169 = por %p167, %p168
      %p170 = scmp.ne.s32.totalorder %s161, %s162
      %p171 = scmp.eq.s32.totalorder %s25, 0
      %p172 = por %p170, %p171
      %p173 = scmp.ne.s32.totalorder %s161, %s162
      %p174 = scmp.eq.s32.totalorder %s26, 1
      %p175 = por %p173, %p174
      %p177 = scmp.ne.s32.totalorder %s162, %s176
      %p178 = scmp.eq.s32.totalorder %s26, 0
      %p179 = por %p177, %p178
      %s181 = sadd.s32 %s180, 1
      %p184 = scmp.eq.s32.totalorder %s20, 1
      %p185 = scmp.ne.s32.totalorder %s180, %s182
      %p186 = scmp.eq.s32.totalorder %s20, 0
      %p187 = por %p185, %p186
      %p188 = scmp.ne.s32.totalorder %s180, %s182
      %p189 = scmp.eq.s32.totalorder %s25, 1
      %p190 = por %p188, %p189
      %p191 = scmp.ne.s32.totalorder %s182, %s183
      %p192 = scmp.eq.s32.totalorder %s25, 0
      %p193 = por %p191, %p192
      %p194 = scmp.ne.s32.totalorder %s182, %s183
      %p195 = scmp.eq.s32.totalorder %s26, 1
      %p196 = por %p194, %p195
      %p198 = scmp.ne.s32.totalorder %s183, %s197
      %p199 = scmp.eq.s32.totalorder %s26, 0
      %p200 = por %p198, %p199
      %s202 = sadd.s32 %s201, 1
      %p205 = scmp.eq.s32.totalorder %s20, 1
      %p206 = scmp.ne.s32.totalorder %s201, %s203
      %p207 = scmp.eq.s32.totalorder %s20, 0
      %p208 = por %p206, %p207
      %p209 = scmp.ne.s32.totalorder %s201, %s203
      %p210 = scmp.eq.s32.totalorder %s25, 1
      %p211 = por %p209, %p210
      %p212 = scmp.ne.s32.totalorder %s203, %s204
      %p213 = scmp.eq.s32.totalorder %s25, 0
      %p214 = por %p212, %p213
      %p215 = scmp.ne.s32.totalorder %s203, %s204
      %p216 = scmp.eq.s32.totalorder %s26, 1
      %p217 = por %p215, %p216
      %p219 = scmp.ne.s32.totalorder %s204, %s218
      %p220 = scmp.eq.s32.totalorder %s26, 0
      %p221 = por %p219, %p220
      %s223 = sadd.s32 %s222, 1
      %p226 = scmp.eq.s32.totalorder %s20, 1
      %p227 = scmp.ne.s32.totalorder %s222, %s224
      %p228 = scmp.eq.s32.totalorder %s20, 0
      %p229 = por %p227, %p228
      %p230 = scmp.ne.s32.totalorder %s222, %s224
      %p231 = scmp.eq.s32.totalorder %s25, 1
      %p232 = por %p230, %p231
      %p233 = scmp.ne.s32.totalorder %s224, %s225
      %p234 = scmp.eq.s32.totalorder %s25, 0
      %p235 = por %p233, %p234
      %p236 = scmp.ne.s32.totalorder %s224, %s225
      %p237 = scmp.eq.s32.totalorder %s26, 1
      %p238 = por %p236, %p237
      %p240 = scmp.ne.s32.totalorder %s225, %s239
      %p241 = scmp.eq.s32.totalorder %s26, 0
      %p242 = por %p240, %p241
      %s244 = sadd.s32 %s243, 1
      %p247 = scmp.eq.s32.totalorder %s20, 1
      %p248 = scmp.ne.s32.totalorder %s243, %s245
      %p249 = scmp.eq.s32.totalorder %s20, 0
      %p250 = por %p248, %p249
      %p251 = scmp.ne.s32.totalorder %s243, %s245
      %p252 = scmp.eq.s32.totalorder %s25, 1
      %p253 = por %p251, %p252
      %p254 = scmp.ne.s32.totalorder %s245, %s246
      %p255 = scmp.eq.s32.totalorder %s25, 0
      %p256 = por %p254, %p255
      %p257 = scmp.ne.s32.totalorder %s245, %s246
      %p258 = scmp.eq.s32.totalorder %s26, 1
      %p259 = por %p257, %p258
      %p261 = scmp.ne.s32.totalorder %s246, %s260
      %p262 = scmp.eq.s32.totalorder %s26, 0
      %p263 = por %p261, %p262
      %s264 = ssub.s32 %s20, %s27
      %p265 = scmp.eq.s32.totalorder %s264, 0
      %s267 = sadd.s32 %s266, 1
      %s268 = scalar_select %p265, %s266, %s267
      %p271 = pneg %p265
      %p272 = scmp.eq.s32.totalorder %s20, 1
      %p273 = por %p271, %p272
      %p274 = scmp.ne.s32.totalorder %s266, %s269
      %p275 = scmp.eq.s32.totalorder %s20, 0
      %p276 = por %p274, %p275
      %p277 = scmp.ne.s32.totalorder %s266, %s269
      %p278 = scmp.eq.s32.totalorder %s25, 1
      %p279 = por %p277, %p278
      %p280 = scmp.ne.s32.totalorder %s269, %s270
      %p281 = scmp.eq.s32.totalorder %s25, 0
      %p282 = por %p280, %p281
      %p283 = scmp.ne.s32.totalorder %s269, %s270
      %p284 = scmp.eq.s32.totalorder %s26, 1
      %p285 = por %p283, %p284
      %p287 = scmp.ne.s32.totalorder %s270, %s286
      %p288 = scmp.eq.s32.totalorder %s26, 0
      %p289 = por %p287, %p288
      %p290 = scmp.le.s32.totalorder 1, %s20
      %p291 = scmp.lt.s32.totalorder %s20, 3
      %p292 = pnand %p290, %p291
      %p293 = pneg %p292
      // Predicated region
      $region9: #{_tudui_forward.1} parent=5 // pred_check
        _
      $region10: #{_tudui_forward.1} parent=5 // pred_check_branch
        %295 = sbr.rel (%p292) target = $region12
      $region11: #{_tudui_forward.1} parent=5 // pred_region
        %s296 = ssub.s32 %s20, 1
        // Predicated region
        $region13: #{_tudui_forward.1} parent=11 // pred_check
          %p297 = pneg %p67
        $region14: #{_tudui_forward.1} parent=11 // pred_check_branch
          %299 = sbr.rel (%p297) target = $region16
        $region15: #{_tudui_forward.1} parent=11 // pred_region
          _
        $region16: #{_tudui_forward.1} parent=11 // pred_fallthru
          _
        // Predicated region
        $region17: #{_tudui_forward.1} parent=11 // pred_check
          %p300 = pneg %p88
        $region18: #{_tudui_forward.1} parent=11 // pred_check_branch
          %302 = sbr.rel (%p300) target = $region20
        $region19: #{_tudui_forward.1} parent=11 // pred_region
          _
        $region20: #{_tudui_forward.1} parent=11 // pred_fallthru
          _
        // Predicated region
        $region21: #{_tudui_forward.1} parent=11 // pred_check
          %p303 = pneg %p109
        $region22: #{_tudui_forward.1} parent=11 // pred_check_branch
          %305 = sbr.rel (%p303) target = $region24
        $region23: #{_tudui_forward.1} parent=11 // pred_region
          _
        $region24: #{_tudui_forward.1} parent=11 // pred_fallthru
          _
        // Predicated region
        $region25: #{_tudui_forward.1} parent=11 // pred_check
          %p306 = pneg %p130
        $region26: #{_tudui_forward.1} parent=11 // pred_check_branch
          %308 = sbr.rel (%p306) target = $region28
        $region27: #{_tudui_forward.1} parent=11 // pred_region
          _
        $region28: #{_tudui_forward.1} parent=11 // pred_fallthru
          _
        // Predicated region
        $region29: #{_tudui_forward.1} parent=11 // pred_check
          %p309 = pneg %p151
        $region30: #{_tudui_forward.1} parent=11 // pred_check_branch
          %311 = sbr.rel (%p309) target = $region32
        $region31: #{_tudui_forward.1} parent=11 // pred_region
          _
        $region32: #{_tudui_forward.1} parent=11 // pred_fallthru
          _
        // Predicated region
        $region33: #{_tudui_forward.1} parent=11 // pred_check
          %p312 = pneg %p172
        $region34: #{_tudui_forward.1} parent=11 // pred_check_branch
          %314 = sbr.rel (%p312) target = $region36
        $region35: #{_tudui_forward.1} parent=11 // pred_region
          _
        $region36: #{_tudui_forward.1} parent=11 // pred_fallthru
          _
        // Predicated region
        $region37: #{_tudui_forward.1} parent=11 // pred_check
          %p315 = pneg %p193
        $region38: #{_tudui_forward.1} parent=11 // pred_check_branch
          %317 = sbr.rel (%p315) target = $region40
        $region39: #{_tudui_forward.1} parent=11 // pred_region
          _
        $region40: #{_tudui_forward.1} parent=11 // pred_fallthru
          _
        // Predicated region
        $region41: #{_tudui_forward.1} parent=11 // pred_check
          %p318 = pneg %p214
        $region42: #{_tudui_forward.1} parent=11 // pred_check_branch
          %320 = sbr.rel (%p318) target = $region44
        $region43: #{_tudui_forward.1} parent=11 // pred_region
          _
        $region44: #{_tudui_forward.1} parent=11 // pred_fallthru
          _
        // Predicated region
        $region45: #{_tudui_forward.1} parent=11 // pred_check
          %p321 = pneg %p235
        $region46: #{_tudui_forward.1} parent=11 // pred_check_branch
          %323 = sbr.rel (%p321) target = $region48
        $region47: #{_tudui_forward.1} parent=11 // pred_region
          _
        $region48: #{_tudui_forward.1} parent=11 // pred_fallthru
          _
        // Predicated region
        $region49: #{_tudui_forward.1} parent=11 // pred_check
          %p324 = pneg %p256
        $region50: #{_tudui_forward.1} parent=11 // pred_check_branch
          %326 = sbr.rel (%p324) target = $region52
        $region51: #{_tudui_forward.1} parent=11 // pred_region
          _
        $region52: #{_tudui_forward.1} parent=11 // pred_fallthru
          _
      $region12: #{_tudui_forward.1} parent=5 // pred_fallthru
        _
      %p327 = scmp.lt.s32.totalorder %s20, 2
      // Predicated region
      $region53: #{_tudui_forward.1} parent=5 // pred_check
        %p328 = pneg %p327
      $region54: #{_tudui_forward.1} parent=5 // pred_check_branch
        %330 = sbr.rel (%p328) target = $region56
      $region55: #{_tudui_forward.1} parent=5 // pred_region
        // Predicated region
        $region57: #{_tudui_forward.1} parent=55 // pred_check
          %p331 = pneg %p40
        $region58: #{_tudui_forward.1} parent=55 // pred_check_branch
          %333 = sbr.rel (%p331) target = $region60
        $region59: #{_tudui_forward.1} parent=55 // pred_region
          %p334 = scmp.lt.s32.totalorder %s20, 1
          %s335 = scalar_select %p334, %s20, 1
          %s336 = smul.addr %s335, 128
          %s337 = smul.addr %s336, 8
          %s338 = scalar_lea.vmem %s0, %s337
        $region60: #{_tudui_forward.1} parent=55 // pred_fallthru
          _
      $region56: #{_tudui_forward.1} parent=5 // pred_fallthru
        _
      %p339 = scmp.le.s32.totalorder 1, %s20
      %p340 = scmp.lt.s32.totalorder %s20, 3
      %p341 = pnand %p339, %p340
      %p342 = pneg %p341
      // Predicated region
      $region61: #{_tudui_forward.1} parent=5 // pred_check
        _
      $region62: #{_tudui_forward.1} parent=5 // pred_check_branch
        %344 = sbr.rel (%p341) target = $region64
      $region63: #{_tudui_forward.1} parent=5 // pred_region
        %s345 = ssub.s32 %s20, 1
        %p346 = scmp.lt.s32.totalorder %s25, 1
        %s347 = scalar_select %p346, %s25, 1
        %s348 = smul.addr %s347, 128
        %s349 = smul.addr %s348, 8
        %s350 = scalar_lea.vmem %s0, %s349
        %p351 = pneg %p46
        %p352 = pneg %p43
        %p353 = pneg %p67
        %p354 = pneg %p64
        %p355 = pneg %p88
        %p356 = pneg %p85
        %p357 = pneg %p109
        %p358 = pneg %p106
        %p359 = pneg %p130
        %p360 = pneg %p127
        %p361 = pneg %p151
        %p362 = pneg %p148
        %p363 = pneg %p172
        %p364 = pneg %p169
        %p365 = pneg %p193
        %p366 = pneg %p190
        %p367 = pneg %p214
        %p368 = pneg %p211
        %p369 = pneg %p235
        %p370 = pneg %p232
        %p371 = pneg %p256
        %p372 = pneg %p253
        %p373 = pneg %p282
        %p374 = pneg %p279
        %s375 = sand.u32 %s269, 1
        %s376 = scalar_lea.sflag [#allocation12], %s375
        %s377 = sand.u32 %s269, 1
        %s378 = scalar_lea.vmem [#allocation11], %s377
        %p379 = scmp.lt.s32.totalorder %s25, 1
        %s380 = scalar_select %p379, %s25, 1
        %s381 = smul.addr %s380, 128
        %s382 = smul.addr %s381, 8
        %s383 = scalar_lea.vmem %s0, %s382
        %vm385 = vcmask 23552
        %386 = vst.msk [vmem:[#allocation2] sm:$0xff] %vm385, 0.0
        %387 = vst.msk [vmem:[#allocation2 + $0x8] sm:$0xff] %vm385, 0.0
        %388 = vst.msk [vmem:[#allocation2 + $0x10] sm:$0xff] %vm385, 0.0
        %389 = vst.msk [vmem:[#allocation2 + $0x18] sm:$0xff] %vm385, 0.0
        %390 = vst.msk [vmem:[#allocation2 + $0x20] sm:$0xff] %vm385, 0.0
        %391 = vst.msk [vmem:[#allocation2 + $0x28] sm:$0xff] %vm385, 0.0
        %392 = vst.msk [vmem:[#allocation2 + $0x30] sm:$0xff] %vm385, 0.0
        %393 = vst.msk [vmem:[#allocation2 + $0x38] sm:$0xff] %vm385, 0.0
        %394 = vst.msk [vmem:[#allocation2 + $0x40] sm:$0xff] %vm385, 0.0
        %395 = vst.msk [vmem:[#allocation2 + $0x48] sm:$0xff] %vm385, 0.0
        %396 = vst.msk [vmem:[#allocation2 + $0x50] sm:$0xff] %vm385, 0.0
        %397 = vst.msk [vmem:[#allocation2 + $0x58] sm:$0xff] %vm385, 0.0
        %398 = vst.msk [vmem:[#allocation2 + $0x60] sm:$0xff] %vm385, 0.0
        %399 = vst.msk [vmem:[#allocation2 + $0x68] sm:$0xff] %vm385, 0.0
        %400 = vst.msk [vmem:[#allocation2 + $0x70] sm:$0xff] %vm385, 0.0
        %401 = vst.msk [vmem:[#allocation2 + $0x78] sm:$0xff] %vm385, 0.0
        %402 = vst.msk [vmem:[#allocation2 + $0x80] sm:$0xff] %vm385, 0.0
        %403 = vst.msk [vmem:[#allocation2 + $0x88] sm:$0xff] %vm385, 0.0
        %404 = vst.msk [vmem:[#allocation2 + $0x90] sm:$0xff] %vm385, 0.0
        %405 = vst.msk [vmem:[#allocation2 + $0x98] sm:$0xff] %vm385, 0.0
        %406 = vst.msk [vmem:[#allocation2 + $0xa0] sm:$0xff] %vm385, 0.0
        %407 = vst.msk [vmem:[#allocation2 + $0xa8] sm:$0xff] %vm385, 0.0
        %408 = vst.msk [vmem:[#allocation2 + $0xb0] sm:$0xff] %vm385, 0.0
        %409 = vst.msk [vmem:[#allocation2 + $0xb8] sm:$0xff] %vm385, 0.0
        %410 = vst.msk [vmem:[#allocation2 + $0xc0] sm:$0xff] %vm385, 0.0
        %411 = vst.msk [vmem:[#allocation2 + $0xc8] sm:$0xff] %vm385, 0.0
        %412 = vst.msk [vmem:[#allocation2 + $0xd0] sm:$0xff] %vm385, 0.0
        %413 = vst.msk [vmem:[#allocation2 + $0xd8] sm:$0xff] %vm385, 0.0
        %414 = vst.msk [vmem:[#allocation2 + $0xe0] sm:$0xff] %vm385, 0.0
        %415 = vst.msk [vmem:[#allocation2 + $0xe8] sm:$0xff] %vm385, 0.0
        %416 = vst.msk [vmem:[#allocation2 + $0xf0] sm:$0xff] %vm385, 0.0
        %417 = vst.msk [vmem:[#allocation2 + $0xf8] sm:$0xff] %vm385, 0.0
        %418 = vst.msk [vmem:[#allocation2 + $0x100] sm:$0xff] %vm385, 0.0
        %419 = vst.msk [vmem:[#allocation2 + $0x108] sm:$0xff] %vm385, 0.0
        %420 = vst.msk [vmem:[#allocation2 + $0x110] sm:$0xff] %vm385, 0.0
        %421 = vst.msk [vmem:[#allocation2 + $0x118] sm:$0xff] %vm385, 0.0
        %422 = vst.msk [vmem:[#allocation2 + $0x120] sm:$0xff] %vm385, 0.0
        %423 = vst.msk [vmem:[#allocation2 + $0x128] sm:$0xff] %vm385, 0.0
        %424 = vst.msk [vmem:[#allocation2 + $0x130] sm:$0xff] %vm385, 0.0
        %425 = vst.msk [vmem:[#allocation2 + $0x138] sm:$0xff] %vm385, 0.0
        %426 = vst.msk [vmem:[#allocation2 + $0x140] sm:$0xff] %vm385, 0.0
        %427 = vst.msk [vmem:[#allocation2 + $0x148] sm:$0xff] %vm385, 0.0
        %428 = vst.msk [vmem:[#allocation2 + $0x150] sm:$0xff] %vm385, 0.0
        %429 = vst.msk [vmem:[#allocation2 + $0x158] sm:$0xff] %vm385, 0.0
        %430 = vst.msk [vmem:[#allocation2 + $0x160] sm:$0xff] %vm385, 0.0
        %431 = vst.msk [vmem:[#allocation2 + $0x168] sm:$0xff] %vm385, 0.0
        %432 = vst.msk [vmem:[#allocation2 + $0x170] sm:$0xff] %vm385, 0.0
        %433 = vst.msk [vmem:[#allocation2 + $0x178] sm:$0xff] %vm385, 0.0
        %434 = vst.msk [vmem:[#allocation2 + $0x180] sm:$0xff] %vm385, 0.0
        %435 = vst.msk [vmem:[#allocation2 + $0x188] sm:$0xff] %vm385, 0.0
        %436 = vst.msk [vmem:[#allocation2 + $0x190] sm:$0xff] %vm385, 0.0
        %437 = vst.msk [vmem:[#allocation2 + $0x198] sm:$0xff] %vm385, 0.0
        %438 = vst.msk [vmem:[#allocation2 + $0x1a0] sm:$0xff] %vm385, 0.0
        %439 = vst.msk [vmem:[#allocation2 + $0x1a8] sm:$0xff] %vm385, 0.0
        %440 = vst.msk [vmem:[#allocation2 + $0x1b0] sm:$0xff] %vm385, 0.0
        %441 = vst.msk [vmem:[#allocation2 + $0x1b8] sm:$0xff] %vm385, 0.0
        %442 = vst.msk [vmem:[#allocation2 + $0x1c0] sm:$0xff] %vm385, 0.0
        %443 = vst.msk [vmem:[#allocation2 + $0x1c8] sm:$0xff] %vm385, 0.0
        %444 = vst.msk [vmem:[#allocation2 + $0x1d0] sm:$0xff] %vm385, 0.0
        %445 = vst.msk [vmem:[#allocation2 + $0x1d8] sm:$0xff] %vm385, 0.0
        %446 = vst.msk [vmem:[#allocation2 + $0x1e0] sm:$0xff] %vm385, 0.0
        %447 = vst.msk [vmem:[#allocation2 + $0x1e8] sm:$0xff] %vm385, 0.0
        %448 = vst.msk [vmem:[#allocation2 + $0x1f0] sm:$0xff] %vm385, 0.0
        %449 = vst.msk [vmem:[#allocation2 + $0x1f8] sm:$0xff] %vm385, 0.0
        %450 = vst.msk [vmem:[#allocation2 + $0x200] sm:$0xff] %vm385, 0.0
        %451 = vst.msk [vmem:[#allocation2 + $0x208] sm:$0xff] %vm385, 0.0
        %452 = vst.msk [vmem:[#allocation2 + $0x210] sm:$0xff] %vm385, 0.0
        %453 = vst.msk [vmem:[#allocation2 + $0x218] sm:$0xff] %vm385, 0.0
        %454 = vst.msk [vmem:[#allocation2 + $0x220] sm:$0xff] %vm385, 0.0
        %455 = vst.msk [vmem:[#allocation2 + $0x228] sm:$0xff] %vm385, 0.0
        %456 = vst.msk [vmem:[#allocation2 + $0x230] sm:$0xff] %vm385, 0.0
        %457 = vst.msk [vmem:[#allocation2 + $0x238] sm:$0xff] %vm385, 0.0
        %458 = vst.msk [vmem:[#allocation2 + $0x240] sm:$0xff] %vm385, 0.0
        %459 = vst.msk [vmem:[#allocation2 + $0x248] sm:$0xff] %vm385, 0.0
        %460 = vst.msk [vmem:[#allocation2 + $0x250] sm:$0xff] %vm385, 0.0
        %461 = vst.msk [vmem:[#allocation2 + $0x258] sm:$0xff] %vm385, 0.0
        %462 = vst.msk [vmem:[#allocation2 + $0x260] sm:$0xff] %vm385, 0.0
        %463 = vst.msk [vmem:[#allocation2 + $0x268] sm:$0xff] %vm385, 0.0
        %464 = vst.msk [vmem:[#allocation2 + $0x270] sm:$0xff] %vm385, 0.0
        %465 = vst.msk [vmem:[#allocation2 + $0x278] sm:$0xff] %vm385, 0.0
        %466 = vst.msk [vmem:[#allocation2 + $0x280] sm:$0xff] %vm385, 0.0
        %467 = vst.msk [vmem:[#allocation2 + $0x288] sm:$0xff] %vm385, 0.0
        %468 = vst.msk [vmem:[#allocation2 + $0x290] sm:$0xff] %vm385, 0.0
        %469 = vst.msk [vmem:[#allocation2 + $0x298] sm:$0xff] %vm385, 0.0
        %470 = vst.msk [vmem:[#allocation2 + $0x2a0] sm:$0xff] %vm385, 0.0
        %471 = vst.msk [vmem:[#allocation2 + $0x2a8] sm:$0xff] %vm385, 0.0
        %472 = vst.msk [vmem:[#allocation2 + $0x2b0] sm:$0xff] %vm385, 0.0
        %473 = vst.msk [vmem:[#allocation2 + $0x2b8] sm:$0xff] %vm385, 0.0
        %474 = vst.msk [vmem:[#allocation2 + $0x2c0] sm:$0xff] %vm385, 0.0
        %475 = vst.msk [vmem:[#allocation2 + $0x2c8] sm:$0xff] %vm385, 0.0
        %476 = vst.msk [vmem:[#allocation2 + $0x2d0] sm:$0xff] %vm385, 0.0
        %477 = vst.msk [vmem:[#allocation2 + $0x2d8] sm:$0xff] %vm385, 0.0
        %478 = vst.msk [vmem:[#allocation2 + $0x2e0] sm:$0xff] %vm385, 0.0
        %479 = vst.msk [vmem:[#allocation2 + $0x2e8] sm:$0xff] %vm385, 0.0
        %480 = vst.msk [vmem:[#allocation2 + $0x2f0] sm:$0xff] %vm385, 0.0
        %481 = vst.msk [vmem:[#allocation2 + $0x2f8] sm:$0xff] %vm385, 0.0
        %482 = vst.msk [vmem:[#allocation2 + $0x300] sm:$0xff] %vm385, 0.0
        %483 = vst.msk [vmem:[#allocation2 + $0x308] sm:$0xff] %vm385, 0.0
        %484 = vst.msk [vmem:[#allocation2 + $0x310] sm:$0xff] %vm385, 0.0
        %485 = vst.msk [vmem:[#allocation2 + $0x318] sm:$0xff] %vm385, 0.0
        %486 = vst.msk [vmem:[#allocation2 + $0x320] sm:$0xff] %vm385, 0.0
        %487 = vst.msk [vmem:[#allocation2 + $0x328] sm:$0xff] %vm385, 0.0
        %488 = vst.msk [vmem:[#allocation2 + $0x330] sm:$0xff] %vm385, 0.0
        %489 = vst.msk [vmem:[#allocation2 + $0x338] sm:$0xff] %vm385, 0.0
        %490 = vst.msk [vmem:[#allocation2 + $0x340] sm:$0xff] %vm385, 0.0
        %491 = vst.msk [vmem:[#allocation2 + $0x348] sm:$0xff] %vm385, 0.0
        %492 = vst.msk [vmem:[#allocation2 + $0x350] sm:$0xff] %vm385, 0.0
        %493 = vst.msk [vmem:[#allocation2 + $0x358] sm:$0xff] %vm385, 0.0
        %494 = vst.msk [vmem:[#allocation2 + $0x360] sm:$0xff] %vm385, 0.0
        %495 = vst.msk [vmem:[#allocation2 + $0x368] sm:$0xff] %vm385, 0.0
        %496 = vst.msk [vmem:[#allocation2 + $0x370] sm:$0xff] %vm385, 0.0
        %497 = vst.msk [vmem:[#allocation2 + $0x378] sm:$0xff] %vm385, 0.0
        %498 = vst.msk [vmem:[#allocation2 + $0x380] sm:$0xff] %vm385, 0.0
        %499 = vst.msk [vmem:[#allocation2 + $0x388] sm:$0xff] %vm385, 0.0
        %500 = vst.msk [vmem:[#allocation2 + $0x390] sm:$0xff] %vm385, 0.0
        %501 = vst.msk [vmem:[#allocation2 + $0x398] sm:$0xff] %vm385, 0.0
        %502 = vst.msk [vmem:[#allocation2 + $0x3a0] sm:$0xff] %vm385, 0.0
        %503 = vst.msk [vmem:[#allocation2 + $0x3a8] sm:$0xff] %vm385, 0.0
        %504 = vst.msk [vmem:[#allocation2 + $0x3b0] sm:$0xff] %vm385, 0.0
        %505 = vst.msk [vmem:[#allocation2 + $0x3b8] sm:$0xff] %vm385, 0.0
        %506 = vst.msk [vmem:[#allocation2 + $0x3c0] sm:$0xff] %vm385, 0.0
        %507 = vst.msk [vmem:[#allocation2 + $0x3c8] sm:$0xff] %vm385, 0.0
        %508 = vst.msk [vmem:[#allocation2 + $0x3d0] sm:$0xff] %vm385, 0.0
        %509 = vst.msk [vmem:[#allocation2 + $0x3d8] sm:$0xff] %vm385, 0.0
        %510 = vst.msk [vmem:[#allocation2 + $0x3e0] sm:$0xff] %vm385, 0.0
        %511 = vst.msk [vmem:[#allocation2 + $0x3e8] sm:$0xff] %vm385, 0.0
        %512 = vst.msk [vmem:[#allocation2 + $0x3f0] sm:$0xff] %vm385, 0.0
        %513 = vst.msk [vmem:[#allocation2 + $0x3f8] sm:$0xff] %vm385, 0.0
        %514 = vst.msk [vmem:[#allocation2 + $0x400] sm:$0xff] %vm385, 0.0
        %515 = vst.msk [vmem:[#allocation2 + $0x408] sm:$0xff] %vm385, 0.0
        %516 = vst.msk [vmem:[#allocation2 + $0x410] sm:$0xff] %vm385, 0.0
        %517 = vst.msk [vmem:[#allocation2 + $0x418] sm:$0xff] %vm385, 0.0
        %518 = vst.msk [vmem:[#allocation2 + $0x420] sm:$0xff] %vm385, 0.0
        %519 = vst.msk [vmem:[#allocation2 + $0x428] sm:$0xff] %vm385, 0.0
        %520 = vst.msk [vmem:[#allocation2 + $0x430] sm:$0xff] %vm385, 0.0
        %521 = vst.msk [vmem:[#allocation2 + $0x438] sm:$0xff] %vm385, 0.0
        %522 = vst.msk [vmem:[#allocation2 + $0x440] sm:$0xff] %vm385, 0.0
        %523 = vst.msk [vmem:[#allocation2 + $0x448] sm:$0xff] %vm385, 0.0
        %524 = vst.msk [vmem:[#allocation2 + $0x450] sm:$0xff] %vm385, 0.0
        %525 = vst.msk [vmem:[#allocation2 + $0x458] sm:$0xff] %vm385, 0.0
        %526 = vst.msk [vmem:[#allocation2 + $0x460] sm:$0xff] %vm385, 0.0
        %527 = vst.msk [vmem:[#allocation2 + $0x468] sm:$0xff] %vm385, 0.0
        %528 = vst.msk [vmem:[#allocation2 + $0x470] sm:$0xff] %vm385, 0.0
        %529 = vst.msk [vmem:[#allocation2 + $0x478] sm:$0xff] %vm385, 0.0
        %530 = vst.msk [vmem:[#allocation2 + $0x480] sm:$0xff] %vm385, 0.0
        %531 = vst.msk [vmem:[#allocation2 + $0x488] sm:$0xff] %vm385, 0.0
        %532 = vst.msk [vmem:[#allocation2 + $0x490] sm:$0xff] %vm385, 0.0
        %533 = vst.msk [vmem:[#allocation2 + $0x498] sm:$0xff] %vm385, 0.0
        %534 = vst.msk [vmem:[#allocation2 + $0x4a0] sm:$0xff] %vm385, 0.0
        %535 = vst.msk [vmem:[#allocation2 + $0x4a8] sm:$0xff] %vm385, 0.0
        %536 = vst.msk [vmem:[#allocation2 + $0x4b0] sm:$0xff] %vm385, 0.0
        %537 = vst.msk [vmem:[#allocation2 + $0x4b8] sm:$0xff] %vm385, 0.0
        %538 = vst.msk [vmem:[#allocation2 + $0x4c0] sm:$0xff] %vm385, 0.0
        %539 = vst.msk [vmem:[#allocation2 + $0x4c8] sm:$0xff] %vm385, 0.0
        %540 = vst.msk [vmem:[#allocation2 + $0x4d0] sm:$0xff] %vm385, 0.0
        %541 = vst.msk [vmem:[#allocation2 + $0x4d8] sm:$0xff] %vm385, 0.0
        %542 = vst.msk [vmem:[#allocation2 + $0x4e0] sm:$0xff] %vm385, 0.0
        %543 = vst.msk [vmem:[#allocation2 + $0x4e8] sm:$0xff] %vm385, 0.0
        %544 = vst.msk [vmem:[#allocation2 + $0x4f0] sm:$0xff] %vm385, 0.0
        %545 = vst.msk [vmem:[#allocation2 + $0x4f8] sm:$0xff] %vm385, 0.0
        %546 = vst.msk [vmem:[#allocation2 + $0x500] sm:$0xff] %vm385, 0.0
        %547 = vst.msk [vmem:[#allocation2 + $0x508] sm:$0xff] %vm385, 0.0
        %548 = vst.msk [vmem:[#allocation2 + $0x510] sm:$0xff] %vm385, 0.0
        %549 = vst.msk [vmem:[#allocation2 + $0x518] sm:$0xff] %vm385, 0.0
        %550 = vst.msk [vmem:[#allocation2 + $0x520] sm:$0xff] %vm385, 0.0
        %551 = vst.msk [vmem:[#allocation2 + $0x528] sm:$0xff] %vm385, 0.0
        %552 = vst.msk [vmem:[#allocation2 + $0x530] sm:$0xff] %vm385, 0.0
        %553 = vst.msk [vmem:[#allocation2 + $0x538] sm:$0xff] %vm385, 0.0
        %554 = vst.msk [vmem:[#allocation2 + $0x540] sm:$0xff] %vm385, 0.0
        %555 = vst.msk [vmem:[#allocation2 + $0x548] sm:$0xff] %vm385, 0.0
        %556 = vst.msk [vmem:[#allocation2 + $0x550] sm:$0xff] %vm385, 0.0
        %557 = vst.msk [vmem:[#allocation2 + $0x558] sm:$0xff] %vm385, 0.0
        %558 = vst.msk [vmem:[#allocation2 + $0x560] sm:$0xff] %vm385, 0.0
        %559 = vst.msk [vmem:[#allocation2 + $0x568] sm:$0xff] %vm385, 0.0
        %560 = vst.msk [vmem:[#allocation2 + $0x570] sm:$0xff] %vm385, 0.0
        %561 = vst.msk [vmem:[#allocation2 + $0x578] sm:$0xff] %vm385, 0.0
        %562 = vst.msk [vmem:[#allocation2 + $0x580] sm:$0xff] %vm385, 0.0
        %563 = vst.msk [vmem:[#allocation2 + $0x588] sm:$0xff] %vm385, 0.0
        %564 = vst.msk [vmem:[#allocation2 + $0x590] sm:$0xff] %vm385, 0.0
        %565 = vst.msk [vmem:[#allocation2 + $0x598] sm:$0xff] %vm385, 0.0
        %566 = vst.msk [vmem:[#allocation2 + $0x5a0] sm:$0xff] %vm385, 0.0
        %567 = vst.msk [vmem:[#allocation2 + $0x5a8] sm:$0xff] %vm385, 0.0
        %568 = vst.msk [vmem:[#allocation2 + $0x5b0] sm:$0xff] %vm385, 0.0
        %569 = vst.msk [vmem:[#allocation2 + $0x5b8] sm:$0xff] %vm385, 0.0
        %570 = vst.msk [vmem:[#allocation2 + $0x5c0] sm:$0xff] %vm385, 0.0
        %571 = vst.msk [vmem:[#allocation2 + $0x5c8] sm:$0xff] %vm385, 0.0
        %572 = vst.msk [vmem:[#allocation2 + $0x5d0] sm:$0xff] %vm385, 0.0
        %573 = vst.msk [vmem:[#allocation2 + $0x5d8] sm:$0xff] %vm385, 0.0
        %574 = vst.msk [vmem:[#allocation2 + $0x5e0] sm:$0xff] %vm385, 0.0
        %575 = vst.msk [vmem:[#allocation2 + $0x5e8] sm:$0xff] %vm385, 0.0
        %576 = vst.msk [vmem:[#allocation2 + $0x5f0] sm:$0xff] %vm385, 0.0
        %577 = vst.msk [vmem:[#allocation2 + $0x5f8] sm:$0xff] %vm385, 0.0
        %578 = vst.msk [vmem:[#allocation2 + $0x600] sm:$0xff] %vm385, 0.0
        %579 = vst.msk [vmem:[#allocation2 + $0x608] sm:$0xff] %vm385, 0.0
        %580 = vst.msk [vmem:[#allocation2 + $0x610] sm:$0xff] %vm385, 0.0
        %581 = vst.msk [vmem:[#allocation2 + $0x618] sm:$0xff] %vm385, 0.0
        %582 = vst.msk [vmem:[#allocation2 + $0x620] sm:$0xff] %vm385, 0.0
        %583 = vst.msk [vmem:[#allocation2 + $0x628] sm:$0xff] %vm385, 0.0
        %584 = vst.msk [vmem:[#allocation2 + $0x630] sm:$0xff] %vm385, 0.0
        %585 = vst.msk [vmem:[#allocation2 + $0x638] sm:$0xff] %vm385, 0.0
        %vm586 = vcmask 19456
        %587 = vst.msk [vmem:[#allocation2 + $0x640] sm:$0xf] %vm586, 0.0
        %v588 = vld [vmem:[%s383] sm:$0xff]
        %v589 = vld [vmem:[%s383 + $0x8] sm:$0xff]
        %v590 = vld [vmem:[%s383 + $0x10] sm:$0xff]
        %v591 = vld [vmem:[%s383 + $0x18] sm:$0xff]
        %592 = vst.msk [vmem:[#allocation2 + $0xa4] sm:$0xff] %vm385, %v588
        %593 = vst.msk [vmem:[#allocation2 + $0xac] sm:$0xff] %vm385, %v589
        %594 = vst.msk [vmem:[#allocation2 + $0xb4] sm:$0xff] %vm385, %v590
        %595 = vst.msk [vmem:[#allocation2 + $0xbc] sm:$0xff] %vm385, %v591
        %s596 = scalar_lea.vmem %s383, 32
        %v597 = vld [vmem:[%s596] sm:$0xff]
        %v598 = vld [vmem:[%s596 + $0x8] sm:$0xff]
        %v599 = vld [vmem:[%s596 + $0x10] sm:$0xff]
        %v600 = vld [vmem:[%s596 + $0x18] sm:$0xff]
        %601 = vst.msk [vmem:[#allocation2 + $0xcc] sm:$0xff] %vm385, %v597
        %602 = vst.msk [vmem:[#allocation2 + $0xd4] sm:$0xff] %vm385, %v598
        %603 = vst.msk [vmem:[#allocation2 + $0xdc] sm:$0xff] %vm385, %v599
        %604 = vst.msk [vmem:[#allocation2 + $0xe4] sm:$0xff] %vm385, %v600
        %s605 = scalar_lea.vmem %s383, 64
        %v606 = vld [vmem:[%s605] sm:$0xff]
        %v607 = vld [vmem:[%s605 + $0x8] sm:$0xff]
        %v608 = vld [vmem:[%s605 + $0x10] sm:$0xff]
        %v609 = vld [vmem:[%s605 + $0x18] sm:$0xff]
        %610 = vst.msk [vmem:[#allocation2 + $0xf4] sm:$0xff] %vm385, %v606
        %611 = vst.msk [vmem:[#allocation2 + $0xfc] sm:$0xff] %vm385, %v607
        %612 = vst.msk [vmem:[#allocation2 + $0x104] sm:$0xff] %vm385, %v608
        %613 = vst.msk [vmem:[#allocation2 + $0x10c] sm:$0xff] %vm385, %v609
        %s614 = scalar_lea.vmem %s383, 96
        %v615 = vld [vmem:[%s614] sm:$0xff]
        %v616 = vld [vmem:[%s614 + $0x8] sm:$0xff]
        %v617 = vld [vmem:[%s614 + $0x10] sm:$0xff]
        %v618 = vld [vmem:[%s614 + $0x18] sm:$0xff]
        %619 = vst.msk [vmem:[#allocation2 + $0x11c] sm:$0xff] %vm385, %v615
        %620 = vst.msk [vmem:[#allocation2 + $0x124] sm:$0xff] %vm385, %v616
        %621 = vst.msk [vmem:[#allocation2 + $0x12c] sm:$0xff] %vm385, %v617
        %622 = vst.msk [vmem:[#allocation2 + $0x134] sm:$0xff] %vm385, %v618
        %s623 = scalar_lea.vmem %s383, 128
        %v624 = vld [vmem:[%s623] sm:$0xff]
        %v625 = vld [vmem:[%s623 + $0x8] sm:$0xff]
        %v626 = vld [vmem:[%s623 + $0x10] sm:$0xff]
        %v627 = vld [vmem:[%s623 + $0x18] sm:$0xff]
        %628 = vst.msk [vmem:[#allocation2 + $0x144] sm:$0xff] %vm385, %v624
        %629 = vst.msk [vmem:[#allocation2 + $0x14c] sm:$0xff] %vm385, %v625
        %630 = vst.msk [vmem:[#allocation2 + $0x154] sm:$0xff] %vm385, %v626
        %631 = vst.msk [vmem:[#allocation2 + $0x15c] sm:$0xff] %vm385, %v627
        %s632 = scalar_lea.vmem %s383, 160
        %v633 = vld [vmem:[%s632] sm:$0xff]
        %v634 = vld [vmem:[%s632 + $0x8] sm:$0xff]
        %v635 = vld [vmem:[%s632 + $0x10] sm:$0xff]
        %v636 = vld [vmem:[%s632 + $0x18] sm:$0xff]
        %637 = vst.msk [vmem:[#allocation2 + $0x16c] sm:$0xff] %vm385, %v633
        %638 = vst.msk [vmem:[#allocation2 + $0x174] sm:$0xff] %vm385, %v634
        %639 = vst.msk [vmem:[#allocation2 + $0x17c] sm:$0xff] %vm385, %v635
        %640 = vst.msk [vmem:[#allocation2 + $0x184] sm:$0xff] %vm385, %v636
        %s641 = scalar_lea.vmem %s383, 192
        %v642 = vld [vmem:[%s641] sm:$0xff]
        %v643 = vld [vmem:[%s641 + $0x8] sm:$0xff]
        %v644 = vld [vmem:[%s641 + $0x10] sm:$0xff]
        %v645 = vld [vmem:[%s641 + $0x18] sm:$0xff]
        %646 = vst.msk [vmem:[#allocation2 + $0x194] sm:$0xff] %vm385, %v642
        %647 = vst.msk [vmem:[#allocation2 + $0x19c] sm:$0xff] %vm385, %v643
        %648 = vst.msk [vmem:[#allocation2 + $0x1a4] sm:$0xff] %vm385, %v644
        %649 = vst.msk [vmem:[#allocation2 + $0x1ac] sm:$0xff] %vm385, %v645
        %s650 = scalar_lea.vmem %s383, 224
        %v651 = vld [vmem:[%s650] sm:$0xff]
        %v652 = vld [vmem:[%s650 + $0x8] sm:$0xff]
        %v653 = vld [vmem:[%s650 + $0x10] sm:$0xff]
        %v654 = vld [vmem:[%s650 + $0x18] sm:$0xff]
        %655 = vst.msk [vmem:[#allocation2 + $0x1bc] sm:$0xff] %vm385, %v651
        %656 = vst.msk [vmem:[#allocation2 + $0x1c4] sm:$0xff] %vm385, %v652
        %657 = vst.msk [vmem:[#allocation2 + $0x1cc] sm:$0xff] %vm385, %v653
        %658 = vst.msk [vmem:[#allocation2 + $0x1d4] sm:$0xff] %vm385, %v654
        %s659 = scalar_lea.vmem %s383, 256
        %v660 = vld [vmem:[%s659] sm:$0xff]
        %v661 = vld [vmem:[%s659 + $0x8] sm:$0xff]
        %v662 = vld [vmem:[%s659 + $0x10] sm:$0xff]
        %v663 = vld [vmem:[%s659 + $0x18] sm:$0xff]
        %664 = vst.msk [vmem:[#allocation2 + $0x1e4] sm:$0xff] %vm385, %v660
        %665 = vst.msk [vmem:[#allocation2 + $0x1ec] sm:$0xff] %vm385, %v661
        %666 = vst.msk [vmem:[#allocation2 + $0x1f4] sm:$0xff] %vm385, %v662
        %667 = vst.msk [vmem:[#allocation2 + $0x1fc] sm:$0xff] %vm385, %v663
        %s668 = scalar_lea.vmem %s383, 288
        %v669 = vld [vmem:[%s668] sm:$0xff]
        %v670 = vld [vmem:[%s668 + $0x8] sm:$0xff]
        %v671 = vld [vmem:[%s668 + $0x10] sm:$0xff]
        %v672 = vld [vmem:[%s668 + $0x18] sm:$0xff]
        %673 = vst.msk [vmem:[#allocation2 + $0x20c] sm:$0xff] %vm385, %v669
        %674 = vst.msk [vmem:[#allocation2 + $0x214] sm:$0xff] %vm385, %v670
        %675 = vst.msk [vmem:[#allocation2 + $0x21c] sm:$0xff] %vm385, %v671
        %676 = vst.msk [vmem:[#allocation2 + $0x224] sm:$0xff] %vm385, %v672
        %s677 = scalar_lea.vmem %s383, 320
        %v678 = vld [vmem:[%s677] sm:$0xff]
        %v679 = vld [vmem:[%s677 + $0x8] sm:$0xff]
        %v680 = vld [vmem:[%s677 + $0x10] sm:$0xff]
        %v681 = vld [vmem:[%s677 + $0x18] sm:$0xff]
        %682 = vst.msk [vmem:[#allocation2 + $0x234] sm:$0xff] %vm385, %v678
        %683 = vst.msk [vmem:[#allocation2 + $0x23c] sm:$0xff] %vm385, %v679
        %684 = vst.msk [vmem:[#allocation2 + $0x244] sm:$0xff] %vm385, %v680
        %685 = vst.msk [vmem:[#allocation2 + $0x24c] sm:$0xff] %vm385, %v681
        %s686 = scalar_lea.vmem %s383, 352
        %v687 = vld [vmem:[%s686] sm:$0xff]
        %v688 = vld [vmem:[%s686 + $0x8] sm:$0xff]
        %v689 = vld [vmem:[%s686 + $0x10] sm:$0xff]
        %v690 = vld [vmem:[%s686 + $0x18] sm:$0xff]
        %691 = vst.msk [vmem:[#allocation2 + $0x25c] sm:$0xff] %vm385, %v687
        %692 = vst.msk [vmem:[#allocation2 + $0x264] sm:$0xff] %vm385, %v688
        %693 = vst.msk [vmem:[#allocation2 + $0x26c] sm:$0xff] %vm385, %v689
        %694 = vst.msk [vmem:[#allocation2 + $0x274] sm:$0xff] %vm385, %v690
        %s695 = scalar_lea.vmem %s383, 384
        %v696 = vld [vmem:[%s695] sm:$0xff]
        %v697 = vld [vmem:[%s695 + $0x8] sm:$0xff]
        %v698 = vld [vmem:[%s695 + $0x10] sm:$0xff]
        %v699 = vld [vmem:[%s695 + $0x18] sm:$0xff]
        %700 = vst.msk [vmem:[#allocation2 + $0x284] sm:$0xff] %vm385, %v696
        %701 = vst.msk [vmem:[#allocation2 + $0x28c] sm:$0xff] %vm385, %v697
        %702 = vst.msk [vmem:[#allocation2 + $0x294] sm:$0xff] %vm385, %v698
        %703 = vst.msk [vmem:[#allocation2 + $0x29c] sm:$0xff] %vm385, %v699
        %s704 = scalar_lea.vmem %s383, 416
        %v705 = vld [vmem:[%s704] sm:$0xff]
        %v706 = vld [vmem:[%s704 + $0x8] sm:$0xff]
        %v707 = vld [vmem:[%s704 + $0x10] sm:$0xff]
        %v708 = vld [vmem:[%s704 + $0x18] sm:$0xff]
        %709 = vst.msk [vmem:[#allocation2 + $0x2ac] sm:$0xff] %vm385, %v705
        %710 = vst.msk [vmem:[#allocation2 + $0x2b4] sm:$0xff] %vm385, %v706
        %711 = vst.msk [vmem:[#allocation2 + $0x2bc] sm:$0xff] %vm385, %v707
        %712 = vst.msk [vmem:[#allocation2 + $0x2c4] sm:$0xff] %vm385, %v708
        %s713 = scalar_lea.vmem %s383, 448
        %v714 = vld [vmem:[%s713] sm:$0xff]
        %v715 = vld [vmem:[%s713 + $0x8] sm:$0xff]
        %v716 = vld [vmem:[%s713 + $0x10] sm:$0xff]
        %v717 = vld [vmem:[%s713 + $0x18] sm:$0xff]
        %718 = vst.msk [vmem:[#allocation2 + $0x2d4] sm:$0xff] %vm385, %v714
        %719 = vst.msk [vmem:[#allocation2 + $0x2dc] sm:$0xff] %vm385, %v715
        %720 = vst.msk [vmem:[#allocation2 + $0x2e4] sm:$0xff] %vm385, %v716
        %721 = vst.msk [vmem:[#allocation2 + $0x2ec] sm:$0xff] %vm385, %v717
        %s722 = scalar_lea.vmem %s383, 480
        %v723 = vld [vmem:[%s722] sm:$0xff]
        %v724 = vld [vmem:[%s722 + $0x8] sm:$0xff]
        %v725 = vld [vmem:[%s722 + $0x10] sm:$0xff]
        %v726 = vld [vmem:[%s722 + $0x18] sm:$0xff]
        %727 = vst.msk [vmem:[#allocation2 + $0x2fc] sm:$0xff] %vm385, %v723
        %728 = vst.msk [vmem:[#allocation2 + $0x304] sm:$0xff] %vm385, %v724
        %729 = vst.msk [vmem:[#allocation2 + $0x30c] sm:$0xff] %vm385, %v725
        %730 = vst.msk [vmem:[#allocation2 + $0x314] sm:$0xff] %vm385, %v726
        %s731 = scalar_lea.vmem %s383, 512
        %v732 = vld [vmem:[%s731] sm:$0xff]
        %v733 = vld [vmem:[%s731 + $0x8] sm:$0xff]
        %v734 = vld [vmem:[%s731 + $0x10] sm:$0xff]
        %v735 = vld [vmem:[%s731 + $0x18] sm:$0xff]
        %736 = vst.msk [vmem:[#allocation2 + $0x324] sm:$0xff] %vm385, %v732
        %737 = vst.msk [vmem:[#allocation2 + $0x32c] sm:$0xff] %vm385, %v733
        %738 = vst.msk [vmem:[#allocation2 + $0x334] sm:$0xff] %vm385, %v734
        %739 = vst.msk [vmem:[#allocation2 + $0x33c] sm:$0xff] %vm385, %v735
        %s740 = scalar_lea.vmem %s383, 544
        %v741 = vld [vmem:[%s740] sm:$0xff]
        %v742 = vld [vmem:[%s740 + $0x8] sm:$0xff]
        %v743 = vld [vmem:[%s740 + $0x10] sm:$0xff]
        %v744 = vld [vmem:[%s740 + $0x18] sm:$0xff]
        %745 = vst.msk [vmem:[#allocation2 + $0x34c] sm:$0xff] %vm385, %v741
        %746 = vst.msk [vmem:[#allocation2 + $0x354] sm:$0xff] %vm385, %v742
        %747 = vst.msk [vmem:[#allocation2 + $0x35c] sm:$0xff] %vm385, %v743
        %748 = vst.msk [vmem:[#allocation2 + $0x364] sm:$0xff] %vm385, %v744
        %s749 = scalar_lea.vmem %s383, 576
        %v750 = vld [vmem:[%s749] sm:$0xff]
        %v751 = vld [vmem:[%s749 + $0x8] sm:$0xff]
        %v752 = vld [vmem:[%s749 + $0x10] sm:$0xff]
        %v753 = vld [vmem:[%s749 + $0x18] sm:$0xff]
        %754 = vst.msk [vmem:[#allocation2 + $0x374] sm:$0xff] %vm385, %v750
        %755 = vst.msk [vmem:[#allocation2 + $0x37c] sm:$0xff] %vm385, %v751
        %756 = vst.msk [vmem:[#allocation2 + $0x384] sm:$0xff] %vm385, %v752
        %757 = vst.msk [vmem:[#allocation2 + $0x38c] sm:$0xff] %vm385, %v753
        %s758 = scalar_lea.vmem %s383, 608
        %v759 = vld [vmem:[%s758] sm:$0xff]
        %v760 = vld [vmem:[%s758 + $0x8] sm:$0xff]
        %v761 = vld [vmem:[%s758 + $0x10] sm:$0xff]
        %v762 = vld [vmem:[%s758 + $0x18] sm:$0xff]
        %763 = vst.msk [vmem:[#allocation2 + $0x39c] sm:$0xff] %vm385, %v759
        %764 = vst.msk [vmem:[#allocation2 + $0x3a4] sm:$0xff] %vm385, %v760
        %765 = vst.msk [vmem:[#allocation2 + $0x3ac] sm:$0xff] %vm385, %v761
        %766 = vst.msk [vmem:[#allocation2 + $0x3b4] sm:$0xff] %vm385, %v762
        %s767 = scalar_lea.vmem %s383, 640
        %v768 = vld [vmem:[%s767] sm:$0xff]
        %v769 = vld [vmem:[%s767 + $0x8] sm:$0xff]
        %v770 = vld [vmem:[%s767 + $0x10] sm:$0xff]
        %v771 = vld [vmem:[%s767 + $0x18] sm:$0xff]
        %772 = vst.msk [vmem:[#allocation2 + $0x3c4] sm:$0xff] %vm385, %v768
        %773 = vst.msk [vmem:[#allocation2 + $0x3cc] sm:$0xff] %vm385, %v769
        %774 = vst.msk [vmem:[#allocation2 + $0x3d4] sm:$0xff] %vm385, %v770
        %775 = vst.msk [vmem:[#allocation2 + $0x3dc] sm:$0xff] %vm385, %v771
        %s776 = scalar_lea.vmem %s383, 672
        %v777 = vld [vmem:[%s776] sm:$0xff]
        %v778 = vld [vmem:[%s776 + $0x8] sm:$0xff]
        %v779 = vld [vmem:[%s776 + $0x10] sm:$0xff]
        %v780 = vld [vmem:[%s776 + $0x18] sm:$0xff]
        %781 = vst.msk [vmem:[#allocation2 + $0x3ec] sm:$0xff] %vm385, %v777
        %782 = vst.msk [vmem:[#allocation2 + $0x3f4] sm:$0xff] %vm385, %v778
        %783 = vst.msk [vmem:[#allocation2 + $0x3fc] sm:$0xff] %vm385, %v779
        %784 = vst.msk [vmem:[#allocation2 + $0x404] sm:$0xff] %vm385, %v780
        %s785 = scalar_lea.vmem %s383, 704
        %v786 = vld [vmem:[%s785] sm:$0xff]
        %v787 = vld [vmem:[%s785 + $0x8] sm:$0xff]
        %v788 = vld [vmem:[%s785 + $0x10] sm:$0xff]
        %v789 = vld [vmem:[%s785 + $0x18] sm:$0xff]
        %790 = vst.msk [vmem:[#allocation2 + $0x414] sm:$0xff] %vm385, %v786
        %791 = vst.msk [vmem:[#allocation2 + $0x41c] sm:$0xff] %vm385, %v787
        %792 = vst.msk [vmem:[#allocation2 + $0x424] sm:$0xff] %vm385, %v788
        %793 = vst.msk [vmem:[#allocation2 + $0x42c] sm:$0xff] %vm385, %v789
        %s794 = scalar_lea.vmem %s383, 736
        %v795 = vld [vmem:[%s794] sm:$0xff]
        %v796 = vld [vmem:[%s794 + $0x8] sm:$0xff]
        %v797 = vld [vmem:[%s794 + $0x10] sm:$0xff]
        %v798 = vld [vmem:[%s794 + $0x18] sm:$0xff]
        %799 = vst.msk [vmem:[#allocation2 + $0x43c] sm:$0xff] %vm385, %v795
        %800 = vst.msk [vmem:[#allocation2 + $0x444] sm:$0xff] %vm385, %v796
        %801 = vst.msk [vmem:[#allocation2 + $0x44c] sm:$0xff] %vm385, %v797
        %802 = vst.msk [vmem:[#allocation2 + $0x454] sm:$0xff] %vm385, %v798
        %s803 = scalar_lea.vmem %s383, 768
        %v804 = vld [vmem:[%s803] sm:$0xff]
        %v805 = vld [vmem:[%s803 + $0x8] sm:$0xff]
        %v806 = vld [vmem:[%s803 + $0x10] sm:$0xff]
        %v807 = vld [vmem:[%s803 + $0x18] sm:$0xff]
        %808 = vst.msk [vmem:[#allocation2 + $0x464] sm:$0xff] %vm385, %v804
        %809 = vst.msk [vmem:[#allocation2 + $0x46c] sm:$0xff] %vm385, %v805
        %810 = vst.msk [vmem:[#allocation2 + $0x474] sm:$0xff] %vm385, %v806
        %811 = vst.msk [vmem:[#allocation2 + $0x47c] sm:$0xff] %vm385, %v807
        %s812 = scalar_lea.vmem %s383, 800
        %v813 = vld [vmem:[%s812] sm:$0xff]
        %v814 = vld [vmem:[%s812 + $0x8] sm:$0xff]
        %v815 = vld [vmem:[%s812 + $0x10] sm:$0xff]
        %v816 = vld [vmem:[%s812 + $0x18] sm:$0xff]
        %817 = vst.msk [vmem:[#allocation2 + $0x48c] sm:$0xff] %vm385, %v813
        %818 = vst.msk [vmem:[#allocation2 + $0x494] sm:$0xff] %vm385, %v814
        %819 = vst.msk [vmem:[#allocation2 + $0x49c] sm:$0xff] %vm385, %v815
        %820 = vst.msk [vmem:[#allocation2 + $0x4a4] sm:$0xff] %vm385, %v816
        %s821 = scalar_lea.vmem %s383, 832
        %v822 = vld [vmem:[%s821] sm:$0xff]
        %v823 = vld [vmem:[%s821 + $0x8] sm:$0xff]
        %v824 = vld [vmem:[%s821 + $0x10] sm:$0xff]
        %v825 = vld [vmem:[%s821 + $0x18] sm:$0xff]
        %826 = vst.msk [vmem:[#allocation2 + $0x4b4] sm:$0xff] %vm385, %v822
        %827 = vst.msk [vmem:[#allocation2 + $0x4bc] sm:$0xff] %vm385, %v823
        %828 = vst.msk [vmem:[#allocation2 + $0x4c4] sm:$0xff] %vm385, %v824
        %829 = vst.msk [vmem:[#allocation2 + $0x4cc] sm:$0xff] %vm385, %v825
        %s830 = scalar_lea.vmem %s383, 864
        %v831 = vld [vmem:[%s830] sm:$0xff]
        %v832 = vld [vmem:[%s830 + $0x8] sm:$0xff]
        %v833 = vld [vmem:[%s830 + $0x10] sm:$0xff]
        %v834 = vld [vmem:[%s830 + $0x18] sm:$0xff]
        %835 = vst.msk [vmem:[#allocation2 + $0x4dc] sm:$0xff] %vm385, %v831
        %836 = vst.msk [vmem:[#allocation2 + $0x4e4] sm:$0xff] %vm385, %v832
        %837 = vst.msk [vmem:[#allocation2 + $0x4ec] sm:$0xff] %vm385, %v833
        %838 = vst.msk [vmem:[#allocation2 + $0x4f4] sm:$0xff] %vm385, %v834
        %s839 = scalar_lea.vmem %s383, 896
        %v840 = vld [vmem:[%s839] sm:$0xff]
        %v841 = vld [vmem:[%s839 + $0x8] sm:$0xff]
        %v842 = vld [vmem:[%s839 + $0x10] sm:$0xff]
        %v843 = vld [vmem:[%s839 + $0x18] sm:$0xff]
        %844 = vst.msk [vmem:[#allocation2 + $0x504] sm:$0xff] %vm385, %v840
        %845 = vst.msk [vmem:[#allocation2 + $0x50c] sm:$0xff] %vm385, %v841
        %846 = vst.msk [vmem:[#allocation2 + $0x514] sm:$0xff] %vm385, %v842
        %847 = vst.msk [vmem:[#allocation2 + $0x51c] sm:$0xff] %vm385, %v843
        %s848 = scalar_lea.vmem %s383, 928
        %v849 = vld [vmem:[%s848] sm:$0xff]
        %v850 = vld [vmem:[%s848 + $0x8] sm:$0xff]
        %v851 = vld [vmem:[%s848 + $0x10] sm:$0xff]
        %v852 = vld [vmem:[%s848 + $0x18] sm:$0xff]
        %853 = vst.msk [vmem:[#allocation2 + $0x52c] sm:$0xff] %vm385, %v849
        %854 = vst.msk [vmem:[#allocation2 + $0x534] sm:$0xff] %vm385, %v850
        %855 = vst.msk [vmem:[#allocation2 + $0x53c] sm:$0xff] %vm385, %v851
        %856 = vst.msk [vmem:[#allocation2 + $0x544] sm:$0xff] %vm385, %v852
        %s857 = scalar_lea.vmem %s383, 960
        %v858 = vld [vmem:[%s857] sm:$0xff]
        %v859 = vld [vmem:[%s857 + $0x8] sm:$0xff]
        %v860 = vld [vmem:[%s857 + $0x10] sm:$0xff]
        %v861 = vld [vmem:[%s857 + $0x18] sm:$0xff]
        %862 = vst.msk [vmem:[#allocation2 + $0x554] sm:$0xff] %vm385, %v858
        %863 = vst.msk [vmem:[#allocation2 + $0x55c] sm:$0xff] %vm385, %v859
        %864 = vst.msk [vmem:[#allocation2 + $0x564] sm:$0xff] %vm385, %v860
        %865 = vst.msk [vmem:[#allocation2 + $0x56c] sm:$0xff] %vm385, %v861
        %s866 = scalar_lea.vmem %s383, 992
        %v867 = vld [vmem:[%s866] sm:$0xff]
        %v868 = vld [vmem:[%s866 + $0x8] sm:$0xff]
        %v869 = vld [vmem:[%s866 + $0x10] sm:$0xff]
        %v870 = vld [vmem:[%s866 + $0x18] sm:$0xff]
        %871 = vst.msk [vmem:[#allocation2 + $0x57c] sm:$0xff] %vm385, %v867
        %872 = vst.msk [vmem:[#allocation2 + $0x584] sm:$0xff] %vm385, %v868
        %873 = vst.msk [vmem:[#allocation2 + $0x58c] sm:$0xff] %vm385, %v869
        %874 = vst.msk [vmem:[#allocation2 + $0x594] sm:$0xff] %vm385, %v870
        %v875 = vld [vmem:[%s2] sm:$0x1]
        %v877 = vlaneseq
        %v878 = vshrl.u32 %v877, 7
        %v879 = vsub.s32 0, %v878
        %v880 = vrot.slane %v875, %v879
        %vm882 = vcmask 261120
        %883 = vst.msk [vmem:[#allocation3] sm:$0xff] %vm882, %v880
        %884 = vst.msk [vmem:[#allocation3 + $0x8] sm:$0xff] %vm882, %v880
        %885 = vst.msk [vmem:[#allocation3 + $0x10] sm:$0xff] %vm882, %v880
        %886 = vst.msk [vmem:[#allocation3 + $0x18] sm:$0xff] %vm882, %v880
        %887 = vst.msk [vmem:[#allocation3 + $0x20] sm:$0xff] %vm882, %v880
        %888 = vst.msk [vmem:[#allocation3 + $0x28] sm:$0xff] %vm882, %v880
        %889 = vst.msk [vmem:[#allocation3 + $0x30] sm:$0xff] %vm882, %v880
        %890 = vst.msk [vmem:[#allocation3 + $0x38] sm:$0xff] %vm882, %v880
        %891 = vst.msk [vmem:[#allocation3 + $0x40] sm:$0xff] %vm882, %v880
        %892 = vst.msk [vmem:[#allocation3 + $0x48] sm:$0xff] %vm882, %v880
        %893 = vst.msk [vmem:[#allocation3 + $0x50] sm:$0xff] %vm882, %v880
        %894 = vst.msk [vmem:[#allocation3 + $0x58] sm:$0xff] %vm882, %v880
        %895 = vst.msk [vmem:[#allocation3 + $0x60] sm:$0xff] %vm882, %v880
        %896 = vst.msk [vmem:[#allocation3 + $0x68] sm:$0xff] %vm882, %v880
        %897 = vst.msk [vmem:[#allocation3 + $0x70] sm:$0xff] %vm882, %v880
        %898 = vst.msk [vmem:[#allocation3 + $0x78] sm:$0xff] %vm882, %v880
        %899 = vst.msk [vmem:[#allocation3 + $0x80] sm:$0xff] %vm882, %v880
        %900 = vst.msk [vmem:[#allocation3 + $0x88] sm:$0xff] %vm882, %v880
        %901 = vst.msk [vmem:[#allocation3 + $0x90] sm:$0xff] %vm882, %v880
        %902 = vst.msk [vmem:[#allocation3 + $0x98] sm:$0xff] %vm882, %v880
        %903 = vst.msk [vmem:[#allocation3 + $0xa0] sm:$0xff] %vm882, %v880
        %904 = vst.msk [vmem:[#allocation3 + $0xa8] sm:$0xff] %vm882, %v880
        %905 = vst.msk [vmem:[#allocation3 + $0xb0] sm:$0xff] %vm882, %v880
        %906 = vst.msk [vmem:[#allocation3 + $0xb8] sm:$0xff] %vm882, %v880
        %907 = vst.msk [vmem:[#allocation3 + $0xc0] sm:$0xff] %vm882, %v880
        %908 = vst.msk [vmem:[#allocation3 + $0xc8] sm:$0xff] %vm882, %v880
        %909 = vst.msk [vmem:[#allocation3 + $0xd0] sm:$0xff] %vm882, %v880
        %910 = vst.msk [vmem:[#allocation3 + $0xd8] sm:$0xff] %vm882, %v880
        %911 = vst.msk [vmem:[#allocation3 + $0xe0] sm:$0xff] %vm882, %v880
        %912 = vst.msk [vmem:[#allocation3 + $0xe8] sm:$0xff] %vm882, %v880
        %913 = vst.msk [vmem:[#allocation3 + $0xf0] sm:$0xff] %vm882, %v880
        %914 = vst.msk [vmem:[#allocation3 + $0xf8] sm:$0xff] %vm882, %v880
        %915 = vst.msk [vmem:[#allocation3 + $0x100] sm:$0xff] %vm882, %v880
        %916 = vst.msk [vmem:[#allocation3 + $0x108] sm:$0xff] %vm882, %v880
        %917 = vst.msk [vmem:[#allocation3 + $0x110] sm:$0xff] %vm882, %v880
        %918 = vst.msk [vmem:[#allocation3 + $0x118] sm:$0xff] %vm882, %v880
        %919 = vst.msk [vmem:[#allocation3 + $0x120] sm:$0xff] %vm882, %v880
        %920 = vst.msk [vmem:[#allocation3 + $0x128] sm:$0xff] %vm882, %v880
        %921 = vst.msk [vmem:[#allocation3 + $0x130] sm:$0xff] %vm882, %v880
        %922 = vst.msk [vmem:[#allocation3 + $0x138] sm:$0xff] %vm882, %v880
        %923 = vst.msk [vmem:[#allocation3 + $0x140] sm:$0xff] %vm882, %v880
        %924 = vst.msk [vmem:[#allocation3 + $0x148] sm:$0xff] %vm882, %v880
        %925 = vst.msk [vmem:[#allocation3 + $0x150] sm:$0xff] %vm882, %v880
        %926 = vst.msk [vmem:[#allocation3 + $0x158] sm:$0xff] %vm882, %v880
        %927 = vst.msk [vmem:[#allocation3 + $0x160] sm:$0xff] %vm882, %v880
        %928 = vst.msk [vmem:[#allocation3 + $0x168] sm:$0xff] %vm882, %v880
        %929 = vst.msk [vmem:[#allocation3 + $0x170] sm:$0xff] %vm882, %v880
        %930 = vst.msk [vmem:[#allocation3 + $0x178] sm:$0xff] %vm882, %v880
        %931 = vst.msk [vmem:[#allocation3 + $0x180] sm:$0xff] %vm882, %v880
        %932 = vst.msk [vmem:[#allocation3 + $0x188] sm:$0xff] %vm882, %v880
        %933 = vst.msk [vmem:[#allocation3 + $0x190] sm:$0xff] %vm882, %v880
        %934 = vst.msk [vmem:[#allocation3 + $0x198] sm:$0xff] %vm882, %v880
        %935 = vst.msk [vmem:[#allocation3 + $0x1a0] sm:$0xff] %vm882, %v880
        %936 = vst.msk [vmem:[#allocation3 + $0x1a8] sm:$0xff] %vm882, %v880
        %937 = vst.msk [vmem:[#allocation3 + $0x1b0] sm:$0xff] %vm882, %v880
        %938 = vst.msk [vmem:[#allocation3 + $0x1b8] sm:$0xff] %vm882, %v880
        %939 = vst.msk [vmem:[#allocation3 + $0x1c0] sm:$0xff] %vm882, %v880
        %940 = vst.msk [vmem:[#allocation3 + $0x1c8] sm:$0xff] %vm882, %v880
        %941 = vst.msk [vmem:[#allocation3 + $0x1d0] sm:$0xff] %vm882, %v880
        %942 = vst.msk [vmem:[#allocation3 + $0x1d8] sm:$0xff] %vm882, %v880
        %943 = vst.msk [vmem:[#allocation3 + $0x1e0] sm:$0xff] %vm882, %v880
        %944 = vst.msk [vmem:[#allocation3 + $0x1e8] sm:$0xff] %vm882, %v880
        %945 = vst.msk [vmem:[#allocation3 + $0x1f0] sm:$0xff] %vm882, %v880
        %946 = vst.msk [vmem:[#allocation3 + $0x1f8] sm:$0xff] %vm882, %v880
        %947 = vst.msk [vmem:[#allocation3 + $0x200] sm:$0xff] %vm882, %v880
        %948 = vst.msk [vmem:[#allocation3 + $0x208] sm:$0xff] %vm882, %v880
        %949 = vst.msk [vmem:[#allocation3 + $0x210] sm:$0xff] %vm882, %v880
        %950 = vst.msk [vmem:[#allocation3 + $0x218] sm:$0xff] %vm882, %v880
        %951 = vst.msk [vmem:[#allocation3 + $0x220] sm:$0xff] %vm882, %v880
        %952 = vst.msk [vmem:[#allocation3 + $0x228] sm:$0xff] %vm882, %v880
        %953 = vst.msk [vmem:[#allocation3 + $0x230] sm:$0xff] %vm882, %v880
        %954 = vst.msk [vmem:[#allocation3 + $0x238] sm:$0xff] %vm882, %v880
        %955 = vst.msk [vmem:[#allocation3 + $0x240] sm:$0xff] %vm882, %v880
        %956 = vst.msk [vmem:[#allocation3 + $0x248] sm:$0xff] %vm882, %v880
        %957 = vst.msk [vmem:[#allocation3 + $0x250] sm:$0xff] %vm882, %v880
        %958 = vst.msk [vmem:[#allocation3 + $0x258] sm:$0xff] %vm882, %v880
        %959 = vst.msk [vmem:[#allocation3 + $0x260] sm:$0xff] %vm882, %v880
        %960 = vst.msk [vmem:[#allocation3 + $0x268] sm:$0xff] %vm882, %v880
        %961 = vst.msk [vmem:[#allocation3 + $0x270] sm:$0xff] %vm882, %v880
        %962 = vst.msk [vmem:[#allocation3 + $0x278] sm:$0xff] %vm882, %v880
        %963 = vst.msk [vmem:[#allocation3 + $0x280] sm:$0xff] %vm882, %v880
        %964 = vst.msk [vmem:[#allocation3 + $0x288] sm:$0xff] %vm882, %v880
        %965 = vst.msk [vmem:[#allocation3 + $0x290] sm:$0xff] %vm882, %v880
        %966 = vst.msk [vmem:[#allocation3 + $0x298] sm:$0xff] %vm882, %v880
        %967 = vst.msk [vmem:[#allocation3 + $0x2a0] sm:$0xff] %vm882, %v880
        %968 = vst.msk [vmem:[#allocation3 + $0x2a8] sm:$0xff] %vm882, %v880
        %969 = vst.msk [vmem:[#allocation3 + $0x2b0] sm:$0xff] %vm882, %v880
        %970 = vst.msk [vmem:[#allocation3 + $0x2b8] sm:$0xff] %vm882, %v880
        %971 = vst.msk [vmem:[#allocation3 + $0x2c0] sm:$0xff] %vm882, %v880
        %972 = vst.msk [vmem:[#allocation3 + $0x2c8] sm:$0xff] %vm882, %v880
        %973 = vst.msk [vmem:[#allocation3 + $0x2d0] sm:$0xff] %vm882, %v880
        %974 = vst.msk [vmem:[#allocation3 + $0x2d8] sm:$0xff] %vm882, %v880
        %975 = vst.msk [vmem:[#allocation3 + $0x2e0] sm:$0xff] %vm882, %v880
        %976 = vst.msk [vmem:[#allocation3 + $0x2e8] sm:$0xff] %vm882, %v880
        %977 = vst.msk [vmem:[#allocation3 + $0x2f0] sm:$0xff] %vm882, %v880
        %978 = vst.msk [vmem:[#allocation3 + $0x2f8] sm:$0xff] %vm882, %v880
        %979 = vst.msk [vmem:[#allocation3 + $0x300] sm:$0xff] %vm882, %v880
        %980 = vst.msk [vmem:[#allocation3 + $0x308] sm:$0xff] %vm882, %v880
        %981 = vst.msk [vmem:[#allocation3 + $0x310] sm:$0xff] %vm882, %v880
        %982 = vst.msk [vmem:[#allocation3 + $0x318] sm:$0xff] %vm882, %v880
        %983 = vst.msk [vmem:[#allocation3 + $0x320] sm:$0xff] %vm882, %v880
        %984 = vst.msk [vmem:[#allocation3 + $0x328] sm:$0xff] %vm882, %v880
        %985 = vst.msk [vmem:[#allocation3 + $0x330] sm:$0xff] %vm882, %v880
        %986 = vst.msk [vmem:[#allocation3 + $0x338] sm:$0xff] %vm882, %v880
        %987 = vst.msk [vmem:[#allocation3 + $0x340] sm:$0xff] %vm882, %v880
        %988 = vst.msk [vmem:[#allocation3 + $0x348] sm:$0xff] %vm882, %v880
        %989 = vst.msk [vmem:[#allocation3 + $0x350] sm:$0xff] %vm882, %v880
        %990 = vst.msk [vmem:[#allocation3 + $0x358] sm:$0xff] %vm882, %v880
        %991 = vst.msk [vmem:[#allocation3 + $0x360] sm:$0xff] %vm882, %v880
        %992 = vst.msk [vmem:[#allocation3 + $0x368] sm:$0xff] %vm882, %v880
        %993 = vst.msk [vmem:[#allocation3 + $0x370] sm:$0xff] %vm882, %v880
        %994 = vst.msk [vmem:[#allocation3 + $0x378] sm:$0xff] %vm882, %v880
        %995 = vst.msk [vmem:[#allocation3 + $0x380] sm:$0xff] %vm882, %v880
        %996 = vst.msk [vmem:[#allocation3 + $0x388] sm:$0xff] %vm882, %v880
        %997 = vst.msk [vmem:[#allocation3 + $0x390] sm:$0xff] %vm882, %v880
        %998 = vst.msk [vmem:[#allocation3 + $0x398] sm:$0xff] %vm882, %v880
        %999 = vst.msk [vmem:[#allocation3 + $0x3a0] sm:$0xff] %vm882, %v880
        %1000 = vst.msk [vmem:[#allocation3 + $0x3a8] sm:$0xff] %vm882, %v880
        %1001 = vst.msk [vmem:[#allocation3 + $0x3b0] sm:$0xff] %vm882, %v880
        %1002 = vst.msk [vmem:[#allocation3 + $0x3b8] sm:$0xff] %vm882, %v880
        %1003 = vst.msk [vmem:[#allocation3 + $0x3c0] sm:$0xff] %vm882, %v880
        %1004 = vst.msk [vmem:[#allocation3 + $0x3c8] sm:$0xff] %vm882, %v880
        %1005 = vst.msk [vmem:[#allocation3 + $0x3d0] sm:$0xff] %vm882, %v880
        %1006 = vst.msk [vmem:[#allocation3 + $0x3d8] sm:$0xff] %vm882, %v880
        %1007 = vst.msk [vmem:[#allocation3 + $0x3e0] sm:$0xff] %vm882, %v880
        %1008 = vst.msk [vmem:[#allocation3 + $0x3e8] sm:$0xff] %vm882, %v880
        %1009 = vst.msk [vmem:[#allocation3 + $0x3f0] sm:$0xff] %vm882, %v880
        %1010 = vst.msk [vmem:[#allocation3 + $0x3f8] sm:$0xff] %vm882, %v880
        %1011 = vst.msk [vmem:[#allocation3 + $0x400] sm:$0xff] %vm882, %v880
        %1012 = vst.msk [vmem:[#allocation3 + $0x408] sm:$0xff] %vm882, %v880
        %1013 = vst.msk [vmem:[#allocation3 + $0x410] sm:$0xff] %vm882, %v880
        %1014 = vst.msk [vmem:[#allocation3 + $0x418] sm:$0xff] %vm882, %v880
        %1015 = vst.msk [vmem:[#allocation3 + $0x420] sm:$0xff] %vm882, %v880
        %1016 = vst.msk [vmem:[#allocation3 + $0x428] sm:$0xff] %vm882, %v880
        %1017 = vst.msk [vmem:[#allocation3 + $0x430] sm:$0xff] %vm882, %v880
        %1018 = vst.msk [vmem:[#allocation3 + $0x438] sm:$0xff] %vm882, %v880
        %1019 = vst.msk [vmem:[#allocation3 + $0x440] sm:$0xff] %vm882, %v880
        %1020 = vst.msk [vmem:[#allocation3 + $0x448] sm:$0xff] %vm882, %v880
        %1021 = vst.msk [vmem:[#allocation3 + $0x450] sm:$0xff] %vm882, %v880
        %1022 = vst.msk [vmem:[#allocation3 + $0x458] sm:$0xff] %vm882, %v880
        %1023 = vst.msk [vmem:[#allocation3 + $0x460] sm:$0xff] %vm882, %v880
        %1024 = vst.msk [vmem:[#allocation3 + $0x468] sm:$0xff] %vm882, %v880
        %1025 = vst.msk [vmem:[#allocation3 + $0x470] sm:$0xff] %vm882, %v880
        %1026 = vst.msk [vmem:[#allocation3 + $0x478] sm:$0xff] %vm882, %v880
        %1027 = vst.msk [vmem:[#allocation3 + $0x480] sm:$0xff] %vm882, %v880
        %1028 = vst.msk [vmem:[#allocation3 + $0x488] sm:$0xff] %vm882, %v880
        %1029 = vst.msk [vmem:[#allocation3 + $0x490] sm:$0xff] %vm882, %v880
        %1030 = vst.msk [vmem:[#allocation3 + $0x498] sm:$0xff] %vm882, %v880
        %1031 = vst.msk [vmem:[#allocation3 + $0x4a0] sm:$0xff] %vm882, %v880
        %1032 = vst.msk [vmem:[#allocation3 + $0x4a8] sm:$0xff] %vm882, %v880
        %1033 = vst.msk [vmem:[#allocation3 + $0x4b0] sm:$0xff] %vm882, %v880
        %1034 = vst.msk [vmem:[#allocation3 + $0x4b8] sm:$0xff] %vm882, %v880
        %1035 = vst.msk [vmem:[#allocation3 + $0x4c0] sm:$0xff] %vm882, %v880
        %1036 = vst.msk [vmem:[#allocation3 + $0x4c8] sm:$0xff] %vm882, %v880
        %1037 = vst.msk [vmem:[#allocation3 + $0x4d0] sm:$0xff] %vm882, %v880
        %1038 = vst.msk [vmem:[#allocation3 + $0x4d8] sm:$0xff] %vm882, %v880
        %1039 = vst.msk [vmem:[#allocation3 + $0x4e0] sm:$0xff] %vm882, %v880
        %1040 = vst.msk [vmem:[#allocation3 + $0x4e8] sm:$0xff] %vm882, %v880
        %1041 = vst.msk [vmem:[#allocation3 + $0x4f0] sm:$0xff] %vm882, %v880
        %1042 = vst.msk [vmem:[#allocation3 + $0x4f8] sm:$0xff] %vm882, %v880
        %1043 = vst.msk [vmem:[#allocation3 + $0x500] sm:$0xff] %vm882, %v880
        %1044 = vst.msk [vmem:[#allocation3 + $0x508] sm:$0xff] %vm882, %v880
        %1045 = vst.msk [vmem:[#allocation3 + $0x510] sm:$0xff] %vm882, %v880
        %1046 = vst.msk [vmem:[#allocation3 + $0x518] sm:$0xff] %vm882, %v880
        %1047 = vst.msk [vmem:[#allocation3 + $0x520] sm:$0xff] %vm882, %v880
        %1048 = vst.msk [vmem:[#allocation3 + $0x528] sm:$0xff] %vm882, %v880
        %1049 = vst.msk [vmem:[#allocation3 + $0x530] sm:$0xff] %vm882, %v880
        %1050 = vst.msk [vmem:[#allocation3 + $0x538] sm:$0xff] %vm882, %v880
        %1051 = vst.msk [vmem:[#allocation3 + $0x540] sm:$0xff] %vm882, %v880
        %1052 = vst.msk [vmem:[#allocation3 + $0x548] sm:$0xff] %vm882, %v880
        %1053 = vst.msk [vmem:[#allocation3 + $0x550] sm:$0xff] %vm882, %v880
        %1054 = vst.msk [vmem:[#allocation3 + $0x558] sm:$0xff] %vm882, %v880
        %1055 = vst.msk [vmem:[#allocation3 + $0x560] sm:$0xff] %vm882, %v880
        %1056 = vst.msk [vmem:[#allocation3 + $0x568] sm:$0xff] %vm882, %v880
        %1057 = vst.msk [vmem:[#allocation3 + $0x570] sm:$0xff] %vm882, %v880
        %1058 = vst.msk [vmem:[#allocation3 + $0x578] sm:$0xff] %vm882, %v880
        %1059 = vst.msk [vmem:[#allocation3 + $0x580] sm:$0xff] %vm882, %v880
        %1060 = vst.msk [vmem:[#allocation3 + $0x588] sm:$0xff] %vm882, %v880
        %1061 = vst.msk [vmem:[#allocation3 + $0x590] sm:$0xff] %vm882, %v880
        %1062 = vst.msk [vmem:[#allocation3 + $0x598] sm:$0xff] %vm882, %v880
        loop: start=0, step=1, limit=5
        $region65: #{_tudui_forward.1} parent=63 // loop_pre_header
          _
        $region66: #{_tudui_forward.1} parent=63 // loop_header
          %s1064 = sphi 0, %s1068
          %p1065 = scmp.ge.s32.totalorder %s1064, 5
        $region67: #{_tudui_forward.1} parent=63 // loop_header_branch
          %1067 = sbr.rel (%p1065) target = $region71
        $region68: #{_tudui_forward.1} parent=63 // loop_body
          loop: start=0, step=1, limit=5
          $region72: #{_tudui_forward.1} parent=68 // loop_pre_header
            _
          $region73: #{_tudui_forward.1} parent=68 // loop_header
            %s1070 = sphi 0, %s1074
            %p1071 = scmp.ge.s32.totalorder %s1070, 5
          $region74: #{_tudui_forward.1} parent=68 // loop_header_branch
            %1073 = sbr.rel (%p1071) target = $region78
          $region75: #{_tudui_forward.1} parent=68 // loop_body
            %s1075 = ssub.s32 %s1064, 2
            %s1076 = smul.u32 %s1075, 40
            %s1077 = sadd.s32 %s1076, 82
            %s1078 = ssub.s32 %s1070, 2
            %s1079 = sadd.s32 %s1077, %s1078
            %s1080 = scalar_lea.vmem [#allocation2], %s1079
            %v1081 = vld [vmem:[%s1080] sm:$0xff]
            %v1082 = vld [vmem:[%s1080 + $0x8] sm:$0xff]
            %v1083 = vld [vmem:[%s1080 + $0x10] sm:$0xff]
            %v1084 = vld [vmem:[%s1080 + $0x18] sm:$0xff]
            %v1085 = vld [vmem:[%s1080 + $0x20] sm:$0xff]
            %v1086 = vld [vmem:[%s1080 + $0x28] sm:$0xff]
            %v1087 = vld [vmem:[%s1080 + $0x30] sm:$0xff]
            %v1088 = vld [vmem:[%s1080 + $0x38] sm:$0xff]
            %v1089 = vld [vmem:[%s1080 + $0x40] sm:$0xff]
            %v1090 = vld [vmem:[%s1080 + $0x48] sm:$0xff]
            %v1091 = vld [vmem:[%s1080 + $0x50] sm:$0xff]
            %v1092 = vld [vmem:[%s1080 + $0x58] sm:$0xff]
            %v1093 = vld [vmem:[%s1080 + $0x60] sm:$0xff]
            %v1094 = vld [vmem:[%s1080 + $0x68] sm:$0xff]
            %v1095 = vld [vmem:[%s1080 + $0x70] sm:$0xff]
            %v1096 = vld [vmem:[%s1080 + $0x78] sm:$0xff]
            %v1097 = vld [vmem:[%s1080 + $0x80] sm:$0xff]
            %v1098 = vld [vmem:[%s1080 + $0x88] sm:$0xff]
            %v1099 = vld [vmem:[%s1080 + $0x90] sm:$0xff]
            %v1100 = vld [vmem:[%s1080 + $0x98] sm:$0xff]
            %v1101 = vld [vmem:[%s1080 + $0xa0] sm:$0xff]
            %v1102 = vld [vmem:[%s1080 + $0xa8] sm:$0xff]
            %v1103 = vld [vmem:[%s1080 + $0xb0] sm:$0xff]
            %v1104 = vld [vmem:[%s1080 + $0xb8] sm:$0xff]
            %v1105 = vld [vmem:[%s1080 + $0xc0] sm:$0xff]
            %v1106 = vld [vmem:[%s1080 + $0xc8] sm:$0xff]
            %v1107 = vld [vmem:[%s1080 + $0xd0] sm:$0xff]
            %v1108 = vld [vmem:[%s1080 + $0xd8] sm:$0xff]
            %v1109 = vld [vmem:[%s1080 + $0xe0] sm:$0xff]
            %v1110 = vld [vmem:[%s1080 + $0xe8] sm:$0xff]
            %v1111 = vld [vmem:[%s1080 + $0xf0] sm:$0xff]
            %v1112 = vld [vmem:[%s1080 + $0xf8] sm:$0xff]
            %v1113 = vld [vmem:[%s1080 + $0x100] sm:$0xff]
            %v1114 = vld [vmem:[%s1080 + $0x108] sm:$0xff]
            %v1115 = vld [vmem:[%s1080 + $0x110] sm:$0xff]
            %v1116 = vld [vmem:[%s1080 + $0x118] sm:$0xff]
            %v1117 = vld [vmem:[%s1080 + $0x120] sm:$0xff]
            %v1118 = vld [vmem:[%s1080 + $0x128] sm:$0xff]
            %v1119 = vld [vmem:[%s1080 + $0x130] sm:$0xff]
            %v1120 = vld [vmem:[%s1080 + $0x138] sm:$0xff]
            %v1121 = vld [vmem:[%s1080 + $0x140] sm:$0xff]
            %v1122 = vld [vmem:[%s1080 + $0x148] sm:$0xff]
            %v1123 = vld [vmem:[%s1080 + $0x150] sm:$0xff]
            %v1124 = vld [vmem:[%s1080 + $0x158] sm:$0xff]
            %v1125 = vld [vmem:[%s1080 + $0x160] sm:$0xff]
            %v1126 = vld [vmem:[%s1080 + $0x168] sm:$0xff]
            %v1127 = vld [vmem:[%s1080 + $0x170] sm:$0xff]
            %v1128 = vld [vmem:[%s1080 + $0x178] sm:$0xff]
            %v1129 = vld [vmem:[%s1080 + $0x180] sm:$0xff]
            %v1130 = vld [vmem:[%s1080 + $0x188] sm:$0xff]
            %v1131 = vld [vmem:[%s1080 + $0x190] sm:$0xff]
            %v1132 = vld [vmem:[%s1080 + $0x198] sm:$0xff]
            %v1133 = vld [vmem:[%s1080 + $0x1a0] sm:$0xff]
            %v1134 = vld [vmem:[%s1080 + $0x1a8] sm:$0xff]
            %v1135 = vld [vmem:[%s1080 + $0x1b0] sm:$0xff]
            %v1136 = vld [vmem:[%s1080 + $0x1b8] sm:$0xff]
            %v1137 = vld [vmem:[%s1080 + $0x1c0] sm:$0xff]
            %v1138 = vld [vmem:[%s1080 + $0x1c8] sm:$0xff]
            %v1139 = vld [vmem:[%s1080 + $0x1d0] sm:$0xff]
            %v1140 = vld [vmem:[%s1080 + $0x1d8] sm:$0xff]
            %v1141 = vld [vmem:[%s1080 + $0x1e0] sm:$0xff]
            %v1142 = vld [vmem:[%s1080 + $0x1e8] sm:$0xff]
            %v1143 = vld [vmem:[%s1080 + $0x1f0] sm:$0xff]
            %v1144 = vld [vmem:[%s1080 + $0x1f8] sm:$0xff]
            %v1145 = vld [vmem:[%s1080 + $0x200] sm:$0xff]
            %v1146 = vld [vmem:[%s1080 + $0x208] sm:$0xff]
            %v1147 = vld [vmem:[%s1080 + $0x210] sm:$0xff]
            %v1148 = vld [vmem:[%s1080 + $0x218] sm:$0xff]
            %v1149 = vld [vmem:[%s1080 + $0x220] sm:$0xff]
            %v1150 = vld [vmem:[%s1080 + $0x228] sm:$0xff]
            %v1151 = vld [vmem:[%s1080 + $0x230] sm:$0xff]
            %v1152 = vld [vmem:[%s1080 + $0x238] sm:$0xff]
            %v1153 = vld [vmem:[%s1080 + $0x240] sm:$0xff]
            %v1154 = vld [vmem:[%s1080 + $0x248] sm:$0xff]
            %v1155 = vld [vmem:[%s1080 + $0x250] sm:$0xff]
            %v1156 = vld [vmem:[%s1080 + $0x258] sm:$0xff]
            %v1157 = vld [vmem:[%s1080 + $0x260] sm:$0xff]
            %v1158 = vld [vmem:[%s1080 + $0x268] sm:$0xff]
            %v1159 = vld [vmem:[%s1080 + $0x270] sm:$0xff]
            %v1160 = vld [vmem:[%s1080 + $0x278] sm:$0xff]
            %v1161 = vld [vmem:[%s1080 + $0x280] sm:$0xff]
            %v1162 = vld [vmem:[%s1080 + $0x288] sm:$0xff]
            %v1163 = vld [vmem:[%s1080 + $0x290] sm:$0xff]
            %v1164 = vld [vmem:[%s1080 + $0x298] sm:$0xff]
            %v1165 = vld [vmem:[%s1080 + $0x2a0] sm:$0xff]
            %v1166 = vld [vmem:[%s1080 + $0x2a8] sm:$0xff]
            %v1167 = vld [vmem:[%s1080 + $0x2b0] sm:$0xff]
            %v1168 = vld [vmem:[%s1080 + $0x2b8] sm:$0xff]
            %v1169 = vld [vmem:[%s1080 + $0x2c0] sm:$0xff]
            %v1170 = vld [vmem:[%s1080 + $0x2c8] sm:$0xff]
            %v1171 = vld [vmem:[%s1080 + $0x2d0] sm:$0xff]
            %v1172 = vld [vmem:[%s1080 + $0x2d8] sm:$0xff]
            %v1173 = vld [vmem:[%s1080 + $0x2e0] sm:$0xff]
            %v1174 = vld [vmem:[%s1080 + $0x2e8] sm:$0xff]
            %v1175 = vld [vmem:[%s1080 + $0x2f0] sm:$0xff]
            %v1176 = vld [vmem:[%s1080 + $0x2f8] sm:$0xff]
            %v1177 = vld [vmem:[%s1080 + $0x300] sm:$0xff]
            %v1178 = vld [vmem:[%s1080 + $0x308] sm:$0xff]
            %v1179 = vld [vmem:[%s1080 + $0x310] sm:$0xff]
            %v1180 = vld [vmem:[%s1080 + $0x318] sm:$0xff]
            %v1181 = vld [vmem:[%s1080 + $0x320] sm:$0xff]
            %v1182 = vld [vmem:[%s1080 + $0x328] sm:$0xff]
            %v1183 = vld [vmem:[%s1080 + $0x330] sm:$0xff]
            %v1184 = vld [vmem:[%s1080 + $0x338] sm:$0xff]
            %v1185 = vld [vmem:[%s1080 + $0x340] sm:$0xff]
            %v1186 = vld [vmem:[%s1080 + $0x348] sm:$0xff]
            %v1187 = vld [vmem:[%s1080 + $0x350] sm:$0xff]
            %v1188 = vld [vmem:[%s1080 + $0x358] sm:$0xff]
            %v1189 = vld [vmem:[%s1080 + $0x360] sm:$0xff]
            %v1190 = vld [vmem:[%s1080 + $0x368] sm:$0xff]
            %v1191 = vld [vmem:[%s1080 + $0x370] sm:$0xff]
            %v1192 = vld [vmem:[%s1080 + $0x378] sm:$0xff]
            %v1193 = vld [vmem:[%s1080 + $0x380] sm:$0xff]
            %v1194 = vld [vmem:[%s1080 + $0x388] sm:$0xff]
            %v1195 = vld [vmem:[%s1080 + $0x390] sm:$0xff]
            %v1196 = vld [vmem:[%s1080 + $0x398] sm:$0xff]
            %v1197 = vld [vmem:[%s1080 + $0x3a0] sm:$0xff]
            %v1198 = vld [vmem:[%s1080 + $0x3a8] sm:$0xff]
            %v1199 = vld [vmem:[%s1080 + $0x3b0] sm:$0xff]
            %v1200 = vld [vmem:[%s1080 + $0x3b8] sm:$0xff]
            %v1201 = vld [vmem:[%s1080 + $0x3c0] sm:$0xff]
            %v1202 = vld [vmem:[%s1080 + $0x3c8] sm:$0xff]
            %v1203 = vld [vmem:[%s1080 + $0x3d0] sm:$0xff]
            %v1204 = vld [vmem:[%s1080 + $0x3d8] sm:$0xff]
            %v1205 = vld [vmem:[%s1080 + $0x3e0] sm:$0xff]
            %v1206 = vld [vmem:[%s1080 + $0x3e8] sm:$0xff]
            %v1207 = vld [vmem:[%s1080 + $0x3f0] sm:$0xff]
            %v1208 = vld [vmem:[%s1080 + $0x3f8] sm:$0xff]
            %v1209 = vld [vmem:[%s1080 + $0x400] sm:$0xff]
            %v1210 = vld [vmem:[%s1080 + $0x408] sm:$0xff]
            %v1211 = vld [vmem:[%s1080 + $0x410] sm:$0xff]
            %v1212 = vld [vmem:[%s1080 + $0x418] sm:$0xff]
            %v1213 = vld [vmem:[%s1080 + $0x420] sm:$0xff]
            %v1214 = vld [vmem:[%s1080 + $0x428] sm:$0xff]
            %v1215 = vld [vmem:[%s1080 + $0x430] sm:$0xff]
            %v1216 = vld [vmem:[%s1080 + $0x438] sm:$0xff]
            %v1217 = vld [vmem:[%s1080 + $0x440] sm:$0xff]
            %v1218 = vld [vmem:[%s1080 + $0x448] sm:$0xff]
            %v1219 = vld [vmem:[%s1080 + $0x450] sm:$0xff]
            %v1220 = vld [vmem:[%s1080 + $0x458] sm:$0xff]
            %v1221 = vld [vmem:[%s1080 + $0x460] sm:$0xff]
            %v1222 = vld [vmem:[%s1080 + $0x468] sm:$0xff]
            %v1223 = vld [vmem:[%s1080 + $0x470] sm:$0xff]
            %v1224 = vld [vmem:[%s1080 + $0x478] sm:$0xff]
            %v1225 = vld [vmem:[%s1080 + $0x480] sm:$0xff]
            %v1226 = vld [vmem:[%s1080 + $0x488] sm:$0xff]
            %v1227 = vld [vmem:[%s1080 + $0x490] sm:$0xff]
            %v1228 = vld [vmem:[%s1080 + $0x498] sm:$0xff]
            %v1229 = vld [vmem:[%s1080 + $0x4a0] sm:$0xff]
            %v1230 = vld [vmem:[%s1080 + $0x4a8] sm:$0xff]
            %v1231 = vld [vmem:[%s1080 + $0x4b0] sm:$0xff]
            %v1232 = vld [vmem:[%s1080 + $0x4b8] sm:$0xff]
            %v1233 = vld [vmem:[%s1080 + $0x4c0] sm:$0xff]
            %v1234 = vld [vmem:[%s1080 + $0x4c8] sm:$0xff]
            %v1235 = vld [vmem:[%s1080 + $0x4d0] sm:$0xff]
            %v1236 = vld [vmem:[%s1080 + $0x4d8] sm:$0xff]
            %v1237 = vld [vmem:[%s1080 + $0x4e0] sm:$0xff]
            %v1238 = vld [vmem:[%s1080 + $0x4e8] sm:$0xff]
            %v1239 = vld [vmem:[%s1080 + $0x4f0] sm:$0xff]
            %v1240 = vld [vmem:[%s1080 + $0x4f8] sm:$0xff]
            %v1241 = vld [vmem:[%s1080 + $0x500] sm:$0xff]
            %v1242 = vld [vmem:[%s1080 + $0x508] sm:$0xff]
            %v1243 = vld [vmem:[%s1080 + $0x510] sm:$0xff]
            %v1244 = vld [vmem:[%s1080 + $0x518] sm:$0xff]
            %v1245 = vld [vmem:[%s1080 + $0x520] sm:$0xff]
            %v1246 = vld [vmem:[%s1080 + $0x528] sm:$0xff]
            %v1247 = vld [vmem:[%s1080 + $0x530] sm:$0xff]
            %v1248 = vld [vmem:[%s1080 + $0x538] sm:$0xff]
            %v1249 = vld [vmem:[%s1080 + $0x540] sm:$0xff]
            %v1250 = vld [vmem:[%s1080 + $0x548] sm:$0xff]
            %v1251 = vld [vmem:[%s1080 + $0x550] sm:$0xff]
            %v1252 = vld [vmem:[%s1080 + $0x558] sm:$0xff]
            %v1253 = vld [vmem:[%s1080 + $0x560] sm:$0xff]
            %v1254 = vld [vmem:[%s1080 + $0x568] sm:$0xff]
            %v1255 = vld [vmem:[%s1080 + $0x570] sm:$0xff]
            %v1256 = vld [vmem:[%s1080 + $0x578] sm:$0xff]
            %v1257 = vld [vmem:[%s1080 + $0x580] sm:$0xff]
            %v1258 = vld [vmem:[%s1080 + $0x588] sm:$0xff]
            %v1259 = vld [vmem:[%s1080 + $0x590] sm:$0xff]
            %v1260 = vld [vmem:[%s1080 + $0x598] sm:$0xff]
            %v1261 = vpack.c.bf16 %v1082, %v1081
            %v1262 = vpack.c.bf16 %v1084, %v1083
            %v1263 = vpack.c.bf16 %v1086, %v1085
            %v1264 = vpack.c.bf16 %v1088, %v1087
            %v1265 = vpack.c.bf16 %v1090, %v1089
            %v1266 = vpack.c.bf16 %v1092, %v1091
            %v1267 = vpack.c.bf16 %v1094, %v1093
            %v1268 = vpack.c.bf16 %v1096, %v1095
            %v1269 = vpack.c.bf16 %v1098, %v1097
            %v1270 = vpack.c.bf16 %v1100, %v1099
            %v1271 = vpack.c.bf16 %v1102, %v1101
            %v1272 = vpack.c.bf16 %v1104, %v1103
            %v1273 = vpack.c.bf16 %v1106, %v1105
            %v1274 = vpack.c.bf16 %v1108, %v1107
            %v1275 = vpack.c.bf16 %v1110, %v1109
            %v1276 = vpack.c.bf16 %v1112, %v1111
            %v1277 = vpack.c.bf16 %v1114, %v1113
            %v1278 = vpack.c.bf16 %v1116, %v1115
            %v1279 = vpack.c.bf16 %v1118, %v1117
            %v1280 = vpack.c.bf16 %v1120, %v1119
            %v1281 = vpack.c.bf16 %v1122, %v1121
            %v1282 = vpack.c.bf16 %v1124, %v1123
            %v1283 = vpack.c.bf16 %v1126, %v1125
            %v1284 = vpack.c.bf16 %v1128, %v1127
            %v1285 = vpack.c.bf16 %v1130, %v1129
            %v1286 = vpack.c.bf16 %v1132, %v1131
            %v1287 = vpack.c.bf16 %v1134, %v1133
            %v1288 = vpack.c.bf16 %v1136, %v1135
            %v1289 = vpack.c.bf16 %v1138, %v1137
            %v1290 = vpack.c.bf16 %v1140, %v1139
            %v1291 = vpack.c.bf16 %v1142, %v1141
            %v1292 = vpack.c.bf16 %v1144, %v1143
            %v1293 = vpack.c.bf16 %v1146, %v1145
            %v1294 = vpack.c.bf16 %v1148, %v1147
            %v1295 = vpack.c.bf16 %v1150, %v1149
            %v1296 = vpack.c.bf16 %v1152, %v1151
            %v1297 = vpack.c.bf16 %v1154, %v1153
            %v1298 = vpack.c.bf16 %v1156, %v1155
            %v1299 = vpack.c.bf16 %v1158, %v1157
            %v1300 = vpack.c.bf16 %v1160, %v1159
            %v1301 = vpack.c.bf16 %v1162, %v1161
            %v1302 = vpack.c.bf16 %v1164, %v1163
            %v1303 = vpack.c.bf16 %v1166, %v1165
            %v1304 = vpack.c.bf16 %v1168, %v1167
            %v1305 = vpack.c.bf16 %v1170, %v1169
            %v1306 = vpack.c.bf16 %v1172, %v1171
            %v1307 = vpack.c.bf16 %v1174, %v1173
            %v1308 = vpack.c.bf16 %v1176, %v1175
            %v1309 = vpack.c.bf16 %v1178, %v1177
            %v1310 = vpack.c.bf16 %v1180, %v1179
            %v1311 = vpack.c.bf16 %v1182, %v1181
            %v1312 = vpack.c.bf16 %v1184, %v1183
            %v1313 = vpack.c.bf16 %v1186, %v1185
            %v1314 = vpack.c.bf16 %v1188, %v1187
            %v1315 = vpack.c.bf16 %v1190, %v1189
            %v1316 = vpack.c.bf16 %v1192, %v1191
            %v1317 = vpack.c.bf16 %v1194, %v1193
            %v1318 = vpack.c.bf16 %v1196, %v1195
            %v1319 = vpack.c.bf16 %v1198, %v1197
            %v1320 = vpack.c.bf16 %v1200, %v1199
            %v1321 = vpack.c.bf16 %v1202, %v1201
            %v1322 = vpack.c.bf16 %v1204, %v1203
            %v1323 = vpack.c.bf16 %v1206, %v1205
            %v1324 = vpack.c.bf16 %v1208, %v1207
            %v1325 = vpack.c.bf16 %v1210, %v1209
            %v1326 = vpack.c.bf16 %v1212, %v1211
            %v1327 = vpack.c.bf16 %v1214, %v1213
            %v1328 = vpack.c.bf16 %v1216, %v1215
            %v1329 = vpack.c.bf16 %v1218, %v1217
            %v1330 = vpack.c.bf16 %v1220, %v1219
            %v1331 = vpack.c.bf16 %v1222, %v1221
            %v1332 = vpack.c.bf16 %v1224, %v1223
            %v1333 = vpack.c.bf16 %v1226, %v1225
            %v1334 = vpack.c.bf16 %v1228, %v1227
            %v1335 = vpack.c.bf16 %v1230, %v1229
            %v1336 = vpack.c.bf16 %v1232, %v1231
            %v1337 = vpack.c.bf16 %v1234, %v1233
            %v1338 = vpack.c.bf16 %v1236, %v1235
            %v1339 = vpack.c.bf16 %v1238, %v1237
            %v1340 = vpack.c.bf16 %v1240, %v1239
            %v1341 = vpack.c.bf16 %v1242, %v1241
            %v1342 = vpack.c.bf16 %v1244, %v1243
            %v1343 = vpack.c.bf16 %v1246, %v1245
            %v1344 = vpack.c.bf16 %v1248, %v1247
            %v1345 = vpack.c.bf16 %v1250, %v1249
            %v1346 = vpack.c.bf16 %v1252, %v1251
            %v1347 = vpack.c.bf16 %v1254, %v1253
            %v1348 = vpack.c.bf16 %v1256, %v1255
            %v1349 = vpack.c.bf16 %v1258, %v1257
            %v1350 = vpack.c.bf16 %v1260, %v1259
            %v1351 = vld [vmem:[#allocation3] sm:$0xff]
            %v1352 = vld [vmem:[#allocation3 + $0x8] sm:$0xff]
            %v1353 = vld [vmem:[#allocation3 + $0x10] sm:$0xff]
            %v1354 = vld [vmem:[#allocation3 + $0x18] sm:$0xff]
            %v1355 = vld [vmem:[#allocation3 + $0x20] sm:$0xff]
            %v1356 = vld [vmem:[#allocation3 + $0x28] sm:$0xff]
            %v1357 = vld [vmem:[#allocation3 + $0x30] sm:$0xff]
            %v1358 = vld [vmem:[#allocation3 + $0x38] sm:$0xff]
            %v1359 = vld [vmem:[#allocation3 + $0x40] sm:$0xff]
            %v1360 = vld [vmem:[#allocation3 + $0x48] sm:$0xff]
            %v1361 = vld [vmem:[#allocation3 + $0x50] sm:$0xff]
            %v1362 = vld [vmem:[#allocation3 + $0x58] sm:$0xff]
            %v1363 = vld [vmem:[#allocation3 + $0x60] sm:$0xff]
            %v1364 = vld [vmem:[#allocation3 + $0x68] sm:$0xff]
            %v1365 = vld [vmem:[#allocation3 + $0x70] sm:$0xff]
            %v1366 = vld [vmem:[#allocation3 + $0x78] sm:$0xff]
            %v1367 = vld [vmem:[#allocation3 + $0x80] sm:$0xff]
            %v1368 = vld [vmem:[#allocation3 + $0x88] sm:$0xff]
            %v1369 = vld [vmem:[#allocation3 + $0x90] sm:$0xff]
            %v1370 = vld [vmem:[#allocation3 + $0x98] sm:$0xff]
            %v1371 = vld [vmem:[#allocation3 + $0xa0] sm:$0xff]
            %v1372 = vld [vmem:[#allocation3 + $0xa8] sm:$0xff]
            %v1373 = vld [vmem:[#allocation3 + $0xb0] sm:$0xff]
            %v1374 = vld [vmem:[#allocation3 + $0xb8] sm:$0xff]
            %v1375 = vld [vmem:[#allocation3 + $0xc0] sm:$0xff]
            %v1376 = vld [vmem:[#allocation3 + $0xc8] sm:$0xff]
            %v1377 = vld [vmem:[#allocation3 + $0xd0] sm:$0xff]
            %v1378 = vld [vmem:[#allocation3 + $0xd8] sm:$0xff]
            %v1379 = vld [vmem:[#allocation3 + $0xe0] sm:$0xff]
            %v1380 = vld [vmem:[#allocation3 + $0xe8] sm:$0xff]
            %v1381 = vld [vmem:[#allocation3 + $0xf0] sm:$0xff]
            %v1382 = vld [vmem:[#allocation3 + $0xf8] sm:$0xff]
            %v1383 = vld [vmem:[#allocation3 + $0x100] sm:$0xff]
            %v1384 = vld [vmem:[#allocation3 + $0x108] sm:$0xff]
            %v1385 = vld [vmem:[#allocation3 + $0x110] sm:$0xff]
            %v1386 = vld [vmem:[#allocation3 + $0x118] sm:$0xff]
            %v1387 = vld [vmem:[#allocation3 + $0x120] sm:$0xff]
            %v1388 = vld [vmem:[#allocation3 + $0x128] sm:$0xff]
            %v1389 = vld [vmem:[#allocation3 + $0x130] sm:$0xff]
            %v1390 = vld [vmem:[#allocation3 + $0x138] sm:$0xff]
            %v1391 = vld [vmem:[#allocation3 + $0x140] sm:$0xff]
            %v1392 = vld [vmem:[#allocation3 + $0x148] sm:$0xff]
            %v1393 = vld [vmem:[#allocation3 + $0x150] sm:$0xff]
            %v1394 = vld [vmem:[#allocation3 + $0x158] sm:$0xff]
            %v1395 = vld [vmem:[#allocation3 + $0x160] sm:$0xff]
            %v1396 = vld [vmem:[#allocation3 + $0x168] sm:$0xff]
            %v1397 = vld [vmem:[#allocation3 + $0x170] sm:$0xff]
            %v1398 = vld [vmem:[#allocation3 + $0x178] sm:$0xff]
            %v1399 = vld [vmem:[#allocation3 + $0x180] sm:$0xff]
            %v1400 = vld [vmem:[#allocation3 + $0x188] sm:$0xff]
            %v1401 = vld [vmem:[#allocation3 + $0x190] sm:$0xff]
            %v1402 = vld [vmem:[#allocation3 + $0x198] sm:$0xff]
            %v1403 = vld [vmem:[#allocation3 + $0x1a0] sm:$0xff]
            %v1404 = vld [vmem:[#allocation3 + $0x1a8] sm:$0xff]
            %v1405 = vld [vmem:[#allocation3 + $0x1b0] sm:$0xff]
            %v1406 = vld [vmem:[#allocation3 + $0x1b8] sm:$0xff]
            %v1407 = vld [vmem:[#allocation3 + $0x1c0] sm:$0xff]
            %v1408 = vld [vmem:[#allocation3 + $0x1c8] sm:$0xff]
            %v1409 = vld [vmem:[#allocation3 + $0x1d0] sm:$0xff]
            %v1410 = vld [vmem:[#allocation3 + $0x1d8] sm:$0xff]
            %v1411 = vld [vmem:[#allocation3 + $0x1e0] sm:$0xff]
            %v1412 = vld [vmem:[#allocation3 + $0x1e8] sm:$0xff]
            %v1413 = vld [vmem:[#allocation3 + $0x1f0] sm:$0xff]
            %v1414 = vld [vmem:[#allocation3 + $0x1f8] sm:$0xff]
            %v1415 = vld [vmem:[#allocation3 + $0x200] sm:$0xff]
            %v1416 = vld [vmem:[#allocation3 + $0x208] sm:$0xff]
            %v1417 = vld [vmem:[#allocation3 + $0x210] sm:$0xff]
            %v1418 = vld [vmem:[#allocation3 + $0x218] sm:$0xff]
            %v1419 = vld [vmem:[#allocation3 + $0x220] sm:$0xff]
            %v1420 = vld [vmem:[#allocation3 + $0x228] sm:$0xff]
            %v1421 = vld [vmem:[#allocation3 + $0x230] sm:$0xff]
            %v1422 = vld [vmem:[#allocation3 + $0x238] sm:$0xff]
            %v1423 = vld [vmem:[#allocation3 + $0x240] sm:$0xff]
            %v1424 = vld [vmem:[#allocation3 + $0x248] sm:$0xff]
            %v1425 = vld [vmem:[#allocation3 + $0x250] sm:$0xff]
            %v1426 = vld [vmem:[#allocation3 + $0x258] sm:$0xff]
            %v1427 = vld [vmem:[#allocation3 + $0x260] sm:$0xff]
            %v1428 = vld [vmem:[#allocation3 + $0x268] sm:$0xff]
            %v1429 = vld [vmem:[#allocation3 + $0x270] sm:$0xff]
            %v1430 = vld [vmem:[#allocation3 + $0x278] sm:$0xff]
            %v1431 = vld [vmem:[#allocation3 + $0x280] sm:$0xff]
            %v1432 = vld [vmem:[#allocation3 + $0x288] sm:$0xff]
            %v1433 = vld [vmem:[#allocation3 + $0x290] sm:$0xff]
            %v1434 = vld [vmem:[#allocation3 + $0x298] sm:$0xff]
            %v1435 = vld [vmem:[#allocation3 + $0x2a0] sm:$0xff]
            %v1436 = vld [vmem:[#allocation3 + $0x2a8] sm:$0xff]
            %v1437 = vld [vmem:[#allocation3 + $0x2b0] sm:$0xff]
            %v1438 = vld [vmem:[#allocation3 + $0x2b8] sm:$0xff]
            %v1439 = vld [vmem:[#allocation3 + $0x2c0] sm:$0xff]
            %v1440 = vld [vmem:[#allocation3 + $0x2c8] sm:$0xff]
            %v1441 = vld [vmem:[#allocation3 + $0x2d0] sm:$0xff]
            %v1442 = vld [vmem:[#allocation3 + $0x2d8] sm:$0xff]
            %v1443 = vld [vmem:[#allocation3 + $0x2e0] sm:$0xff]
            %v1444 = vld [vmem:[#allocation3 + $0x2e8] sm:$0xff]
            %v1445 = vld [vmem:[#allocation3 + $0x2f0] sm:$0xff]
            %v1446 = vld [vmem:[#allocation3 + $0x2f8] sm:$0xff]
            %v1447 = vld [vmem:[#allocation3 + $0x300] sm:$0xff]
            %v1448 = vld [vmem:[#allocation3 + $0x308] sm:$0xff]
            %v1449 = vld [vmem:[#allocation3 + $0x310] sm:$0xff]
            %v1450 = vld [vmem:[#allocation3 + $0x318] sm:$0xff]
            %v1451 = vld [vmem:[#allocation3 + $0x320] sm:$0xff]
            %v1452 = vld [vmem:[#allocation3 + $0x328] sm:$0xff]
            %v1453 = vld [vmem:[#allocation3 + $0x330] sm:$0xff]
            %v1454 = vld [vmem:[#allocation3 + $0x338] sm:$0xff]
            %v1455 = vld [vmem:[#allocation3 + $0x340] sm:$0xff]
            %v1456 = vld [vmem:[#allocation3 + $0x348] sm:$0xff]
            %v1457 = vld [vmem:[#allocation3 + $0x350] sm:$0xff]
            %v1458 = vld [vmem:[#allocation3 + $0x358] sm:$0xff]
            %v1459 = vld [vmem:[#allocation3 + $0x360] sm:$0xff]
            %v1460 = vld [vmem:[#allocation3 + $0x368] sm:$0xff]
            %v1461 = vld [vmem:[#allocation3 + $0x370] sm:$0xff]
            %v1462 = vld [vmem:[#allocation3 + $0x378] sm:$0xff]
            %v1463 = vld [vmem:[#allocation3 + $0x380] sm:$0xff]
            %v1464 = vld [vmem:[#allocation3 + $0x388] sm:$0xff]
            %v1465 = vld [vmem:[#allocation3 + $0x390] sm:$0xff]
            %v1466 = vld [vmem:[#allocation3 + $0x398] sm:$0xff]
            %v1467 = vld [vmem:[#allocation3 + $0x3a0] sm:$0xff]
            %v1468 = vld [vmem:[#allocation3 + $0x3a8] sm:$0xff]
            %v1469 = vld [vmem:[#allocation3 + $0x3b0] sm:$0xff]
            %v1470 = vld [vmem:[#allocation3 + $0x3b8] sm:$0xff]
            %v1471 = vld [vmem:[#allocation3 + $0x3c0] sm:$0xff]
            %v1472 = vld [vmem:[#allocation3 + $0x3c8] sm:$0xff]
            %v1473 = vld [vmem:[#allocation3 + $0x3d0] sm:$0xff]
            %v1474 = vld [vmem:[#allocation3 + $0x3d8] sm:$0xff]
            %v1475 = vld [vmem:[#allocation3 + $0x3e0] sm:$0xff]
            %v1476 = vld [vmem:[#allocation3 + $0x3e8] sm:$0xff]
            %v1477 = vld [vmem:[#allocation3 + $0x3f0] sm:$0xff]
            %v1478 = vld [vmem:[#allocation3 + $0x3f8] sm:$0xff]
            %v1479 = vld [vmem:[#allocation3 + $0x400] sm:$0xff]
            %v1480 = vld [vmem:[#allocation3 + $0x408] sm:$0xff]
            %v1481 = vld [vmem:[#allocation3 + $0x410] sm:$0xff]
            %v1482 = vld [vmem:[#allocation3 + $0x418] sm:$0xff]
            %v1483 = vld [vmem:[#allocation3 + $0x420] sm:$0xff]
            %v1484 = vld [vmem:[#allocation3 + $0x428] sm:$0xff]
            %v1485 = vld [vmem:[#allocation3 + $0x430] sm:$0xff]
            %v1486 = vld [vmem:[#allocation3 + $0x438] sm:$0xff]
            %v1487 = vld [vmem:[#allocation3 + $0x440] sm:$0xff]
            %v1488 = vld [vmem:[#allocation3 + $0x448] sm:$0xff]
            %v1489 = vld [vmem:[#allocation3 + $0x450] sm:$0xff]
            %v1490 = vld [vmem:[#allocation3 + $0x458] sm:$0xff]
            %v1491 = vld [vmem:[#allocation3 + $0x460] sm:$0xff]
            %v1492 = vld [vmem:[#allocation3 + $0x468] sm:$0xff]
            %v1493 = vld [vmem:[#allocation3 + $0x470] sm:$0xff]
            %v1494 = vld [vmem:[#allocation3 + $0x478] sm:$0xff]
            %v1495 = vld [vmem:[#allocation3 + $0x480] sm:$0xff]
            %v1496 = vld [vmem:[#allocation3 + $0x488] sm:$0xff]
            %v1497 = vld [vmem:[#allocation3 + $0x490] sm:$0xff]
            %v1498 = vld [vmem:[#allocation3 + $0x498] sm:$0xff]
            %v1499 = vld [vmem:[#allocation3 + $0x4a0] sm:$0xff]
            %v1500 = vld [vmem:[#allocation3 + $0x4a8] sm:$0xff]
            %v1501 = vld [vmem:[#allocation3 + $0x4b0] sm:$0xff]
            %v1502 = vld [vmem:[#allocation3 + $0x4b8] sm:$0xff]
            %v1503 = vld [vmem:[#allocation3 + $0x4c0] sm:$0xff]
            %v1504 = vld [vmem:[#allocation3 + $0x4c8] sm:$0xff]
            %v1505 = vld [vmem:[#allocation3 + $0x4d0] sm:$0xff]
            %v1506 = vld [vmem:[#allocation3 + $0x4d8] sm:$0xff]
            %v1507 = vld [vmem:[#allocation3 + $0x4e0] sm:$0xff]
            %v1508 = vld [vmem:[#allocation3 + $0x4e8] sm:$0xff]
            %v1509 = vld [vmem:[#allocation3 + $0x4f0] sm:$0xff]
            %v1510 = vld [vmem:[#allocation3 + $0x4f8] sm:$0xff]
            %v1511 = vld [vmem:[#allocation3 + $0x500] sm:$0xff]
            %v1512 = vld [vmem:[#allocation3 + $0x508] sm:$0xff]
            %v1513 = vld [vmem:[#allocation3 + $0x510] sm:$0xff]
            %v1514 = vld [vmem:[#allocation3 + $0x518] sm:$0xff]
            %v1515 = vld [vmem:[#allocation3 + $0x520] sm:$0xff]
            %v1516 = vld [vmem:[#allocation3 + $0x528] sm:$0xff]
            %v1517 = vld [vmem:[#allocation3 + $0x530] sm:$0xff]
            %v1518 = vld [vmem:[#allocation3 + $0x538] sm:$0xff]
            %v1519 = vld [vmem:[#allocation3 + $0x540] sm:$0xff]
            %v1520 = vld [vmem:[#allocation3 + $0x548] sm:$0xff]
            %v1521 = vld [vmem:[#allocation3 + $0x550] sm:$0xff]
            %v1522 = vld [vmem:[#allocation3 + $0x558] sm:$0xff]
            %v1523 = vld [vmem:[#allocation3 + $0x560] sm:$0xff]
            %v1524 = vld [vmem:[#allocation3 + $0x568] sm:$0xff]
            %v1525 = vld [vmem:[#allocation3 + $0x570] sm:$0xff]
            %v1526 = vld [vmem:[#allocation3 + $0x578] sm:$0xff]
            %v1527 = vld [vmem:[#allocation3 + $0x580] sm:$0xff]
            %v1528 = vld [vmem:[#allocation3 + $0x588] sm:$0xff]
            %v1529 = vld [vmem:[#allocation3 + $0x590] sm:$0xff]
            %v1530 = vld [vmem:[#allocation3 + $0x598] sm:$0xff]
            %s1531 = smul.u32 %s1064, 5
            %s1532 = sadd.s32 %s1531, %s1070
            %s1533 = smul.addr %s1532, 2
            %s1534 = scalar_lea.vmem %s1, %s1533
            %v1535 = vld [vmem:[%s1534] sm:$0x3]
            %v1537 = vsel %vm385, %v1261, 0
            %v1540 = vsel %vm385, %v1262, 0
            %v1543 = vsel %vm385, %v1263, 0
            %v1546 = vsel %vm385, %v1264, 0
            %v1549 = vsel %vm385, %v1265, 0
            %v1552 = vsel %vm385, %v1266, 0
            %v1555 = vsel %vm385, %v1267, 0
            %v1558 = vsel %vm385, %v1268, 0
            %v1561 = vsel %vm385, %v1269, 0
            %v1564 = vsel %vm385, %v1270, 0
            %v1567 = vsel %vm385, %v1271, 0
            %v1570 = vsel %vm385, %v1272, 0
            %v1573 = vsel %vm385, %v1273, 0
            %v1576 = vsel %vm385, %v1274, 0
            %v1579 = vsel %vm385, %v1275, 0
            %v1582 = vsel %vm385, %v1276, 0
            %v1585 = vsel %vm385, %v1277, 0
            %v1588 = vsel %vm385, %v1278, 0
            %v1591 = vsel %vm385, %v1279, 0
            %v1594 = vsel %vm385, %v1280, 0
            %v1597 = vsel %vm385, %v1281, 0
            %v1600 = vsel %vm385, %v1282, 0
            %v1603 = vsel %vm385, %v1283, 0
            %v1606 = vsel %vm385, %v1284, 0
            %v1609 = vsel %vm385, %v1285, 0
            %v1612 = vsel %vm385, %v1286, 0
            %v1615 = vsel %vm385, %v1287, 0
            %v1618 = vsel %vm385, %v1288, 0
            %v1621 = vsel %vm385, %v1289, 0
            %v1624 = vsel %vm385, %v1290, 0
            %v1627 = vsel %vm385, %v1291, 0
            %v1630 = vsel %vm385, %v1292, 0
            %v1633 = vsel %vm385, %v1293, 0
            %v1636 = vsel %vm385, %v1294, 0
            %v1639 = vsel %vm385, %v1295, 0
            %v1642 = vsel %vm385, %v1296, 0
            %v1645 = vsel %vm385, %v1297, 0
            %v1648 = vsel %vm385, %v1298, 0
            %v1651 = vsel %vm385, %v1299, 0
            %v1654 = vsel %vm385, %v1300, 0
            %v1657 = vsel %vm385, %v1301, 0
            %v1660 = vsel %vm385, %v1302, 0
            %v1663 = vsel %vm385, %v1303, 0
            %v1666 = vsel %vm385, %v1304, 0
            %v1669 = vsel %vm385, %v1305, 0
            %v1672 = vsel %vm385, %v1306, 0
            %v1675 = vsel %vm385, %v1307, 0
            %v1678 = vsel %vm385, %v1308, 0
            %v1681 = vsel %vm385, %v1309, 0
            %v1684 = vsel %vm385, %v1310, 0
            %v1687 = vsel %vm385, %v1311, 0
            %v1690 = vsel %vm385, %v1312, 0
            %v1693 = vsel %vm385, %v1313, 0
            %v1696 = vsel %vm385, %v1314, 0
            %v1699 = vsel %vm385, %v1315, 0
            %v1702 = vsel %vm385, %v1316, 0
            %v1705 = vsel %vm385, %v1317, 0
            %v1708 = vsel %vm385, %v1318, 0
            %v1711 = vsel %vm385, %v1319, 0
            %v1714 = vsel %vm385, %v1320, 0
            %v1717 = vsel %vm385, %v1321, 0
            %v1720 = vsel %vm385, %v1322, 0
            %v1723 = vsel %vm385, %v1323, 0
            %v1726 = vsel %vm385, %v1324, 0
            %v1729 = vsel %vm385, %v1325, 0
            %v1732 = vsel %vm385, %v1326, 0
            %v1735 = vsel %vm385, %v1327, 0
            %v1738 = vsel %vm385, %v1328, 0
            %v1741 = vsel %vm385, %v1329, 0
            %v1744 = vsel %vm385, %v1330, 0
            %v1747 = vsel %vm385, %v1331, 0
            %v1750 = vsel %vm385, %v1332, 0
            %v1753 = vsel %vm385, %v1333, 0
            %v1756 = vsel %vm385, %v1334, 0
            %v1759 = vsel %vm385, %v1335, 0
            %v1762 = vsel %vm385, %v1336, 0
            %v1765 = vsel %vm385, %v1337, 0
            %v1768 = vsel %vm385, %v1338, 0
            %v1771 = vsel %vm385, %v1339, 0
            %v1774 = vsel %vm385, %v1340, 0
            %v1777 = vsel %vm385, %v1341, 0
            %v1780 = vsel %vm385, %v1342, 0
            %v1783 = vsel %vm385, %v1343, 0
            %v1786 = vsel %vm385, %v1344, 0
            %v1789 = vsel %vm385, %v1345, 0
            %v1792 = vsel %vm385, %v1346, 0
            %v1795 = vsel %vm385, %v1347, 0
            %v1798 = vsel %vm385, %v1348, 0
            %v1801 = vsel %vm385, %v1349, 0
            %v1804 = vsel %vm385, %v1350, 0
            %vm1806 = vcmask 1040384
            %vm1807 = vcmask 1041408
            %v1808 = vsel %vm1806, 4294967295, 65535
            %v1809 = vsel %vm1807, %v1808, 0
            %v1811 = vand.u32 %v1535, %v1809
            %1813 = vmatprep.subr.bf16.mxu0 0
            %1814 = vmatpush1.bf16.msra.mxu0 %v1811
            %1815 = vmatprep.subr.bf16.mxu0 0
            %1816 = vmatpush1.bf16.msra.mxu0 0
            %1817 = vmatprep.subr.bf16.mxu0 0
            %1818 = vmatpush1.bf16.msra.mxu0 0
            %1819 = vmatprep.subr.bf16.mxu0 0
            %1820 = vmatpush1.bf16.msra.mxu0 0
            %1821 = vmatprep.subr.bf16.mxu0 0
            %1822 = vmatpush1.bf16.msra.mxu0 0
            %1823 = vmatprep.subr.bf16.mxu0 0
            %1824 = vmatpush1.bf16.msra.mxu0 0
            %1825 = vmatprep.subr.bf16.mxu0 0
            %1826 = vmatpush1.bf16.msra.mxu0 0
            %1827 = vmatprep.subr.bf16.mxu0 0
            %1828 = vmatpush1.bf16.msra.mxu0 0
            %1829 = vmatprep.subr.bf16.mxu0 0
            %1830 = vmatpush1.bf16.msra.mxu0 0
            %1831 = vmatprep.subr.bf16.mxu0 0
            %1832 = vmatpush1.bf16.msra.mxu0 0
            %1833 = vmatprep.subr.bf16.mxu0 0
            %1834 = vmatpush1.bf16.msra.mxu0 0
            %1835 = vmatprep.subr.bf16.mxu0 0
            %1836 = vmatpush1.bf16.msra.mxu0 0
            %1837 = vmatprep.subr.bf16.mxu0 0
            %1838 = vmatpush1.bf16.msra.mxu0 0
            %1839 = vmatprep.subr.bf16.mxu0 0
            %1840 = vmatpush1.bf16.msra.mxu0 0
            %1841 = vmatprep.subr.bf16.mxu0 0
            %1842 = vmatpush1.bf16.msra.mxu0 0
            %1843 = vmatprep.subr.bf16.mxu0 0
            %1844 = vmatpush1.bf16.msra.mxu0 0
            %1845 = vmatprep.mubr.bf16.mxu0 0
            %1846 = vmatmul.mubr.bf16.gmra.mrb[0].mxu0 %v1537
            %v1847 = vpop.f32.mrb[0].mxu0
            %v1848 = vadd.f32 0.0, %v1847
            %v1849 = vpop.f32.mrb[0].mxu0
            %v1850 = vpop.f32.mrb[0].mxu0
            %v1851 = vadd.f32 0.0, %v1850
            %v1852 = vpop.f32.mrb[0].mxu0
            %1853 = vmatprep.mubr.bf16.mxu0 0
            %1854 = vmatmul.mubr.bf16.gmra.mrb[0].mxu0 %v1540
            %v1855 = vpop.f32.mrb[0].mxu0
            %v1856 = vadd.f32 0.0, %v1855
            %v1857 = vpop.f32.mrb[0].mxu0
            %v1858 = vpop.f32.mrb[0].mxu0
            %v1859 = vadd.f32 0.0, %v1858
            %v1860 = vpop.f32.mrb[0].mxu0
            %1861 = vmatprep.mubr.bf16.mxu0 0
            %1862 = vmatmul.mubr.bf16.gmra.mrb[0].mxu0 %v1543
            %v1863 = vpop.f32.mrb[0].mxu0
            %v1864 = vadd.f32 0.0, %v1863
            %v1865 = vpop.f32.mrb[0].mxu0
            %v1866 = vpop.f32.mrb[0].mxu0
            %v1867 = vadd.f32 0.0, %v1866
            %v1868 = vpop.f32.mrb[0].mxu0
            %1869 = vmatprep.mubr.bf16.mxu0 0
            %1870 = vmatmul.mubr.bf16.gmra.mrb[0].mxu0 %v1546
            %v1871 = vpop.f32.mrb[0].mxu0
            %v1872 = vadd.f32 0.0, %v1871
            %v1873 = vpop.f32.mrb[0].mxu0
            %v1874 = vpop.f32.mrb[0].mxu0
            %v1875 = vadd.f32 0.0, %v1874
            %v1876 = vpop.f32.mrb[0].mxu0
            %1877 = vmatprep.mubr.bf16.mxu0 0
            %1878 = vmatmul.mubr.bf16.gmra.mrb[0].mxu0 %v1549
            %v1879 = vpop.f32.mrb[0].mxu0
            %v1880 = vadd.f32 0.0, %v1879
            %v1881 = vpop.f32.mrb[0].mxu0
            %v1882 = vpop.f32.mrb[0].mxu0
            %v1883 = vadd.f32 0.0, %v1882
            %v1884 = vpop.f32.mrb[0].mxu0
            %1885 = vmatprep.mubr.bf16.mxu0 0
            %1886 = vmatmul.mubr.bf16.gmra.mrb[0].mxu0 %v1552
            %v1887 = vpop.f32.mrb[0].mxu0
            %v1888 = vadd.f32 0.0, %v1887
            %v1889 = vpop.f32.mrb[0].mxu0
            %v1890 = vpop.f32.mrb[0].mxu0
            %v1891 = vadd.f32 0.0, %v1890
            %v1892 = vpop.f32.mrb[0].mxu0
            %1893 = vmatprep.mubr.bf16.mxu0 0
            %1894 = vmatmul.mubr.bf16.gmra.mrb[0].mxu0 %v1555
            %v1895 = vpop.f32.mrb[0].mxu0
            %v1896 = vadd.f32 0.0, %v1895
            %v1897 = vpop.f32.mrb[0].mxu0
            %v1898 = vpop.f32.mrb[0].mxu0
            %v1899 = vadd.f32 0.0, %v1898
            %v1900 = vpop.f32.mrb[0].mxu0
            %1901 = vmatprep.mubr.bf16.mxu0 0
            %1902 = vmatmul.mubr.bf16.gmra.mrb[0].mxu0 %v1558
            %v1903 = vpop.f32.mrb[0].mxu0
            %v1904 = vadd.f32 0.0, %v1903
            %v1905 = vpop.f32.mrb[0].mxu0
            %v1906 = vpop.f32.mrb[0].mxu0
            %v1907 = vadd.f32 0.0, %v1906
            %v1908 = vpop.f32.mrb[0].mxu0
            %1909 = vmatprep.mubr.bf16.mxu0 0
            %1910 = vmatmul.mubr.bf16.gmra.mrb[0].mxu0 %v1561
            %v1911 = vpop.f32.mrb[0].mxu0
            %v1912 = vadd.f32 0.0, %v1911
            %v1913 = vpop.f32.mrb[0].mxu0
            %v1914 = vpop.f32.mrb[0].mxu0
            %v1915 = vadd.f32 0.0, %v1914
            %v1916 = vpop.f32.mrb[0].mxu0
            %1917 = vmatprep.mubr.bf16.mxu0 0
            %1918 = vmatmul.mubr.bf16.gmra.mrb[0].mxu0 %v1564
            %v1919 = vpop.f32.mrb[0].mxu0
            %v1920 = vadd.f32 0.0, %v1919
            %v1921 = vpop.f32.mrb[0].mxu0
            %v1922 = vpop.f32.mrb[0].mxu0
            %v1923 = vadd.f32 0.0, %v1922
            %v1924 = vpop.f32.mrb[0].mxu0
            %1925 = vmatprep.mubr.bf16.mxu0 0
            %1926 = vmatmul.mubr.bf16.gmra.mrb[0].mxu0 %v1567
            %v1927 = vpop.f32.mrb[0].mxu0
            %v1928 = vadd.f32 0.0, %v1927
            %v1929 = vpop.f32.mrb[0].mxu0
            %v1930 = vpop.f32.mrb[0].mxu0
            %v1931 = vadd.f32 0.0, %v1930
            %v1932 = vpop.f32.mrb[0].mxu0
            %1933 = vmatprep.mubr.bf16.mxu0 0
            %1934 = vmatmul.mubr.bf16.gmra.mrb[0].mxu0 %v1570
            %v1935 = vpop.f32.mrb[0].mxu0
            %v1936 = vadd.f32 0.0, %v1935
            %v1937 = vpop.f32.mrb[0].mxu0
            %v1938 = vpop.f32.mrb[0].mxu0
            %v1939 = vadd.f32 0.0, %v1938
            %v1940 = vpop.f32.mrb[0].mxu0
            %1941 = vmatprep.mubr.bf16.mxu0 0
            %1942 = vmatmul.mubr.bf16.gmra.mrb[0].mxu0 %v1573
            %v1943 = vpop.f32.mrb[0].mxu0
            %v1944 = vadd.f32 0.0, %v1943
            %v1945 = vpop.f32.mrb[0].mxu0
            %v1946 = vpop.f32.mrb[0].mxu0
            %v1947 = vadd.f32 0.0, %v1946
            %v1948 = vpop.f32.mrb[0].mxu0
            %1949 = vmatprep.mubr.bf16.mxu0 0
            %1950 = vmatmul.mubr.bf16.gmra.mrb[0].mxu0 %v1576
            %v1951 = vpop.f32.mrb[0].mxu0
            %v1952 = vadd.f32 0.0, %v1951
            %v1953 = vpop.f32.mrb[0].mxu0
            %v1954 = vpop.f32.mrb[0].mxu0
            %v1955 = vadd.f32 0.0, %v1954
            %v1956 = vpop.f32.mrb[0].mxu0
            %1957 = vmatprep.mubr.bf16.mxu0 0
            %1958 = vmatmul.mubr.bf16.gmra.mrb[0].mxu0 %v1579
            %v1959 = vpop.f32.mrb[0].mxu0
            %v1960 = vadd.f32 0.0, %v1959
            %v1961 = vpop.f32.mrb[0].mxu0
            %v1962 = vpop.f32.mrb[0].mxu0
            %v1963 = vadd.f32 0.0, %v1962
            %v1964 = vpop.f32.mrb[0].mxu0
            %1965 = vmatprep.mubr.bf16.mxu0 0
            %1966 = vmatmul.mubr.bf16.gmra.mrb[0].mxu0 %v1582
            %v1967 = vpop.f32.mrb[0].mxu0
            %v1968 = vadd.f32 0.0, %v1967
            %v1969 = vpop.f32.mrb[0].mxu0
            %v1970 = vpop.f32.mrb[0].mxu0
            %v1971 = vadd.f32 0.0, %v1970
            %v1972 = vpop.f32.mrb[0].mxu0
            %1973 = vmatprep.mubr.bf16.mxu0 0
            %1974 = vmatmul.mubr.bf16.gmra.mrb[0].mxu0 %v1585
            %v1975 = vpop.f32.mrb[0].mxu0
            %v1976 = vadd.f32 0.0, %v1975
            %v1977 = vpop.f32.mrb[0].mxu0
            %v1978 = vpop.f32.mrb[0].mxu0
            %v1979 = vadd.f32 0.0, %v1978
            %v1980 = vpop.f32.mrb[0].mxu0
            %1981 = vmatprep.mubr.bf16.mxu0 0
            %1982 = vmatmul.mubr.bf16.gmra.mrb[0].mxu0 %v1588
            %v1983 = vpop.f32.mrb[0].mxu0
            %v1984 = vadd.f32 0.0, %v1983
            %v1985 = vpop.f32.mrb[0].mxu0
            %v1986 = vpop.f32.mrb[0].mxu0
            %v1987 = vadd.f32 0.0, %v1986
            %v1988 = vpop.f32.mrb[0].mxu0
            %1989 = vmatprep.mubr.bf16.mxu0 0
            %1990 = vmatmul.mubr.bf16.gmra.mrb[0].mxu0 %v1591
            %v1991 = vpop.f32.mrb[0].mxu0
            %v1992 = vadd.f32 0.0, %v1991
            %v1993 = vpop.f32.mrb[0].mxu0
            %v1994 = vpop.f32.mrb[0].mxu0
            %v1995 = vadd.f32 0.0, %v1994
            %v1996 = vpop.f32.mrb[0].mxu0
            %1997 = vmatprep.mubr.bf16.mxu0 0
            %1998 = vmatmul.mubr.bf16.gmra.mrb[0].mxu0 %v1594
            %v1999 = vpop.f32.mrb[0].mxu0
            %v2000 = vadd.f32 0.0, %v1999
            %v2001 = vpop.f32.mrb[0].mxu0
            %v2002 = vpop.f32.mrb[0].mxu0
            %v2003 = vadd.f32 0.0, %v2002
            %v2004 = vpop.f32.mrb[0].mxu0
            %2005 = vmatprep.mubr.bf16.mxu0 0
            %2006 = vmatmul.mubr.bf16.gmra.mrb[0].mxu0 %v1597
            %v2007 = vpop.f32.mrb[0].mxu0
            %v2008 = vadd.f32 0.0, %v2007
            %v2009 = vpop.f32.mrb[0].mxu0
            %v2010 = vpop.f32.mrb[0].mxu0
            %v2011 = vadd.f32 0.0, %v2010
            %v2012 = vpop.f32.mrb[0].mxu0
            %2013 = vmatprep.mubr.bf16.mxu0 0
            %2014 = vmatmul.mubr.bf16.gmra.mrb[0].mxu0 %v1600
            %v2015 = vpop.f32.mrb[0].mxu0
            %v2016 = vadd.f32 0.0, %v2015
            %v2017 = vpop.f32.mrb[0].mxu0
            %v2018 = vpop.f32.mrb[0].mxu0
            %v2019 = vadd.f32 0.0, %v2018
            %v2020 = vpop.f32.mrb[0].mxu0
            %2021 = vmatprep.mubr.bf16.mxu0 0
            %2022 = vmatmul.mubr.bf16.gmra.mrb[0].mxu0 %v1603
            %v2023 = vpop.f32.mrb[0].mxu0
            %v2024 = vadd.f32 0.0, %v2023
            %v2025 = vpop.f32.mrb[0].mxu0
            %v2026 = vpop.f32.mrb[0].mxu0
            %v2027 = vadd.f32 0.0, %v2026
            %v2028 = vpop.f32.mrb[0].mxu0
            %2029 = vmatprep.mubr.bf16.mxu0 0
            %2030 = vmatmul.mubr.bf16.gmra.mrb[0].mxu0 %v1606
            %v2031 = vpop.f32.mrb[0].mxu0
            %v2032 = vadd.f32 0.0, %v2031
            %v2033 = vpop.f32.mrb[0].mxu0
            %v2034 = vpop.f32.mrb[0].mxu0
            %v2035 = vadd.f32 0.0, %v2034
            %v2036 = vpop.f32.mrb[0].mxu0
            %2037 = vmatprep.mubr.bf16.mxu0 0
            %2038 = vmatmul.mubr.bf16.gmra.mrb[0].mxu0 %v1609
            %v2039 = vpop.f32.mrb[0].mxu0
            %v2040 = vadd.f32 0.0, %v2039
            %v2041 = vpop.f32.mrb[0].mxu0
            %v2042 = vpop.f32.mrb[0].mxu0
            %v2043 = vadd.f32 0.0, %v2042
            %v2044 = vpop.f32.mrb[0].mxu0
            %2045 = vmatprep.mubr.bf16.mxu0 0
            %2046 = vmatmul.mubr.bf16.gmra.mrb[0].mxu0 %v1612
            %v2047 = vpop.f32.mrb[0].mxu0
            %v2048 = vadd.f32 0.0, %v2047
            %v2049 = vpop.f32.mrb[0].mxu0
            %v2050 = vpop.f32.mrb[0].mxu0
            %v2051 = vadd.f32 0.0, %v2050
            %v2052 = vpop.f32.mrb[0].mxu0
            %2053 = vmatprep.mubr.bf16.mxu0 0
            %2054 = vmatmul.mubr.bf16.gmra.mrb[0].mxu0 %v1615
            %v2055 = vpop.f32.mrb[0].mxu0
            %v2056 = vadd.f32 0.0, %v2055
            %v2057 = vpop.f32.mrb[0].mxu0
            %v2058 = vpop.f32.mrb[0].mxu0
            %v2059 = vadd.f32 0.0, %v2058
            %v2060 = vpop.f32.mrb[0].mxu0
            %2061 = vmatprep.mubr.bf16.mxu0 0
            %2062 = vmatmul.mubr.bf16.gmra.mrb[0].mxu0 %v1618
            %v2063 = vpop.f32.mrb[0].mxu0
            %v2064 = vadd.f32 0.0, %v2063
            %v2065 = vpop.f32.mrb[0].mxu0
            %v2066 = vpop.f32.mrb[0].mxu0
            %v2067 = vadd.f32 0.0, %v2066
            %v2068 = vpop.f32.mrb[0].mxu0
            %2069 = vmatprep.mubr.bf16.mxu0 0
            %2070 = vmatmul.mubr.bf16.gmra.mrb[0].mxu0 %v1621
            %v2071 = vpop.f32.mrb[0].mxu0
            %v2072 = vadd.f32 0.0, %v2071
            %v2073 = vpop.f32.mrb[0].mxu0
            %v2074 = vpop.f32.mrb[0].mxu0
            %v2075 = vadd.f32 0.0, %v2074
            %v2076 = vpop.f32.mrb[0].mxu0
            %2077 = vmatprep.mubr.bf16.mxu0 0
            %2078 = vmatmul.mubr.bf16.gmra.mrb[0].mxu0 %v1624
            %v2079 = vpop.f32.mrb[0].mxu0
            %v2080 = vadd.f32 0.0, %v2079
            %v2081 = vpop.f32.mrb[0].mxu0
            %v2082 = vpop.f32.mrb[0].mxu0
            %v2083 = vadd.f32 0.0, %v2082
            %v2084 = vpop.f32.mrb[0].mxu0
            %2085 = vmatprep.mubr.bf16.mxu0 0
            %2086 = vmatmul.mubr.bf16.gmra.mrb[0].mxu0 %v1627
            %v2087 = vpop.f32.mrb[0].mxu0
            %v2088 = vadd.f32 0.0, %v2087
            %v2089 = vpop.f32.mrb[0].mxu0
            %v2090 = vpop.f32.mrb[0].mxu0
            %v2091 = vadd.f32 0.0, %v2090
            %v2092 = vpop.f32.mrb[0].mxu0
            %2093 = vmatprep.mubr.bf16.mxu0 0
            %2094 = vmatmul.mubr.bf16.gmra.mrb[0].mxu0 %v1630
            %v2095 = vpop.f32.mrb[0].mxu0
            %v2096 = vadd.f32 0.0, %v2095
            %v2097 = vpop.f32.mrb[0].mxu0
            %v2098 = vpop.f32.mrb[0].mxu0
            %v2099 = vadd.f32 0.0, %v2098
            %v2100 = vpop.f32.mrb[0].mxu0
            %2101 = vmatprep.mubr.bf16.mxu0 0
            %2102 = vmatmul.mubr.bf16.gmra.mrb[0].mxu0 %v1633
            %v2103 = vpop.f32.mrb[0].mxu0
            %v2104 = vadd.f32 0.0, %v2103
            %v2105 = vpop.f32.mrb[0].mxu0
            %v2106 = vpop.f32.mrb[0].mxu0
            %v2107 = vadd.f32 0.0, %v2106
            %v2108 = vpop.f32.mrb[0].mxu0
            %2109 = vmatprep.mubr.bf16.mxu0 0
            %2110 = vmatmul.mubr.bf16.gmra.mrb[0].mxu0 %v1636
            %v2111 = vpop.f32.mrb[0].mxu0
            %v2112 = vadd.f32 0.0, %v2111
            %v2113 = vpop.f32.mrb[0].mxu0
            %v2114 = vpop.f32.mrb[0].mxu0
            %v2115 = vadd.f32 0.0, %v2114
            %v2116 = vpop.f32.mrb[0].mxu0
            %2117 = vmatprep.mubr.bf16.mxu0 0
            %2118 = vmatmul.mubr.bf16.gmra.mrb[0].mxu0 %v1639
            %v2119 = vpop.f32.mrb[0].mxu0
            %v2120 = vadd.f32 0.0, %v2119
            %v2121 = vpop.f32.mrb[0].mxu0
            %v2122 = vpop.f32.mrb[0].mxu0
            %v2123 = vadd.f32 0.0, %v2122
            %v2124 = vpop.f32.mrb[0].mxu0
            %2125 = vmatprep.mubr.bf16.mxu0 0
            %2126 = vmatmul.mubr.bf16.gmra.mrb[0].mxu0 %v1642
            %v2127 = vpop.f32.mrb[0].mxu0
            %v2128 = vadd.f32 0.0, %v2127
            %v2129 = vpop.f32.mrb[0].mxu0
            %v2130 = vpop.f32.mrb[0].mxu0
            %v2131 = vadd.f32 0.0, %v2130
            %v2132 = vpop.f32.mrb[0].mxu0
            %2133 = vmatprep.mubr.bf16.mxu0 0
            %2134 = vmatmul.mubr.bf16.gmra.mrb[0].mxu0 %v1645
            %v2135 = vpop.f32.mrb[0].mxu0
            %v2136 = vadd.f32 0.0, %v2135
            %v2137 = vpop.f32.mrb[0].mxu0
            %v2138 = vpop.f32.mrb[0].mxu0
            %v2139 = vadd.f32 0.0, %v2138
            %v2140 = vpop.f32.mrb[0].mxu0
            %2141 = vmatprep.mubr.bf16.mxu0 0
            %2142 = vmatmul.mubr.bf16.gmra.mrb[0].mxu0 %v1648
            %v2143 = vpop.f32.mrb[0].mxu0
            %v2144 = vadd.f32 0.0, %v2143
            %v2145 = vpop.f32.mrb[0].mxu0
            %v2146 = vpop.f32.mrb[0].mxu0
            %v2147 = vadd.f32 0.0, %v2146
            %v2148 = vpop.f32.mrb[0].mxu0
            %2149 = vmatprep.mubr.bf16.mxu0 0
            %2150 = vmatmul.mubr.bf16.gmra.mrb[0].mxu0 %v1651
            %v2151 = vpop.f32.mrb[0].mxu0
            %v2152 = vadd.f32 0.0, %v2151
            %v2153 = vpop.f32.mrb[0].mxu0
            %v2154 = vpop.f32.mrb[0].mxu0
            %v2155 = vadd.f32 0.0, %v2154
            %v2156 = vpop.f32.mrb[0].mxu0
            %2157 = vmatprep.mubr.bf16.mxu0 0
            %2158 = vmatmul.mubr.bf16.gmra.mrb[0].mxu0 %v1654
            %v2159 = vpop.f32.mrb[0].mxu0
            %v2160 = vadd.f32 0.0, %v2159
            %v2161 = vpop.f32.mrb[0].mxu0
            %v2162 = vpop.f32.mrb[0].mxu0
            %v2163 = vadd.f32 0.0, %v2162
            %v2164 = vpop.f32.mrb[0].mxu0
            %2165 = vmatprep.mubr.bf16.mxu0 0
            %2166 = vmatmul.mubr.bf16.gmra.mrb[0].mxu0 %v1657
            %v2167 = vpop.f32.mrb[0].mxu0
            %v2168 = vadd.f32 0.0, %v2167
            %v2169 = vpop.f32.mrb[0].mxu0
            %v2170 = vpop.f32.mrb[0].mxu0
            %v2171 = vadd.f32 0.0, %v2170
            %v2172 = vpop.f32.mrb[0].mxu0
            %2173 = vmatprep.mubr.bf16.mxu0 0
            %2174 = vmatmul.mubr.bf16.gmra.mrb[0].mxu0 %v1660
            %v2175 = vpop.f32.mrb[0].mxu0
            %v2176 = vadd.f32 0.0, %v2175
            %v2177 = vpop.f32.mrb[0].mxu0
            %v2178 = vpop.f32.mrb[0].mxu0
            %v2179 = vadd.f32 0.0, %v2178
            %v2180 = vpop.f32.mrb[0].mxu0
            %2181 = vmatprep.mubr.bf16.mxu0 0
            %2182 = vmatmul.mubr.bf16.gmra.mrb[0].mxu0 %v1663
            %v2183 = vpop.f32.mrb[0].mxu0
            %v2184 = vadd.f32 0.0, %v2183
            %v2185 = vpop.f32.mrb[0].mxu0
            %v2186 = vpop.f32.mrb[0].mxu0
            %v2187 = vadd.f32 0.0, %v2186
            %v2188 = vpop.f32.mrb[0].mxu0
            %2189 = vmatprep.mubr.bf16.mxu0 0
            %2190 = vmatmul.mubr.bf16.gmra.mrb[0].mxu0 %v1666
            %v2191 = vpop.f32.mrb[0].mxu0
            %v2192 = vadd.f32 0.0, %v2191
            %v2193 = vpop.f32.mrb[0].mxu0
            %v2194 = vpop.f32.mrb[0].mxu0
            %v2195 = vadd.f32 0.0, %v2194
            %v2196 = vpop.f32.mrb[0].mxu0
            %2197 = vmatprep.mubr.bf16.mxu0 0
            %2198 = vmatmul.mubr.bf16.gmra.mrb[0].mxu0 %v1669
            %v2199 = vpop.f32.mrb[0].mxu0
            %v2200 = vadd.f32 0.0, %v2199
            %v2201 = vpop.f32.mrb[0].mxu0
            %v2202 = vpop.f32.mrb[0].mxu0
            %v2203 = vadd.f32 0.0, %v2202
            %v2204 = vpop.f32.mrb[0].mxu0
            %2205 = vmatprep.mubr.bf16.mxu0 0
            %2206 = vmatmul.mubr.bf16.gmra.mrb[0].mxu0 %v1672
            %v2207 = vpop.f32.mrb[0].mxu0
            %v2208 = vadd.f32 0.0, %v2207
            %v2209 = vpop.f32.mrb[0].mxu0
            %v2210 = vpop.f32.mrb[0].mxu0
            %v2211 = vadd.f32 0.0, %v2210
            %v2212 = vpop.f32.mrb[0].mxu0
            %2213 = vmatprep.mubr.bf16.mxu0 0
            %2214 = vmatmul.mubr.bf16.gmra.mrb[0].mxu0 %v1675
            %v2215 = vpop.f32.mrb[0].mxu0
            %v2216 = vadd.f32 0.0, %v2215
            %v2217 = vpop.f32.mrb[0].mxu0
            %v2218 = vpop.f32.mrb[0].mxu0
            %v2219 = vadd.f32 0.0, %v2218
            %v2220 = vpop.f32.mrb[0].mxu0
            %2221 = vmatprep.mubr.bf16.mxu0 0
            %2222 = vmatmul.mubr.bf16.gmra.mrb[0].mxu0 %v1678
            %v2223 = vpop.f32.mrb[0].mxu0
            %v2224 = vadd.f32 0.0, %v2223
            %v2225 = vpop.f32.mrb[0].mxu0
            %v2226 = vpop.f32.mrb[0].mxu0
            %v2227 = vadd.f32 0.0, %v2226
            %v2228 = vpop.f32.mrb[0].mxu0
            %2229 = vmatprep.mubr.bf16.mxu0 0
            %2230 = vmatmul.mubr.bf16.gmra.mrb[0].mxu0 %v1681
            %v2231 = vpop.f32.mrb[0].mxu0
            %v2232 = vadd.f32 0.0, %v2231
            %v2233 = vpop.f32.mrb[0].mxu0
            %v2234 = vpop.f32.mrb[0].mxu0
            %v2235 = vadd.f32 0.0, %v2234
            %v2236 = vpop.f32.mrb[0].mxu0
            %2237 = vmatprep.mubr.bf16.mxu0 0
            %2238 = vmatmul.mubr.bf16.gmra.mrb[0].mxu0 %v1684
            %v2239 = vpop.f32.mrb[0].mxu0
            %v2240 = vadd.f32 0.0, %v2239
            %v2241 = vpop.f32.mrb[0].mxu0
            %v2242 = vpop.f32.mrb[0].mxu0
            %v2243 = vadd.f32 0.0, %v2242
            %v2244 = vpop.f32.mrb[0].mxu0
            %2245 = vmatprep.mubr.bf16.mxu0 0
            %2246 = vmatmul.mubr.bf16.gmra.mrb[0].mxu0 %v1687
            %v2247 = vpop.f32.mrb[0].mxu0
            %v2248 = vadd.f32 0.0, %v2247
            %v2249 = vpop.f32.mrb[0].mxu0
            %v2250 = vpop.f32.mrb[0].mxu0
            %v2251 = vadd.f32 0.0, %v2250
            %v2252 = vpop.f32.mrb[0].mxu0
            %2253 = vmatprep.mubr.bf16.mxu0 0
            %2254 = vmatmul.mubr.bf16.gmra.mrb[0].mxu0 %v1690
            %v2255 = vpop.f32.mrb[0].mxu0
            %v2256 = vadd.f32 0.0, %v2255
            %v2257 = vpop.f32.mrb[0].mxu0
            %v2258 = vpop.f32.mrb[0].mxu0
            %v2259 = vadd.f32 0.0, %v2258
            %v2260 = vpop.f32.mrb[0].mxu0
            %2261 = vmatprep.mubr.bf16.mxu0 0
            %2262 = vmatmul.mubr.bf16.gmra.mrb[0].mxu0 %v1693
            %v2263 = vpop.f32.mrb[0].mxu0
            %v2264 = vadd.f32 0.0, %v2263
            %v2265 = vpop.f32.mrb[0].mxu0
            %v2266 = vpop.f32.mrb[0].mxu0
            %v2267 = vadd.f32 0.0, %v2266
            %v2268 = vpop.f32.mrb[0].mxu0
            %2269 = vmatprep.mubr.bf16.mxu0 0
            %2270 = vmatmul.mubr.bf16.gmra.mrb[0].mxu0 %v1696
            %v2271 = vpop.f32.mrb[0].mxu0
            %v2272 = vadd.f32 0.0, %v2271
            %v2273 = vpop.f32.mrb[0].mxu0
            %v2274 = vpop.f32.mrb[0].mxu0
            %v2275 = vadd.f32 0.0, %v2274
            %v2276 = vpop.f32.mrb[0].mxu0
            %2277 = vmatprep.mubr.bf16.mxu0 0
            %2278 = vmatmul.mubr.bf16.gmra.mrb[0].mxu0 %v1699
            %v2279 = vpop.f32.mrb[0].mxu0
            %v2280 = vadd.f32 0.0, %v2279
            %v2281 = vpop.f32.mrb[0].mxu0
            %v2282 = vpop.f32.mrb[0].mxu0
            %v2283 = vadd.f32 0.0, %v2282
            %v2284 = vpop.f32.mrb[0].mxu0
            %2285 = vmatprep.mubr.bf16.mxu0 0
            %2286 = vmatmul.mubr.bf16.gmra.mrb[0].mxu0 %v1702
            %v2287 = vpop.f32.mrb[0].mxu0
            %v2288 = vadd.f32 0.0, %v2287
            %v2289 = vpop.f32.mrb[0].mxu0
            %v2290 = vpop.f32.mrb[0].mxu0
            %v2291 = vadd.f32 0.0, %v2290
            %v2292 = vpop.f32.mrb[0].mxu0
            %2293 = vmatprep.mubr.bf16.mxu0 0
            %2294 = vmatmul.mubr.bf16.gmra.mrb[0].mxu0 %v1705
            %v2295 = vpop.f32.mrb[0].mxu0
            %v2296 = vadd.f32 0.0, %v2295
            %v2297 = vpop.f32.mrb[0].mxu0
            %v2298 = vpop.f32.mrb[0].mxu0
            %v2299 = vadd.f32 0.0, %v2298
            %v2300 = vpop.f32.mrb[0].mxu0
            %2301 = vmatprep.mubr.bf16.mxu0 0
            %2302 = vmatmul.mubr.bf16.gmra.mrb[0].mxu0 %v1708
            %v2303 = vpop.f32.mrb[0].mxu0
            %v2304 = vadd.f32 0.0, %v2303
            %v2305 = vpop.f32.mrb[0].mxu0
            %v2306 = vpop.f32.mrb[0].mxu0
            %v2307 = vadd.f32 0.0, %v2306
            %v2308 = vpop.f32.mrb[0].mxu0
            %2309 = vmatprep.mubr.bf16.mxu0 0
            %2310 = vmatmul.mubr.bf16.gmra.mrb[0].mxu0 %v1711
            %v2311 = vpop.f32.mrb[0].mxu0
            %v2312 = vadd.f32 0.0, %v2311
            %v2313 = vpop.f32.mrb[0].mxu0
            %v2314 = vpop.f32.mrb[0].mxu0
            %v2315 = vadd.f32 0.0, %v2314
            %v2316 = vpop.f32.mrb[0].mxu0
            %2317 = vmatprep.mubr.bf16.mxu0 0
            %2318 = vmatmul.mubr.bf16.gmra.mrb[0].mxu0 %v1714
            %v2319 = vpop.f32.mrb[0].mxu0
            %v2320 = vadd.f32 0.0, %v2319
            %v2321 = vpop.f32.mrb[0].mxu0
            %v2322 = vpop.f32.mrb[0].mxu0
            %v2323 = vadd.f32 0.0, %v2322
            %v2324 = vpop.f32.mrb[0].mxu0
            %2325 = vmatprep.mubr.bf16.mxu0 0
            %2326 = vmatmul.mubr.bf16.gmra.mrb[0].mxu0 %v1717
            %v2327 = vpop.f32.mrb[0].mxu0
            %v2328 = vadd.f32 0.0, %v2327
            %v2329 = vpop.f32.mrb[0].mxu0
            %v2330 = vpop.f32.mrb[0].mxu0
            %v2331 = vadd.f32 0.0, %v2330
            %v2332 = vpop.f32.mrb[0].mxu0
            %2333 = vmatprep.mubr.bf16.mxu0 0
            %2334 = vmatmul.mubr.bf16.gmra.mrb[0].mxu0 %v1720
            %v2335 = vpop.f32.mrb[0].mxu0
            %v2336 = vadd.f32 0.0, %v2335
            %v2337 = vpop.f32.mrb[0].mxu0
            %v2338 = vpop.f32.mrb[0].mxu0
            %v2339 = vadd.f32 0.0, %v2338
            %v2340 = vpop.f32.mrb[0].mxu0
            %2341 = vmatprep.mubr.bf16.mxu0 0
            %2342 = vmatmul.mubr.bf16.gmra.mrb[0].mxu0 %v1723
            %v2343 = vpop.f32.mrb[0].mxu0
            %v2344 = vadd.f32 0.0, %v2343
            %v2345 = vpop.f32.mrb[0].mxu0
            %v2346 = vpop.f32.mrb[0].mxu0
            %v2347 = vadd.f32 0.0, %v2346
            %v2348 = vpop.f32.mrb[0].mxu0
            %2349 = vmatprep.mubr.bf16.mxu0 0
            %2350 = vmatmul.mubr.bf16.gmra.mrb[0].mxu0 %v1726
            %v2351 = vpop.f32.mrb[0].mxu0
            %v2352 = vadd.f32 0.0, %v2351
            %v2353 = vpop.f32.mrb[0].mxu0
            %v2354 = vpop.f32.mrb[0].mxu0
            %v2355 = vadd.f32 0.0, %v2354
            %v2356 = vpop.f32.mrb[0].mxu0
            %2357 = vmatprep.mubr.bf16.mxu0 0
            %2358 = vmatmul.mubr.bf16.gmra.mrb[0].mxu0 %v1729
            %v2359 = vpop.f32.mrb[0].mxu0
            %v2360 = vadd.f32 0.0, %v2359
            %v2361 = vpop.f32.mrb[0].mxu0
            %v2362 = vpop.f32.mrb[0].mxu0
            %v2363 = vadd.f32 0.0, %v2362
            %v2364 = vpop.f32.mrb[0].mxu0
            %2365 = vmatprep.mubr.bf16.mxu0 0
            %2366 = vmatmul.mubr.bf16.gmra.mrb[0].mxu0 %v1732
            %v2367 = vpop.f32.mrb[0].mxu0
            %v2368 = vadd.f32 0.0, %v2367
            %v2369 = vpop.f32.mrb[0].mxu0
            %v2370 = vpop.f32.mrb[0].mxu0
            %v2371 = vadd.f32 0.0, %v2370
            %v2372 = vpop.f32.mrb[0].mxu0
            %2373 = vmatprep.mubr.bf16.mxu0 0
            %2374 = vmatmul.mubr.bf16.gmra.mrb[0].mxu0 %v1735
            %v2375 = vpop.f32.mrb[0].mxu0
            %v2376 = vadd.f32 0.0, %v2375
            %v2377 = vpop.f32.mrb[0].mxu0
            %v2378 = vpop.f32.mrb[0].mxu0
            %v2379 = vadd.f32 0.0, %v2378
            %v2380 = vpop.f32.mrb[0].mxu0
            %2381 = vmatprep.mubr.bf16.mxu0 0
            %2382 = vmatmul.mubr.bf16.gmra.mrb[0].mxu0 %v1738
            %v2383 = vpop.f32.mrb[0].mxu0
            %v2384 = vadd.f32 0.0, %v2383
            %v2385 = vpop.f32.mrb[0].mxu0
            %v2386 = vpop.f32.mrb[0].mxu0
            %v2387 = vadd.f32 0.0, %v2386
            %v2388 = vpop.f32.mrb[0].mxu0
            %2389 = vmatprep.mubr.bf16.mxu0 0
            %2390 = vmatmul.mubr.bf16.gmra.mrb[0].mxu0 %v1741
            %v2391 = vpop.f32.mrb[0].mxu0
            %v2392 = vadd.f32 0.0, %v2391
            %v2393 = vpop.f32.mrb[0].mxu0
            %v2394 = vpop.f32.mrb[0].mxu0
            %v2395 = vadd.f32 0.0, %v2394
            %v2396 = vpop.f32.mrb[0].mxu0
            %2397 = vmatprep.mubr.bf16.mxu0 0
            %2398 = vmatmul.mubr.bf16.gmra.mrb[0].mxu0 %v1744
            %v2399 = vpop.f32.mrb[0].mxu0
            %v2400 = vadd.f32 0.0, %v2399
            %v2401 = vpop.f32.mrb[0].mxu0
            %v2402 = vpop.f32.mrb[0].mxu0
            %v2403 = vadd.f32 0.0, %v2402
            %v2404 = vpop.f32.mrb[0].mxu0
            %2405 = vmatprep.mubr.bf16.mxu0 0
            %2406 = vmatmul.mubr.bf16.gmra.mrb[0].mxu0 %v1747
            %v2407 = vpop.f32.mrb[0].mxu0
            %v2408 = vadd.f32 0.0, %v2407
            %v2409 = vpop.f32.mrb[0].mxu0
            %v2410 = vpop.f32.mrb[0].mxu0
            %v2411 = vadd.f32 0.0, %v2410
            %v2412 = vpop.f32.mrb[0].mxu0
            %2413 = vmatprep.mubr.bf16.mxu0 0
            %2414 = vmatmul.mubr.bf16.gmra.mrb[0].mxu0 %v1750
            %v2415 = vpop.f32.mrb[0].mxu0
            %v2416 = vadd.f32 0.0, %v2415
            %v2417 = vpop.f32.mrb[0].mxu0
            %v2418 = vpop.f32.mrb[0].mxu0
            %v2419 = vadd.f32 0.0, %v2418
            %v2420 = vpop.f32.mrb[0].mxu0
            %2421 = vmatprep.mubr.bf16.mxu0 0
            %2422 = vmatmul.mubr.bf16.gmra.mrb[0].mxu0 %v1753
            %v2423 = vpop.f32.mrb[0].mxu0
            %v2424 = vadd.f32 0.0, %v2423
            %v2425 = vpop.f32.mrb[0].mxu0
            %v2426 = vpop.f32.mrb[0].mxu0
            %v2427 = vadd.f32 0.0, %v2426
            %v2428 = vpop.f32.mrb[0].mxu0
            %2429 = vmatprep.mubr.bf16.mxu0 0
            %2430 = vmatmul.mubr.bf16.gmra.mrb[0].mxu0 %v1756
            %v2431 = vpop.f32.mrb[0].mxu0
            %v2432 = vadd.f32 0.0, %v2431
            %v2433 = vpop.f32.mrb[0].mxu0
            %v2434 = vpop.f32.mrb[0].mxu0
            %v2435 = vadd.f32 0.0, %v2434
            %v2436 = vpop.f32.mrb[0].mxu0
            %2437 = vmatprep.mubr.bf16.mxu0 0
            %2438 = vmatmul.mubr.bf16.gmra.mrb[0].mxu0 %v1759
            %v2439 = vpop.f32.mrb[0].mxu0
            %v2440 = vadd.f32 0.0, %v2439
            %v2441 = vpop.f32.mrb[0].mxu0
            %v2442 = vpop.f32.mrb[0].mxu0
            %v2443 = vadd.f32 0.0, %v2442
            %v2444 = vpop.f32.mrb[0].mxu0
            %2445 = vmatprep.mubr.bf16.mxu0 0
            %2446 = vmatmul.mubr.bf16.gmra.mrb[0].mxu0 %v1762
            %v2447 = vpop.f32.mrb[0].mxu0
            %v2448 = vadd.f32 0.0, %v2447
            %v2449 = vpop.f32.mrb[0].mxu0
            %v2450 = vpop.f32.mrb[0].mxu0
            %v2451 = vadd.f32 0.0, %v2450
            %v2452 = vpop.f32.mrb[0].mxu0
            %2453 = vmatprep.mubr.bf16.mxu0 0
            %2454 = vmatmul.mubr.bf16.gmra.mrb[0].mxu0 %v1765
            %v2455 = vpop.f32.mrb[0].mxu0
            %v2456 = vadd.f32 0.0, %v2455
            %v2457 = vpop.f32.mrb[0].mxu0
            %v2458 = vpop.f32.mrb[0].mxu0
            %v2459 = vadd.f32 0.0, %v2458
            %v2460 = vpop.f32.mrb[0].mxu0
            %2461 = vmatprep.mubr.bf16.mxu0 0
            %2462 = vmatmul.mubr.bf16.gmra.mrb[0].mxu0 %v1768
            %v2463 = vpop.f32.mrb[0].mxu0
            %v2464 = vadd.f32 0.0, %v2463
            %v2465 = vpop.f32.mrb[0].mxu0
            %v2466 = vpop.f32.mrb[0].mxu0
            %v2467 = vadd.f32 0.0, %v2466
            %v2468 = vpop.f32.mrb[0].mxu0
            %2469 = vmatprep.mubr.bf16.mxu0 0
            %2470 = vmatmul.mubr.bf16.gmra.mrb[0].mxu0 %v1771
            %v2471 = vpop.f32.mrb[0].mxu0
            %v2472 = vadd.f32 0.0, %v2471
            %v2473 = vpop.f32.mrb[0].mxu0
            %v2474 = vpop.f32.mrb[0].mxu0
            %v2475 = vadd.f32 0.0, %v2474
            %v2476 = vpop.f32.mrb[0].mxu0
            %2477 = vmatprep.mubr.bf16.mxu0 0
            %2478 = vmatmul.mubr.bf16.gmra.mrb[0].mxu0 %v1774
            %v2479 = vpop.f32.mrb[0].mxu0
            %v2480 = vadd.f32 0.0, %v2479
            %v2481 = vpop.f32.mrb[0].mxu0
            %v2482 = vpop.f32.mrb[0].mxu0
            %v2483 = vadd.f32 0.0, %v2482
            %v2484 = vpop.f32.mrb[0].mxu0
            %2485 = vmatprep.mubr.bf16.mxu0 0
            %2486 = vmatmul.mubr.bf16.gmra.mrb[0].mxu0 %v1777
            %v2487 = vpop.f32.mrb[0].mxu0
            %v2488 = vadd.f32 0.0, %v2487
            %v2489 = vpop.f32.mrb[0].mxu0
            %v2490 = vpop.f32.mrb[0].mxu0
            %v2491 = vadd.f32 0.0, %v2490
            %v2492 = vpop.f32.mrb[0].mxu0
            %2493 = vmatprep.mubr.bf16.mxu0 0
            %2494 = vmatmul.mubr.bf16.gmra.mrb[0].mxu0 %v1780
            %v2495 = vpop.f32.mrb[0].mxu0
            %v2496 = vadd.f32 0.0, %v2495
            %v2497 = vpop.f32.mrb[0].mxu0
            %v2498 = vpop.f32.mrb[0].mxu0
            %v2499 = vadd.f32 0.0, %v2498
            %v2500 = vpop.f32.mrb[0].mxu0
            %2501 = vmatprep.mubr.bf16.mxu0 0
            %2502 = vmatmul.mubr.bf16.gmra.mrb[0].mxu0 %v1783
            %v2503 = vpop.f32.mrb[0].mxu0
            %v2504 = vadd.f32 0.0, %v2503
            %v2505 = vpop.f32.mrb[0].mxu0
            %v2506 = vpop.f32.mrb[0].mxu0
            %v2507 = vadd.f32 0.0, %v2506
            %v2508 = vpop.f32.mrb[0].mxu0
            %2509 = vmatprep.mubr.bf16.mxu0 0
            %2510 = vmatmul.mubr.bf16.gmra.mrb[0].mxu0 %v1786
            %v2511 = vpop.f32.mrb[0].mxu0
            %v2512 = vadd.f32 0.0, %v2511
            %v2513 = vpop.f32.mrb[0].mxu0
            %v2514 = vpop.f32.mrb[0].mxu0
            %v2515 = vadd.f32 0.0, %v2514
            %v2516 = vpop.f32.mrb[0].mxu0
            %2517 = vmatprep.mubr.bf16.mxu0 0
            %2518 = vmatmul.mubr.bf16.gmra.mrb[0].mxu0 %v1789
            %v2519 = vpop.f32.mrb[0].mxu0
            %v2520 = vadd.f32 0.0, %v2519
            %v2521 = vpop.f32.mrb[0].mxu0
            %v2522 = vpop.f32.mrb[0].mxu0
            %v2523 = vadd.f32 0.0, %v2522
            %v2524 = vpop.f32.mrb[0].mxu0
            %2525 = vmatprep.mubr.bf16.mxu0 0
            %2526 = vmatmul.mubr.bf16.gmra.mrb[0].mxu0 %v1792
            %v2527 = vpop.f32.mrb[0].mxu0
            %v2528 = vadd.f32 0.0, %v2527
            %v2529 = vpop.f32.mrb[0].mxu0
            %v2530 = vpop.f32.mrb[0].mxu0
            %v2531 = vadd.f32 0.0, %v2530
            %v2532 = vpop.f32.mrb[0].mxu0
            %2533 = vmatprep.mubr.bf16.mxu0 0
            %2534 = vmatmul.mubr.bf16.gmra.mrb[0].mxu0 %v1795
            %v2535 = vpop.f32.mrb[0].mxu0
            %v2536 = vadd.f32 0.0, %v2535
            %v2537 = vpop.f32.mrb[0].mxu0
            %v2538 = vpop.f32.mrb[0].mxu0
            %v2539 = vadd.f32 0.0, %v2538
            %v2540 = vpop.f32.mrb[0].mxu0
            %2541 = vmatprep.mubr.bf16.mxu0 0
            %2542 = vmatmul.mubr.bf16.gmra.mrb[0].mxu0 %v1798
            %v2543 = vpop.f32.mrb[0].mxu0
            %v2544 = vadd.f32 0.0, %v2543
            %v2545 = vpop.f32.mrb[0].mxu0
            %v2546 = vpop.f32.mrb[0].mxu0
            %v2547 = vadd.f32 0.0, %v2546
            %v2548 = vpop.f32.mrb[0].mxu0
            %2549 = vmatprep.mubr.bf16.mxu0 0
            %2550 = vmatmul.mubr.bf16.gmra.mrb[0].mxu0 %v1801
            %v2551 = vpop.f32.mrb[0].mxu0
            %v2552 = vadd.f32 0.0, %v2551
            %v2553 = vpop.f32.mrb[0].mxu0
            %v2554 = vpop.f32.mrb[0].mxu0
            %v2555 = vadd.f32 0.0, %v2554
            %v2556 = vpop.f32.mrb[0].mxu0
            %2557 = vmatprep.mubr.bf16.mxu0 0
            %2558 = vmatmul.mubr.bf16.gmra.mrb[0].mxu0 %v1804
            %v2559 = vpop.f32.mrb[0].mxu0
            %v2560 = vadd.f32 0.0, %v2559
            %v2561 = vpop.f32.mrb[0].mxu0
            %v2562 = vpop.f32.mrb[0].mxu0
            %v2563 = vadd.f32 0.0, %v2562
            %v2564 = vpop.f32.mrb[0].mxu0
            %2565 = vdwg.mxu0
            %v2566 = vadd.f32 %v1351, %v1848
            %v2567 = vadd.f32 %v1352, %v1851
            %v2568 = vadd.f32 %v1353, %v1856
            %v2569 = vadd.f32 %v1354, %v1859
            %v2570 = vadd.f32 %v1355, %v1864
            %v2571 = vadd.f32 %v1356, %v1867
            %v2572 = vadd.f32 %v1357, %v1872
            %v2573 = vadd.f32 %v1358, %v1875
            %v2574 = vadd.f32 %v1359, %v1880
            %v2575 = vadd.f32 %v1360, %v1883
            %v2576 = vadd.f32 %v1361, %v1888
            %v2577 = vadd.f32 %v1362, %v1891
            %v2578 = vadd.f32 %v1363, %v1896
            %v2579 = vadd.f32 %v1364, %v1899
            %v2580 = vadd.f32 %v1365, %v1904
            %v2581 = vadd.f32 %v1366, %v1907
            %v2582 = vadd.f32 %v1367, %v1912
            %v2583 = vadd.f32 %v1368, %v1915
            %v2584 = vadd.f32 %v1369, %v1920
            %v2585 = vadd.f32 %v1370, %v1923
            %v2586 = vadd.f32 %v1371, %v1928
            %v2587 = vadd.f32 %v1372, %v1931
            %v2588 = vadd.f32 %v1373, %v1936
            %v2589 = vadd.f32 %v1374, %v1939
            %v2590 = vadd.f32 %v1375, %v1944
            %v2591 = vadd.f32 %v1376, %v1947
            %v2592 = vadd.f32 %v1377, %v1952
            %v2593 = vadd.f32 %v1378, %v1955
            %v2594 = vadd.f32 %v1379, %v1960
            %v2595 = vadd.f32 %v1380, %v1963
            %v2596 = vadd.f32 %v1381, %v1968
            %v2597 = vadd.f32 %v1382, %v1971
            %v2598 = vadd.f32 %v1383, %v1976
            %v2599 = vadd.f32 %v1384, %v1979
            %v2600 = vadd.f32 %v1385, %v1984
            %v2601 = vadd.f32 %v1386, %v1987
            %v2602 = vadd.f32 %v1387, %v1992
            %v2603 = vadd.f32 %v1388, %v1995
            %v2604 = vadd.f32 %v1389, %v2000
            %v2605 = vadd.f32 %v1390, %v2003
            %v2606 = vadd.f32 %v1391, %v2008
            %v2607 = vadd.f32 %v1392, %v2011
            %v2608 = vadd.f32 %v1393, %v2016
            %v2609 = vadd.f32 %v1394, %v2019
            %v2610 = vadd.f32 %v1395, %v2024
            %v2611 = vadd.f32 %v1396, %v2027
            %v2612 = vadd.f32 %v1397, %v2032
            %v2613 = vadd.f32 %v1398, %v2035
            %v2614 = vadd.f32 %v1399, %v2040
            %v2615 = vadd.f32 %v1400, %v2043
            %v2616 = vadd.f32 %v1401, %v2048
            %v2617 = vadd.f32 %v1402, %v2051
            %v2618 = vadd.f32 %v1403, %v2056
            %v2619 = vadd.f32 %v1404, %v2059
            %v2620 = vadd.f32 %v1405, %v2064
            %v2621 = vadd.f32 %v1406, %v2067
            %v2622 = vadd.f32 %v1407, %v2072
            %v2623 = vadd.f32 %v1408, %v2075
            %v2624 = vadd.f32 %v1409, %v2080
            %v2625 = vadd.f32 %v1410, %v2083
            %v2626 = vadd.f32 %v1411, %v2088
            %v2627 = vadd.f32 %v1412, %v2091
            %v2628 = vadd.f32 %v1413, %v2096
            %v2629 = vadd.f32 %v1414, %v2099
            %v2630 = vadd.f32 %v1415, %v2104
            %v2631 = vadd.f32 %v1416, %v2107
            %v2632 = vadd.f32 %v1417, %v2112
            %v2633 = vadd.f32 %v1418, %v2115
            %v2634 = vadd.f32 %v1419, %v2120
            %v2635 = vadd.f32 %v1420, %v2123
            %v2636 = vadd.f32 %v1421, %v2128
            %v2637 = vadd.f32 %v1422, %v2131
            %v2638 = vadd.f32 %v1423, %v2136
            %v2639 = vadd.f32 %v1424, %v2139
            %v2640 = vadd.f32 %v1425, %v2144
            %v2641 = vadd.f32 %v1426, %v2147
            %v2642 = vadd.f32 %v1427, %v2152
            %v2643 = vadd.f32 %v1428, %v2155
            %v2644 = vadd.f32 %v1429, %v2160
            %v2645 = vadd.f32 %v1430, %v2163
            %v2646 = vadd.f32 %v1431, %v2168
            %v2647 = vadd.f32 %v1432, %v2171
            %v2648 = vadd.f32 %v1433, %v2176
            %v2649 = vadd.f32 %v1434, %v2179
            %v2650 = vadd.f32 %v1435, %v2184
            %v2651 = vadd.f32 %v1436, %v2187
            %v2652 = vadd.f32 %v1437, %v2192
            %v2653 = vadd.f32 %v1438, %v2195
            %v2654 = vadd.f32 %v1439, %v2200
            %v2655 = vadd.f32 %v1440, %v2203
            %v2656 = vadd.f32 %v1441, %v2208
            %v2657 = vadd.f32 %v1442, %v2211
            %v2658 = vadd.f32 %v1443, %v2216
            %v2659 = vadd.f32 %v1444, %v2219
            %v2660 = vadd.f32 %v1445, %v2224
            %v2661 = vadd.f32 %v1446, %v2227
            %v2662 = vadd.f32 %v1447, %v2232
            %v2663 = vadd.f32 %v1448, %v2235
            %v2664 = vadd.f32 %v1449, %v2240
            %v2665 = vadd.f32 %v1450, %v2243
            %v2666 = vadd.f32 %v1451, %v2248
            %v2667 = vadd.f32 %v1452, %v2251
            %v2668 = vadd.f32 %v1453, %v2256
            %v2669 = vadd.f32 %v1454, %v2259
            %v2670 = vadd.f32 %v1455, %v2264
            %v2671 = vadd.f32 %v1456, %v2267
            %v2672 = vadd.f32 %v1457, %v2272
            %v2673 = vadd.f32 %v1458, %v2275
            %v2674 = vadd.f32 %v1459, %v2280
            %v2675 = vadd.f32 %v1460, %v2283
            %v2676 = vadd.f32 %v1461, %v2288
            %v2677 = vadd.f32 %v1462, %v2291
            %v2678 = vadd.f32 %v1463, %v2296
            %v2679 = vadd.f32 %v1464, %v2299
            %v2680 = vadd.f32 %v1465, %v2304
            %v2681 = vadd.f32 %v1466, %v2307
            %v2682 = vadd.f32 %v1467, %v2312
            %v2683 = vadd.f32 %v1468, %v2315
            %v2684 = vadd.f32 %v1469, %v2320
            %v2685 = vadd.f32 %v1470, %v2323
            %v2686 = vadd.f32 %v1471, %v2328
            %v2687 = vadd.f32 %v1472, %v2331
            %v2688 = vadd.f32 %v1473, %v2336
            %v2689 = vadd.f32 %v1474, %v2339
            %v2690 = vadd.f32 %v1475, %v2344
            %v2691 = vadd.f32 %v1476, %v2347
            %v2692 = vadd.f32 %v1477, %v2352
            %v2693 = vadd.f32 %v1478, %v2355
            %v2694 = vadd.f32 %v1479, %v2360
            %v2695 = vadd.f32 %v1480, %v2363
            %v2696 = vadd.f32 %v1481, %v2368
            %v2697 = vadd.f32 %v1482, %v2371
            %v2698 = vadd.f32 %v1483, %v2376
            %v2699 = vadd.f32 %v1484, %v2379
            %v2700 = vadd.f32 %v1485, %v2384
            %v2701 = vadd.f32 %v1486, %v2387
            %v2702 = vadd.f32 %v1487, %v2392
            %v2703 = vadd.f32 %v1488, %v2395
            %v2704 = vadd.f32 %v1489, %v2400
            %v2705 = vadd.f32 %v1490, %v2403
            %v2706 = vadd.f32 %v1491, %v2408
            %v2707 = vadd.f32 %v1492, %v2411
            %v2708 = vadd.f32 %v1493, %v2416
            %v2709 = vadd.f32 %v1494, %v2419
            %v2710 = vadd.f32 %v1495, %v2424
            %v2711 = vadd.f32 %v1496, %v2427
            %v2712 = vadd.f32 %v1497, %v2432
            %v2713 = vadd.f32 %v1498, %v2435
            %v2714 = vadd.f32 %v1499, %v2440
            %v2715 = vadd.f32 %v1500, %v2443
            %v2716 = vadd.f32 %v1501, %v2448
            %v2717 = vadd.f32 %v1502, %v2451
            %v2718 = vadd.f32 %v1503, %v2456
            %v2719 = vadd.f32 %v1504, %v2459
            %v2720 = vadd.f32 %v1505, %v2464
            %v2721 = vadd.f32 %v1506, %v2467
            %v2722 = vadd.f32 %v1507, %v2472
            %v2723 = vadd.f32 %v1508, %v2475
            %v2724 = vadd.f32 %v1509, %v2480
            %v2725 = vadd.f32 %v1510, %v2483
            %v2726 = vadd.f32 %v1511, %v2488
            %v2727 = vadd.f32 %v1512, %v2491
            %v2728 = vadd.f32 %v1513, %v2496
            %v2729 = vadd.f32 %v1514, %v2499
            %v2730 = vadd.f32 %v1515, %v2504
            %v2731 = vadd.f32 %v1516, %v2507
            %v2732 = vadd.f32 %v1517, %v2512
            %v2733 = vadd.f32 %v1518, %v2515
            %v2734 = vadd.f32 %v1519, %v2520
            %v2735 = vadd.f32 %v1520, %v2523
            %v2736 = vadd.f32 %v1521, %v2528
            %v2737 = vadd.f32 %v1522, %v2531
            %v2738 = vadd.f32 %v1523, %v2536
            %v2739 = vadd.f32 %v1524, %v2539
            %v2740 = vadd.f32 %v1525, %v2544
            %v2741 = vadd.f32 %v1526, %v2547
            %v2742 = vadd.f32 %v1527, %v2552
            %v2743 = vadd.f32 %v1528, %v2555
            %v2744 = vadd.f32 %v1529, %v2560
            %v2745 = vadd.f32 %v1530, %v2563
            %2746 = vst.msk [vmem:[#allocation3] sm:$0xff] %vm882, %v2566
            %2747 = vst.msk [vmem:[#allocation3 + $0x8] sm:$0xff] %vm882, %v2567
            %2748 = vst.msk [vmem:[#allocation3 + $0x10] sm:$0xff] %vm882, %v2568
            %2749 = vst.msk [vmem:[#allocation3 + $0x18] sm:$0xff] %vm882, %v2569
            %2750 = vst.msk [vmem:[#allocation3 + $0x20] sm:$0xff] %vm882, %v2570
            %2751 = vst.msk [vmem:[#allocation3 + $0x28] sm:$0xff] %vm882, %v2571
            %2752 = vst.msk [vmem:[#allocation3 + $0x30] sm:$0xff] %vm882, %v2572
            %2753 = vst.msk [vmem:[#allocation3 + $0x38] sm:$0xff] %vm882, %v2573
            %2754 = vst.msk [vmem:[#allocation3 + $0x40] sm:$0xff] %vm882, %v2574
            %2755 = vst.msk [vmem:[#allocation3 + $0x48] sm:$0xff] %vm882, %v2575
            %2756 = vst.msk [vmem:[#allocation3 + $0x50] sm:$0xff] %vm882, %v2576
            %2757 = vst.msk [vmem:[#allocation3 + $0x58] sm:$0xff] %vm882, %v2577
            %2758 = vst.msk [vmem:[#allocation3 + $0x60] sm:$0xff] %vm882, %v2578
            %2759 = vst.msk [vmem:[#allocation3 + $0x68] sm:$0xff] %vm882, %v2579
            %2760 = vst.msk [vmem:[#allocation3 + $0x70] sm:$0xff] %vm882, %v2580
            %2761 = vst.msk [vmem:[#allocation3 + $0x78] sm:$0xff] %vm882, %v2581
            %2762 = vst.msk [vmem:[#allocation3 + $0x80] sm:$0xff] %vm882, %v2582
            %2763 = vst.msk [vmem:[#allocation3 + $0x88] sm:$0xff] %vm882, %v2583
            %2764 = vst.msk [vmem:[#allocation3 + $0x90] sm:$0xff] %vm882, %v2584
            %2765 = vst.msk [vmem:[#allocation3 + $0x98] sm:$0xff] %vm882, %v2585
            %2766 = vst.msk [vmem:[#allocation3 + $0xa0] sm:$0xff] %vm882, %v2586
            %2767 = vst.msk [vmem:[#allocation3 + $0xa8] sm:$0xff] %vm882, %v2587
            %2768 = vst.msk [vmem:[#allocation3 + $0xb0] sm:$0xff] %vm882, %v2588
            %2769 = vst.msk [vmem:[#allocation3 + $0xb8] sm:$0xff] %vm882, %v2589
            %2770 = vst.msk [vmem:[#allocation3 + $0xc0] sm:$0xff] %vm882, %v2590
            %2771 = vst.msk [vmem:[#allocation3 + $0xc8] sm:$0xff] %vm882, %v2591
            %2772 = vst.msk [vmem:[#allocation3 + $0xd0] sm:$0xff] %vm882, %v2592
            %2773 = vst.msk [vmem:[#allocation3 + $0xd8] sm:$0xff] %vm882, %v2593
            %2774 = vst.msk [vmem:[#allocation3 + $0xe0] sm:$0xff] %vm882, %v2594
            %2775 = vst.msk [vmem:[#allocation3 + $0xe8] sm:$0xff] %vm882, %v2595
            %2776 = vst.msk [vmem:[#allocation3 + $0xf0] sm:$0xff] %vm882, %v2596
            %2777 = vst.msk [vmem:[#allocation3 + $0xf8] sm:$0xff] %vm882, %v2597
            %2778 = vst.msk [vmem:[#allocation3 + $0x100] sm:$0xff] %vm882, %v2598
            %2779 = vst.msk [vmem:[#allocation3 + $0x108] sm:$0xff] %vm882, %v2599
            %2780 = vst.msk [vmem:[#allocation3 + $0x110] sm:$0xff] %vm882, %v2600
            %2781 = vst.msk [vmem:[#allocation3 + $0x118] sm:$0xff] %vm882, %v2601
            %2782 = vst.msk [vmem:[#allocation3 + $0x120] sm:$0xff] %vm882, %v2602
            %2783 = vst.msk [vmem:[#allocation3 + $0x128] sm:$0xff] %vm882, %v2603
            %2784 = vst.msk [vmem:[#allocation3 + $0x130] sm:$0xff] %vm882, %v2604
            %2785 = vst.msk [vmem:[#allocation3 + $0x138] sm:$0xff] %vm882, %v2605
            %2786 = vst.msk [vmem:[#allocation3 + $0x140] sm:$0xff] %vm882, %v2606
            %2787 = vst.msk [vmem:[#allocation3 + $0x148] sm:$0xff] %vm882, %v2607
            %2788 = vst.msk [vmem:[#allocation3 + $0x150] sm:$0xff] %vm882, %v2608
            %2789 = vst.msk [vmem:[#allocation3 + $0x158] sm:$0xff] %vm882, %v2609
            %2790 = vst.msk [vmem:[#allocation3 + $0x160] sm:$0xff] %vm882, %v2610
            %2791 = vst.msk [vmem:[#allocation3 + $0x168] sm:$0xff] %vm882, %v2611
            %2792 = vst.msk [vmem:[#allocation3 + $0x170] sm:$0xff] %vm882, %v2612
            %2793 = vst.msk [vmem:[#allocation3 + $0x178] sm:$0xff] %vm882, %v2613
            %2794 = vst.msk [vmem:[#allocation3 + $0x180] sm:$0xff] %vm882, %v2614
            %2795 = vst.msk [vmem:[#allocation3 + $0x188] sm:$0xff] %vm882, %v2615
            %2796 = vst.msk [vmem:[#allocation3 + $0x190] sm:$0xff] %vm882, %v2616
            %2797 = vst.msk [vmem:[#allocation3 + $0x198] sm:$0xff] %vm882, %v2617
            %2798 = vst.msk [vmem:[#allocation3 + $0x1a0] sm:$0xff] %vm882, %v2618
            %2799 = vst.msk [vmem:[#allocation3 + $0x1a8] sm:$0xff] %vm882, %v2619
            %2800 = vst.msk [vmem:[#allocation3 + $0x1b0] sm:$0xff] %vm882, %v2620
            %2801 = vst.msk [vmem:[#allocation3 + $0x1b8] sm:$0xff] %vm882, %v2621
            %2802 = vst.msk [vmem:[#allocation3 + $0x1c0] sm:$0xff] %vm882, %v2622
            %2803 = vst.msk [vmem:[#allocation3 + $0x1c8] sm:$0xff] %vm882, %v2623
            %2804 = vst.msk [vmem:[#allocation3 + $0x1d0] sm:$0xff] %vm882, %v2624
            %2805 = vst.msk [vmem:[#allocation3 + $0x1d8] sm:$0xff] %vm882, %v2625
            %2806 = vst.msk [vmem:[#allocation3 + $0x1e0] sm:$0xff] %vm882, %v2626
            %2807 = vst.msk [vmem:[#allocation3 + $0x1e8] sm:$0xff] %vm882, %v2627
            %2808 = vst.msk [vmem:[#allocation3 + $0x1f0] sm:$0xff] %vm882, %v2628
            %2809 = vst.msk [vmem:[#allocation3 + $0x1f8] sm:$0xff] %vm882, %v2629
            %2810 = vst.msk [vmem:[#allocation3 + $0x200] sm:$0xff] %vm882, %v2630
            %2811 = vst.msk [vmem:[#allocation3 + $0x208] sm:$0xff] %vm882, %v2631
            %2812 = vst.msk [vmem:[#allocation3 + $0x210] sm:$0xff] %vm882, %v2632
            %2813 = vst.msk [vmem:[#allocation3 + $0x218] sm:$0xff] %vm882, %v2633
            %2814 = vst.msk [vmem:[#allocation3 + $0x220] sm:$0xff] %vm882, %v2634
            %2815 = vst.msk [vmem:[#allocation3 + $0x228] sm:$0xff] %vm882, %v2635
            %2816 = vst.msk [vmem:[#allocation3 + $0x230] sm:$0xff] %vm882, %v2636
            %2817 = vst.msk [vmem:[#allocation3 + $0x238] sm:$0xff] %vm882, %v2637
            %2818 = vst.msk [vmem:[#allocation3 + $0x240] sm:$0xff] %vm882, %v2638
            %2819 = vst.msk [vmem:[#allocation3 + $0x248] sm:$0xff] %vm882, %v2639
            %2820 = vst.msk [vmem:[#allocation3 + $0x250] sm:$0xff] %vm882, %v2640
            %2821 = vst.msk [vmem:[#allocation3 + $0x258] sm:$0xff] %vm882, %v2641
            %2822 = vst.msk [vmem:[#allocation3 + $0x260] sm:$0xff] %vm882, %v2642
            %2823 = vst.msk [vmem:[#allocation3 + $0x268] sm:$0xff] %vm882, %v2643
            %2824 = vst.msk [vmem:[#allocation3 + $0x270] sm:$0xff] %vm882, %v2644
            %2825 = vst.msk [vmem:[#allocation3 + $0x278] sm:$0xff] %vm882, %v2645
            %2826 = vst.msk [vmem:[#allocation3 + $0x280] sm:$0xff] %vm882, %v2646
            %2827 = vst.msk [vmem:[#allocation3 + $0x288] sm:$0xff] %vm882, %v2647
            %2828 = vst.msk [vmem:[#allocation3 + $0x290] sm:$0xff] %vm882, %v2648
            %2829 = vst.msk [vmem:[#allocation3 + $0x298] sm:$0xff] %vm882, %v2649
            %2830 = vst.msk [vmem:[#allocation3 + $0x2a0] sm:$0xff] %vm882, %v2650
            %2831 = vst.msk [vmem:[#allocation3 + $0x2a8] sm:$0xff] %vm882, %v2651
            %2832 = vst.msk [vmem:[#allocation3 + $0x2b0] sm:$0xff] %vm882, %v2652
            %2833 = vst.msk [vmem:[#allocation3 + $0x2b8] sm:$0xff] %vm882, %v2653
            %2834 = vst.msk [vmem:[#allocation3 + $0x2c0] sm:$0xff] %vm882, %v2654
            %2835 = vst.msk [vmem:[#allocation3 + $0x2c8] sm:$0xff] %vm882, %v2655
            %2836 = vst.msk [vmem:[#allocation3 + $0x2d0] sm:$0xff] %vm882, %v2656
            %2837 = vst.msk [vmem:[#allocation3 + $0x2d8] sm:$0xff] %vm882, %v2657
            %2838 = vst.msk [vmem:[#allocation3 + $0x2e0] sm:$0xff] %vm882, %v2658
            %2839 = vst.msk [vmem:[#allocation3 + $0x2e8] sm:$0xff] %vm882, %v2659
            %2840 = vst.msk [vmem:[#allocation3 + $0x2f0] sm:$0xff] %vm882, %v2660
            %2841 = vst.msk [vmem:[#allocation3 + $0x2f8] sm:$0xff] %vm882, %v2661
            %2842 = vst.msk [vmem:[#allocation3 + $0x300] sm:$0xff] %vm882, %v2662
            %2843 = vst.msk [vmem:[#allocation3 + $0x308] sm:$0xff] %vm882, %v2663
            %2844 = vst.msk [vmem:[#allocation3 + $0x310] sm:$0xff] %vm882, %v2664
            %2845 = vst.msk [vmem:[#allocation3 + $0x318] sm:$0xff] %vm882, %v2665
            %2846 = vst.msk [vmem:[#allocation3 + $0x320] sm:$0xff] %vm882, %v2666
            %2847 = vst.msk [vmem:[#allocation3 + $0x328] sm:$0xff] %vm882, %v2667
            %2848 = vst.msk [vmem:[#allocation3 + $0x330] sm:$0xff] %vm882, %v2668
            %2849 = vst.msk [vmem:[#allocation3 + $0x338] sm:$0xff] %vm882, %v2669
            %2850 = vst.msk [vmem:[#allocation3 + $0x340] sm:$0xff] %vm882, %v2670
            %2851 = vst.msk [vmem:[#allocation3 + $0x348] sm:$0xff] %vm882, %v2671
            %2852 = vst.msk [vmem:[#allocation3 + $0x350] sm:$0xff] %vm882, %v2672
            %2853 = vst.msk [vmem:[#allocation3 + $0x358] sm:$0xff] %vm882, %v2673
            %2854 = vst.msk [vmem:[#allocation3 + $0x360] sm:$0xff] %vm882, %v2674
            %2855 = vst.msk [vmem:[#allocation3 + $0x368] sm:$0xff] %vm882, %v2675
            %2856 = vst.msk [vmem:[#allocation3 + $0x370] sm:$0xff] %vm882, %v2676
            %2857 = vst.msk [vmem:[#allocation3 + $0x378] sm:$0xff] %vm882, %v2677
            %2858 = vst.msk [vmem:[#allocation3 + $0x380] sm:$0xff] %vm882, %v2678
            %2859 = vst.msk [vmem:[#allocation3 + $0x388] sm:$0xff] %vm882, %v2679
            %2860 = vst.msk [vmem:[#allocation3 + $0x390] sm:$0xff] %vm882, %v2680
            %2861 = vst.msk [vmem:[#allocation3 + $0x398] sm:$0xff] %vm882, %v2681
            %2862 = vst.msk [vmem:[#allocation3 + $0x3a0] sm:$0xff] %vm882, %v2682
            %2863 = vst.msk [vmem:[#allocation3 + $0x3a8] sm:$0xff] %vm882, %v2683
            %2864 = vst.msk [vmem:[#allocation3 + $0x3b0] sm:$0xff] %vm882, %v2684
            %2865 = vst.msk [vmem:[#allocation3 + $0x3b8] sm:$0xff] %vm882, %v2685
            %2866 = vst.msk [vmem:[#allocation3 + $0x3c0] sm:$0xff] %vm882, %v2686
            %2867 = vst.msk [vmem:[#allocation3 + $0x3c8] sm:$0xff] %vm882, %v2687
            %2868 = vst.msk [vmem:[#allocation3 + $0x3d0] sm:$0xff] %vm882, %v2688
            %2869 = vst.msk [vmem:[#allocation3 + $0x3d8] sm:$0xff] %vm882, %v2689
            %2870 = vst.msk [vmem:[#allocation3 + $0x3e0] sm:$0xff] %vm882, %v2690
            %2871 = vst.msk [vmem:[#allocation3 + $0x3e8] sm:$0xff] %vm882, %v2691
            %2872 = vst.msk [vmem:[#allocation3 + $0x3f0] sm:$0xff] %vm882, %v2692
            %2873 = vst.msk [vmem:[#allocation3 + $0x3f8] sm:$0xff] %vm882, %v2693
            %2874 = vst.msk [vmem:[#allocation3 + $0x400] sm:$0xff] %vm882, %v2694
            %2875 = vst.msk [vmem:[#allocation3 + $0x408] sm:$0xff] %vm882, %v2695
            %2876 = vst.msk [vmem:[#allocation3 + $0x410] sm:$0xff] %vm882, %v2696
            %2877 = vst.msk [vmem:[#allocation3 + $0x418] sm:$0xff] %vm882, %v2697
            %2878 = vst.msk [vmem:[#allocation3 + $0x420] sm:$0xff] %vm882, %v2698
            %2879 = vst.msk [vmem:[#allocation3 + $0x428] sm:$0xff] %vm882, %v2699
            %2880 = vst.msk [vmem:[#allocation3 + $0x430] sm:$0xff] %vm882, %v2700
            %2881 = vst.msk [vmem:[#allocation3 + $0x438] sm:$0xff] %vm882, %v2701
            %2882 = vst.msk [vmem:[#allocation3 + $0x440] sm:$0xff] %vm882, %v2702
            %2883 = vst.msk [vmem:[#allocation3 + $0x448] sm:$0xff] %vm882, %v2703
            %2884 = vst.msk [vmem:[#allocation3 + $0x450] sm:$0xff] %vm882, %v2704
            %2885 = vst.msk [vmem:[#allocation3 + $0x458] sm:$0xff] %vm882, %v2705
            %2886 = vst.msk [vmem:[#allocation3 + $0x460] sm:$0xff] %vm882, %v2706
            %2887 = vst.msk [vmem:[#allocation3 + $0x468] sm:$0xff] %vm882, %v2707
            %2888 = vst.msk [vmem:[#allocation3 + $0x470] sm:$0xff] %vm882, %v2708
            %2889 = vst.msk [vmem:[#allocation3 + $0x478] sm:$0xff] %vm882, %v2709
            %2890 = vst.msk [vmem:[#allocation3 + $0x480] sm:$0xff] %vm882, %v2710
            %2891 = vst.msk [vmem:[#allocation3 + $0x488] sm:$0xff] %vm882, %v2711
            %2892 = vst.msk [vmem:[#allocation3 + $0x490] sm:$0xff] %vm882, %v2712
            %2893 = vst.msk [vmem:[#allocation3 + $0x498] sm:$0xff] %vm882, %v2713
            %2894 = vst.msk [vmem:[#allocation3 + $0x4a0] sm:$0xff] %vm882, %v2714
            %2895 = vst.msk [vmem:[#allocation3 + $0x4a8] sm:$0xff] %vm882, %v2715
            %2896 = vst.msk [vmem:[#allocation3 + $0x4b0] sm:$0xff] %vm882, %v2716
            %2897 = vst.msk [vmem:[#allocation3 + $0x4b8] sm:$0xff] %vm882, %v2717
            %2898 = vst.msk [vmem:[#allocation3 + $0x4c0] sm:$0xff] %vm882, %v2718
            %2899 = vst.msk [vmem:[#allocation3 + $0x4c8] sm:$0xff] %vm882, %v2719
            %2900 = vst.msk [vmem:[#allocation3 + $0x4d0] sm:$0xff] %vm882, %v2720
            %2901 = vst.msk [vmem:[#allocation3 + $0x4d8] sm:$0xff] %vm882, %v2721
            %2902 = vst.msk [vmem:[#allocation3 + $0x4e0] sm:$0xff] %vm882, %v2722
            %2903 = vst.msk [vmem:[#allocation3 + $0x4e8] sm:$0xff] %vm882, %v2723
            %2904 = vst.msk [vmem:[#allocation3 + $0x4f0] sm:$0xff] %vm882, %v2724
            %2905 = vst.msk [vmem:[#allocation3 + $0x4f8] sm:$0xff] %vm882, %v2725
            %2906 = vst.msk [vmem:[#allocation3 + $0x500] sm:$0xff] %vm882, %v2726
            %2907 = vst.msk [vmem:[#allocation3 + $0x508] sm:$0xff] %vm882, %v2727
            %2908 = vst.msk [vmem:[#allocation3 + $0x510] sm:$0xff] %vm882, %v2728
            %2909 = vst.msk [vmem:[#allocation3 + $0x518] sm:$0xff] %vm882, %v2729
            %2910 = vst.msk [vmem:[#allocation3 + $0x520] sm:$0xff] %vm882, %v2730
            %2911 = vst.msk [vmem:[#allocation3 + $0x528] sm:$0xff] %vm882, %v2731
            %2912 = vst.msk [vmem:[#allocation3 + $0x530] sm:$0xff] %vm882, %v2732
            %2913 = vst.msk [vmem:[#allocation3 + $0x538] sm:$0xff] %vm882, %v2733
            %2914 = vst.msk [vmem:[#allocation3 + $0x540] sm:$0xff] %vm882, %v2734
            %2915 = vst.msk [vmem:[#allocation3 + $0x548] sm:$0xff] %vm882, %v2735
            %2916 = vst.msk [vmem:[#allocation3 + $0x550] sm:$0xff] %vm882, %v2736
            %2917 = vst.msk [vmem:[#allocation3 + $0x558] sm:$0xff] %vm882, %v2737
            %2918 = vst.msk [vmem:[#allocation3 + $0x560] sm:$0xff] %vm882, %v2738
            %2919 = vst.msk [vmem:[#allocation3 + $0x568] sm:$0xff] %vm882, %v2739
            %2920 = vst.msk [vmem:[#allocation3 + $0x570] sm:$0xff] %vm882, %v2740
            %2921 = vst.msk [vmem:[#allocation3 + $0x578] sm:$0xff] %vm882, %v2741
            %2922 = vst.msk [vmem:[#allocation3 + $0x580] sm:$0xff] %vm882, %v2742
            %2923 = vst.msk [vmem:[#allocation3 + $0x588] sm:$0xff] %vm882, %v2743
            %2924 = vst.msk [vmem:[#allocation3 + $0x590] sm:$0xff] %vm882, %v2744
            %2925 = vst.msk [vmem:[#allocation3 + $0x598] sm:$0xff] %vm882, %v2745
          $region76: #{_tudui_forward.1} parent=68 // loop_footer
            %s1074 = sadd.s32 1, %s1070
          $region77: #{_tudui_forward.1} parent=68 // loop_footer_branch
            %1069 = sbr.rel target = $region73
          $region78: #{_tudui_forward.1} parent=68 // loop_exit
            _
        $region69: #{_tudui_forward.1} parent=63 // loop_footer
          %s1068 = sadd.s32 1, %s1064
        $region70: #{_tudui_forward.1} parent=63 // loop_footer_branch
          %1063 = sbr.rel target = $region66
        $region71: #{_tudui_forward.1} parent=63 // loop_exit
          _
        %v2926 = vld [vmem:[#allocation3 + $0x50] sm:$0xff]
        %v2927 = vld [vmem:[#allocation3 + $0x58] sm:$0xff]
        %v2928 = vld [vmem:[#allocation3 + $0x60] sm:$0xff]
        %v2929 = vld [vmem:[#allocation3 + $0x68] sm:$0xff]
        %v2930 = vld [vmem:[#allocation3 + $0x70] sm:$0xff]
        %2931 = vst.msk [vmem:[#allocation4] sm:$0xff] %vm882, %v2926
        %2932 = vst.msk [vmem:[#allocation4 + $0x8] sm:$0xff] %vm882, %v2927
        %2933 = vst.msk [vmem:[#allocation4 + $0x10] sm:$0xff] %vm882, %v2928
        %2934 = vst.msk [vmem:[#allocation4 + $0x18] sm:$0xff] %vm882, %v2929
        %2935 = vst.msk [vmem:[#allocation4 + $0x20] sm:$0xff] %vm882, %v2930
        %v2936 = vld [vmem:[#allocation3 + $0x78] sm:$0xff]
        %v2937 = vld [vmem:[#allocation3 + $0x80] sm:$0xff]
        %v2938 = vld [vmem:[#allocation3 + $0x88] sm:$0xff]
        %v2939 = vld [vmem:[#allocation3 + $0x90] sm:$0xff]
        %v2940 = vld [vmem:[#allocation3 + $0x98] sm:$0xff]
        %s2941 = scalar_lea.vmem [#allocation4], 40
        %2942 = vst.msk [vmem:[%s2941] sm:$0xff] %vm882, %v2936
        %2943 = vst.msk [vmem:[%s2941 + $0x8] sm:$0xff] %vm882, %v2937
        %2944 = vst.msk [vmem:[%s2941 + $0x10] sm:$0xff] %vm882, %v2938
        %2945 = vst.msk [vmem:[%s2941 + $0x18] sm:$0xff] %vm882, %v2939
        %2946 = vst.msk [vmem:[%s2941 + $0x20] sm:$0xff] %vm882, %v2940
        %v2947 = vld [vmem:[#allocation3 + $0xa0] sm:$0xff]
        %v2948 = vld [vmem:[#allocation3 + $0xa8] sm:$0xff]
        %v2949 = vld [vmem:[#allocation3 + $0xb0] sm:$0xff]
        %v2950 = vld [vmem:[#allocation3 + $0xb8] sm:$0xff]
        %v2951 = vld [vmem:[#allocation3 + $0xc0] sm:$0xff]
        %s2952 = scalar_lea.vmem [#allocation4], 80
        %2953 = vst.msk [vmem:[%s2952] sm:$0xff] %vm882, %v2947
        %2954 = vst.msk [vmem:[%s2952 + $0x8] sm:$0xff] %vm882, %v2948
        %2955 = vst.msk [vmem:[%s2952 + $0x10] sm:$0xff] %vm882, %v2949
        %2956 = vst.msk [vmem:[%s2952 + $0x18] sm:$0xff] %vm882, %v2950
        %2957 = vst.msk [vmem:[%s2952 + $0x20] sm:$0xff] %vm882, %v2951
        %v2958 = vld [vmem:[#allocation3 + $0xc8] sm:$0xff]
        %v2959 = vld [vmem:[#allocation3 + $0xd0] sm:$0xff]
        %v2960 = vld [vmem:[#allocation3 + $0xd8] sm:$0xff]
        %v2961 = vld [vmem:[#allocation3 + $0xe0] sm:$0xff]
        %v2962 = vld [vmem:[#allocation3 + $0xe8] sm:$0xff]
        %s2963 = scalar_lea.vmem [#allocation4], 120
        %2964 = vst.msk [vmem:[%s2963] sm:$0xff] %vm882, %v2958
        %2965 = vst.msk [vmem:[%s2963 + $0x8] sm:$0xff] %vm882, %v2959
        %2966 = vst.msk [vmem:[%s2963 + $0x10] sm:$0xff] %vm882, %v2960
        %2967 = vst.msk [vmem:[%s2963 + $0x18] sm:$0xff] %vm882, %v2961
        %2968 = vst.msk [vmem:[%s2963 + $0x20] sm:$0xff] %vm882, %v2962
        %v2969 = vld [vmem:[#allocation3 + $0xf0] sm:$0xff]
        %v2970 = vld [vmem:[#allocation3 + $0xf8] sm:$0xff]
        %v2971 = vld [vmem:[#allocation3 + $0x100] sm:$0xff]
        %v2972 = vld [vmem:[#allocation3 + $0x108] sm:$0xff]
        %v2973 = vld [vmem:[#allocation3 + $0x110] sm:$0xff]
        %s2974 = scalar_lea.vmem [#allocation4], 160
        %2975 = vst.msk [vmem:[%s2974] sm:$0xff] %vm882, %v2969
        %2976 = vst.msk [vmem:[%s2974 + $0x8] sm:$0xff] %vm882, %v2970
        %2977 = vst.msk [vmem:[%s2974 + $0x10] sm:$0xff] %vm882, %v2971
        %2978 = vst.msk [vmem:[%s2974 + $0x18] sm:$0xff] %vm882, %v2972
        %2979 = vst.msk [vmem:[%s2974 + $0x20] sm:$0xff] %vm882, %v2973
        %v2980 = vld [vmem:[#allocation3 + $0x118] sm:$0xff]
        %v2981 = vld [vmem:[#allocation3 + $0x120] sm:$0xff]
        %v2982 = vld [vmem:[#allocation3 + $0x128] sm:$0xff]
        %v2983 = vld [vmem:[#allocation3 + $0x130] sm:$0xff]
        %v2984 = vld [vmem:[#allocation3 + $0x138] sm:$0xff]
        %s2985 = scalar_lea.vmem [#allocation4], 200
        %2986 = vst.msk [vmem:[%s2985] sm:$0xff] %vm882, %v2980
        %2987 = vst.msk [vmem:[%s2985 + $0x8] sm:$0xff] %vm882, %v2981
        %2988 = vst.msk [vmem:[%s2985 + $0x10] sm:$0xff] %vm882, %v2982
        %2989 = vst.msk [vmem:[%s2985 + $0x18] sm:$0xff] %vm882, %v2983
        %2990 = vst.msk [vmem:[%s2985 + $0x20] sm:$0xff] %vm882, %v2984
        %v2991 = vld [vmem:[#allocation3 + $0x140] sm:$0xff]
        %v2992 = vld [vmem:[#allocation3 + $0x148] sm:$0xff]
        %v2993 = vld [vmem:[#allocation3 + $0x150] sm:$0xff]
        %v2994 = vld [vmem:[#allocation3 + $0x158] sm:$0xff]
        %v2995 = vld [vmem:[#allocation3 + $0x160] sm:$0xff]
        %s2996 = scalar_lea.vmem [#allocation4], 240
        %2997 = vst.msk [vmem:[%s2996] sm:$0xff] %vm882, %v2991
        %2998 = vst.msk [vmem:[%s2996 + $0x8] sm:$0xff] %vm882, %v2992
        %2999 = vst.msk [vmem:[%s2996 + $0x10] sm:$0xff] %vm882, %v2993
        %3000 = vst.msk [vmem:[%s2996 + $0x18] sm:$0xff] %vm882, %v2994
        %3001 = vst.msk [vmem:[%s2996 + $0x20] sm:$0xff] %vm882, %v2995
        %v3002 = vld [vmem:[#allocation3 + $0x168] sm:$0xff]
        %v3003 = vld [vmem:[#allocation3 + $0x170] sm:$0xff]
        %v3004 = vld [vmem:[#allocation3 + $0x178] sm:$0xff]
        %v3005 = vld [vmem:[#allocation3 + $0x180] sm:$0xff]
        %v3006 = vld [vmem:[#allocation3 + $0x188] sm:$0xff]
        %s3007 = scalar_lea.vmem [#allocation4], 280
        %3008 = vst.msk [vmem:[%s3007] sm:$0xff] %vm882, %v3002
        %3009 = vst.msk [vmem:[%s3007 + $0x8] sm:$0xff] %vm882, %v3003
        %3010 = vst.msk [vmem:[%s3007 + $0x10] sm:$0xff] %vm882, %v3004
        %3011 = vst.msk [vmem:[%s3007 + $0x18] sm:$0xff] %vm882, %v3005
        %3012 = vst.msk [vmem:[%s3007 + $0x20] sm:$0xff] %vm882, %v3006
        %v3013 = vld [vmem:[#allocation3 + $0x190] sm:$0xff]
        %v3014 = vld [vmem:[#allocation3 + $0x198] sm:$0xff]
        %v3015 = vld [vmem:[#allocation3 + $0x1a0] sm:$0xff]
        %v3016 = vld [vmem:[#allocation3 + $0x1a8] sm:$0xff]
        %v3017 = vld [vmem:[#allocation3 + $0x1b0] sm:$0xff]
        %s3018 = scalar_lea.vmem [#allocation4], 320
        %3019 = vst.msk [vmem:[%s3018] sm:$0xff] %vm882, %v3013
        %3020 = vst.msk [vmem:[%s3018 + $0x8] sm:$0xff] %vm882, %v3014
        %3021 = vst.msk [vmem:[%s3018 + $0x10] sm:$0xff] %vm882, %v3015
        %3022 = vst.msk [vmem:[%s3018 + $0x18] sm:$0xff] %vm882, %v3016
        %3023 = vst.msk [vmem:[%s3018 + $0x20] sm:$0xff] %vm882, %v3017
        %v3024 = vld [vmem:[#allocation3 + $0x1b8] sm:$0xff]
        %v3025 = vld [vmem:[#allocation3 + $0x1c0] sm:$0xff]
        %v3026 = vld [vmem:[#allocation3 + $0x1c8] sm:$0xff]
        %v3027 = vld [vmem:[#allocation3 + $0x1d0] sm:$0xff]
        %v3028 = vld [vmem:[#allocation3 + $0x1d8] sm:$0xff]
        %s3029 = scalar_lea.vmem [#allocation4], 360
        %3030 = vst.msk [vmem:[%s3029] sm:$0xff] %vm882, %v3024
        %3031 = vst.msk [vmem:[%s3029 + $0x8] sm:$0xff] %vm882, %v3025
        %3032 = vst.msk [vmem:[%s3029 + $0x10] sm:$0xff] %vm882, %v3026
        %3033 = vst.msk [vmem:[%s3029 + $0x18] sm:$0xff] %vm882, %v3027
        %3034 = vst.msk [vmem:[%s3029 + $0x20] sm:$0xff] %vm882, %v3028
        %v3035 = vld [vmem:[#allocation3 + $0x1e0] sm:$0xff]
        %v3036 = vld [vmem:[#allocation3 + $0x1e8] sm:$0xff]
        %v3037 = vld [vmem:[#allocation3 + $0x1f0] sm:$0xff]
        %v3038 = vld [vmem:[#allocation3 + $0x1f8] sm:$0xff]
        %v3039 = vld [vmem:[#allocation3 + $0x200] sm:$0xff]
        %s3040 = scalar_lea.vmem [#allocation4], 400
        %3041 = vst.msk [vmem:[%s3040] sm:$0xff] %vm882, %v3035
        %3042 = vst.msk [vmem:[%s3040 + $0x8] sm:$0xff] %vm882, %v3036
        %3043 = vst.msk [vmem:[%s3040 + $0x10] sm:$0xff] %vm882, %v3037
        %3044 = vst.msk [vmem:[%s3040 + $0x18] sm:$0xff] %vm882, %v3038
        %3045 = vst.msk [vmem:[%s3040 + $0x20] sm:$0xff] %vm882, %v3039
        %v3046 = vld [vmem:[#allocation3 + $0x208] sm:$0xff]
        %v3047 = vld [vmem:[#allocation3 + $0x210] sm:$0xff]
        %v3048 = vld [vmem:[#allocation3 + $0x218] sm:$0xff]
        %v3049 = vld [vmem:[#allocation3 + $0x220] sm:$0xff]
        %v3050 = vld [vmem:[#allocation3 + $0x228] sm:$0xff]
        %s3051 = scalar_lea.vmem [#allocation4], 440
        %3052 = vst.msk [vmem:[%s3051] sm:$0xff] %vm882, %v3046
        %3053 = vst.msk [vmem:[%s3051 + $0x8] sm:$0xff] %vm882, %v3047
        %3054 = vst.msk [vmem:[%s3051 + $0x10] sm:$0xff] %vm882, %v3048
        %3055 = vst.msk [vmem:[%s3051 + $0x18] sm:$0xff] %vm882, %v3049
        %3056 = vst.msk [vmem:[%s3051 + $0x20] sm:$0xff] %vm882, %v3050
        %v3057 = vld [vmem:[#allocation3 + $0x230] sm:$0xff]
        %v3058 = vld [vmem:[#allocation3 + $0x238] sm:$0xff]
        %v3059 = vld [vmem:[#allocation3 + $0x240] sm:$0xff]
        %v3060 = vld [vmem:[#allocation3 + $0x248] sm:$0xff]
        %v3061 = vld [vmem:[#allocation3 + $0x250] sm:$0xff]
        %s3062 = scalar_lea.vmem [#allocation4], 480
        %3063 = vst.msk [vmem:[%s3062] sm:$0xff] %vm882, %v3057
        %3064 = vst.msk [vmem:[%s3062 + $0x8] sm:$0xff] %vm882, %v3058
        %3065 = vst.msk [vmem:[%s3062 + $0x10] sm:$0xff] %vm882, %v3059
        %3066 = vst.msk [vmem:[%s3062 + $0x18] sm:$0xff] %vm882, %v3060
        %3067 = vst.msk [vmem:[%s3062 + $0x20] sm:$0xff] %vm882, %v3061
        %v3068 = vld [vmem:[#allocation3 + $0x258] sm:$0xff]
        %v3069 = vld [vmem:[#allocation3 + $0x260] sm:$0xff]
        %v3070 = vld [vmem:[#allocation3 + $0x268] sm:$0xff]
        %v3071 = vld [vmem:[#allocation3 + $0x270] sm:$0xff]
        %v3072 = vld [vmem:[#allocation3 + $0x278] sm:$0xff]
        %s3073 = scalar_lea.vmem [#allocation4], 520
        %3074 = vst.msk [vmem:[%s3073] sm:$0xff] %vm882, %v3068
        %3075 = vst.msk [vmem:[%s3073 + $0x8] sm:$0xff] %vm882, %v3069
        %3076 = vst.msk [vmem:[%s3073 + $0x10] sm:$0xff] %vm882, %v3070
        %3077 = vst.msk [vmem:[%s3073 + $0x18] sm:$0xff] %vm882, %v3071
        %3078 = vst.msk [vmem:[%s3073 + $0x20] sm:$0xff] %vm882, %v3072
        %v3079 = vld [vmem:[#allocation3 + $0x280] sm:$0xff]
        %v3080 = vld [vmem:[#allocation3 + $0x288] sm:$0xff]
        %v3081 = vld [vmem:[#allocation3 + $0x290] sm:$0xff]
        %v3082 = vld [vmem:[#allocation3 + $0x298] sm:$0xff]
        %v3083 = vld [vmem:[#allocation3 + $0x2a0] sm:$0xff]
        %s3084 = scalar_lea.vmem [#allocation4], 560
        %3085 = vst.msk [vmem:[%s3084] sm:$0xff] %vm882, %v3079
        %3086 = vst.msk [vmem:[%s3084 + $0x8] sm:$0xff] %vm882, %v3080
        %3087 = vst.msk [vmem:[%s3084 + $0x10] sm:$0xff] %vm882, %v3081
        %3088 = vst.msk [vmem:[%s3084 + $0x18] sm:$0xff] %vm882, %v3082
        %3089 = vst.msk [vmem:[%s3084 + $0x20] sm:$0xff] %vm882, %v3083
        %v3090 = vld [vmem:[#allocation3 + $0x2a8] sm:$0xff]
        %v3091 = vld [vmem:[#allocation3 + $0x2b0] sm:$0xff]
        %v3092 = vld [vmem:[#allocation3 + $0x2b8] sm:$0xff]
        %v3093 = vld [vmem:[#allocation3 + $0x2c0] sm:$0xff]
        %v3094 = vld [vmem:[#allocation3 + $0x2c8] sm:$0xff]
        %s3095 = scalar_lea.vmem [#allocation4], 600
        %3096 = vst.msk [vmem:[%s3095] sm:$0xff] %vm882, %v3090
        %3097 = vst.msk [vmem:[%s3095 + $0x8] sm:$0xff] %vm882, %v3091
        %3098 = vst.msk [vmem:[%s3095 + $0x10] sm:$0xff] %vm882, %v3092
        %3099 = vst.msk [vmem:[%s3095 + $0x18] sm:$0xff] %vm882, %v3093
        %3100 = vst.msk [vmem:[%s3095 + $0x20] sm:$0xff] %vm882, %v3094
        %v3101 = vld [vmem:[#allocation3 + $0x2d0] sm:$0xff]
        %v3102 = vld [vmem:[#allocation3 + $0x2d8] sm:$0xff]
        %v3103 = vld [vmem:[#allocation3 + $0x2e0] sm:$0xff]
        %v3104 = vld [vmem:[#allocation3 + $0x2e8] sm:$0xff]
        %v3105 = vld [vmem:[#allocation3 + $0x2f0] sm:$0xff]
        %s3106 = scalar_lea.vmem [#allocation4], 640
        %3107 = vst.msk [vmem:[%s3106] sm:$0xff] %vm882, %v3101
        %3108 = vst.msk [vmem:[%s3106 + $0x8] sm:$0xff] %vm882, %v3102
        %3109 = vst.msk [vmem:[%s3106 + $0x10] sm:$0xff] %vm882, %v3103
        %3110 = vst.msk [vmem:[%s3106 + $0x18] sm:$0xff] %vm882, %v3104
        %3111 = vst.msk [vmem:[%s3106 + $0x20] sm:$0xff] %vm882, %v3105
        %v3112 = vld [vmem:[#allocation3 + $0x2f8] sm:$0xff]
        %v3113 = vld [vmem:[#allocation3 + $0x300] sm:$0xff]
        %v3114 = vld [vmem:[#allocation3 + $0x308] sm:$0xff]
        %v3115 = vld [vmem:[#allocation3 + $0x310] sm:$0xff]
        %v3116 = vld [vmem:[#allocation3 + $0x318] sm:$0xff]
        %s3117 = scalar_lea.vmem [#allocation4], 680
        %3118 = vst.msk [vmem:[%s3117] sm:$0xff] %vm882, %v3112
        %3119 = vst.msk [vmem:[%s3117 + $0x8] sm:$0xff] %vm882, %v3113
        %3120 = vst.msk [vmem:[%s3117 + $0x10] sm:$0xff] %vm882, %v3114
        %3121 = vst.msk [vmem:[%s3117 + $0x18] sm:$0xff] %vm882, %v3115
        %3122 = vst.msk [vmem:[%s3117 + $0x20] sm:$0xff] %vm882, %v3116
        %v3123 = vld [vmem:[#allocation3 + $0x320] sm:$0xff]
        %v3124 = vld [vmem:[#allocation3 + $0x328] sm:$0xff]
        %v3125 = vld [vmem:[#allocation3 + $0x330] sm:$0xff]
        %v3126 = vld [vmem:[#allocation3 + $0x338] sm:$0xff]
        %v3127 = vld [vmem:[#allocation3 + $0x340] sm:$0xff]
        %s3128 = scalar_lea.vmem [#allocation4], 720
        %3129 = vst.msk [vmem:[%s3128] sm:$0xff] %vm882, %v3123
        %3130 = vst.msk [vmem:[%s3128 + $0x8] sm:$0xff] %vm882, %v3124
        %3131 = vst.msk [vmem:[%s3128 + $0x10] sm:$0xff] %vm882, %v3125
        %3132 = vst.msk [vmem:[%s3128 + $0x18] sm:$0xff] %vm882, %v3126
        %3133 = vst.msk [vmem:[%s3128 + $0x20] sm:$0xff] %vm882, %v3127
        %v3134 = vld [vmem:[#allocation3 + $0x348] sm:$0xff]
        %v3135 = vld [vmem:[#allocation3 + $0x350] sm:$0xff]
        %v3136 = vld [vmem:[#allocation3 + $0x358] sm:$0xff]
        %v3137 = vld [vmem:[#allocation3 + $0x360] sm:$0xff]
        %v3138 = vld [vmem:[#allocation3 + $0x368] sm:$0xff]
        %s3139 = scalar_lea.vmem [#allocation4], 760
        %3140 = vst.msk [vmem:[%s3139] sm:$0xff] %vm882, %v3134
        %3141 = vst.msk [vmem:[%s3139 + $0x8] sm:$0xff] %vm882, %v3135
        %3142 = vst.msk [vmem:[%s3139 + $0x10] sm:$0xff] %vm882, %v3136
        %3143 = vst.msk [vmem:[%s3139 + $0x18] sm:$0xff] %vm882, %v3137
        %3144 = vst.msk [vmem:[%s3139 + $0x20] sm:$0xff] %vm882, %v3138
        %v3145 = vld [vmem:[#allocation3 + $0x370] sm:$0xff]
        %v3146 = vld [vmem:[#allocation3 + $0x378] sm:$0xff]
        %v3147 = vld [vmem:[#allocation3 + $0x380] sm:$0xff]
        %v3148 = vld [vmem:[#allocation3 + $0x388] sm:$0xff]
        %v3149 = vld [vmem:[#allocation3 + $0x390] sm:$0xff]
        %s3150 = scalar_lea.vmem [#allocation4], 800
        %3151 = vst.msk [vmem:[%s3150] sm:$0xff] %vm882, %v3145
        %3152 = vst.msk [vmem:[%s3150 + $0x8] sm:$0xff] %vm882, %v3146
        %3153 = vst.msk [vmem:[%s3150 + $0x10] sm:$0xff] %vm882, %v3147
        %3154 = vst.msk [vmem:[%s3150 + $0x18] sm:$0xff] %vm882, %v3148
        %3155 = vst.msk [vmem:[%s3150 + $0x20] sm:$0xff] %vm882, %v3149
        %v3156 = vld [vmem:[#allocation3 + $0x398] sm:$0xff]
        %v3157 = vld [vmem:[#allocation3 + $0x3a0] sm:$0xff]
        %v3158 = vld [vmem:[#allocation3 + $0x3a8] sm:$0xff]
        %v3159 = vld [vmem:[#allocation3 + $0x3b0] sm:$0xff]
        %v3160 = vld [vmem:[#allocation3 + $0x3b8] sm:$0xff]
        %s3161 = scalar_lea.vmem [#allocation4], 840
        %3162 = vst.msk [vmem:[%s3161] sm:$0xff] %vm882, %v3156
        %3163 = vst.msk [vmem:[%s3161 + $0x8] sm:$0xff] %vm882, %v3157
        %3164 = vst.msk [vmem:[%s3161 + $0x10] sm:$0xff] %vm882, %v3158
        %3165 = vst.msk [vmem:[%s3161 + $0x18] sm:$0xff] %vm882, %v3159
        %3166 = vst.msk [vmem:[%s3161 + $0x20] sm:$0xff] %vm882, %v3160
        %v3167 = vld [vmem:[#allocation3 + $0x3c0] sm:$0xff]
        %v3168 = vld [vmem:[#allocation3 + $0x3c8] sm:$0xff]
        %v3169 = vld [vmem:[#allocation3 + $0x3d0] sm:$0xff]
        %v3170 = vld [vmem:[#allocation3 + $0x3d8] sm:$0xff]
        %v3171 = vld [vmem:[#allocation3 + $0x3e0] sm:$0xff]
        %s3172 = scalar_lea.vmem [#allocation4], 880
        %3173 = vst.msk [vmem:[%s3172] sm:$0xff] %vm882, %v3167
        %3174 = vst.msk [vmem:[%s3172 + $0x8] sm:$0xff] %vm882, %v3168
        %3175 = vst.msk [vmem:[%s3172 + $0x10] sm:$0xff] %vm882, %v3169
        %3176 = vst.msk [vmem:[%s3172 + $0x18] sm:$0xff] %vm882, %v3170
        %3177 = vst.msk [vmem:[%s3172 + $0x20] sm:$0xff] %vm882, %v3171
        %v3178 = vld [vmem:[#allocation3 + $0x3e8] sm:$0xff]
        %v3179 = vld [vmem:[#allocation3 + $0x3f0] sm:$0xff]
        %v3180 = vld [vmem:[#allocation3 + $0x3f8] sm:$0xff]
        %v3181 = vld [vmem:[#allocation3 + $0x400] sm:$0xff]
        %v3182 = vld [vmem:[#allocation3 + $0x408] sm:$0xff]
        %s3183 = scalar_lea.vmem [#allocation4], 920
        %3184 = vst.msk [vmem:[%s3183] sm:$0xff] %vm882, %v3178
        %3185 = vst.msk [vmem:[%s3183 + $0x8] sm:$0xff] %vm882, %v3179
        %3186 = vst.msk [vmem:[%s3183 + $0x10] sm:$0xff] %vm882, %v3180
        %3187 = vst.msk [vmem:[%s3183 + $0x18] sm:$0xff] %vm882, %v3181
        %3188 = vst.msk [vmem:[%s3183 + $0x20] sm:$0xff] %vm882, %v3182
        %v3189 = vld [vmem:[#allocation3 + $0x410] sm:$0xff]
        %v3190 = vld [vmem:[#allocation3 + $0x418] sm:$0xff]
        %v3191 = vld [vmem:[#allocation3 + $0x420] sm:$0xff]
        %v3192 = vld [vmem:[#allocation3 + $0x428] sm:$0xff]
        %v3193 = vld [vmem:[#allocation3 + $0x430] sm:$0xff]
        %s3194 = scalar_lea.vmem [#allocation4], 960
        %3195 = vst.msk [vmem:[%s3194] sm:$0xff] %vm882, %v3189
        %3196 = vst.msk [vmem:[%s3194 + $0x8] sm:$0xff] %vm882, %v3190
        %3197 = vst.msk [vmem:[%s3194 + $0x10] sm:$0xff] %vm882, %v3191
        %3198 = vst.msk [vmem:[%s3194 + $0x18] sm:$0xff] %vm882, %v3192
        %3199 = vst.msk [vmem:[%s3194 + $0x20] sm:$0xff] %vm882, %v3193
        %v3200 = vld [vmem:[#allocation3 + $0x438] sm:$0xff]
        %v3201 = vld [vmem:[#allocation3 + $0x440] sm:$0xff]
        %v3202 = vld [vmem:[#allocation3 + $0x448] sm:$0xff]
        %v3203 = vld [vmem:[#allocation3 + $0x450] sm:$0xff]
        %v3204 = vld [vmem:[#allocation3 + $0x458] sm:$0xff]
        %s3205 = scalar_lea.vmem [#allocation4], 1000
        %3206 = vst.msk [vmem:[%s3205] sm:$0xff] %vm882, %v3200
        %3207 = vst.msk [vmem:[%s3205 + $0x8] sm:$0xff] %vm882, %v3201
        %3208 = vst.msk [vmem:[%s3205 + $0x10] sm:$0xff] %vm882, %v3202
        %3209 = vst.msk [vmem:[%s3205 + $0x18] sm:$0xff] %vm882, %v3203
        %3210 = vst.msk [vmem:[%s3205 + $0x20] sm:$0xff] %vm882, %v3204
        %v3211 = vld [vmem:[#allocation3 + $0x460] sm:$0xff]
        %v3212 = vld [vmem:[#allocation3 + $0x468] sm:$0xff]
        %v3213 = vld [vmem:[#allocation3 + $0x470] sm:$0xff]
        %v3214 = vld [vmem:[#allocation3 + $0x478] sm:$0xff]
        %v3215 = vld [vmem:[#allocation3 + $0x480] sm:$0xff]
        %s3216 = scalar_lea.vmem [#allocation4], 1040
        %3217 = vst.msk [vmem:[%s3216] sm:$0xff] %vm882, %v3211
        %3218 = vst.msk [vmem:[%s3216 + $0x8] sm:$0xff] %vm882, %v3212
        %3219 = vst.msk [vmem:[%s3216 + $0x10] sm:$0xff] %vm882, %v3213
        %3220 = vst.msk [vmem:[%s3216 + $0x18] sm:$0xff] %vm882, %v3214
        %3221 = vst.msk [vmem:[%s3216 + $0x20] sm:$0xff] %vm882, %v3215
        %v3222 = vld [vmem:[#allocation3 + $0x488] sm:$0xff]
        %v3223 = vld [vmem:[#allocation3 + $0x490] sm:$0xff]
        %v3224 = vld [vmem:[#allocation3 + $0x498] sm:$0xff]
        %v3225 = vld [vmem:[#allocation3 + $0x4a0] sm:$0xff]
        %v3226 = vld [vmem:[#allocation3 + $0x4a8] sm:$0xff]
        %s3227 = scalar_lea.vmem [#allocation4], 1080
        %3228 = vst.msk [vmem:[%s3227] sm:$0xff] %vm882, %v3222
        %3229 = vst.msk [vmem:[%s3227 + $0x8] sm:$0xff] %vm882, %v3223
        %3230 = vst.msk [vmem:[%s3227 + $0x10] sm:$0xff] %vm882, %v3224
        %3231 = vst.msk [vmem:[%s3227 + $0x18] sm:$0xff] %vm882, %v3225
        %3232 = vst.msk [vmem:[%s3227 + $0x20] sm:$0xff] %vm882, %v3226
        %v3233 = vld [vmem:[#allocation3 + $0x4b0] sm:$0xff]
        %v3234 = vld [vmem:[#allocation3 + $0x4b8] sm:$0xff]
        %v3235 = vld [vmem:[#allocation3 + $0x4c0] sm:$0xff]
        %v3236 = vld [vmem:[#allocation3 + $0x4c8] sm:$0xff]
        %v3237 = vld [vmem:[#allocation3 + $0x4d0] sm:$0xff]
        %s3238 = scalar_lea.vmem [#allocation4], 1120
        %3239 = vst.msk [vmem:[%s3238] sm:$0xff] %vm882, %v3233
        %3240 = vst.msk [vmem:[%s3238 + $0x8] sm:$0xff] %vm882, %v3234
        %3241 = vst.msk [vmem:[%s3238 + $0x10] sm:$0xff] %vm882, %v3235
        %3242 = vst.msk [vmem:[%s3238 + $0x18] sm:$0xff] %vm882, %v3236
        %3243 = vst.msk [vmem:[%s3238 + $0x20] sm:$0xff] %vm882, %v3237
        %v3244 = vld [vmem:[#allocation3 + $0x4d8] sm:$0xff]
        %v3245 = vld [vmem:[#allocation3 + $0x4e0] sm:$0xff]
        %v3246 = vld [vmem:[#allocation3 + $0x4e8] sm:$0xff]
        %v3247 = vld [vmem:[#allocation3 + $0x4f0] sm:$0xff]
        %v3248 = vld [vmem:[#allocation3 + $0x4f8] sm:$0xff]
        %s3249 = scalar_lea.vmem [#allocation4], 1160
        %3250 = vst.msk [vmem:[%s3249] sm:$0xff] %vm882, %v3244
        %3251 = vst.msk [vmem:[%s3249 + $0x8] sm:$0xff] %vm882, %v3245
        %3252 = vst.msk [vmem:[%s3249 + $0x10] sm:$0xff] %vm882, %v3246
        %3253 = vst.msk [vmem:[%s3249 + $0x18] sm:$0xff] %vm882, %v3247
        %3254 = vst.msk [vmem:[%s3249 + $0x20] sm:$0xff] %vm882, %v3248
        %v3255 = vld [vmem:[#allocation3 + $0x500] sm:$0xff]
        %v3256 = vld [vmem:[#allocation3 + $0x508] sm:$0xff]
        %v3257 = vld [vmem:[#allocation3 + $0x510] sm:$0xff]
        %v3258 = vld [vmem:[#allocation3 + $0x518] sm:$0xff]
        %v3259 = vld [vmem:[#allocation3 + $0x520] sm:$0xff]
        %s3260 = scalar_lea.vmem [#allocation4], 1200
        %3261 = vst.msk [vmem:[%s3260] sm:$0xff] %vm882, %v3255
        %3262 = vst.msk [vmem:[%s3260 + $0x8] sm:$0xff] %vm882, %v3256
        %3263 = vst.msk [vmem:[%s3260 + $0x10] sm:$0xff] %vm882, %v3257
        %3264 = vst.msk [vmem:[%s3260 + $0x18] sm:$0xff] %vm882, %v3258
        %3265 = vst.msk [vmem:[%s3260 + $0x20] sm:$0xff] %vm882, %v3259
        %v3266 = vld [vmem:[#allocation3 + $0x528] sm:$0xff]
        %v3267 = vld [vmem:[#allocation3 + $0x530] sm:$0xff]
        %v3268 = vld [vmem:[#allocation3 + $0x538] sm:$0xff]
        %v3269 = vld [vmem:[#allocation3 + $0x540] sm:$0xff]
        %v3270 = vld [vmem:[#allocation3 + $0x548] sm:$0xff]
        %s3271 = scalar_lea.vmem [#allocation4], 1240
        %3272 = vst.msk [vmem:[%s3271] sm:$0xff] %vm882, %v3266
        %3273 = vst.msk [vmem:[%s3271 + $0x8] sm:$0xff] %vm882, %v3267
        %3274 = vst.msk [vmem:[%s3271 + $0x10] sm:$0xff] %vm882, %v3268
        %3275 = vst.msk [vmem:[%s3271 + $0x18] sm:$0xff] %vm882, %v3269
        %3276 = vst.msk [vmem:[%s3271 + $0x20] sm:$0xff] %vm882, %v3270
        %s3277 = scalar_lea.vmem [#allocation4], 2
        %v3278 = vld [vmem:[%s3277] ss:$2 sm:$0xff]
        %s3279 = scalar_lea.vmem [#allocation4], 18
        %v3280 = vld [vmem:[%s3279] ss:$2 sm:$0xff]
        %s3281 = scalar_lea.vmem [#allocation4], 82
        %v3282 = vld [vmem:[%s3281] ss:$2 sm:$0xff]
        %s3283 = scalar_lea.vmem [#allocation4], 98
        %v3284 = vld [vmem:[%s3283] ss:$2 sm:$0xff]
        %s3285 = scalar_lea.vmem [#allocation4], 162
        %v3286 = vld [vmem:[%s3285] ss:$2 sm:$0xff]
        %s3287 = scalar_lea.vmem [#allocation4], 178
        %v3288 = vld [vmem:[%s3287] ss:$2 sm:$0xff]
        %s3289 = scalar_lea.vmem [#allocation4], 242
        %v3290 = vld [vmem:[%s3289] ss:$2 sm:$0xff]
        %s3291 = scalar_lea.vmem [#allocation4], 258
        %v3292 = vld [vmem:[%s3291] ss:$2 sm:$0xff]
        %s3293 = scalar_lea.vmem [#allocation4], 322
        %v3294 = vld [vmem:[%s3293] ss:$2 sm:$0xff]
        %s3295 = scalar_lea.vmem [#allocation4], 338
        %v3296 = vld [vmem:[%s3295] ss:$2 sm:$0xff]
        %s3297 = scalar_lea.vmem [#allocation4], 402
        %v3298 = vld [vmem:[%s3297] ss:$2 sm:$0xff]
        %s3299 = scalar_lea.vmem [#allocation4], 418
        %v3300 = vld [vmem:[%s3299] ss:$2 sm:$0xff]
        %s3301 = scalar_lea.vmem [#allocation4], 482
        %v3302 = vld [vmem:[%s3301] ss:$2 sm:$0xff]
        %s3303 = scalar_lea.vmem [#allocation4], 498
        %v3304 = vld [vmem:[%s3303] ss:$2 sm:$0xff]
        %s3305 = scalar_lea.vmem [#allocation4], 562
        %v3306 = vld [vmem:[%s3305] ss:$2 sm:$0xff]
        %s3307 = scalar_lea.vmem [#allocation4], 578
        %v3308 = vld [vmem:[%s3307] ss:$2 sm:$0xff]
        %s3309 = scalar_lea.vmem [#allocation4], 642
        %v3310 = vld [vmem:[%s3309] ss:$2 sm:$0xff]
        %s3311 = scalar_lea.vmem [#allocation4], 658
        %v3312 = vld [vmem:[%s3311] ss:$2 sm:$0xff]
        %s3313 = scalar_lea.vmem [#allocation4], 722
        %v3314 = vld [vmem:[%s3313] ss:$2 sm:$0xff]
        %s3315 = scalar_lea.vmem [#allocation4], 738
        %v3316 = vld [vmem:[%s3315] ss:$2 sm:$0xff]
        %s3317 = scalar_lea.vmem [#allocation4], 802
        %v3318 = vld [vmem:[%s3317] ss:$2 sm:$0xff]
        %s3319 = scalar_lea.vmem [#allocation4], 818
        %v3320 = vld [vmem:[%s3319] ss:$2 sm:$0xff]
        %s3321 = scalar_lea.vmem [#allocation4], 882
        %v3322 = vld [vmem:[%s3321] ss:$2 sm:$0xff]
        %s3323 = scalar_lea.vmem [#allocation4], 898
        %v3324 = vld [vmem:[%s3323] ss:$2 sm:$0xff]
        %s3325 = scalar_lea.vmem [#allocation4], 962
        %v3326 = vld [vmem:[%s3325] ss:$2 sm:$0xff]
        %s3327 = scalar_lea.vmem [#allocation4], 978
        %v3328 = vld [vmem:[%s3327] ss:$2 sm:$0xff]
        %s3329 = scalar_lea.vmem [#allocation4], 1042
        %v3330 = vld [vmem:[%s3329] ss:$2 sm:$0xff]
        %s3331 = scalar_lea.vmem [#allocation4], 1058
        %v3332 = vld [vmem:[%s3331] ss:$2 sm:$0xff]
        %s3333 = scalar_lea.vmem [#allocation4], 1122
        %v3334 = vld [vmem:[%s3333] ss:$2 sm:$0xff]
        %s3335 = scalar_lea.vmem [#allocation4], 1138
        %v3336 = vld [vmem:[%s3335] ss:$2 sm:$0xff]
        %s3337 = scalar_lea.vmem [#allocation4], 1202
        %v3338 = vld [vmem:[%s3337] ss:$2 sm:$0xff]
        %s3339 = scalar_lea.vmem [#allocation4], 1218
        %v3340 = vld [vmem:[%s3339] ss:$2 sm:$0xff]
        %s3341 = scalar_lea.vmem [#allocation4], 3
        %v3342 = vld [vmem:[%s3341] ss:$2 sm:$0xff]
        %s3343 = scalar_lea.vmem [#allocation4], 19
        %v3344 = vld [vmem:[%s3343] ss:$2 sm:$0xff]
        %s3345 = scalar_lea.vmem [#allocation4], 83
        %v3346 = vld [vmem:[%s3345] ss:$2 sm:$0xff]
        %s3347 = scalar_lea.vmem [#allocation4], 99
        %v3348 = vld [vmem:[%s3347] ss:$2 sm:$0xff]
        %s3349 = scalar_lea.vmem [#allocation4], 163
        %v3350 = vld [vmem:[%s3349] ss:$2 sm:$0xff]
        %s3351 = scalar_lea.vmem [#allocation4], 179
        %v3352 = vld [vmem:[%s3351] ss:$2 sm:$0xff]
        %s3353 = scalar_lea.vmem [#allocation4], 243
        %v3354 = vld [vmem:[%s3353] ss:$2 sm:$0xff]
        %s3355 = scalar_lea.vmem [#allocation4], 259
        %v3356 = vld [vmem:[%s3355] ss:$2 sm:$0xff]
        %s3357 = scalar_lea.vmem [#allocation4], 323
        %v3358 = vld [vmem:[%s3357] ss:$2 sm:$0xff]
        %s3359 = scalar_lea.vmem [#allocation4], 339
        %v3360 = vld [vmem:[%s3359] ss:$2 sm:$0xff]
        %s3361 = scalar_lea.vmem [#allocation4], 403
        %v3362 = vld [vmem:[%s3361] ss:$2 sm:$0xff]
        %s3363 = scalar_lea.vmem [#allocation4], 419
        %v3364 = vld [vmem:[%s3363] ss:$2 sm:$0xff]
        %s3365 = scalar_lea.vmem [#allocation4], 483
        %v3366 = vld [vmem:[%s3365] ss:$2 sm:$0xff]
        %s3367 = scalar_lea.vmem [#allocation4], 499
        %v3368 = vld [vmem:[%s3367] ss:$2 sm:$0xff]
        %s3369 = scalar_lea.vmem [#allocation4], 563
        %v3370 = vld [vmem:[%s3369] ss:$2 sm:$0xff]
        %s3371 = scalar_lea.vmem [#allocation4], 579
        %v3372 = vld [vmem:[%s3371] ss:$2 sm:$0xff]
        %s3373 = scalar_lea.vmem [#allocation4], 643
        %v3374 = vld [vmem:[%s3373] ss:$2 sm:$0xff]
        %s3375 = scalar_lea.vmem [#allocation4], 659
        %v3376 = vld [vmem:[%s3375] ss:$2 sm:$0xff]
        %s3377 = scalar_lea.vmem [#allocation4], 723
        %v3378 = vld [vmem:[%s3377] ss:$2 sm:$0xff]
        %s3379 = scalar_lea.vmem [#allocation4], 739
        %v3380 = vld [vmem:[%s3379] ss:$2 sm:$0xff]
        %s3381 = scalar_lea.vmem [#allocation4], 803
        %v3382 = vld [vmem:[%s3381] ss:$2 sm:$0xff]
        %s3383 = scalar_lea.vmem [#allocation4], 819
        %v3384 = vld [vmem:[%s3383] ss:$2 sm:$0xff]
        %s3385 = scalar_lea.vmem [#allocation4], 883
        %v3386 = vld [vmem:[%s3385] ss:$2 sm:$0xff]
        %s3387 = scalar_lea.vmem [#allocation4], 899
        %v3388 = vld [vmem:[%s3387] ss:$2 sm:$0xff]
        %s3389 = scalar_lea.vmem [#allocation4], 963
        %v3390 = vld [vmem:[%s3389] ss:$2 sm:$0xff]
        %s3391 = scalar_lea.vmem [#allocation4], 979
        %v3392 = vld [vmem:[%s3391] ss:$2 sm:$0xff]
        %s3393 = scalar_lea.vmem [#allocation4], 1043
        %v3394 = vld [vmem:[%s3393] ss:$2 sm:$0xff]
        %s3395 = scalar_lea.vmem [#allocation4], 1059
        %v3396 = vld [vmem:[%s3395] ss:$2 sm:$0xff]
        %s3397 = scalar_lea.vmem [#allocation4], 1123
        %v3398 = vld [vmem:[%s3397] ss:$2 sm:$0xff]
        %s3399 = scalar_lea.vmem [#allocation4], 1139
        %v3400 = vld [vmem:[%s3399] ss:$2 sm:$0xff]
        %s3401 = scalar_lea.vmem [#allocation4], 1203
        %v3402 = vld [vmem:[%s3401] ss:$2 sm:$0xff]
        %s3403 = scalar_lea.vmem [#allocation4], 1219
        %v3404 = vld [vmem:[%s3403] ss:$2 sm:$0xff]
        %s3405 = scalar_lea.vmem %s2941, 2 [#allocation4]
        %v3406 = vld [vmem:[%s3405] ss:$2 sm:$0xff]
        %s3407 = scalar_lea.vmem %s2941, 18 [#allocation4]
        %v3408 = vld [vmem:[%s3407] ss:$2 sm:$0xff]
        %s3409 = scalar_lea.vmem %s2941, 82 [#allocation4]
        %v3410 = vld [vmem:[%s3409] ss:$2 sm:$0xff]
        %s3411 = scalar_lea.vmem %s2941, 98 [#allocation4]
        %v3412 = vld [vmem:[%s3411] ss:$2 sm:$0xff]
        %s3413 = scalar_lea.vmem %s2941, 162 [#allocation4]
        %v3414 = vld [vmem:[%s3413] ss:$2 sm:$0xff]
        %s3415 = scalar_lea.vmem %s2941, 178 [#allocation4]
        %v3416 = vld [vmem:[%s3415] ss:$2 sm:$0xff]
        %s3417 = scalar_lea.vmem %s2941, 242 [#allocation4]
        %v3418 = vld [vmem:[%s3417] ss:$2 sm:$0xff]
        %s3419 = scalar_lea.vmem %s2941, 258 [#allocation4]
        %v3420 = vld [vmem:[%s3419] ss:$2 sm:$0xff]
        %s3421 = scalar_lea.vmem %s2941, 322 [#allocation4]
        %v3422 = vld [vmem:[%s3421] ss:$2 sm:$0xff]
        %s3423 = scalar_lea.vmem %s2941, 338 [#allocation4]
        %v3424 = vld [vmem:[%s3423] ss:$2 sm:$0xff]
        %s3425 = scalar_lea.vmem %s2941, 402 [#allocation4]
        %v3426 = vld [vmem:[%s3425] ss:$2 sm:$0xff]
        %s3427 = scalar_lea.vmem %s2941, 418 [#allocation4]
        %v3428 = vld [vmem:[%s3427] ss:$2 sm:$0xff]
        %s3429 = scalar_lea.vmem %s2941, 482 [#allocation4]
        %v3430 = vld [vmem:[%s3429] ss:$2 sm:$0xff]
        %s3431 = scalar_lea.vmem %s2941, 498 [#allocation4]
        %v3432 = vld [vmem:[%s3431] ss:$2 sm:$0xff]
        %s3433 = scalar_lea.vmem %s2941, 562 [#allocation4]
        %v3434 = vld [vmem:[%s3433] ss:$2 sm:$0xff]
        %s3435 = scalar_lea.vmem %s2941, 578 [#allocation4]
        %v3436 = vld [vmem:[%s3435] ss:$2 sm:$0xff]
        %s3437 = scalar_lea.vmem %s2941, 642 [#allocation4]
        %v3438 = vld [vmem:[%s3437] ss:$2 sm:$0xff]
        %s3439 = scalar_lea.vmem %s2941, 658 [#allocation4]
        %v3440 = vld [vmem:[%s3439] ss:$2 sm:$0xff]
        %s3441 = scalar_lea.vmem %s2941, 722 [#allocation4]
        %v3442 = vld [vmem:[%s3441] ss:$2 sm:$0xff]
        %s3443 = scalar_lea.vmem %s2941, 738 [#allocation4]
        %v3444 = vld [vmem:[%s3443] ss:$2 sm:$0xff]
        %s3445 = scalar_lea.vmem %s2941, 802 [#allocation4]
        %v3446 = vld [vmem:[%s3445] ss:$2 sm:$0xff]
        %s3447 = scalar_lea.vmem %s2941, 818 [#allocation4]
        %v3448 = vld [vmem:[%s3447] ss:$2 sm:$0xff]
        %s3449 = scalar_lea.vmem %s2941, 882 [#allocation4]
        %v3450 = vld [vmem:[%s3449] ss:$2 sm:$0xff]
        %s3451 = scalar_lea.vmem %s2941, 898 [#allocation4]
        %v3452 = vld [vmem:[%s3451] ss:$2 sm:$0xff]
        %s3453 = scalar_lea.vmem %s2941, 962 [#allocation4]
        %v3454 = vld [vmem:[%s3453] ss:$2 sm:$0xff]
        %s3455 = scalar_lea.vmem %s2941, 978 [#allocation4]
        %v3456 = vld [vmem:[%s3455] ss:$2 sm:$0xff]
        %s3457 = scalar_lea.vmem %s2941, 1042 [#allocation4]
        %v3458 = vld [vmem:[%s3457] ss:$2 sm:$0xff]
        %s3459 = scalar_lea.vmem %s2941, 1058 [#allocation4]
        %v3460 = vld [vmem:[%s3459] ss:$2 sm:$0xff]
        %s3461 = scalar_lea.vmem %s2941, 1122 [#allocation4]
        %v3462 = vld [vmem:[%s3461] ss:$2 sm:$0xff]
        %s3463 = scalar_lea.vmem %s2941, 1138 [#allocation4]
        %v3464 = vld [vmem:[%s3463] ss:$2 sm:$0xff]
        %s3465 = scalar_lea.vmem %s2941, 1202 [#allocation4]
        %v3466 = vld [vmem:[%s3465] ss:$2 sm:$0xff]
        %s3467 = scalar_lea.vmem %s2941, 1218 [#allocation4]
        %v3468 = vld [vmem:[%s3467] ss:$2 sm:$0xff]
        %s3469 = scalar_lea.vmem %s2941, 3 [#allocation4]
        %v3470 = vld [vmem:[%s3469] ss:$2 sm:$0xff]
        %s3471 = scalar_lea.vmem %s2941, 19 [#allocation4]
        %v3472 = vld [vmem:[%s3471] ss:$2 sm:$0xff]
        %s3473 = scalar_lea.vmem %s2941, 83 [#allocation4]
        %v3474 = vld [vmem:[%s3473] ss:$2 sm:$0xff]
        %s3475 = scalar_lea.vmem %s2941, 99 [#allocation4]
        %v3476 = vld [vmem:[%s3475] ss:$2 sm:$0xff]
        %s3477 = scalar_lea.vmem %s2941, 163 [#allocation4]
        %v3478 = vld [vmem:[%s3477] ss:$2 sm:$0xff]
        %s3479 = scalar_lea.vmem %s2941, 179 [#allocation4]
        %v3480 = vld [vmem:[%s3479] ss:$2 sm:$0xff]
        %s3481 = scalar_lea.vmem %s2941, 243 [#allocation4]
        %v3482 = vld [vmem:[%s3481] ss:$2 sm:$0xff]
        %s3483 = scalar_lea.vmem %s2941, 259 [#allocation4]
        %v3484 = vld [vmem:[%s3483] ss:$2 sm:$0xff]
        %s3485 = scalar_lea.vmem %s2941, 323 [#allocation4]
        %v3486 = vld [vmem:[%s3485] ss:$2 sm:$0xff]
        %s3487 = scalar_lea.vmem %s2941, 339 [#allocation4]
        %v3488 = vld [vmem:[%s3487] ss:$2 sm:$0xff]
        %s3489 = scalar_lea.vmem %s2941, 403 [#allocation4]
        %v3490 = vld [vmem:[%s3489] ss:$2 sm:$0xff]
        %s3491 = scalar_lea.vmem %s2941, 419 [#allocation4]
        %v3492 = vld [vmem:[%s3491] ss:$2 sm:$0xff]
        %s3493 = scalar_lea.vmem %s2941, 483 [#allocation4]
        %v3494 = vld [vmem:[%s3493] ss:$2 sm:$0xff]
        %s3495 = scalar_lea.vmem %s2941, 499 [#allocation4]
        %v3496 = vld [vmem:[%s3495] ss:$2 sm:$0xff]
        %s3497 = scalar_lea.vmem %s2941, 563 [#allocation4]
        %v3498 = vld [vmem:[%s3497] ss:$2 sm:$0xff]
        %s3499 = scalar_lea.vmem %s2941, 579 [#allocation4]
        %v3500 = vld [vmem:[%s3499] ss:$2 sm:$0xff]
        %s3501 = scalar_lea.vmem %s2941, 643 [#allocation4]
        %v3502 = vld [vmem:[%s3501] ss:$2 sm:$0xff]
        %s3503 = scalar_lea.vmem %s2941, 659 [#allocation4]
        %v3504 = vld [vmem:[%s3503] ss:$2 sm:$0xff]
        %s3505 = scalar_lea.vmem %s2941, 723 [#allocation4]
        %v3506 = vld [vmem:[%s3505] ss:$2 sm:$0xff]
        %s3507 = scalar_lea.vmem %s2941, 739 [#allocation4]
        %v3508 = vld [vmem:[%s3507] ss:$2 sm:$0xff]
        %s3509 = scalar_lea.vmem %s2941, 803 [#allocation4]
        %v3510 = vld [vmem:[%s3509] ss:$2 sm:$0xff]
        %s3511 = scalar_lea.vmem %s2941, 819 [#allocation4]
        %v3512 = vld [vmem:[%s3511] ss:$2 sm:$0xff]
        %s3513 = scalar_lea.vmem %s2941, 883 [#allocation4]
        %v3514 = vld [vmem:[%s3513] ss:$2 sm:$0xff]
        %s3515 = scalar_lea.vmem %s2941, 899 [#allocation4]
        %v3516 = vld [vmem:[%s3515] ss:$2 sm:$0xff]
        %s3517 = scalar_lea.vmem %s2941, 963 [#allocation4]
        %v3518 = vld [vmem:[%s3517] ss:$2 sm:$0xff]
        %s3519 = scalar_lea.vmem %s2941, 979 [#allocation4]
        %v3520 = vld [vmem:[%s3519] ss:$2 sm:$0xff]
        %s3521 = scalar_lea.vmem %s2941, 1043 [#allocation4]
        %v3522 = vld [vmem:[%s3521] ss:$2 sm:$0xff]
        %s3523 = scalar_lea.vmem %s2941, 1059 [#allocation4]
        %v3524 = vld [vmem:[%s3523] ss:$2 sm:$0xff]
        %s3525 = scalar_lea.vmem %s2941, 1123 [#allocation4]
        %v3526 = vld [vmem:[%s3525] ss:$2 sm:$0xff]
        %s3527 = scalar_lea.vmem %s2941, 1139 [#allocation4]
        %v3528 = vld [vmem:[%s3527] ss:$2 sm:$0xff]
        %s3529 = scalar_lea.vmem %s2941, 1203 [#allocation4]
        %v3530 = vld [vmem:[%s3529] ss:$2 sm:$0xff]
        %s3531 = scalar_lea.vmem %s2941, 1219 [#allocation4]
        %v3532 = vld [vmem:[%s3531] ss:$2 sm:$0xff]
        %v3533 = vmax.f32 %v3278, %v3342
        %v3534 = vmax.f32 %v3280, %v3344
        %v3535 = vmax.f32 %v3282, %v3346
        %v3536 = vmax.f32 %v3284, %v3348
        %v3537 = vmax.f32 %v3286, %v3350
        %v3538 = vmax.f32 %v3288, %v3352
        %v3539 = vmax.f32 %v3290, %v3354
        %v3540 = vmax.f32 %v3292, %v3356
        %v3541 = vmax.f32 %v3294, %v3358
        %v3542 = vmax.f32 %v3296, %v3360
        %v3543 = vmax.f32 %v3298, %v3362
        %v3544 = vmax.f32 %v3300, %v3364
        %v3545 = vmax.f32 %v3302, %v3366
        %v3546 = vmax.f32 %v3304, %v3368
        %v3547 = vmax.f32 %v3306, %v3370
        %v3548 = vmax.f32 %v3308, %v3372
        %v3549 = vmax.f32 %v3310, %v3374
        %v3550 = vmax.f32 %v3312, %v3376
        %v3551 = vmax.f32 %v3314, %v3378
        %v3552 = vmax.f32 %v3316, %v3380
        %v3553 = vmax.f32 %v3318, %v3382
        %v3554 = vmax.f32 %v3320, %v3384
        %v3555 = vmax.f32 %v3322, %v3386
        %v3556 = vmax.f32 %v3324, %v3388
        %v3557 = vmax.f32 %v3326, %v3390
        %v3558 = vmax.f32 %v3328, %v3392
        %v3559 = vmax.f32 %v3330, %v3394
        %v3560 = vmax.f32 %v3332, %v3396
        %v3561 = vmax.f32 %v3334, %v3398
        %v3562 = vmax.f32 %v3336, %v3400
        %v3563 = vmax.f32 %v3338, %v3402
        %v3564 = vmax.f32 %v3340, %v3404
        %v3565 = vmax.f32 %v3406, %v3470
        %v3566 = vmax.f32 %v3408, %v3472
        %v3567 = vmax.f32 %v3410, %v3474
        %v3568 = vmax.f32 %v3412, %v3476
        %v3569 = vmax.f32 %v3414, %v3478
        %v3570 = vmax.f32 %v3416, %v3480
        %v3571 = vmax.f32 %v3418, %v3482
        %v3572 = vmax.f32 %v3420, %v3484
        %v3573 = vmax.f32 %v3422, %v3486
        %v3574 = vmax.f32 %v3424, %v3488
        %v3575 = vmax.f32 %v3426, %v3490
        %v3576 = vmax.f32 %v3428, %v3492
        %v3577 = vmax.f32 %v3430, %v3494
        %v3578 = vmax.f32 %v3432, %v3496
        %v3579 = vmax.f32 %v3434, %v3498
        %v3580 = vmax.f32 %v3436, %v3500
        %v3581 = vmax.f32 %v3438, %v3502
        %v3582 = vmax.f32 %v3440, %v3504
        %v3583 = vmax.f32 %v3442, %v3506
        %v3584 = vmax.f32 %v3444, %v3508
        %v3585 = vmax.f32 %v3446, %v3510
        %v3586 = vmax.f32 %v3448, %v3512
        %v3587 = vmax.f32 %v3450, %v3514
        %v3588 = vmax.f32 %v3452, %v3516
        %v3589 = vmax.f32 %v3454, %v3518
        %v3590 = vmax.f32 %v3456, %v3520
        %v3591 = vmax.f32 %v3458, %v3522
        %v3592 = vmax.f32 %v3460, %v3524
        %v3593 = vmax.f32 %v3462, %v3526
        %v3594 = vmax.f32 %v3464, %v3528
        %v3595 = vmax.f32 %v3466, %v3530
        %v3596 = vmax.f32 %v3468, %v3532
        %v3597 = vmax.f32 %v3533, %v3565
        %v3598 = vmax.f32 %v3534, %v3566
        %v3599 = vmax.f32 %v3535, %v3567
        %v3600 = vmax.f32 %v3536, %v3568
        %v3601 = vmax.f32 %v3537, %v3569
        %v3602 = vmax.f32 %v3538, %v3570
        %v3603 = vmax.f32 %v3539, %v3571
        %v3604 = vmax.f32 %v3540, %v3572
        %v3605 = vmax.f32 %v3541, %v3573
        %v3606 = vmax.f32 %v3542, %v3574
        %v3607 = vmax.f32 %v3543, %v3575
        %v3608 = vmax.f32 %v3544, %v3576
        %v3609 = vmax.f32 %v3545, %v3577
        %v3610 = vmax.f32 %v3546, %v3578
        %v3611 = vmax.f32 %v3547, %v3579
        %v3612 = vmax.f32 %v3548, %v3580
        %v3613 = vmax.f32 %v3549, %v3581
        %v3614 = vmax.f32 %v3550, %v3582
        %v3615 = vmax.f32 %v3551, %v3583
        %v3616 = vmax.f32 %v3552, %v3584
        %v3617 = vmax.f32 %v3553, %v3585
        %v3618 = vmax.f32 %v3554, %v3586
        %v3619 = vmax.f32 %v3555, %v3587
        %v3620 = vmax.f32 %v3556, %v3588
        %v3621 = vmax.f32 %v3557, %v3589
        %v3622 = vmax.f32 %v3558, %v3590
        %v3623 = vmax.f32 %v3559, %v3591
        %v3624 = vmax.f32 %v3560, %v3592
        %v3625 = vmax.f32 %v3561, %v3593
        %v3626 = vmax.f32 %v3562, %v3594
        %v3627 = vmax.f32 %v3563, %v3595
        %v3628 = vmax.f32 %v3564, %v3596
        %3629 = vst.msk [vmem:[#allocation5] sm:$0xff] %vm882, 0.0
        %3630 = vst.msk [vmem:[#allocation5 + $0x8] sm:$0xff] %vm882, 0.0
        %3631 = vst.msk [vmem:[#allocation5 + $0x10] sm:$0xff] %vm882, 0.0
        %3632 = vst.msk [vmem:[#allocation5 + $0x18] sm:$0xff] %vm882, 0.0
        %3633 = vst.msk [vmem:[#allocation5 + $0x20] sm:$0xff] %vm882, 0.0
        %3634 = vst.msk [vmem:[#allocation5 + $0x28] sm:$0xff] %vm882, 0.0
        %3635 = vst.msk [vmem:[#allocation5 + $0x30] sm:$0xff] %vm882, 0.0
        %3636 = vst.msk [vmem:[#allocation5 + $0x38] sm:$0xff] %vm882, 0.0
        %3637 = vst.msk [vmem:[#allocation5 + $0x40] sm:$0xff] %vm882, 0.0
        %3638 = vst.msk [vmem:[#allocation5 + $0x48] sm:$0xff] %vm882, 0.0
        %3639 = vst.msk [vmem:[#allocation5 + $0x50] sm:$0xff] %vm882, 0.0
        %3640 = vst.msk [vmem:[#allocation5 + $0x58] sm:$0xff] %vm882, 0.0
        %3641 = vst.msk [vmem:[#allocation5 + $0x60] sm:$0xff] %vm882, 0.0
        %3642 = vst.msk [vmem:[#allocation5 + $0x68] sm:$0xff] %vm882, 0.0
        %3643 = vst.msk [vmem:[#allocation5 + $0x70] sm:$0xff] %vm882, 0.0
        %3644 = vst.msk [vmem:[#allocation5 + $0x78] sm:$0xff] %vm882, 0.0
        %3645 = vst.msk [vmem:[#allocation5 + $0x80] sm:$0xff] %vm882, 0.0
        %3646 = vst.msk [vmem:[#allocation5 + $0x88] sm:$0xff] %vm882, 0.0
        %3647 = vst.msk [vmem:[#allocation5 + $0x90] sm:$0xff] %vm882, 0.0
        %3648 = vst.msk [vmem:[#allocation5 + $0x98] sm:$0xff] %vm882, 0.0
        %3649 = vst.msk [vmem:[#allocation5 + $0xa0] sm:$0xff] %vm882, 0.0
        %3650 = vst.msk [vmem:[#allocation5 + $0xa8] sm:$0xff] %vm882, 0.0
        %3651 = vst.msk [vmem:[#allocation5 + $0xb0] sm:$0xff] %vm882, 0.0
        %3652 = vst.msk [vmem:[#allocation5 + $0xb8] sm:$0xff] %vm882, 0.0
        %3653 = vst.msk [vmem:[#allocation5 + $0xc0] sm:$0xff] %vm882, 0.0
        %3654 = vst.msk [vmem:[#allocation5 + $0xc8] sm:$0xff] %vm882, 0.0
        %3655 = vst.msk [vmem:[#allocation5 + $0xd0] sm:$0xff] %vm882, 0.0
        %3656 = vst.msk [vmem:[#allocation5 + $0xd8] sm:$0xff] %vm882, 0.0
        %3657 = vst.msk [vmem:[#allocation5 + $0xe0] sm:$0xff] %vm882, 0.0
        %3658 = vst.msk [vmem:[#allocation5 + $0xe8] sm:$0xff] %vm882, 0.0
        %3659 = vst.msk [vmem:[#allocation5 + $0xf0] sm:$0xff] %vm882, 0.0
        %3660 = vst.msk [vmem:[#allocation5 + $0xf8] sm:$0xff] %vm882, 0.0
        %3661 = vst.msk [vmem:[#allocation5 + $0x100] sm:$0xff] %vm882, 0.0
        %3662 = vst.msk [vmem:[#allocation5 + $0x108] sm:$0xff] %vm882, 0.0
        %3663 = vst.msk [vmem:[#allocation5 + $0x110] sm:$0xff] %vm882, 0.0
        %3664 = vst.msk [vmem:[#allocation5 + $0x118] sm:$0xff] %vm882, 0.0
        %3665 = vst.msk [vmem:[#allocation5 + $0x120] sm:$0xff] %vm882, 0.0
        %3666 = vst.msk [vmem:[#allocation5 + $0x128] sm:$0xff] %vm882, 0.0
        %3667 = vst.msk [vmem:[#allocation5 + $0x130] sm:$0xff] %vm882, 0.0
        %3668 = vst.msk [vmem:[#allocation5 + $0x138] sm:$0xff] %vm882, 0.0
        %3669 = vst.msk [vmem:[#allocation5 + $0x140] sm:$0xff] %vm882, 0.0
        %3670 = vst.msk [vmem:[#allocation5 + $0x148] sm:$0xff] %vm882, 0.0
        %3671 = vst.msk [vmem:[#allocation5 + $0x150] sm:$0xff] %vm882, 0.0
        %3672 = vst.msk [vmem:[#allocation5 + $0x158] sm:$0xff] %vm882, 0.0
        %3673 = vst.msk [vmem:[#allocation5 + $0x160] sm:$0xff] %vm882, 0.0
        %3674 = vst.msk [vmem:[#allocation5 + $0x168] sm:$0xff] %vm882, 0.0
        %3675 = vst.msk [vmem:[#allocation5 + $0x170] sm:$0xff] %vm882, 0.0
        %3676 = vst.msk [vmem:[#allocation5 + $0x178] sm:$0xff] %vm882, 0.0
        %3677 = vst.msk [vmem:[#allocation5 + $0x180] sm:$0xff] %vm882, 0.0
        %3678 = vst.msk [vmem:[#allocation5 + $0x188] sm:$0xff] %vm882, 0.0
        %3679 = vst.msk [vmem:[#allocation5 + $0x190] sm:$0xff] %vm882, 0.0
        %3680 = vst.msk [vmem:[#allocation5 + $0x198] sm:$0xff] %vm882, 0.0
        %3681 = vst.msk [vmem:[#allocation5 + $0x1a0] sm:$0xff] %vm882, 0.0
        %3682 = vst.msk [vmem:[#allocation5 + $0x1a8] sm:$0xff] %vm882, 0.0
        %3683 = vst.msk [vmem:[#allocation5 + $0x1b0] sm:$0xff] %vm882, 0.0
        %3684 = vst.msk [vmem:[#allocation5 + $0x1b8] sm:$0xff] %vm882, 0.0
        %3685 = vst.msk [vmem:[#allocation5 + $0x1c0] sm:$0xff] %vm882, 0.0
        %3686 = vst.msk [vmem:[#allocation5 + $0x1c8] sm:$0xff] %vm882, 0.0
        %3687 = vst.msk [vmem:[#allocation5 + $0x1d0] sm:$0xff] %vm882, 0.0
        %3688 = vst.msk [vmem:[#allocation5 + $0x1d8] sm:$0xff] %vm882, 0.0
        %3689 = vst.msk [vmem:[#allocation5 + $0x1e0] sm:$0xff] %vm882, 0.0
        %3690 = vst.msk [vmem:[#allocation5 + $0x1e8] sm:$0xff] %vm882, 0.0
        %3691 = vst.msk [vmem:[#allocation5 + $0x1f0] sm:$0xff] %vm882, 0.0
        %3692 = vst.msk [vmem:[#allocation5 + $0x1f8] sm:$0xff] %vm882, 0.0
        %3693 = vst.msk [vmem:[#allocation5 + $0x200] sm:$0xff] %vm882, 0.0
        %3694 = vst.msk [vmem:[#allocation5 + $0x208] sm:$0xff] %vm882, 0.0
        %3695 = vst.msk [vmem:[#allocation5 + $0x210] sm:$0xff] %vm882, 0.0
        %3696 = vst.msk [vmem:[#allocation5 + $0x218] sm:$0xff] %vm882, 0.0
        %3697 = vst.msk [vmem:[#allocation5 + $0x220] sm:$0xff] %vm882, 0.0
        %3698 = vst.msk [vmem:[#allocation5 + $0x228] sm:$0xff] %vm882, 0.0
        %3699 = vst.msk [vmem:[#allocation5 + $0x230] sm:$0xff] %vm882, 0.0
        %3700 = vst.msk [vmem:[#allocation5 + $0x238] sm:$0xff] %vm882, 0.0
        %vm3701 = vcmask 257024
        %3702 = vst.msk [vmem:[#allocation5 + $0x240] sm:$0xf] %vm3701, 0.0
        %3703 = vst.msk [vmem:[#allocation5 + $0x64] sm:$0xff] %vm882, %v3597
        %3704 = vst.msk [vmem:[#allocation5 + $0x6c] sm:$0xff] %vm882, %v3598
        %3705 = vst.msk [vmem:[#allocation5 + $0x7c] sm:$0xff] %vm882, %v3599
        %3706 = vst.msk [vmem:[#allocation5 + $0x84] sm:$0xff] %vm882, %v3600
        %3707 = vst.msk [vmem:[#allocation5 + $0x94] sm:$0xff] %vm882, %v3601
        %3708 = vst.msk [vmem:[#allocation5 + $0x9c] sm:$0xff] %vm882, %v3602
        %3709 = vst.msk [vmem:[#allocation5 + $0xac] sm:$0xff] %vm882, %v3603
        %3710 = vst.msk [vmem:[#allocation5 + $0xb4] sm:$0xff] %vm882, %v3604
        %3711 = vst.msk [vmem:[#allocation5 + $0xc4] sm:$0xff] %vm882, %v3605
        %3712 = vst.msk [vmem:[#allocation5 + $0xcc] sm:$0xff] %vm882, %v3606
        %3713 = vst.msk [vmem:[#allocation5 + $0xdc] sm:$0xff] %vm882, %v3607
        %3714 = vst.msk [vmem:[#allocation5 + $0xe4] sm:$0xff] %vm882, %v3608
        %3715 = vst.msk [vmem:[#allocation5 + $0xf4] sm:$0xff] %vm882, %v3609
        %3716 = vst.msk [vmem:[#allocation5 + $0xfc] sm:$0xff] %vm882, %v3610
        %3717 = vst.msk [vmem:[#allocation5 + $0x10c] sm:$0xff] %vm882, %v3611
        %3718 = vst.msk [vmem:[#allocation5 + $0x114] sm:$0xff] %vm882, %v3612
        %3719 = vst.msk [vmem:[#allocation5 + $0x124] sm:$0xff] %vm882, %v3613
        %3720 = vst.msk [vmem:[#allocation5 + $0x12c] sm:$0xff] %vm882, %v3614
        %3721 = vst.msk [vmem:[#allocation5 + $0x13c] sm:$0xff] %vm882, %v3615
        %3722 = vst.msk [vmem:[#allocation5 + $0x144] sm:$0xff] %vm882, %v3616
        %3723 = vst.msk [vmem:[#allocation5 + $0x154] sm:$0xff] %vm882, %v3617
        %3724 = vst.msk [vmem:[#allocation5 + $0x15c] sm:$0xff] %vm882, %v3618
        %3725 = vst.msk [vmem:[#allocation5 + $0x16c] sm:$0xff] %vm882, %v3619
        %3726 = vst.msk [vmem:[#allocation5 + $0x174] sm:$0xff] %vm882, %v3620
        %3727 = vst.msk [vmem:[#allocation5 + $0x184] sm:$0xff] %vm882, %v3621
        %3728 = vst.msk [vmem:[#allocation5 + $0x18c] sm:$0xff] %vm882, %v3622
        %3729 = vst.msk [vmem:[#allocation5 + $0x19c] sm:$0xff] %vm882, %v3623
        %3730 = vst.msk [vmem:[#allocation5 + $0x1a4] sm:$0xff] %vm882, %v3624
        %3731 = vst.msk [vmem:[#allocation5 + $0x1b4] sm:$0xff] %vm882, %v3625
        %3732 = vst.msk [vmem:[#allocation5 + $0x1bc] sm:$0xff] %vm882, %v3626
        %3733 = vst.msk [vmem:[#allocation5 + $0x1cc] sm:$0xff] %vm882, %v3627
        %3734 = vst.msk [vmem:[#allocation5 + $0x1d4] sm:$0xff] %vm882, %v3628
        %v3735 = vld [vmem:[%s4] sm:$0x1]
        %v3737 = vlaneseq
        %v3738 = vshrl.u32 %v3737, 7
        %v3739 = vsub.s32 0, %v3738
        %v3740 = vrot.slane %v3735, %v3739
        %3742 = vst.msk [vmem:[#allocation6] sm:$0xff] %vm882, %v3740
        %3743 = vst.msk [vmem:[#allocation6 + $0x8] sm:$0xff] %vm882, %v3740
        %3744 = vst.msk [vmem:[#allocation6 + $0x10] sm:$0xff] %vm882, %v3740
        %3745 = vst.msk [vmem:[#allocation6 + $0x18] sm:$0xff] %vm882, %v3740
        %3746 = vst.msk [vmem:[#allocation6 + $0x20] sm:$0xff] %vm882, %v3740
        %3747 = vst.msk [vmem:[#allocation6 + $0x28] sm:$0xff] %vm882, %v3740
        %3748 = vst.msk [vmem:[#allocation6 + $0x30] sm:$0xff] %vm882, %v3740
        %3749 = vst.msk [vmem:[#allocation6 + $0x38] sm:$0xff] %vm882, %v3740
        %3750 = vst.msk [vmem:[#allocation6 + $0x40] sm:$0xff] %vm882, %v3740
        %3751 = vst.msk [vmem:[#allocation6 + $0x48] sm:$0xff] %vm882, %v3740
        %3752 = vst.msk [vmem:[#allocation6 + $0x50] sm:$0xff] %vm882, %v3740
        %3753 = vst.msk [vmem:[#allocation6 + $0x58] sm:$0xff] %vm882, %v3740
        %3754 = vst.msk [vmem:[#allocation6 + $0x60] sm:$0xff] %vm882, %v3740
        %3755 = vst.msk [vmem:[#allocation6 + $0x68] sm:$0xff] %vm882, %v3740
        %3756 = vst.msk [vmem:[#allocation6 + $0x70] sm:$0xff] %vm882, %v3740
        %3757 = vst.msk [vmem:[#allocation6 + $0x78] sm:$0xff] %vm882, %v3740
        %3758 = vst.msk [vmem:[#allocation6 + $0x80] sm:$0xff] %vm882, %v3740
        %3759 = vst.msk [vmem:[#allocation6 + $0x88] sm:$0xff] %vm882, %v3740
        %3760 = vst.msk [vmem:[#allocation6 + $0x90] sm:$0xff] %vm882, %v3740
        %3761 = vst.msk [vmem:[#allocation6 + $0x98] sm:$0xff] %vm882, %v3740
        %3762 = vst.msk [vmem:[#allocation6 + $0xa0] sm:$0xff] %vm882, %v3740
        %3763 = vst.msk [vmem:[#allocation6 + $0xa8] sm:$0xff] %vm882, %v3740
        %3764 = vst.msk [vmem:[#allocation6 + $0xb0] sm:$0xff] %vm882, %v3740
        %3765 = vst.msk [vmem:[#allocation6 + $0xb8] sm:$0xff] %vm882, %v3740
        %3766 = vst.msk [vmem:[#allocation6 + $0xc0] sm:$0xff] %vm882, %v3740
        %3767 = vst.msk [vmem:[#allocation6 + $0xc8] sm:$0xff] %vm882, %v3740
        %3768 = vst.msk [vmem:[#allocation6 + $0xd0] sm:$0xff] %vm882, %v3740
        %3769 = vst.msk [vmem:[#allocation6 + $0xd8] sm:$0xff] %vm882, %v3740
        %3770 = vst.msk [vmem:[#allocation6 + $0xe0] sm:$0xff] %vm882, %v3740
        %3771 = vst.msk [vmem:[#allocation6 + $0xe8] sm:$0xff] %vm882, %v3740
        %3772 = vst.msk [vmem:[#allocation6 + $0xf0] sm:$0xff] %vm882, %v3740
        %3773 = vst.msk [vmem:[#allocation6 + $0xf8] sm:$0xff] %vm882, %v3740
        %3774 = vst.msk [vmem:[#allocation6 + $0x100] sm:$0xff] %vm882, %v3740
        %3775 = vst.msk [vmem:[#allocation6 + $0x108] sm:$0xff] %vm882, %v3740
        %3776 = vst.msk [vmem:[#allocation6 + $0x110] sm:$0xff] %vm882, %v3740
        %3777 = vst.msk [vmem:[#allocation6 + $0x118] sm:$0xff] %vm882, %v3740
        %3778 = vst.msk [vmem:[#allocation6 + $0x120] sm:$0xff] %vm882, %v3740
        %3779 = vst.msk [vmem:[#allocation6 + $0x128] sm:$0xff] %vm882, %v3740
        %3780 = vst.msk [vmem:[#allocation6 + $0x130] sm:$0xff] %vm882, %v3740
        %3781 = vst.msk [vmem:[#allocation6 + $0x138] sm:$0xff] %vm882, %v3740
        %3782 = vst.msk [vmem:[#allocation6 + $0x140] sm:$0xff] %vm882, %v3740
        %3783 = vst.msk [vmem:[#allocation6 + $0x148] sm:$0xff] %vm882, %v3740
        %3784 = vst.msk [vmem:[#allocation6 + $0x150] sm:$0xff] %vm882, %v3740
        %3785 = vst.msk [vmem:[#allocation6 + $0x158] sm:$0xff] %vm882, %v3740
        %3786 = vst.msk [vmem:[#allocation6 + $0x160] sm:$0xff] %vm882, %v3740
        %3787 = vst.msk [vmem:[#allocation6 + $0x168] sm:$0xff] %vm882, %v3740
        %3788 = vst.msk [vmem:[#allocation6 + $0x170] sm:$0xff] %vm882, %v3740
        %3789 = vst.msk [vmem:[#allocation6 + $0x178] sm:$0xff] %vm882, %v3740
        %3790 = vst.msk [vmem:[#allocation6 + $0x180] sm:$0xff] %vm882, %v3740
        %3791 = vst.msk [vmem:[#allocation6 + $0x188] sm:$0xff] %vm882, %v3740
        %3792 = vst.msk [vmem:[#allocation6 + $0x190] sm:$0xff] %vm882, %v3740
        %3793 = vst.msk [vmem:[#allocation6 + $0x198] sm:$0xff] %vm882, %v3740
        %3794 = vst.msk [vmem:[#allocation6 + $0x1a0] sm:$0xff] %vm882, %v3740
        %3795 = vst.msk [vmem:[#allocation6 + $0x1a8] sm:$0xff] %vm882, %v3740
        %3796 = vst.msk [vmem:[#allocation6 + $0x1b0] sm:$0xff] %vm882, %v3740
        %3797 = vst.msk [vmem:[#allocation6 + $0x1b8] sm:$0xff] %vm882, %v3740
        %3798 = vst.msk [vmem:[#allocation6 + $0x1c0] sm:$0xff] %vm882, %v3740
        %3799 = vst.msk [vmem:[#allocation6 + $0x1c8] sm:$0xff] %vm882, %v3740
        %3800 = vst.msk [vmem:[#allocation6 + $0x1d0] sm:$0xff] %vm882, %v3740
        %3801 = vst.msk [vmem:[#allocation6 + $0x1d8] sm:$0xff] %vm882, %v3740
        loop: start=0, step=1, limit=5
        $region79: #{_tudui_forward.1} parent=63 // loop_pre_header
          _
        $region80: #{_tudui_forward.1} parent=63 // loop_header
          %s3803 = sphi 0, %s3807
          %p3804 = scmp.ge.s32.totalorder %s3803, 5
        $region81: #{_tudui_forward.1} parent=63 // loop_header_branch
          %3806 = sbr.rel (%p3804) target = $region85
        $region82: #{_tudui_forward.1} parent=63 // loop_body
          loop: start=0, step=1, limit=5
          $region86: #{_tudui_forward.1} parent=82 // loop_pre_header
            _
          $region87: #{_tudui_forward.1} parent=82 // loop_header
            %s3809 = sphi 0, %s3813
            %p3810 = scmp.ge.s32.totalorder %s3809, 5
          $region88: #{_tudui_forward.1} parent=82 // loop_header_branch
            %3812 = sbr.rel (%p3810) target = $region92
          $region89: #{_tudui_forward.1} parent=82 // loop_body
            %s3814 = ssub.s32 %s3803, 2
            %s3815 = smul.u32 %s3814, 24
            %s3816 = sadd.s32 %s3815, 50
            %s3817 = ssub.s32 %s3809, 2
            %s3818 = sadd.s32 %s3816, %s3817
            %s3819 = scalar_lea.vmem [#allocation5], %s3818
            %v3820 = vld [vmem:[%s3819] sm:$0xff]
            %v3821 = vld [vmem:[%s3819 + $0x8] sm:$0xff]
            %v3822 = vld [vmem:[%s3819 + $0x10] sm:$0xff]
            %v3823 = vld [vmem:[%s3819 + $0x18] sm:$0xff]
            %v3824 = vld [vmem:[%s3819 + $0x20] sm:$0xff]
            %v3825 = vld [vmem:[%s3819 + $0x28] sm:$0xff]
            %v3826 = vld [vmem:[%s3819 + $0x30] sm:$0xff]
            %v3827 = vld [vmem:[%s3819 + $0x38] sm:$0xff]
            %v3828 = vld [vmem:[%s3819 + $0x40] sm:$0xff]
            %v3829 = vld [vmem:[%s3819 + $0x48] sm:$0xff]
            %v3830 = vld [vmem:[%s3819 + $0x50] sm:$0xff]
            %v3831 = vld [vmem:[%s3819 + $0x58] sm:$0xff]
            %v3832 = vld [vmem:[%s3819 + $0x60] sm:$0xff]
            %v3833 = vld [vmem:[%s3819 + $0x68] sm:$0xff]
            %v3834 = vld [vmem:[%s3819 + $0x70] sm:$0xff]
            %v3835 = vld [vmem:[%s3819 + $0x78] sm:$0xff]
            %v3836 = vld [vmem:[%s3819 + $0x80] sm:$0xff]
            %v3837 = vld [vmem:[%s3819 + $0x88] sm:$0xff]
            %v3838 = vld [vmem:[%s3819 + $0x90] sm:$0xff]
            %v3839 = vld [vmem:[%s3819 + $0x98] sm:$0xff]
            %v3840 = vld [vmem:[%s3819 + $0xa0] sm:$0xff]
            %v3841 = vld [vmem:[%s3819 + $0xa8] sm:$0xff]
            %v3842 = vld [vmem:[%s3819 + $0xb0] sm:$0xff]
            %v3843 = vld [vmem:[%s3819 + $0xb8] sm:$0xff]
            %v3844 = vld [vmem:[%s3819 + $0xc0] sm:$0xff]
            %v3845 = vld [vmem:[%s3819 + $0xc8] sm:$0xff]
            %v3846 = vld [vmem:[%s3819 + $0xd0] sm:$0xff]
            %v3847 = vld [vmem:[%s3819 + $0xd8] sm:$0xff]
            %v3848 = vld [vmem:[%s3819 + $0xe0] sm:$0xff]
            %v3849 = vld [vmem:[%s3819 + $0xe8] sm:$0xff]
            %v3850 = vld [vmem:[%s3819 + $0xf0] sm:$0xff]
            %v3851 = vld [vmem:[%s3819 + $0xf8] sm:$0xff]
            %v3852 = vld [vmem:[%s3819 + $0x100] sm:$0xff]
            %v3853 = vld [vmem:[%s3819 + $0x108] sm:$0xff]
            %v3854 = vld [vmem:[%s3819 + $0x110] sm:$0xff]
            %v3855 = vld [vmem:[%s3819 + $0x118] sm:$0xff]
            %v3856 = vld [vmem:[%s3819 + $0x120] sm:$0xff]
            %v3857 = vld [vmem:[%s3819 + $0x128] sm:$0xff]
            %v3858 = vld [vmem:[%s3819 + $0x130] sm:$0xff]
            %v3859 = vld [vmem:[%s3819 + $0x138] sm:$0xff]
            %v3860 = vld [vmem:[%s3819 + $0x140] sm:$0xff]
            %v3861 = vld [vmem:[%s3819 + $0x148] sm:$0xff]
            %v3862 = vld [vmem:[%s3819 + $0x150] sm:$0xff]
            %v3863 = vld [vmem:[%s3819 + $0x158] sm:$0xff]
            %v3864 = vld [vmem:[%s3819 + $0x160] sm:$0xff]
            %v3865 = vld [vmem:[%s3819 + $0x168] sm:$0xff]
            %v3866 = vld [vmem:[%s3819 + $0x170] sm:$0xff]
            %v3867 = vld [vmem:[%s3819 + $0x178] sm:$0xff]
            %v3868 = vld [vmem:[%s3819 + $0x180] sm:$0xff]
            %v3869 = vld [vmem:[%s3819 + $0x188] sm:$0xff]
            %v3870 = vld [vmem:[%s3819 + $0x190] sm:$0xff]
            %v3871 = vld [vmem:[%s3819 + $0x198] sm:$0xff]
            %v3872 = vld [vmem:[%s3819 + $0x1a0] sm:$0xff]
            %v3873 = vld [vmem:[%s3819 + $0x1a8] sm:$0xff]
            %v3874 = vld [vmem:[%s3819 + $0x1b0] sm:$0xff]
            %v3875 = vld [vmem:[%s3819 + $0x1b8] sm:$0xff]
            %v3876 = vld [vmem:[%s3819 + $0x1c0] sm:$0xff]
            %v3877 = vld [vmem:[%s3819 + $0x1c8] sm:$0xff]
            %v3878 = vld [vmem:[%s3819 + $0x1d0] sm:$0xff]
            %v3879 = vld [vmem:[%s3819 + $0x1d8] sm:$0xff]
            %v3880 = vpack.c.bf16 %v3821, %v3820
            %v3881 = vpack.c.bf16 %v3823, %v3822
            %v3882 = vpack.c.bf16 %v3825, %v3824
            %v3883 = vpack.c.bf16 %v3827, %v3826
            %v3884 = vpack.c.bf16 %v3829, %v3828
            %v3885 = vpack.c.bf16 %v3831, %v3830
            %v3886 = vpack.c.bf16 %v3833, %v3832
            %v3887 = vpack.c.bf16 %v3835, %v3834
            %v3888 = vpack.c.bf16 %v3837, %v3836
            %v3889 = vpack.c.bf16 %v3839, %v3838
            %v3890 = vpack.c.bf16 %v3841, %v3840
            %v3891 = vpack.c.bf16 %v3843, %v3842
            %v3892 = vpack.c.bf16 %v3845, %v3844
            %v3893 = vpack.c.bf16 %v3847, %v3846
            %v3894 = vpack.c.bf16 %v3849, %v3848
            %v3895 = vpack.c.bf16 %v3851, %v3850
            %v3896 = vpack.c.bf16 %v3853, %v3852
            %v3897 = vpack.c.bf16 %v3855, %v3854
            %v3898 = vpack.c.bf16 %v3857, %v3856
            %v3899 = vpack.c.bf16 %v3859, %v3858
            %v3900 = vpack.c.bf16 %v3861, %v3860
            %v3901 = vpack.c.bf16 %v3863, %v3862
            %v3902 = vpack.c.bf16 %v3865, %v3864
            %v3903 = vpack.c.bf16 %v3867, %v3866
            %v3904 = vpack.c.bf16 %v3869, %v3868
            %v3905 = vpack.c.bf16 %v3871, %v3870
            %v3906 = vpack.c.bf16 %v3873, %v3872
            %v3907 = vpack.c.bf16 %v3875, %v3874
            %v3908 = vpack.c.bf16 %v3877, %v3876
            %v3909 = vpack.c.bf16 %v3879, %v3878
            %v3910 = vld [vmem:[#allocation6] sm:$0xff]
            %v3911 = vld [vmem:[#allocation6 + $0x8] sm:$0xff]
            %v3912 = vld [vmem:[#allocation6 + $0x10] sm:$0xff]
            %v3913 = vld [vmem:[#allocation6 + $0x18] sm:$0xff]
            %v3914 = vld [vmem:[#allocation6 + $0x20] sm:$0xff]
            %v3915 = vld [vmem:[#allocation6 + $0x28] sm:$0xff]
            %v3916 = vld [vmem:[#allocation6 + $0x30] sm:$0xff]
            %v3917 = vld [vmem:[#allocation6 + $0x38] sm:$0xff]
            %v3918 = vld [vmem:[#allocation6 + $0x40] sm:$0xff]
            %v3919 = vld [vmem:[#allocation6 + $0x48] sm:$0xff]
            %v3920 = vld [vmem:[#allocation6 + $0x50] sm:$0xff]
            %v3921 = vld [vmem:[#allocation6 + $0x58] sm:$0xff]
            %v3922 = vld [vmem:[#allocation6 + $0x60] sm:$0xff]
            %v3923 = vld [vmem:[#allocation6 + $0x68] sm:$0xff]
            %v3924 = vld [vmem:[#allocation6 + $0x70] sm:$0xff]
            %v3925 = vld [vmem:[#allocation6 + $0x78] sm:$0xff]
            %v3926 = vld [vmem:[#allocation6 + $0x80] sm:$0xff]
            %v3927 = vld [vmem:[#allocation6 + $0x88] sm:$0xff]
            %v3928 = vld [vmem:[#allocation6 + $0x90] sm:$0xff]
            %v3929 = vld [vmem:[#allocation6 + $0x98] sm:$0xff]
            %v3930 = vld [vmem:[#allocation6 + $0xa0] sm:$0xff]
            %v3931 = vld [vmem:[#allocation6 + $0xa8] sm:$0xff]
            %v3932 = vld [vmem:[#allocation6 + $0xb0] sm:$0xff]
            %v3933 = vld [vmem:[#allocation6 + $0xb8] sm:$0xff]
            %v3934 = vld [vmem:[#allocation6 + $0xc0] sm:$0xff]
            %v3935 = vld [vmem:[#allocation6 + $0xc8] sm:$0xff]
            %v3936 = vld [vmem:[#allocation6 + $0xd0] sm:$0xff]
            %v3937 = vld [vmem:[#allocation6 + $0xd8] sm:$0xff]
            %v3938 = vld [vmem:[#allocation6 + $0xe0] sm:$0xff]
            %v3939 = vld [vmem:[#allocation6 + $0xe8] sm:$0xff]
            %v3940 = vld [vmem:[#allocation6 + $0xf0] sm:$0xff]
            %v3941 = vld [vmem:[#allocation6 + $0xf8] sm:$0xff]
            %v3942 = vld [vmem:[#allocation6 + $0x100] sm:$0xff]
            %v3943 = vld [vmem:[#allocation6 + $0x108] sm:$0xff]
            %v3944 = vld [vmem:[#allocation6 + $0x110] sm:$0xff]
            %v3945 = vld [vmem:[#allocation6 + $0x118] sm:$0xff]
            %v3946 = vld [vmem:[#allocation6 + $0x120] sm:$0xff]
            %v3947 = vld [vmem:[#allocation6 + $0x128] sm:$0xff]
            %v3948 = vld [vmem:[#allocation6 + $0x130] sm:$0xff]
            %v3949 = vld [vmem:[#allocation6 + $0x138] sm:$0xff]
            %v3950 = vld [vmem:[#allocation6 + $0x140] sm:$0xff]
            %v3951 = vld [vmem:[#allocation6 + $0x148] sm:$0xff]
            %v3952 = vld [vmem:[#allocation6 + $0x150] sm:$0xff]
            %v3953 = vld [vmem:[#allocation6 + $0x158] sm:$0xff]
            %v3954 = vld [vmem:[#allocation6 + $0x160] sm:$0xff]
            %v3955 = vld [vmem:[#allocation6 + $0x168] sm:$0xff]
            %v3956 = vld [vmem:[#allocation6 + $0x170] sm:$0xff]
            %v3957 = vld [vmem:[#allocation6 + $0x178] sm:$0xff]
            %v3958 = vld [vmem:[#allocation6 + $0x180] sm:$0xff]
            %v3959 = vld [vmem:[#allocation6 + $0x188] sm:$0xff]
            %v3960 = vld [vmem:[#allocation6 + $0x190] sm:$0xff]
            %v3961 = vld [vmem:[#allocation6 + $0x198] sm:$0xff]
            %v3962 = vld [vmem:[#allocation6 + $0x1a0] sm:$0xff]
            %v3963 = vld [vmem:[#allocation6 + $0x1a8] sm:$0xff]
            %v3964 = vld [vmem:[#allocation6 + $0x1b0] sm:$0xff]
            %v3965 = vld [vmem:[#allocation6 + $0x1b8] sm:$0xff]
            %v3966 = vld [vmem:[#allocation6 + $0x1c0] sm:$0xff]
            %v3967 = vld [vmem:[#allocation6 + $0x1c8] sm:$0xff]
            %v3968 = vld [vmem:[#allocation6 + $0x1d0] sm:$0xff]
            %v3969 = vld [vmem:[#allocation6 + $0x1d8] sm:$0xff]
            %s3970 = smul.u32 %s3803, 5
            %s3971 = sadd.s32 %s3970, %s3809
            %s3972 = smul.u32 %s3971, 4
            %s3973 = smul.addr %s3972, 4
            %s3974 = scalar_lea.vmem %s3, %s3973
            %v3975 = vld [vmem:[%s3974] sm:$0xf]
            %v3976 = vld [vmem:[%s3974 + $0x4] sm:$0xf]
            %v3977 = vld [vmem:[%s3974 + $0x8] sm:$0xf]
            %v3978 = vld [vmem:[%s3974 + $0xc] sm:$0xf]
            %v3983 = vunpack.c.l.b16 %v3975
            %v3984 = vunpack.c.l.b16 %v3976
            %v3985 = vunpack.c.l.b16 %v3977
            %v3986 = vunpack.c.l.b16 %v3978
            %v3987 = vpack.c.b16 %v3984, %v3983
            %v3988 = vpack.c.b16 %v3986, %v3985
            %v3992 = vsel %vm882, %v3880, 0
            %v3995 = vsel %vm882, %v3881, 0
            %v3998 = vsel %vm882, %v3882, 0
            %v4001 = vsel %vm882, %v3883, 0
            %v4004 = vsel %vm882, %v3884, 0
            %v4007 = vsel %vm882, %v3885, 0
            %v4010 = vsel %vm882, %v3886, 0
            %v4013 = vsel %vm882, %v3887, 0
            %v4016 = vsel %vm882, %v3888, 0
            %v4019 = vsel %vm882, %v3889, 0
            %v4022 = vsel %vm882, %v3890, 0
            %v4025 = vsel %vm882, %v3891, 0
            %v4028 = vsel %vm882, %v3892, 0
            %v4031 = vsel %vm882, %v3893, 0
            %v4034 = vsel %vm882, %v3894, 0
            %v4037 = vsel %vm882, %v3895, 0
            %v4040 = vsel %vm882, %v3896, 0
            %v4043 = vsel %vm882, %v3897, 0
            %v4046 = vsel %vm882, %v3898, 0
            %v4049 = vsel %vm882, %v3899, 0
            %v4052 = vsel %vm882, %v3900, 0
            %v4055 = vsel %vm882, %v3901, 0
            %v4058 = vsel %vm882, %v3902, 0
            %v4061 = vsel %vm882, %v3903, 0
            %v4064 = vsel %vm882, %v3904, 0
            %v4067 = vsel %vm882, %v3905, 0
            %v4070 = vsel %vm882, %v3906, 0
            %v4073 = vsel %vm882, %v3907, 0
            %v4076 = vsel %vm882, %v3908, 0
            %v4079 = vsel %vm882, %v3909, 0
            %4081 = vmatprep.subr.bf16.mxu0 0
            %4082 = vmatpush1.bf16.msra.mxu0 %v3987
            %4083 = vmatprep.subr.bf16.mxu0 0
            %4084 = vmatpush1.bf16.msra.mxu0 %v3988
            %4085 = vmatprep.subr.bf16.mxu0 0
            %4086 = vmatpush1.bf16.msra.mxu0 0
            %4087 = vmatprep.subr.bf16.mxu0 0
            %4088 = vmatpush1.bf16.msra.mxu0 0
            %4089 = vmatprep.subr.bf16.mxu0 0
            %4090 = vmatpush1.bf16.msra.mxu0 0
            %4091 = vmatprep.subr.bf16.mxu0 0
            %4092 = vmatpush1.bf16.msra.mxu0 0
            %4093 = vmatprep.subr.bf16.mxu0 0
            %4094 = vmatpush1.bf16.msra.mxu0 0
            %4095 = vmatprep.subr.bf16.mxu0 0
            %4096 = vmatpush1.bf16.msra.mxu0 0
            %4097 = vmatprep.subr.bf16.mxu0 0
            %4098 = vmatpush1.bf16.msra.mxu0 0
            %4099 = vmatprep.subr.bf16.mxu0 0
            %4100 = vmatpush1.bf16.msra.mxu0 0
            %4101 = vmatprep.subr.bf16.mxu0 0
            %4102 = vmatpush1.bf16.msra.mxu0 0
            %4103 = vmatprep.subr.bf16.mxu0 0
            %4104 = vmatpush1.bf16.msra.mxu0 0
            %4105 = vmatprep.subr.bf16.mxu0 0
            %4106 = vmatpush1.bf16.msra.mxu0 0
            %4107 = vmatprep.subr.bf16.mxu0 0
            %4108 = vmatpush1.bf16.msra.mxu0 0
            %4109 = vmatprep.subr.bf16.mxu0 0
            %4110 = vmatpush1.bf16.msra.mxu0 0
            %4111 = vmatprep.subr.bf16.mxu0 0
            %4112 = vmatpush1.bf16.msra.mxu0 0
            %4113 = vmatprep.mubr.bf16.mxu0 0
            %4114 = vmatmul.mubr.bf16.gmra.mrb[0].mxu0 %v3992
            %v4115 = vpop.f32.mrb[0].mxu0
            %v4116 = vadd.f32 0.0, %v4115
            %v4117 = vpop.f32.mrb[0].mxu0
            %v4118 = vpop.f32.mrb[0].mxu0
            %v4119 = vadd.f32 0.0, %v4118
            %v4120 = vpop.f32.mrb[0].mxu0
            %4121 = vmatprep.mubr.bf16.mxu0 0
            %4122 = vmatmul.mubr.bf16.gmra.mrb[0].mxu0 %v3995
            %v4123 = vpop.f32.mrb[0].mxu0
            %v4124 = vadd.f32 0.0, %v4123
            %v4125 = vpop.f32.mrb[0].mxu0
            %v4126 = vpop.f32.mrb[0].mxu0
            %v4127 = vadd.f32 0.0, %v4126
            %v4128 = vpop.f32.mrb[0].mxu0
            %4129 = vmatprep.mubr.bf16.mxu0 0
            %4130 = vmatmul.mubr.bf16.gmra.mrb[0].mxu0 %v3998
            %v4131 = vpop.f32.mrb[0].mxu0
            %v4132 = vadd.f32 0.0, %v4131
            %v4133 = vpop.f32.mrb[0].mxu0
            %v4134 = vpop.f32.mrb[0].mxu0
            %v4135 = vadd.f32 0.0, %v4134
            %v4136 = vpop.f32.mrb[0].mxu0
            %4137 = vmatprep.mubr.bf16.mxu0 0
            %4138 = vmatmul.mubr.bf16.gmra.mrb[0].mxu0 %v4001
            %v4139 = vpop.f32.mrb[0].mxu0
            %v4140 = vadd.f32 0.0, %v4139
            %v4141 = vpop.f32.mrb[0].mxu0
            %v4142 = vpop.f32.mrb[0].mxu0
            %v4143 = vadd.f32 0.0, %v4142
            %v4144 = vpop.f32.mrb[0].mxu0
            %4145 = vmatprep.mubr.bf16.mxu0 0
            %4146 = vmatmul.mubr.bf16.gmra.mrb[0].mxu0 %v4004
            %v4147 = vpop.f32.mrb[0].mxu0
            %v4148 = vadd.f32 0.0, %v4147
            %v4149 = vpop.f32.mrb[0].mxu0
            %v4150 = vpop.f32.mrb[0].mxu0
            %v4151 = vadd.f32 0.0, %v4150
            %v4152 = vpop.f32.mrb[0].mxu0
            %4153 = vmatprep.mubr.bf16.mxu0 0
            %4154 = vmatmul.mubr.bf16.gmra.mrb[0].mxu0 %v4007
            %v4155 = vpop.f32.mrb[0].mxu0
            %v4156 = vadd.f32 0.0, %v4155
            %v4157 = vpop.f32.mrb[0].mxu0
            %v4158 = vpop.f32.mrb[0].mxu0
            %v4159 = vadd.f32 0.0, %v4158
            %v4160 = vpop.f32.mrb[0].mxu0
            %4161 = vmatprep.mubr.bf16.mxu0 0
            %4162 = vmatmul.mubr.bf16.gmra.mrb[0].mxu0 %v4010
            %v4163 = vpop.f32.mrb[0].mxu0
            %v4164 = vadd.f32 0.0, %v4163
            %v4165 = vpop.f32.mrb[0].mxu0
            %v4166 = vpop.f32.mrb[0].mxu0
            %v4167 = vadd.f32 0.0, %v4166
            %v4168 = vpop.f32.mrb[0].mxu0
            %4169 = vmatprep.mubr.bf16.mxu0 0
            %4170 = vmatmul.mubr.bf16.gmra.mrb[0].mxu0 %v4013
            %v4171 = vpop.f32.mrb[0].mxu0
            %v4172 = vadd.f32 0.0, %v4171
            %v4173 = vpop.f32.mrb[0].mxu0
            %v4174 = vpop.f32.mrb[0].mxu0
            %v4175 = vadd.f32 0.0, %v4174
            %v4176 = vpop.f32.mrb[0].mxu0
            %4177 = vmatprep.mubr.bf16.mxu0 0
            %4178 = vmatmul.mubr.bf16.gmra.mrb[0].mxu0 %v4016
            %v4179 = vpop.f32.mrb[0].mxu0
            %v4180 = vadd.f32 0.0, %v4179
            %v4181 = vpop.f32.mrb[0].mxu0
            %v4182 = vpop.f32.mrb[0].mxu0
            %v4183 = vadd.f32 0.0, %v4182
            %v4184 = vpop.f32.mrb[0].mxu0
            %4185 = vmatprep.mubr.bf16.mxu0 0
            %4186 = vmatmul.mubr.bf16.gmra.mrb[0].mxu0 %v4019
            %v4187 = vpop.f32.mrb[0].mxu0
            %v4188 = vadd.f32 0.0, %v4187
            %v4189 = vpop.f32.mrb[0].mxu0
            %v4190 = vpop.f32.mrb[0].mxu0
            %v4191 = vadd.f32 0.0, %v4190
            %v4192 = vpop.f32.mrb[0].mxu0
            %4193 = vmatprep.mubr.bf16.mxu0 0
            %4194 = vmatmul.mubr.bf16.gmra.mrb[0].mxu0 %v4022
            %v4195 = vpop.f32.mrb[0].mxu0
            %v4196 = vadd.f32 0.0, %v4195
            %v4197 = vpop.f32.mrb[0].mxu0
            %v4198 = vpop.f32.mrb[0].mxu0
            %v4199 = vadd.f32 0.0, %v4198
            %v4200 = vpop.f32.mrb[0].mxu0
            %4201 = vmatprep.mubr.bf16.mxu0 0
            %4202 = vmatmul.mubr.bf16.gmra.mrb[0].mxu0 %v4025
            %v4203 = vpop.f32.mrb[0].mxu0
            %v4204 = vadd.f32 0.0, %v4203
            %v4205 = vpop.f32.mrb[0].mxu0
            %v4206 = vpop.f32.mrb[0].mxu0
            %v4207 = vadd.f32 0.0, %v4206
            %v4208 = vpop.f32.mrb[0].mxu0
            %4209 = vmatprep.mubr.bf16.mxu0 0
            %4210 = vmatmul.mubr.bf16.gmra.mrb[0].mxu0 %v4028
            %v4211 = vpop.f32.mrb[0].mxu0
            %v4212 = vadd.f32 0.0, %v4211
            %v4213 = vpop.f32.mrb[0].mxu0
            %v4214 = vpop.f32.mrb[0].mxu0
            %v4215 = vadd.f32 0.0, %v4214
            %v4216 = vpop.f32.mrb[0].mxu0
            %4217 = vmatprep.mubr.bf16.mxu0 0
            %4218 = vmatmul.mubr.bf16.gmra.mrb[0].mxu0 %v4031
            %v4219 = vpop.f32.mrb[0].mxu0
            %v4220 = vadd.f32 0.0, %v4219
            %v4221 = vpop.f32.mrb[0].mxu0
            %v4222 = vpop.f32.mrb[0].mxu0
            %v4223 = vadd.f32 0.0, %v4222
            %v4224 = vpop.f32.mrb[0].mxu0
            %4225 = vmatprep.mubr.bf16.mxu0 0
            %4226 = vmatmul.mubr.bf16.gmra.mrb[0].mxu0 %v4034
            %v4227 = vpop.f32.mrb[0].mxu0
            %v4228 = vadd.f32 0.0, %v4227
            %v4229 = vpop.f32.mrb[0].mxu0
            %v4230 = vpop.f32.mrb[0].mxu0
            %v4231 = vadd.f32 0.0, %v4230
            %v4232 = vpop.f32.mrb[0].mxu0
            %4233 = vmatprep.mubr.bf16.mxu0 0
            %4234 = vmatmul.mubr.bf16.gmra.mrb[0].mxu0 %v4037
            %v4235 = vpop.f32.mrb[0].mxu0
            %v4236 = vadd.f32 0.0, %v4235
            %v4237 = vpop.f32.mrb[0].mxu0
            %v4238 = vpop.f32.mrb[0].mxu0
            %v4239 = vadd.f32 0.0, %v4238
            %v4240 = vpop.f32.mrb[0].mxu0
            %4241 = vmatprep.mubr.bf16.mxu0 0
            %4242 = vmatmul.mubr.bf16.gmra.mrb[0].mxu0 %v4040
            %v4243 = vpop.f32.mrb[0].mxu0
            %v4244 = vadd.f32 0.0, %v4243
            %v4245 = vpop.f32.mrb[0].mxu0
            %v4246 = vpop.f32.mrb[0].mxu0
            %v4247 = vadd.f32 0.0, %v4246
            %v4248 = vpop.f32.mrb[0].mxu0
            %4249 = vmatprep.mubr.bf16.mxu0 0
            %4250 = vmatmul.mubr.bf16.gmra.mrb[0].mxu0 %v4043
            %v4251 = vpop.f32.mrb[0].mxu0
            %v4252 = vadd.f32 0.0, %v4251
            %v4253 = vpop.f32.mrb[0].mxu0
            %v4254 = vpop.f32.mrb[0].mxu0
            %v4255 = vadd.f32 0.0, %v4254
            %v4256 = vpop.f32.mrb[0].mxu0
            %4257 = vmatprep.mubr.bf16.mxu0 0
            %4258 = vmatmul.mubr.bf16.gmra.mrb[0].mxu0 %v4046
            %v4259 = vpop.f32.mrb[0].mxu0
            %v4260 = vadd.f32 0.0, %v4259
            %v4261 = vpop.f32.mrb[0].mxu0
            %v4262 = vpop.f32.mrb[0].mxu0
            %v4263 = vadd.f32 0.0, %v4262
            %v4264 = vpop.f32.mrb[0].mxu0
            %4265 = vmatprep.mubr.bf16.mxu0 0
            %4266 = vmatmul.mubr.bf16.gmra.mrb[0].mxu0 %v4049
            %v4267 = vpop.f32.mrb[0].mxu0
            %v4268 = vadd.f32 0.0, %v4267
            %v4269 = vpop.f32.mrb[0].mxu0
            %v4270 = vpop.f32.mrb[0].mxu0
            %v4271 = vadd.f32 0.0, %v4270
            %v4272 = vpop.f32.mrb[0].mxu0
            %4273 = vmatprep.mubr.bf16.mxu0 0
            %4274 = vmatmul.mubr.bf16.gmra.mrb[0].mxu0 %v4052
            %v4275 = vpop.f32.mrb[0].mxu0
            %v4276 = vadd.f32 0.0, %v4275
            %v4277 = vpop.f32.mrb[0].mxu0
            %v4278 = vpop.f32.mrb[0].mxu0
            %v4279 = vadd.f32 0.0, %v4278
            %v4280 = vpop.f32.mrb[0].mxu0
            %4281 = vmatprep.mubr.bf16.mxu0 0
            %4282 = vmatmul.mubr.bf16.gmra.mrb[0].mxu0 %v4055
            %v4283 = vpop.f32.mrb[0].mxu0
            %v4284 = vadd.f32 0.0, %v4283
            %v4285 = vpop.f32.mrb[0].mxu0
            %v4286 = vpop.f32.mrb[0].mxu0
            %v4287 = vadd.f32 0.0, %v4286
            %v4288 = vpop.f32.mrb[0].mxu0
            %4289 = vmatprep.mubr.bf16.mxu0 0
            %4290 = vmatmul.mubr.bf16.gmra.mrb[0].mxu0 %v4058
            %v4291 = vpop.f32.mrb[0].mxu0
            %v4292 = vadd.f32 0.0, %v4291
            %v4293 = vpop.f32.mrb[0].mxu0
            %v4294 = vpop.f32.mrb[0].mxu0
            %v4295 = vadd.f32 0.0, %v4294
            %v4296 = vpop.f32.mrb[0].mxu0
            %4297 = vmatprep.mubr.bf16.mxu0 0
            %4298 = vmatmul.mubr.bf16.gmra.mrb[0].mxu0 %v4061
            %v4299 = vpop.f32.mrb[0].mxu0
            %v4300 = vadd.f32 0.0, %v4299
            %v4301 = vpop.f32.mrb[0].mxu0
            %v4302 = vpop.f32.mrb[0].mxu0
            %v4303 = vadd.f32 0.0, %v4302
            %v4304 = vpop.f32.mrb[0].mxu0
            %4305 = vmatprep.mubr.bf16.mxu0 0
            %4306 = vmatmul.mubr.bf16.gmra.mrb[0].mxu0 %v4064
            %v4307 = vpop.f32.mrb[0].mxu0
            %v4308 = vadd.f32 0.0, %v4307
            %v4309 = vpop.f32.mrb[0].mxu0
            %v4310 = vpop.f32.mrb[0].mxu0
            %v4311 = vadd.f32 0.0, %v4310
            %v4312 = vpop.f32.mrb[0].mxu0
            %4313 = vmatprep.mubr.bf16.mxu0 0
            %4314 = vmatmul.mubr.bf16.gmra.mrb[0].mxu0 %v4067
            %v4315 = vpop.f32.mrb[0].mxu0
            %v4316 = vadd.f32 0.0, %v4315
            %v4317 = vpop.f32.mrb[0].mxu0
            %v4318 = vpop.f32.mrb[0].mxu0
            %v4319 = vadd.f32 0.0, %v4318
            %v4320 = vpop.f32.mrb[0].mxu0
            %4321 = vmatprep.mubr.bf16.mxu0 0
            %4322 = vmatmul.mubr.bf16.gmra.mrb[0].mxu0 %v4070
            %v4323 = vpop.f32.mrb[0].mxu0
            %v4324 = vadd.f32 0.0, %v4323
            %v4325 = vpop.f32.mrb[0].mxu0
            %v4326 = vpop.f32.mrb[0].mxu0
            %v4327 = vadd.f32 0.0, %v4326
            %v4328 = vpop.f32.mrb[0].mxu0
            %4329 = vmatprep.mubr.bf16.mxu0 0
            %4330 = vmatmul.mubr.bf16.gmra.mrb[0].mxu0 %v4073
            %v4331 = vpop.f32.mrb[0].mxu0
            %v4332 = vadd.f32 0.0, %v4331
            %v4333 = vpop.f32.mrb[0].mxu0
            %v4334 = vpop.f32.mrb[0].mxu0
            %v4335 = vadd.f32 0.0, %v4334
            %v4336 = vpop.f32.mrb[0].mxu0
            %4337 = vmatprep.mubr.bf16.mxu0 0
            %4338 = vmatmul.mubr.bf16.gmra.mrb[0].mxu0 %v4076
            %v4339 = vpop.f32.mrb[0].mxu0
            %v4340 = vadd.f32 0.0, %v4339
            %v4341 = vpop.f32.mrb[0].mxu0
            %v4342 = vpop.f32.mrb[0].mxu0
            %v4343 = vadd.f32 0.0, %v4342
            %v4344 = vpop.f32.mrb[0].mxu0
            %4345 = vmatprep.mubr.bf16.mxu0 0
            %4346 = vmatmul.mubr.bf16.gmra.mrb[0].mxu0 %v4079
            %v4347 = vpop.f32.mrb[0].mxu0
            %v4348 = vadd.f32 0.0, %v4347
            %v4349 = vpop.f32.mrb[0].mxu0
            %v4350 = vpop.f32.mrb[0].mxu0
            %v4351 = vadd.f32 0.0, %v4350
            %v4352 = vpop.f32.mrb[0].mxu0
            %4353 = vdwg.mxu0
            %v4354 = vadd.f32 %v3910, %v4116
            %v4355 = vadd.f32 %v3911, %v4119
            %v4356 = vadd.f32 %v3912, %v4124
            %v4357 = vadd.f32 %v3913, %v4127
            %v4358 = vadd.f32 %v3914, %v4132
            %v4359 = vadd.f32 %v3915, %v4135
            %v4360 = vadd.f32 %v3916, %v4140
            %v4361 = vadd.f32 %v3917, %v4143
            %v4362 = vadd.f32 %v3918, %v4148
            %v4363 = vadd.f32 %v3919, %v4151
            %v4364 = vadd.f32 %v3920, %v4156
            %v4365 = vadd.f32 %v3921, %v4159
            %v4366 = vadd.f32 %v3922, %v4164
            %v4367 = vadd.f32 %v3923, %v4167
            %v4368 = vadd.f32 %v3924, %v4172
            %v4369 = vadd.f32 %v3925, %v4175
            %v4370 = vadd.f32 %v3926, %v4180
            %v4371 = vadd.f32 %v3927, %v4183
            %v4372 = vadd.f32 %v3928, %v4188
            %v4373 = vadd.f32 %v3929, %v4191
            %v4374 = vadd.f32 %v3930, %v4196
            %v4375 = vadd.f32 %v3931, %v4199
            %v4376 = vadd.f32 %v3932, %v4204
            %v4377 = vadd.f32 %v3933, %v4207
            %v4378 = vadd.f32 %v3934, %v4212
            %v4379 = vadd.f32 %v3935, %v4215
            %v4380 = vadd.f32 %v3936, %v4220
            %v4381 = vadd.f32 %v3937, %v4223
            %v4382 = vadd.f32 %v3938, %v4228
            %v4383 = vadd.f32 %v3939, %v4231
            %v4384 = vadd.f32 %v3940, %v4236
            %v4385 = vadd.f32 %v3941, %v4239
            %v4386 = vadd.f32 %v3942, %v4244
            %v4387 = vadd.f32 %v3943, %v4247
            %v4388 = vadd.f32 %v3944, %v4252
            %v4389 = vadd.f32 %v3945, %v4255
            %v4390 = vadd.f32 %v3946, %v4260
            %v4391 = vadd.f32 %v3947, %v4263
            %v4392 = vadd.f32 %v3948, %v4268
            %v4393 = vadd.f32 %v3949, %v4271
            %v4394 = vadd.f32 %v3950, %v4276
            %v4395 = vadd.f32 %v3951, %v4279
            %v4396 = vadd.f32 %v3952, %v4284
            %v4397 = vadd.f32 %v3953, %v4287
            %v4398 = vadd.f32 %v3954, %v4292
            %v4399 = vadd.f32 %v3955, %v4295
            %v4400 = vadd.f32 %v3956, %v4300
            %v4401 = vadd.f32 %v3957, %v4303
            %v4402 = vadd.f32 %v3958, %v4308
            %v4403 = vadd.f32 %v3959, %v4311
            %v4404 = vadd.f32 %v3960, %v4316
            %v4405 = vadd.f32 %v3961, %v4319
            %v4406 = vadd.f32 %v3962, %v4324
            %v4407 = vadd.f32 %v3963, %v4327
            %v4408 = vadd.f32 %v3964, %v4332
            %v4409 = vadd.f32 %v3965, %v4335
            %v4410 = vadd.f32 %v3966, %v4340
            %v4411 = vadd.f32 %v3967, %v4343
            %v4412 = vadd.f32 %v3968, %v4348
            %v4413 = vadd.f32 %v3969, %v4351
            %4414 = vst.msk [vmem:[#allocation6] sm:$0xff] %vm882, %v4354
            %4415 = vst.msk [vmem:[#allocation6 + $0x8] sm:$0xff] %vm882, %v4355
            %4416 = vst.msk [vmem:[#allocation6 + $0x10] sm:$0xff] %vm882, %v4356
            %4417 = vst.msk [vmem:[#allocation6 + $0x18] sm:$0xff] %vm882, %v4357
            %4418 = vst.msk [vmem:[#allocation6 + $0x20] sm:$0xff] %vm882, %v4358
            %4419 = vst.msk [vmem:[#allocation6 + $0x28] sm:$0xff] %vm882, %v4359
            %4420 = vst.msk [vmem:[#allocation6 + $0x30] sm:$0xff] %vm882, %v4360
            %4421 = vst.msk [vmem:[#allocation6 + $0x38] sm:$0xff] %vm882, %v4361
            %4422 = vst.msk [vmem:[#allocation6 + $0x40] sm:$0xff] %vm882, %v4362
            %4423 = vst.msk [vmem:[#allocation6 + $0x48] sm:$0xff] %vm882, %v4363
            %4424 = vst.msk [vmem:[#allocation6 + $0x50] sm:$0xff] %vm882, %v4364
            %4425 = vst.msk [vmem:[#allocation6 + $0x58] sm:$0xff] %vm882, %v4365
            %4426 = vst.msk [vmem:[#allocation6 + $0x60] sm:$0xff] %vm882, %v4366
            %4427 = vst.msk [vmem:[#allocation6 + $0x68] sm:$0xff] %vm882, %v4367
            %4428 = vst.msk [vmem:[#allocation6 + $0x70] sm:$0xff] %vm882, %v4368
            %4429 = vst.msk [vmem:[#allocation6 + $0x78] sm:$0xff] %vm882, %v4369
            %4430 = vst.msk [vmem:[#allocation6 + $0x80] sm:$0xff] %vm882, %v4370
            %4431 = vst.msk [vmem:[#allocation6 + $0x88] sm:$0xff] %vm882, %v4371
            %4432 = vst.msk [vmem:[#allocation6 + $0x90] sm:$0xff] %vm882, %v4372
            %4433 = vst.msk [vmem:[#allocation6 + $0x98] sm:$0xff] %vm882, %v4373
            %4434 = vst.msk [vmem:[#allocation6 + $0xa0] sm:$0xff] %vm882, %v4374
            %4435 = vst.msk [vmem:[#allocation6 + $0xa8] sm:$0xff] %vm882, %v4375
            %4436 = vst.msk [vmem:[#allocation6 + $0xb0] sm:$0xff] %vm882, %v4376
            %4437 = vst.msk [vmem:[#allocation6 + $0xb8] sm:$0xff] %vm882, %v4377
            %4438 = vst.msk [vmem:[#allocation6 + $0xc0] sm:$0xff] %vm882, %v4378
            %4439 = vst.msk [vmem:[#allocation6 + $0xc8] sm:$0xff] %vm882, %v4379
            %4440 = vst.msk [vmem:[#allocation6 + $0xd0] sm:$0xff] %vm882, %v4380
            %4441 = vst.msk [vmem:[#allocation6 + $0xd8] sm:$0xff] %vm882, %v4381
            %4442 = vst.msk [vmem:[#allocation6 + $0xe0] sm:$0xff] %vm882, %v4382
            %4443 = vst.msk [vmem:[#allocation6 + $0xe8] sm:$0xff] %vm882, %v4383
            %4444 = vst.msk [vmem:[#allocation6 + $0xf0] sm:$0xff] %vm882, %v4384
            %4445 = vst.msk [vmem:[#allocation6 + $0xf8] sm:$0xff] %vm882, %v4385
            %4446 = vst.msk [vmem:[#allocation6 + $0x100] sm:$0xff] %vm882, %v4386
            %4447 = vst.msk [vmem:[#allocation6 + $0x108] sm:$0xff] %vm882, %v4387
            %4448 = vst.msk [vmem:[#allocation6 + $0x110] sm:$0xff] %vm882, %v4388
            %4449 = vst.msk [vmem:[#allocation6 + $0x118] sm:$0xff] %vm882, %v4389
            %4450 = vst.msk [vmem:[#allocation6 + $0x120] sm:$0xff] %vm882, %v4390
            %4451 = vst.msk [vmem:[#allocation6 + $0x128] sm:$0xff] %vm882, %v4391
            %4452 = vst.msk [vmem:[#allocation6 + $0x130] sm:$0xff] %vm882, %v4392
            %4453 = vst.msk [vmem:[#allocation6 + $0x138] sm:$0xff] %vm882, %v4393
            %4454 = vst.msk [vmem:[#allocation6 + $0x140] sm:$0xff] %vm882, %v4394
            %4455 = vst.msk [vmem:[#allocation6 + $0x148] sm:$0xff] %vm882, %v4395
            %4456 = vst.msk [vmem:[#allocation6 + $0x150] sm:$0xff] %vm882, %v4396
            %4457 = vst.msk [vmem:[#allocation6 + $0x158] sm:$0xff] %vm882, %v4397
            %4458 = vst.msk [vmem:[#allocation6 + $0x160] sm:$0xff] %vm882, %v4398
            %4459 = vst.msk [vmem:[#allocation6 + $0x168] sm:$0xff] %vm882, %v4399
            %4460 = vst.msk [vmem:[#allocation6 + $0x170] sm:$0xff] %vm882, %v4400
            %4461 = vst.msk [vmem:[#allocation6 + $0x178] sm:$0xff] %vm882, %v4401
            %4462 = vst.msk [vmem:[#allocation6 + $0x180] sm:$0xff] %vm882, %v4402
            %4463 = vst.msk [vmem:[#allocation6 + $0x188] sm:$0xff] %vm882, %v4403
            %4464 = vst.msk [vmem:[#allocation6 + $0x190] sm:$0xff] %vm882, %v4404
            %4465 = vst.msk [vmem:[#allocation6 + $0x198] sm:$0xff] %vm882, %v4405
            %4466 = vst.msk [vmem:[#allocation6 + $0x1a0] sm:$0xff] %vm882, %v4406
            %4467 = vst.msk [vmem:[#allocation6 + $0x1a8] sm:$0xff] %vm882, %v4407
            %4468 = vst.msk [vmem:[#allocation6 + $0x1b0] sm:$0xff] %vm882, %v4408
            %4469 = vst.msk [vmem:[#allocation6 + $0x1b8] sm:$0xff] %vm882, %v4409
            %4470 = vst.msk [vmem:[#allocation6 + $0x1c0] sm:$0xff] %vm882, %v4410
            %4471 = vst.msk [vmem:[#allocation6 + $0x1c8] sm:$0xff] %vm882, %v4411
            %4472 = vst.msk [vmem:[#allocation6 + $0x1d0] sm:$0xff] %vm882, %v4412
            %4473 = vst.msk [vmem:[#allocation6 + $0x1d8] sm:$0xff] %vm882, %v4413
          $region90: #{_tudui_forward.1} parent=82 // loop_footer
            %s3813 = sadd.s32 1, %s3809
          $region91: #{_tudui_forward.1} parent=82 // loop_footer_branch
            %3808 = sbr.rel target = $region87
          $region92: #{_tudui_forward.1} parent=82 // loop_exit
            _
        $region83: #{_tudui_forward.1} parent=63 // loop_footer
          %s3807 = sadd.s32 1, %s3803
        $region84: #{_tudui_forward.1} parent=63 // loop_footer_branch
          %3802 = sbr.rel target = $region80
        $region85: #{_tudui_forward.1} parent=63 // loop_exit
          _
        %v4474 = vld [vmem:[#allocation6 + $0x30] sm:$0xff]
        %v4475 = vld [vmem:[#allocation6 + $0x38] sm:$0xff]
        %v4476 = vld [vmem:[#allocation6 + $0x40] sm:$0xff]
        %4477 = vst.msk [vmem:[#allocation7] sm:$0xff] %vm882, %v4474
        %4478 = vst.msk [vmem:[#allocation7 + $0x8] sm:$0xff] %vm882, %v4475
        %4479 = vst.msk [vmem:[#allocation7 + $0x10] sm:$0xff] %vm882, %v4476
        %v4480 = vld [vmem:[#allocation6 + $0x48] sm:$0xff]
        %v4481 = vld [vmem:[#allocation6 + $0x50] sm:$0xff]
        %v4482 = vld [vmem:[#allocation6 + $0x58] sm:$0xff]
        %s4483 = scalar_lea.vmem [#allocation7], 24
        %4484 = vst.msk [vmem:[%s4483] sm:$0xff] %vm882, %v4480
        %4485 = vst.msk [vmem:[%s4483 + $0x8] sm:$0xff] %vm882, %v4481
        %4486 = vst.msk [vmem:[%s4483 + $0x10] sm:$0xff] %vm882, %v4482
        %v4487 = vld [vmem:[#allocation6 + $0x60] sm:$0xff]
        %v4488 = vld [vmem:[#allocation6 + $0x68] sm:$0xff]
        %v4489 = vld [vmem:[#allocation6 + $0x70] sm:$0xff]
        %s4490 = scalar_lea.vmem [#allocation7], 48
        %4491 = vst.msk [vmem:[%s4490] sm:$0xff] %vm882, %v4487
        %4492 = vst.msk [vmem:[%s4490 + $0x8] sm:$0xff] %vm882, %v4488
        %4493 = vst.msk [vmem:[%s4490 + $0x10] sm:$0xff] %vm882, %v4489
        %v4494 = vld [vmem:[#allocation6 + $0x78] sm:$0xff]
        %v4495 = vld [vmem:[#allocation6 + $0x80] sm:$0xff]
        %v4496 = vld [vmem:[#allocation6 + $0x88] sm:$0xff]
        %s4497 = scalar_lea.vmem [#allocation7], 72
        %4498 = vst.msk [vmem:[%s4497] sm:$0xff] %vm882, %v4494
        %4499 = vst.msk [vmem:[%s4497 + $0x8] sm:$0xff] %vm882, %v4495
        %4500 = vst.msk [vmem:[%s4497 + $0x10] sm:$0xff] %vm882, %v4496
        %v4501 = vld [vmem:[#allocation6 + $0x90] sm:$0xff]
        %v4502 = vld [vmem:[#allocation6 + $0x98] sm:$0xff]
        %v4503 = vld [vmem:[#allocation6 + $0xa0] sm:$0xff]
        %s4504 = scalar_lea.vmem [#allocation7], 96
        %4505 = vst.msk [vmem:[%s4504] sm:$0xff] %vm882, %v4501
        %4506 = vst.msk [vmem:[%s4504 + $0x8] sm:$0xff] %vm882, %v4502
        %4507 = vst.msk [vmem:[%s4504 + $0x10] sm:$0xff] %vm882, %v4503
        %v4508 = vld [vmem:[#allocation6 + $0xa8] sm:$0xff]
        %v4509 = vld [vmem:[#allocation6 + $0xb0] sm:$0xff]
        %v4510 = vld [vmem:[#allocation6 + $0xb8] sm:$0xff]
        %s4511 = scalar_lea.vmem [#allocation7], 120
        %4512 = vst.msk [vmem:[%s4511] sm:$0xff] %vm882, %v4508
        %4513 = vst.msk [vmem:[%s4511 + $0x8] sm:$0xff] %vm882, %v4509
        %4514 = vst.msk [vmem:[%s4511 + $0x10] sm:$0xff] %vm882, %v4510
        %v4515 = vld [vmem:[#allocation6 + $0xc0] sm:$0xff]
        %v4516 = vld [vmem:[#allocation6 + $0xc8] sm:$0xff]
        %v4517 = vld [vmem:[#allocation6 + $0xd0] sm:$0xff]
        %s4518 = scalar_lea.vmem [#allocation7], 144
        %4519 = vst.msk [vmem:[%s4518] sm:$0xff] %vm882, %v4515
        %4520 = vst.msk [vmem:[%s4518 + $0x8] sm:$0xff] %vm882, %v4516
        %4521 = vst.msk [vmem:[%s4518 + $0x10] sm:$0xff] %vm882, %v4517
        %v4522 = vld [vmem:[#allocation6 + $0xd8] sm:$0xff]
        %v4523 = vld [vmem:[#allocation6 + $0xe0] sm:$0xff]
        %v4524 = vld [vmem:[#allocation6 + $0xe8] sm:$0xff]
        %s4525 = scalar_lea.vmem [#allocation7], 168
        %4526 = vst.msk [vmem:[%s4525] sm:$0xff] %vm882, %v4522
        %4527 = vst.msk [vmem:[%s4525 + $0x8] sm:$0xff] %vm882, %v4523
        %4528 = vst.msk [vmem:[%s4525 + $0x10] sm:$0xff] %vm882, %v4524
        %v4529 = vld [vmem:[#allocation6 + $0xf0] sm:$0xff]
        %v4530 = vld [vmem:[#allocation6 + $0xf8] sm:$0xff]
        %v4531 = vld [vmem:[#allocation6 + $0x100] sm:$0xff]
        %s4532 = scalar_lea.vmem [#allocation7], 192
        %4533 = vst.msk [vmem:[%s4532] sm:$0xff] %vm882, %v4529
        %4534 = vst.msk [vmem:[%s4532 + $0x8] sm:$0xff] %vm882, %v4530
        %4535 = vst.msk [vmem:[%s4532 + $0x10] sm:$0xff] %vm882, %v4531
        %v4536 = vld [vmem:[#allocation6 + $0x108] sm:$0xff]
        %v4537 = vld [vmem:[#allocation6 + $0x110] sm:$0xff]
        %v4538 = vld [vmem:[#allocation6 + $0x118] sm:$0xff]
        %s4539 = scalar_lea.vmem [#allocation7], 216
        %4540 = vst.msk [vmem:[%s4539] sm:$0xff] %vm882, %v4536
        %4541 = vst.msk [vmem:[%s4539 + $0x8] sm:$0xff] %vm882, %v4537
        %4542 = vst.msk [vmem:[%s4539 + $0x10] sm:$0xff] %vm882, %v4538
        %v4543 = vld [vmem:[#allocation6 + $0x120] sm:$0xff]
        %v4544 = vld [vmem:[#allocation6 + $0x128] sm:$0xff]
        %v4545 = vld [vmem:[#allocation6 + $0x130] sm:$0xff]
        %s4546 = scalar_lea.vmem [#allocation7], 240
        %4547 = vst.msk [vmem:[%s4546] sm:$0xff] %vm882, %v4543
        %4548 = vst.msk [vmem:[%s4546 + $0x8] sm:$0xff] %vm882, %v4544
        %4549 = vst.msk [vmem:[%s4546 + $0x10] sm:$0xff] %vm882, %v4545
        %v4550 = vld [vmem:[#allocation6 + $0x138] sm:$0xff]
        %v4551 = vld [vmem:[#allocation6 + $0x140] sm:$0xff]
        %v4552 = vld [vmem:[#allocation6 + $0x148] sm:$0xff]
        %s4553 = scalar_lea.vmem [#allocation7], 264
        %4554 = vst.msk [vmem:[%s4553] sm:$0xff] %vm882, %v4550
        %4555 = vst.msk [vmem:[%s4553 + $0x8] sm:$0xff] %vm882, %v4551
        %4556 = vst.msk [vmem:[%s4553 + $0x10] sm:$0xff] %vm882, %v4552
        %v4557 = vld [vmem:[#allocation6 + $0x150] sm:$0xff]
        %v4558 = vld [vmem:[#allocation6 + $0x158] sm:$0xff]
        %v4559 = vld [vmem:[#allocation6 + $0x160] sm:$0xff]
        %s4560 = scalar_lea.vmem [#allocation7], 288
        %4561 = vst.msk [vmem:[%s4560] sm:$0xff] %vm882, %v4557
        %4562 = vst.msk [vmem:[%s4560 + $0x8] sm:$0xff] %vm882, %v4558
        %4563 = vst.msk [vmem:[%s4560 + $0x10] sm:$0xff] %vm882, %v4559
        %v4564 = vld [vmem:[#allocation6 + $0x168] sm:$0xff]
        %v4565 = vld [vmem:[#allocation6 + $0x170] sm:$0xff]
        %v4566 = vld [vmem:[#allocation6 + $0x178] sm:$0xff]
        %s4567 = scalar_lea.vmem [#allocation7], 312
        %4568 = vst.msk [vmem:[%s4567] sm:$0xff] %vm882, %v4564
        %4569 = vst.msk [vmem:[%s4567 + $0x8] sm:$0xff] %vm882, %v4565
        %4570 = vst.msk [vmem:[%s4567 + $0x10] sm:$0xff] %vm882, %v4566
        %v4571 = vld [vmem:[#allocation6 + $0x180] sm:$0xff]
        %v4572 = vld [vmem:[#allocation6 + $0x188] sm:$0xff]
        %v4573 = vld [vmem:[#allocation6 + $0x190] sm:$0xff]
        %s4574 = scalar_lea.vmem [#allocation7], 336
        %4575 = vst.msk [vmem:[%s4574] sm:$0xff] %vm882, %v4571
        %4576 = vst.msk [vmem:[%s4574 + $0x8] sm:$0xff] %vm882, %v4572
        %4577 = vst.msk [vmem:[%s4574 + $0x10] sm:$0xff] %vm882, %v4573
        %v4578 = vld [vmem:[#allocation6 + $0x198] sm:$0xff]
        %v4579 = vld [vmem:[#allocation6 + $0x1a0] sm:$0xff]
        %v4580 = vld [vmem:[#allocation6 + $0x1a8] sm:$0xff]
        %s4581 = scalar_lea.vmem [#allocation7], 360
        %4582 = vst.msk [vmem:[%s4581] sm:$0xff] %vm882, %v4578
        %4583 = vst.msk [vmem:[%s4581 + $0x8] sm:$0xff] %vm882, %v4579
        %4584 = vst.msk [vmem:[%s4581 + $0x10] sm:$0xff] %vm882, %v4580
        %s4585 = scalar_lea.vmem [#allocation7], 2
        %v4586 = vld [vmem:[%s4585] ss:$2 sm:$0xff]
        %s4587 = scalar_lea.vmem [#allocation7], 50
        %v4588 = vld [vmem:[%s4587] ss:$2 sm:$0xff]
        %s4589 = scalar_lea.vmem [#allocation7], 98
        %v4590 = vld [vmem:[%s4589] ss:$2 sm:$0xff]
        %s4591 = scalar_lea.vmem [#allocation7], 146
        %v4592 = vld [vmem:[%s4591] ss:$2 sm:$0xff]
        %s4593 = scalar_lea.vmem [#allocation7], 194
        %v4594 = vld [vmem:[%s4593] ss:$2 sm:$0xff]
        %s4595 = scalar_lea.vmem [#allocation7], 242
        %v4596 = vld [vmem:[%s4595] ss:$2 sm:$0xff]
        %s4597 = scalar_lea.vmem [#allocation7], 290
        %v4598 = vld [vmem:[%s4597] ss:$2 sm:$0xff]
        %s4599 = scalar_lea.vmem [#allocation7], 338
        %v4600 = vld [vmem:[%s4599] ss:$2 sm:$0xff]
        %s4601 = scalar_lea.vmem [#allocation7], 3
        %v4602 = vld [vmem:[%s4601] ss:$2 sm:$0xff]
        %s4603 = scalar_lea.vmem [#allocation7], 51
        %v4604 = vld [vmem:[%s4603] ss:$2 sm:$0xff]
        %s4605 = scalar_lea.vmem [#allocation7], 99
        %v4606 = vld [vmem:[%s4605] ss:$2 sm:$0xff]
        %s4607 = scalar_lea.vmem [#allocation7], 147
        %v4608 = vld [vmem:[%s4607] ss:$2 sm:$0xff]
        %s4609 = scalar_lea.vmem [#allocation7], 195
        %v4610 = vld [vmem:[%s4609] ss:$2 sm:$0xff]
        %s4611 = scalar_lea.vmem [#allocation7], 243
        %v4612 = vld [vmem:[%s4611] ss:$2 sm:$0xff]
        %s4613 = scalar_lea.vmem [#allocation7], 291
        %v4614 = vld [vmem:[%s4613] ss:$2 sm:$0xff]
        %s4615 = scalar_lea.vmem [#allocation7], 339
        %v4616 = vld [vmem:[%s4615] ss:$2 sm:$0xff]
        %s4617 = scalar_lea.vmem %s4483, 2 [#allocation7]
        %v4618 = vld [vmem:[%s4617] ss:$2 sm:$0xff]
        %s4619 = scalar_lea.vmem %s4483, 50 [#allocation7]
        %v4620 = vld [vmem:[%s4619] ss:$2 sm:$0xff]
        %s4621 = scalar_lea.vmem %s4483, 98 [#allocation7]
        %v4622 = vld [vmem:[%s4621] ss:$2 sm:$0xff]
        %s4623 = scalar_lea.vmem %s4483, 146 [#allocation7]
        %v4624 = vld [vmem:[%s4623] ss:$2 sm:$0xff]
        %s4625 = scalar_lea.vmem %s4483, 194 [#allocation7]
        %v4626 = vld [vmem:[%s4625] ss:$2 sm:$0xff]
        %s4627 = scalar_lea.vmem %s4483, 242 [#allocation7]
        %v4628 = vld [vmem:[%s4627] ss:$2 sm:$0xff]
        %s4629 = scalar_lea.vmem %s4483, 290 [#allocation7]
        %v4630 = vld [vmem:[%s4629] ss:$2 sm:$0xff]
        %s4631 = scalar_lea.vmem %s4483, 338 [#allocation7]
        %v4632 = vld [vmem:[%s4631] ss:$2 sm:$0xff]
        %s4633 = scalar_lea.vmem %s4483, 3 [#allocation7]
        %v4634 = vld [vmem:[%s4633] ss:$2 sm:$0xff]
        %s4635 = scalar_lea.vmem %s4483, 51 [#allocation7]
        %v4636 = vld [vmem:[%s4635] ss:$2 sm:$0xff]
        %s4637 = scalar_lea.vmem %s4483, 99 [#allocation7]
        %v4638 = vld [vmem:[%s4637] ss:$2 sm:$0xff]
        %s4639 = scalar_lea.vmem %s4483, 147 [#allocation7]
        %v4640 = vld [vmem:[%s4639] ss:$2 sm:$0xff]
        %s4641 = scalar_lea.vmem %s4483, 195 [#allocation7]
        %v4642 = vld [vmem:[%s4641] ss:$2 sm:$0xff]
        %s4643 = scalar_lea.vmem %s4483, 243 [#allocation7]
        %v4644 = vld [vmem:[%s4643] ss:$2 sm:$0xff]
        %s4645 = scalar_lea.vmem %s4483, 291 [#allocation7]
        %v4646 = vld [vmem:[%s4645] ss:$2 sm:$0xff]
        %s4647 = scalar_lea.vmem %s4483, 339 [#allocation7]
        %v4648 = vld [vmem:[%s4647] ss:$2 sm:$0xff]
        %v4649 = vmax.f32 %v4586, %v4602
        %v4650 = vmax.f32 %v4588, %v4604
        %v4651 = vmax.f32 %v4590, %v4606
        %v4652 = vmax.f32 %v4592, %v4608
        %v4653 = vmax.f32 %v4594, %v4610
        %v4654 = vmax.f32 %v4596, %v4612
        %v4655 = vmax.f32 %v4598, %v4614
        %v4656 = vmax.f32 %v4600, %v4616
        %v4657 = vmax.f32 %v4618, %v4634
        %v4658 = vmax.f32 %v4620, %v4636
        %v4659 = vmax.f32 %v4622, %v4638
        %v4660 = vmax.f32 %v4624, %v4640
        %v4661 = vmax.f32 %v4626, %v4642
        %v4662 = vmax.f32 %v4628, %v4644
        %v4663 = vmax.f32 %v4630, %v4646
        %v4664 = vmax.f32 %v4632, %v4648
        %v4665 = vmax.f32 %v4649, %v4657
        %v4666 = vmax.f32 %v4650, %v4658
        %v4667 = vmax.f32 %v4651, %v4659
        %v4668 = vmax.f32 %v4652, %v4660
        %v4669 = vmax.f32 %v4653, %v4661
        %v4670 = vmax.f32 %v4654, %v4662
        %v4671 = vmax.f32 %v4655, %v4663
        %v4672 = vmax.f32 %v4656, %v4664
        %4673 = vst.msk [vmem:[#allocation8] sm:$0xff] %vm882, 0.0
        %4674 = vst.msk [vmem:[#allocation8 + $0x8] sm:$0xff] %vm882, 0.0
        %4675 = vst.msk [vmem:[#allocation8 + $0x10] sm:$0xff] %vm882, 0.0
        %4676 = vst.msk [vmem:[#allocation8 + $0x18] sm:$0xff] %vm882, 0.0
        %4677 = vst.msk [vmem:[#allocation8 + $0x20] sm:$0xff] %vm882, 0.0
        %4678 = vst.msk [vmem:[#allocation8 + $0x28] sm:$0xff] %vm882, 0.0
        %4679 = vst.msk [vmem:[#allocation8 + $0x30] sm:$0xff] %vm882, 0.0
        %4680 = vst.msk [vmem:[#allocation8 + $0x38] sm:$0xff] %vm882, 0.0
        %4681 = vst.msk [vmem:[#allocation8 + $0x40] sm:$0xff] %vm882, 0.0
        %4682 = vst.msk [vmem:[#allocation8 + $0x48] sm:$0xff] %vm882, 0.0
        %4683 = vst.msk [vmem:[#allocation8 + $0x50] sm:$0xff] %vm882, 0.0
        %4684 = vst.msk [vmem:[#allocation8 + $0x58] sm:$0xff] %vm882, 0.0
        %4685 = vst.msk [vmem:[#allocation8 + $0x60] sm:$0xff] %vm882, 0.0
        %4686 = vst.msk [vmem:[#allocation8 + $0x68] sm:$0xff] %vm882, 0.0
        %4687 = vst.msk [vmem:[#allocation8 + $0x70] sm:$0xff] %vm882, 0.0
        %4688 = vst.msk [vmem:[#allocation8 + $0x78] sm:$0xff] %vm882, 0.0
        %4689 = vst.msk [vmem:[#allocation8 + $0x80] sm:$0xff] %vm882, 0.0
        %4690 = vst.msk [vmem:[#allocation8 + $0x88] sm:$0xff] %vm882, 0.0
        %4691 = vst.msk [vmem:[#allocation8 + $0x90] sm:$0xff] %vm882, 0.0
        %4692 = vst.msk [vmem:[#allocation8 + $0x98] sm:$0xff] %vm882, 0.0
        %4693 = vst.msk [vmem:[#allocation8 + $0xa0] sm:$0xff] %vm882, 0.0
        %4694 = vst.msk [vmem:[#allocation8 + $0xa8] sm:$0xff] %vm882, 0.0
        %4695 = vst.msk [vmem:[#allocation8 + $0xb0] sm:$0xff] %vm882, 0.0
        %4696 = vst.msk [vmem:[#allocation8 + $0xb8] sm:$0xff] %vm882, 0.0
        %4697 = vst.msk [vmem:[#allocation8 + $0xc0] sm:$0xff] %vm882, 0.0
        %4698 = vst.msk [vmem:[#allocation8 + $0xc8] sm:$0xff] %vm882, 0.0
        %4699 = vst.msk [vmem:[#allocation8 + $0xd0] sm:$0xff] %vm882, 0.0
        %4700 = vst.msk [vmem:[#allocation8 + $0xd8] sm:$0xff] %vm882, 0.0
        %4701 = vst.msk [vmem:[#allocation8 + $0xe0] sm:$0xff] %vm882, 0.0
        %4702 = vst.msk [vmem:[#allocation8 + $0xe8] sm:$0xff] %vm882, 0.0
        %4703 = vst.msk [vmem:[#allocation8 + $0xf0] sm:$0xff] %vm882, 0.0
        %4704 = vst.msk [vmem:[#allocation8 + $0xf8] sm:$0xff] %vm882, 0.0
        %4705 = vst.msk [vmem:[#allocation8 + $0x100] sm:$0xf] %vm3701, 0.0
        %4706 = vst.msk [vmem:[#allocation8 + $0x44] sm:$0xff] %vm882, %v4665
        %4707 = vst.msk [vmem:[#allocation8 + $0x54] sm:$0xff] %vm882, %v4666
        %4708 = vst.msk [vmem:[#allocation8 + $0x64] sm:$0xff] %vm882, %v4667
        %4709 = vst.msk [vmem:[#allocation8 + $0x74] sm:$0xff] %vm882, %v4668
        %4710 = vst.msk [vmem:[#allocation8 + $0x84] sm:$0xff] %vm882, %v4669
        %4711 = vst.msk [vmem:[#allocation8 + $0x94] sm:$0xff] %vm882, %v4670
        %4712 = vst.msk [vmem:[#allocation8 + $0xa4] sm:$0xff] %vm882, %v4671
        %4713 = vst.msk [vmem:[#allocation8 + $0xb4] sm:$0xff] %vm882, %v4672
        %v4714 = vld [vmem:[%s6] sm:$0x1]
        %v4716 = vlaneseq
        %v4717 = vshrl.u32 %v4716, 7
        %v4718 = vsub.s32 0, %v4717
        %v4719 = vrot.slane %v4714, %v4718
        %vm4721 = vcmask 523264
        %4722 = vst.msk [vmem:[#allocation9] sm:$0xff] %vm4721, %v4719
        %4723 = vst.msk [vmem:[#allocation9 + $0x8] sm:$0xff] %vm4721, %v4719
        %4724 = vst.msk [vmem:[#allocation9 + $0x10] sm:$0xff] %vm4721, %v4719
        %4725 = vst.msk [vmem:[#allocation9 + $0x18] sm:$0xff] %vm4721, %v4719
        %4726 = vst.msk [vmem:[#allocation9 + $0x20] sm:$0xff] %vm4721, %v4719
        %4727 = vst.msk [vmem:[#allocation9 + $0x28] sm:$0xff] %vm4721, %v4719
        %4728 = vst.msk [vmem:[#allocation9 + $0x30] sm:$0xff] %vm4721, %v4719
        %4729 = vst.msk [vmem:[#allocation9 + $0x38] sm:$0xff] %vm4721, %v4719
        %4730 = vst.msk [vmem:[#allocation9 + $0x40] sm:$0xff] %vm4721, %v4719
        %4731 = vst.msk [vmem:[#allocation9 + $0x48] sm:$0xff] %vm4721, %v4719
        %4732 = vst.msk [vmem:[#allocation9 + $0x50] sm:$0xff] %vm4721, %v4719
        %4733 = vst.msk [vmem:[#allocation9 + $0x58] sm:$0xff] %vm4721, %v4719
        %4734 = vst.msk [vmem:[#allocation9 + $0x60] sm:$0xff] %vm4721, %v4719
        %4735 = vst.msk [vmem:[#allocation9 + $0x68] sm:$0xff] %vm4721, %v4719
        %4736 = vst.msk [vmem:[#allocation9 + $0x70] sm:$0xff] %vm4721, %v4719
        %4737 = vst.msk [vmem:[#allocation9 + $0x78] sm:$0xff] %vm4721, %v4719
        %4738 = vst.msk [vmem:[#allocation9 + $0x80] sm:$0xff] %vm4721, %v4719
        %4739 = vst.msk [vmem:[#allocation9 + $0x88] sm:$0xff] %vm4721, %v4719
        %4740 = vst.msk [vmem:[#allocation9 + $0x90] sm:$0xff] %vm4721, %v4719
        %4741 = vst.msk [vmem:[#allocation9 + $0x98] sm:$0xff] %vm4721, %v4719
        %4742 = vst.msk [vmem:[#allocation9 + $0xa0] sm:$0xff] %vm4721, %v4719
        %4743 = vst.msk [vmem:[#allocation9 + $0xa8] sm:$0xff] %vm4721, %v4719
        %4744 = vst.msk [vmem:[#allocation9 + $0xb0] sm:$0xff] %vm4721, %v4719
        %4745 = vst.msk [vmem:[#allocation9 + $0xb8] sm:$0xff] %vm4721, %v4719
        loop: start=0, step=1, limit=5
        $region93: #{_tudui_forward.1} parent=63 // loop_pre_header
          _
        $region94: #{_tudui_forward.1} parent=63 // loop_header
          %s4747 = sphi 0, %s4751
          %p4748 = scmp.ge.s32.totalorder %s4747, 5
        $region95: #{_tudui_forward.1} parent=63 // loop_header_branch
          %4750 = sbr.rel (%p4748) target = $region99
        $region96: #{_tudui_forward.1} parent=63 // loop_body
          loop: start=0, step=1, limit=5
          $region100: #{_tudui_forward.1} parent=96 // loop_pre_header
            _
          $region101: #{_tudui_forward.1} parent=96 // loop_header
            %s4753 = sphi 0, %s4757
            %p4754 = scmp.ge.s32.totalorder %s4753, 5
          $region102: #{_tudui_forward.1} parent=96 // loop_header_branch
            %4756 = sbr.rel (%p4754) target = $region106
          $region103: #{_tudui_forward.1} parent=96 // loop_body
            %s4758 = ssub.s32 %s4747, 2
            %s4759 = smul.u32 %s4758, 16
            %s4760 = sadd.s32 %s4759, 34
            %s4761 = ssub.s32 %s4753, 2
            %s4762 = sadd.s32 %s4760, %s4761
            %s4763 = scalar_lea.vmem [#allocation8], %s4762
            %v4764 = vld [vmem:[%s4763] sm:$0xff]
            %v4765 = vld [vmem:[%s4763 + $0x8] sm:$0xff]
            %v4766 = vld [vmem:[%s4763 + $0x10] sm:$0xff]
            %v4767 = vld [vmem:[%s4763 + $0x18] sm:$0xff]
            %v4768 = vld [vmem:[%s4763 + $0x20] sm:$0xff]
            %v4769 = vld [vmem:[%s4763 + $0x28] sm:$0xff]
            %v4770 = vld [vmem:[%s4763 + $0x30] sm:$0xff]
            %v4771 = vld [vmem:[%s4763 + $0x38] sm:$0xff]
            %v4772 = vld [vmem:[%s4763 + $0x40] sm:$0xff]
            %v4773 = vld [vmem:[%s4763 + $0x48] sm:$0xff]
            %v4774 = vld [vmem:[%s4763 + $0x50] sm:$0xff]
            %v4775 = vld [vmem:[%s4763 + $0x58] sm:$0xff]
            %v4776 = vld [vmem:[%s4763 + $0x60] sm:$0xff]
            %v4777 = vld [vmem:[%s4763 + $0x68] sm:$0xff]
            %v4778 = vld [vmem:[%s4763 + $0x70] sm:$0xff]
            %v4779 = vld [vmem:[%s4763 + $0x78] sm:$0xff]
            %v4780 = vld [vmem:[%s4763 + $0x80] sm:$0xff]
            %v4781 = vld [vmem:[%s4763 + $0x88] sm:$0xff]
            %v4782 = vld [vmem:[%s4763 + $0x90] sm:$0xff]
            %v4783 = vld [vmem:[%s4763 + $0x98] sm:$0xff]
            %v4784 = vld [vmem:[%s4763 + $0xa0] sm:$0xff]
            %v4785 = vld [vmem:[%s4763 + $0xa8] sm:$0xff]
            %v4786 = vld [vmem:[%s4763 + $0xb0] sm:$0xff]
            %v4787 = vld [vmem:[%s4763 + $0xb8] sm:$0xff]
            %v4788 = vpack.c.bf16 %v4765, %v4764
            %v4789 = vpack.c.bf16 %v4767, %v4766
            %v4790 = vpack.c.bf16 %v4769, %v4768
            %v4791 = vpack.c.bf16 %v4771, %v4770
            %v4792 = vpack.c.bf16 %v4773, %v4772
            %v4793 = vpack.c.bf16 %v4775, %v4774
            %v4794 = vpack.c.bf16 %v4777, %v4776
            %v4795 = vpack.c.bf16 %v4779, %v4778
            %v4796 = vpack.c.bf16 %v4781, %v4780
            %v4797 = vpack.c.bf16 %v4783, %v4782
            %v4798 = vpack.c.bf16 %v4785, %v4784
            %v4799 = vpack.c.bf16 %v4787, %v4786
            %v4800 = vld [vmem:[#allocation9] sm:$0xff]
            %v4801 = vld [vmem:[#allocation9 + $0x8] sm:$0xff]
            %v4802 = vld [vmem:[#allocation9 + $0x10] sm:$0xff]
            %v4803 = vld [vmem:[#allocation9 + $0x18] sm:$0xff]
            %v4804 = vld [vmem:[#allocation9 + $0x20] sm:$0xff]
            %v4805 = vld [vmem:[#allocation9 + $0x28] sm:$0xff]
            %v4806 = vld [vmem:[#allocation9 + $0x30] sm:$0xff]
            %v4807 = vld [vmem:[#allocation9 + $0x38] sm:$0xff]
            %v4808 = vld [vmem:[#allocation9 + $0x40] sm:$0xff]
            %v4809 = vld [vmem:[#allocation9 + $0x48] sm:$0xff]
            %v4810 = vld [vmem:[#allocation9 + $0x50] sm:$0xff]
            %v4811 = vld [vmem:[#allocation9 + $0x58] sm:$0xff]
            %v4812 = vld [vmem:[#allocation9 + $0x60] sm:$0xff]
            %v4813 = vld [vmem:[#allocation9 + $0x68] sm:$0xff]
            %v4814 = vld [vmem:[#allocation9 + $0x70] sm:$0xff]
            %v4815 = vld [vmem:[#allocation9 + $0x78] sm:$0xff]
            %v4816 = vld [vmem:[#allocation9 + $0x80] sm:$0xff]
            %v4817 = vld [vmem:[#allocation9 + $0x88] sm:$0xff]
            %v4818 = vld [vmem:[#allocation9 + $0x90] sm:$0xff]
            %v4819 = vld [vmem:[#allocation9 + $0x98] sm:$0xff]
            %v4820 = vld [vmem:[#allocation9 + $0xa0] sm:$0xff]
            %v4821 = vld [vmem:[#allocation9 + $0xa8] sm:$0xff]
            %v4822 = vld [vmem:[#allocation9 + $0xb0] sm:$0xff]
            %v4823 = vld [vmem:[#allocation9 + $0xb8] sm:$0xff]
            %s4824 = smul.u32 %s4747, 5
            %s4825 = sadd.s32 %s4824, %s4753
            %s4826 = smul.u32 %s4825, 4
            %s4827 = smul.addr %s4826, 4
            %s4828 = scalar_lea.vmem %s5, %s4827
            %v4829 = vld [vmem:[%s4828] sm:$0xf]
            %v4830 = vld [vmem:[%s4828 + $0x4] sm:$0xf]
            %v4831 = vld [vmem:[%s4828 + $0x8] sm:$0xf]
            %v4832 = vld [vmem:[%s4828 + $0xc] sm:$0xf]
            %v4837 = vunpack.c.l.b16 %v4829
            %v4838 = vunpack.c.l.b16 %v4830
            %v4839 = vunpack.c.l.b16 %v4831
            %v4840 = vunpack.c.l.b16 %v4832
            %v4841 = vpack.c.b16 %v4838, %v4837
            %v4842 = vpack.c.b16 %v4840, %v4839
            %v4846 = vsel %vm882, %v4788, 0
            %v4849 = vsel %vm882, %v4789, 0
            %v4852 = vsel %vm882, %v4790, 0
            %v4855 = vsel %vm882, %v4791, 0
            %v4858 = vsel %vm882, %v4792, 0
            %v4861 = vsel %vm882, %v4793, 0
            %v4864 = vsel %vm882, %v4794, 0
            %v4867 = vsel %vm882, %v4795, 0
            %v4870 = vsel %vm882, %v4796, 0
            %v4873 = vsel %vm882, %v4797, 0
            %v4876 = vsel %vm882, %v4798, 0
            %v4879 = vsel %vm882, %v4799, 0
            %4881 = vmatprep.subr.bf16.mxu0 0
            %4882 = vmatpush1.bf16.msra.mxu0 %v4841
            %4883 = vmatprep.subr.bf16.mxu0 0
            %4884 = vmatpush1.bf16.msra.mxu0 %v4842
            %4885 = vmatprep.subr.bf16.mxu0 0
            %4886 = vmatpush1.bf16.msra.mxu0 0
            %4887 = vmatprep.subr.bf16.mxu0 0
            %4888 = vmatpush1.bf16.msra.mxu0 0
            %4889 = vmatprep.subr.bf16.mxu0 0
            %4890 = vmatpush1.bf16.msra.mxu0 0
            %4891 = vmatprep.subr.bf16.mxu0 0
            %4892 = vmatpush1.bf16.msra.mxu0 0
            %4893 = vmatprep.subr.bf16.mxu0 0
            %4894 = vmatpush1.bf16.msra.mxu0 0
            %4895 = vmatprep.subr.bf16.mxu0 0
            %4896 = vmatpush1.bf16.msra.mxu0 0
            %4897 = vmatprep.subr.bf16.mxu0 0
            %4898 = vmatpush1.bf16.msra.mxu0 0
            %4899 = vmatprep.subr.bf16.mxu0 0
            %4900 = vmatpush1.bf16.msra.mxu0 0
            %4901 = vmatprep.subr.bf16.mxu0 0
            %4902 = vmatpush1.bf16.msra.mxu0 0
            %4903 = vmatprep.subr.bf16.mxu0 0
            %4904 = vmatpush1.bf16.msra.mxu0 0
            %4905 = vmatprep.subr.bf16.mxu0 0
            %4906 = vmatpush1.bf16.msra.mxu0 0
            %4907 = vmatprep.subr.bf16.mxu0 0
            %4908 = vmatpush1.bf16.msra.mxu0 0
            %4909 = vmatprep.subr.bf16.mxu0 0
            %4910 = vmatpush1.bf16.msra.mxu0 0
            %4911 = vmatprep.subr.bf16.mxu0 0
            %4912 = vmatpush1.bf16.msra.mxu0 0
            %4913 = vmatprep.mubr.bf16.mxu0 0
            %4914 = vmatmul.mubr.bf16.gmra.mrb[0].mxu0 %v4846
            %v4915 = vpop.f32.mrb[0].mxu0
            %v4916 = vadd.f32 0.0, %v4915
            %v4917 = vpop.f32.mrb[0].mxu0
            %v4918 = vpop.f32.mrb[0].mxu0
            %v4919 = vadd.f32 0.0, %v4918
            %v4920 = vpop.f32.mrb[0].mxu0
            %4921 = vmatprep.mubr.bf16.mxu0 0
            %4922 = vmatmul.mubr.bf16.gmra.mrb[0].mxu0 %v4849
            %v4923 = vpop.f32.mrb[0].mxu0
            %v4924 = vadd.f32 0.0, %v4923
            %v4925 = vpop.f32.mrb[0].mxu0
            %v4926 = vpop.f32.mrb[0].mxu0
            %v4927 = vadd.f32 0.0, %v4926
            %v4928 = vpop.f32.mrb[0].mxu0
            %4929 = vmatprep.mubr.bf16.mxu0 0
            %4930 = vmatmul.mubr.bf16.gmra.mrb[0].mxu0 %v4852
            %v4931 = vpop.f32.mrb[0].mxu0
            %v4932 = vadd.f32 0.0, %v4931
            %v4933 = vpop.f32.mrb[0].mxu0
            %v4934 = vpop.f32.mrb[0].mxu0
            %v4935 = vadd.f32 0.0, %v4934
            %v4936 = vpop.f32.mrb[0].mxu0
            %4937 = vmatprep.mubr.bf16.mxu0 0
            %4938 = vmatmul.mubr.bf16.gmra.mrb[0].mxu0 %v4855
            %v4939 = vpop.f32.mrb[0].mxu0
            %v4940 = vadd.f32 0.0, %v4939
            %v4941 = vpop.f32.mrb[0].mxu0
            %v4942 = vpop.f32.mrb[0].mxu0
            %v4943 = vadd.f32 0.0, %v4942
            %v4944 = vpop.f32.mrb[0].mxu0
            %4945 = vmatprep.mubr.bf16.mxu0 0
            %4946 = vmatmul.mubr.bf16.gmra.mrb[0].mxu0 %v4858
            %v4947 = vpop.f32.mrb[0].mxu0
            %v4948 = vadd.f32 0.0, %v4947
            %v4949 = vpop.f32.mrb[0].mxu0
            %v4950 = vpop.f32.mrb[0].mxu0
            %v4951 = vadd.f32 0.0, %v4950
            %v4952 = vpop.f32.mrb[0].mxu0
            %4953 = vmatprep.mubr.bf16.mxu0 0
            %4954 = vmatmul.mubr.bf16.gmra.mrb[0].mxu0 %v4861
            %v4955 = vpop.f32.mrb[0].mxu0
            %v4956 = vadd.f32 0.0, %v4955
            %v4957 = vpop.f32.mrb[0].mxu0
            %v4958 = vpop.f32.mrb[0].mxu0
            %v4959 = vadd.f32 0.0, %v4958
            %v4960 = vpop.f32.mrb[0].mxu0
            %4961 = vmatprep.mubr.bf16.mxu0 0
            %4962 = vmatmul.mubr.bf16.gmra.mrb[0].mxu0 %v4864
            %v4963 = vpop.f32.mrb[0].mxu0
            %v4964 = vadd.f32 0.0, %v4963
            %v4965 = vpop.f32.mrb[0].mxu0
            %v4966 = vpop.f32.mrb[0].mxu0
            %v4967 = vadd.f32 0.0, %v4966
            %v4968 = vpop.f32.mrb[0].mxu0
            %4969 = vmatprep.mubr.bf16.mxu0 0
            %4970 = vmatmul.mubr.bf16.gmra.mrb[0].mxu0 %v4867
            %v4971 = vpop.f32.mrb[0].mxu0
            %v4972 = vadd.f32 0.0, %v4971
            %v4973 = vpop.f32.mrb[0].mxu0
            %v4974 = vpop.f32.mrb[0].mxu0
            %v4975 = vadd.f32 0.0, %v4974
            %v4976 = vpop.f32.mrb[0].mxu0
            %4977 = vmatprep.mubr.bf16.mxu0 0
            %4978 = vmatmul.mubr.bf16.gmra.mrb[0].mxu0 %v4870
            %v4979 = vpop.f32.mrb[0].mxu0
            %v4980 = vadd.f32 0.0, %v4979
            %v4981 = vpop.f32.mrb[0].mxu0
            %v4982 = vpop.f32.mrb[0].mxu0
            %v4983 = vadd.f32 0.0, %v4982
            %v4984 = vpop.f32.mrb[0].mxu0
            %4985 = vmatprep.mubr.bf16.mxu0 0
            %4986 = vmatmul.mubr.bf16.gmra.mrb[0].mxu0 %v4873
            %v4987 = vpop.f32.mrb[0].mxu0
            %v4988 = vadd.f32 0.0, %v4987
            %v4989 = vpop.f32.mrb[0].mxu0
            %v4990 = vpop.f32.mrb[0].mxu0
            %v4991 = vadd.f32 0.0, %v4990
            %v4992 = vpop.f32.mrb[0].mxu0
            %4993 = vmatprep.mubr.bf16.mxu0 0
            %4994 = vmatmul.mubr.bf16.gmra.mrb[0].mxu0 %v4876
            %v4995 = vpop.f32.mrb[0].mxu0
            %v4996 = vadd.f32 0.0, %v4995
            %v4997 = vpop.f32.mrb[0].mxu0
            %v4998 = vpop.f32.mrb[0].mxu0
            %v4999 = vadd.f32 0.0, %v4998
            %v5000 = vpop.f32.mrb[0].mxu0
            %5001 = vmatprep.mubr.bf16.mxu0 0
            %5002 = vmatmul.mubr.bf16.gmra.mrb[0].mxu0 %v4879
            %v5003 = vpop.f32.mrb[0].mxu0
            %v5004 = vadd.f32 0.0, %v5003
            %v5005 = vpop.f32.mrb[0].mxu0
            %v5006 = vpop.f32.mrb[0].mxu0
            %v5007 = vadd.f32 0.0, %v5006
            %v5008 = vpop.f32.mrb[0].mxu0
            %5009 = vdwg.mxu0
            %v5010 = vadd.f32 %v4800, %v4916
            %v5011 = vadd.f32 %v4801, %v4919
            %v5012 = vadd.f32 %v4802, %v4924
            %v5013 = vadd.f32 %v4803, %v4927
            %v5014 = vadd.f32 %v4804, %v4932
            %v5015 = vadd.f32 %v4805, %v4935
            %v5016 = vadd.f32 %v4806, %v4940
            %v5017 = vadd.f32 %v4807, %v4943
            %v5018 = vadd.f32 %v4808, %v4948
            %v5019 = vadd.f32 %v4809, %v4951
            %v5020 = vadd.f32 %v4810, %v4956
            %v5021 = vadd.f32 %v4811, %v4959
            %v5022 = vadd.f32 %v4812, %v4964
            %v5023 = vadd.f32 %v4813, %v4967
            %v5024 = vadd.f32 %v4814, %v4972
            %v5025 = vadd.f32 %v4815, %v4975
            %v5026 = vadd.f32 %v4816, %v4980
            %v5027 = vadd.f32 %v4817, %v4983
            %v5028 = vadd.f32 %v4818, %v4988
            %v5029 = vadd.f32 %v4819, %v4991
            %v5030 = vadd.f32 %v4820, %v4996
            %v5031 = vadd.f32 %v4821, %v4999
            %v5032 = vadd.f32 %v4822, %v5004
            %v5033 = vadd.f32 %v4823, %v5007
            %5034 = vst.msk [vmem:[#allocation9] sm:$0xff] %vm4721, %v5010
            %5035 = vst.msk [vmem:[#allocation9 + $0x8] sm:$0xff] %vm4721, %v5011
            %5036 = vst.msk [vmem:[#allocation9 + $0x10] sm:$0xff] %vm4721, %v5012
            %5037 = vst.msk [vmem:[#allocation9 + $0x18] sm:$0xff] %vm4721, %v5013
            %5038 = vst.msk [vmem:[#allocation9 + $0x20] sm:$0xff] %vm4721, %v5014
            %5039 = vst.msk [vmem:[#allocation9 + $0x28] sm:$0xff] %vm4721, %v5015
            %5040 = vst.msk [vmem:[#allocation9 + $0x30] sm:$0xff] %vm4721, %v5016
            %5041 = vst.msk [vmem:[#allocation9 + $0x38] sm:$0xff] %vm4721, %v5017
            %5042 = vst.msk [vmem:[#allocation9 + $0x40] sm:$0xff] %vm4721, %v5018
            %5043 = vst.msk [vmem:[#allocation9 + $0x48] sm:$0xff] %vm4721, %v5019
            %5044 = vst.msk [vmem:[#allocation9 + $0x50] sm:$0xff] %vm4721, %v5020
            %5045 = vst.msk [vmem:[#allocation9 + $0x58] sm:$0xff] %vm4721, %v5021
            %5046 = vst.msk [vmem:[#allocation9 + $0x60] sm:$0xff] %vm4721, %v5022
            %5047 = vst.msk [vmem:[#allocation9 + $0x68] sm:$0xff] %vm4721, %v5023
            %5048 = vst.msk [vmem:[#allocation9 + $0x70] sm:$0xff] %vm4721, %v5024
            %5049 = vst.msk [vmem:[#allocation9 + $0x78] sm:$0xff] %vm4721, %v5025
            %5050 = vst.msk [vmem:[#allocation9 + $0x80] sm:$0xff] %vm4721, %v5026
            %5051 = vst.msk [vmem:[#allocation9 + $0x88] sm:$0xff] %vm4721, %v5027
            %5052 = vst.msk [vmem:[#allocation9 + $0x90] sm:$0xff] %vm4721, %v5028
            %5053 = vst.msk [vmem:[#allocation9 + $0x98] sm:$0xff] %vm4721, %v5029
            %5054 = vst.msk [vmem:[#allocation9 + $0xa0] sm:$0xff] %vm4721, %v5030
            %5055 = vst.msk [vmem:[#allocation9 + $0xa8] sm:$0xff] %vm4721, %v5031
            %5056 = vst.msk [vmem:[#allocation9 + $0xb0] sm:$0xff] %vm4721, %v5032
            %5057 = vst.msk [vmem:[#allocation9 + $0xb8] sm:$0xff] %vm4721, %v5033
          $region104: #{_tudui_forward.1} parent=96 // loop_footer
            %s4757 = sadd.s32 1, %s4753
          $region105: #{_tudui_forward.1} parent=96 // loop_footer_branch
            %4752 = sbr.rel target = $region101
          $region106: #{_tudui_forward.1} parent=96 // loop_exit
            _
        $region97: #{_tudui_forward.1} parent=63 // loop_footer
          %s4751 = sadd.s32 1, %s4747
        $region98: #{_tudui_forward.1} parent=63 // loop_footer_branch
          %4746 = sbr.rel target = $region94
        $region99: #{_tudui_forward.1} parent=63 // loop_exit
          _
        %v5058 = vld [vmem:[#allocation9 + $0x20] sm:$0xff]
        %v5059 = vld [vmem:[#allocation9 + $0x28] sm:$0xff]
        %5060 = vst.msk [vmem:[#allocation10] sm:$0xff] %vm4721, %v5058
        %5061 = vst.msk [vmem:[#allocation10 + $0x8] sm:$0xff] %vm4721, %v5059
        %v5062 = vld [vmem:[#allocation9 + $0x30] sm:$0xff]
        %v5063 = vld [vmem:[#allocation9 + $0x38] sm:$0xff]
        %s5064 = scalar_lea.vmem [#allocation10], 16
        %5065 = vst.msk [vmem:[%s5064] sm:$0xff] %vm4721, %v5062
        %5066 = vst.msk [vmem:[%s5064 + $0x8] sm:$0xff] %vm4721, %v5063
        %v5067 = vld [vmem:[#allocation9 + $0x40] sm:$0xff]
        %v5068 = vld [vmem:[#allocation9 + $0x48] sm:$0xff]
        %s5069 = scalar_lea.vmem [#allocation10], 32
        %5070 = vst.msk [vmem:[%s5069] sm:$0xff] %vm4721, %v5067
        %5071 = vst.msk [vmem:[%s5069 + $0x8] sm:$0xff] %vm4721, %v5068
        %v5072 = vld [vmem:[#allocation9 + $0x50] sm:$0xff]
        %v5073 = vld [vmem:[#allocation9 + $0x58] sm:$0xff]
        %s5074 = scalar_lea.vmem [#allocation10], 48
        %5075 = vst.msk [vmem:[%s5074] sm:$0xff] %vm4721, %v5072
        %5076 = vst.msk [vmem:[%s5074 + $0x8] sm:$0xff] %vm4721, %v5073
        %v5077 = vld [vmem:[#allocation9 + $0x60] sm:$0xff]
        %v5078 = vld [vmem:[#allocation9 + $0x68] sm:$0xff]
        %s5079 = scalar_lea.vmem [#allocation10], 64
        %5080 = vst.msk [vmem:[%s5079] sm:$0xff] %vm4721, %v5077
        %5081 = vst.msk [vmem:[%s5079 + $0x8] sm:$0xff] %vm4721, %v5078
        %v5082 = vld [vmem:[#allocation9 + $0x70] sm:$0xff]
        %v5083 = vld [vmem:[#allocation9 + $0x78] sm:$0xff]
        %s5084 = scalar_lea.vmem [#allocation10], 80
        %5085 = vst.msk [vmem:[%s5084] sm:$0xff] %vm4721, %v5082
        %5086 = vst.msk [vmem:[%s5084 + $0x8] sm:$0xff] %vm4721, %v5083
        %v5087 = vld [vmem:[#allocation9 + $0x80] sm:$0xff]
        %v5088 = vld [vmem:[#allocation9 + $0x88] sm:$0xff]
        %s5089 = scalar_lea.vmem [#allocation10], 96
        %5090 = vst.msk [vmem:[%s5089] sm:$0xff] %vm4721, %v5087
        %5091 = vst.msk [vmem:[%s5089 + $0x8] sm:$0xff] %vm4721, %v5088
        %v5092 = vld [vmem:[#allocation9 + $0x90] sm:$0xff]
        %v5093 = vld [vmem:[#allocation9 + $0x98] sm:$0xff]
        %s5094 = scalar_lea.vmem [#allocation10], 112
        %5095 = vst.msk [vmem:[%s5094] sm:$0xff] %vm4721, %v5092
        %5096 = vst.msk [vmem:[%s5094 + $0x8] sm:$0xff] %vm4721, %v5093
        %s5097 = scalar_lea.vmem [#allocation10], 2
        %v5098 = vld [vmem:[%s5097] ss:$2 sm:$0xf]
        %s5099 = scalar_lea.vmem [#allocation10], 34
        %v5100 = vld [vmem:[%s5099] ss:$2 sm:$0xf]
        %s5101 = scalar_lea.vmem [#allocation10], 66
        %v5102 = vld [vmem:[%s5101] ss:$2 sm:$0xf]
        %s5103 = scalar_lea.vmem [#allocation10], 98
        %v5104 = vld [vmem:[%s5103] ss:$2 sm:$0xf]
        %s5105 = scalar_lea.vmem [#allocation10], 3
        %v5106 = vld [vmem:[%s5105] ss:$2 sm:$0xf]
        %s5107 = scalar_lea.vmem [#allocation10], 35
        %v5108 = vld [vmem:[%s5107] ss:$2 sm:$0xf]
        %s5109 = scalar_lea.vmem [#allocation10], 67
        %v5110 = vld [vmem:[%s5109] ss:$2 sm:$0xf]
        %s5111 = scalar_lea.vmem [#allocation10], 99
        %v5112 = vld [vmem:[%s5111] ss:$2 sm:$0xf]
        %s5113 = scalar_lea.vmem %s5064, 2 [#allocation10]
        %v5114 = vld [vmem:[%s5113] ss:$2 sm:$0xf]
        %s5115 = scalar_lea.vmem %s5064, 34 [#allocation10]
        %v5116 = vld [vmem:[%s5115] ss:$2 sm:$0xf]
        %s5117 = scalar_lea.vmem %s5064, 66 [#allocation10]
        %v5118 = vld [vmem:[%s5117] ss:$2 sm:$0xf]
        %s5119 = scalar_lea.vmem %s5064, 98 [#allocation10]
        %v5120 = vld [vmem:[%s5119] ss:$2 sm:$0xf]
        %s5121 = scalar_lea.vmem %s5064, 3 [#allocation10]
        %v5122 = vld [vmem:[%s5121] ss:$2 sm:$0xf]
        %s5123 = scalar_lea.vmem %s5064, 35 [#allocation10]
        %v5124 = vld [vmem:[%s5123] ss:$2 sm:$0xf]
        %s5125 = scalar_lea.vmem %s5064, 67 [#allocation10]
        %v5126 = vld [vmem:[%s5125] ss:$2 sm:$0xf]
        %s5127 = scalar_lea.vmem %s5064, 99 [#allocation10]
        %v5128 = vld [vmem:[%s5127] ss:$2 sm:$0xf]
        %v5129 = vmax.f32 %v5098, %v5106
        %v5130 = vmax.f32 %v5100, %v5108
        %v5131 = vmax.f32 %v5102, %v5110
        %v5132 = vmax.f32 %v5104, %v5112
        %v5133 = vmax.f32 %v5114, %v5122
        %v5134 = vmax.f32 %v5116, %v5124
        %v5135 = vmax.f32 %v5118, %v5126
        %v5136 = vmax.f32 %v5120, %v5128
        %v5137 = vmax.f32 %v5129, %v5133
        %v5138 = vmax.f32 %v5130, %v5134
        %v5139 = vmax.f32 %v5131, %v5135
        %v5140 = vmax.f32 %v5132, %v5136
        %v5141 = vld [vmem:[%s8] sm:$0x1]
        %v5142 = vpack.c.bf16 %v5137, %v5137
        %v5143 = vld [vmem:[%s7] sm:$0xf]
        %v5144 = vld [vmem:[%s7 + $0x4] sm:$0xf]
        %v5145 = vld [vmem:[%s7 + $0x8] sm:$0xf]
        %v5146 = vld [vmem:[%s7 + $0xc] sm:$0xf]
        %v5147 = vld [vmem:[%s7 + $0x10] sm:$0xf]
        %v5148 = vld [vmem:[%s7 + $0x14] sm:$0xf]
        %v5149 = vld [vmem:[%s7 + $0x18] sm:$0xf]
        %v5150 = vld [vmem:[%s7 + $0x1c] sm:$0xf]
        %v5159 = vunpack.c.l.b16 %v5143
        %v5160 = vunpack.c.l.b16 %v5144
        %v5161 = vunpack.c.l.b16 %v5145
        %v5162 = vunpack.c.l.b16 %v5146
        %v5163 = vunpack.c.l.b16 %v5147
        %v5164 = vunpack.c.l.b16 %v5148
        %v5165 = vunpack.c.l.b16 %v5149
        %v5166 = vunpack.c.l.b16 %v5150
        %v5167 = vpack.c.b16 %v5160, %v5159
        %v5168 = vpack.c.b16 %v5162, %v5161
        %v5169 = vpack.c.b16 %v5164, %v5163
        %v5170 = vpack.c.b16 %v5166, %v5165
        %v5176 = vsel %vm4721, %v5142, 0
        %5178 = vmatprep.subr.bf16.mxu0 0
        %5179 = vmatpush1.bf16.msra.mxu0 %v5167
        %5180 = vmatprep.subr.bf16.mxu0 0
        %5181 = vmatpush1.bf16.msra.mxu0 %v5168
        %5182 = vmatprep.subr.bf16.mxu0 0
        %5183 = vmatpush1.bf16.msra.mxu0 %v5169
        %5184 = vmatprep.subr.bf16.mxu0 0
        %5185 = vmatpush1.bf16.msra.mxu0 %v5170
        %5186 = vmatprep.subr.bf16.mxu0 0
        %5187 = vmatpush1.bf16.msra.mxu0 0
        %5188 = vmatprep.subr.bf16.mxu0 0
        %5189 = vmatpush1.bf16.msra.mxu0 0
        %5190 = vmatprep.subr.bf16.mxu0 0
        %5191 = vmatpush1.bf16.msra.mxu0 0
        %5192 = vmatprep.subr.bf16.mxu0 0
        %5193 = vmatpush1.bf16.msra.mxu0 0
        %5194 = vmatprep.subr.bf16.mxu0 0
        %5195 = vmatpush1.bf16.msra.mxu0 0
        %5196 = vmatprep.subr.bf16.mxu0 0
        %5197 = vmatpush1.bf16.msra.mxu0 0
        %5198 = vmatprep.subr.bf16.mxu0 0
        %5199 = vmatpush1.bf16.msra.mxu0 0
        %5200 = vmatprep.subr.bf16.mxu0 0
        %5201 = vmatpush1.bf16.msra.mxu0 0
        %5202 = vmatprep.subr.bf16.mxu0 0
        %5203 = vmatpush1.bf16.msra.mxu0 0
        %5204 = vmatprep.subr.bf16.mxu0 0
        %5205 = vmatpush1.bf16.msra.mxu0 0
        %5206 = vmatprep.subr.bf16.mxu0 0
        %5207 = vmatpush1.bf16.msra.mxu0 0
        %5208 = vmatprep.subr.bf16.mxu0 0
        %5209 = vmatpush1.bf16.msra.mxu0 0
        %5210 = vmatprep.mubr.bf16.mxu0 0
        %5211 = vmatmul.mubr.bf16.gmra.mrb[0].mxu0 %v5176
        %v5212 = vpop.f32.mrb[0].mxu0
        %v5213 = vadd.f32 0.0, %v5212
        %v5214 = vpop.f32.mrb[0].mxu0
        %v5215 = vpop.f32.mrb[0].mxu0
        %v5216 = vpop.f32.mrb[0].mxu0
        %5217 = vdwg.mxu0
        %v5218 = vadd.f32 %v5141, %v5213
        %s5219 = scalar_lea.vmem %s7, 32
        %v5220 = vld [vmem:[%s5219] sm:$0xf]
        %v5221 = vld [vmem:[%s5219 + $0x4] sm:$0xf]
        %v5222 = vld [vmem:[%s5219 + $0x8] sm:$0xf]
        %v5223 = vld [vmem:[%s5219 + $0xc] sm:$0xf]
        %v5224 = vld [vmem:[%s5219 + $0x10] sm:$0xf]
        %v5225 = vld [vmem:[%s5219 + $0x14] sm:$0xf]
        %v5226 = vld [vmem:[%s5219 + $0x18] sm:$0xf]
        %v5227 = vld [vmem:[%s5219 + $0x1c] sm:$0xf]
        %v5228 = vshrl.u32 %v5142, 16
        %v5238 = vunpack.c.l.b16 %v5220
        %v5239 = vunpack.c.l.b16 %v5221
        %v5240 = vunpack.c.l.b16 %v5222
        %v5241 = vunpack.c.l.b16 %v5223
        %v5242 = vunpack.c.l.b16 %v5224
        %v5243 = vunpack.c.l.b16 %v5225
        %v5244 = vunpack.c.l.b16 %v5226
        %v5245 = vunpack.c.l.b16 %v5227
        %v5246 = vpack.c.b16 %v5239, %v5238
        %v5247 = vpack.c.b16 %v5241, %v5240
        %v5248 = vpack.c.b16 %v5243, %v5242
        %v5249 = vpack.c.b16 %v5245, %v5244
        %v5255 = vsel %vm4721, %v5228, 0
        %5257 = vmatprep.subr.bf16.mxu0 0
        %5258 = vmatpush1.bf16.msra.mxu0 %v5246
        %5259 = vmatprep.subr.bf16.mxu0 0
        %5260 = vmatpush1.bf16.msra.mxu0 %v5247
        %5261 = vmatprep.subr.bf16.mxu0 0
        %5262 = vmatpush1.bf16.msra.mxu0 %v5248
        %5263 = vmatprep.subr.bf16.mxu0 0
        %5264 = vmatpush1.bf16.msra.mxu0 %v5249
        %5265 = vmatprep.subr.bf16.mxu0 0
        %5266 = vmatpush1.bf16.msra.mxu0 0
        %5267 = vmatprep.subr.bf16.mxu0 0
        %5268 = vmatpush1.bf16.msra.mxu0 0
        %5269 = vmatprep.subr.bf16.mxu0 0
        %5270 = vmatpush1.bf16.msra.mxu0 0
        %5271 = vmatprep.subr.bf16.mxu0 0
        %5272 = vmatpush1.bf16.msra.mxu0 0
        %5273 = vmatprep.subr.bf16.mxu0 0
        %5274 = vmatpush1.bf16.msra.mxu0 0
        %5275 = vmatprep.subr.bf16.mxu0 0
        %5276 = vmatpush1.bf16.msra.mxu0 0
        %5277 = vmatprep.subr.bf16.mxu0 0
        %5278 = vmatpush1.bf16.msra.mxu0 0
        %5279 = vmatprep.subr.bf16.mxu0 0
        %5280 = vmatpush1.bf16.msra.mxu0 0
        %5281 = vmatprep.subr.bf16.mxu0 0
        %5282 = vmatpush1.bf16.msra.mxu0 0
        %5283 = vmatprep.subr.bf16.mxu0 0
        %5284 = vmatpush1.bf16.msra.mxu0 0
        %5285 = vmatprep.subr.bf16.mxu0 0
        %5286 = vmatpush1.bf16.msra.mxu0 0
        %5287 = vmatprep.subr.bf16.mxu0 0
        %5288 = vmatpush1.bf16.msra.mxu0 0
        %5289 = vmatprep.mubr.bf16.mxu0 0
        %5290 = vmatmul.mubr.bf16.gmra.mrb[0].mxu0 %v5255
        %v5291 = vpop.f32.mrb[0].mxu0
        %v5292 = vadd.f32 0.0, %v5291
        %v5293 = vpop.f32.mrb[0].mxu0
        %v5294 = vpop.f32.mrb[0].mxu0
        %v5295 = vpop.f32.mrb[0].mxu0
        %5296 = vdwg.mxu0
        %v5297 = vadd.f32 %v5218, %v5292
        %s5298 = scalar_lea.vmem %s7, 64
        %v5299 = vld [vmem:[%s5298] sm:$0xf]
        %v5300 = vld [vmem:[%s5298 + $0x4] sm:$0xf]
        %v5301 = vld [vmem:[%s5298 + $0x8] sm:$0xf]
        %v5302 = vld [vmem:[%s5298 + $0xc] sm:$0xf]
        %v5303 = vld [vmem:[%s5298 + $0x10] sm:$0xf]
        %v5304 = vld [vmem:[%s5298 + $0x14] sm:$0xf]
        %v5305 = vld [vmem:[%s5298 + $0x18] sm:$0xf]
        %v5306 = vld [vmem:[%s5298 + $0x1c] sm:$0xf]
        %v5308 = vrot.slane %v5142, 1
        %v5317 = vunpack.c.l.b16 %v5299
        %v5318 = vunpack.c.l.b16 %v5300
        %v5319 = vunpack.c.l.b16 %v5301
        %v5320 = vunpack.c.l.b16 %v5302
        %v5321 = vunpack.c.l.b16 %v5303
        %v5322 = vunpack.c.l.b16 %v5304
        %v5323 = vunpack.c.l.b16 %v5305
        %v5324 = vunpack.c.l.b16 %v5306
        %v5325 = vpack.c.b16 %v5318, %v5317
        %v5326 = vpack.c.b16 %v5320, %v5319
        %v5327 = vpack.c.b16 %v5322, %v5321
        %v5328 = vpack.c.b16 %v5324, %v5323
        %v5334 = vsel %vm4721, %v5308, 0
        %5336 = vmatprep.subr.bf16.mxu0 0
        %5337 = vmatpush1.bf16.msra.mxu0 %v5325
        %5338 = vmatprep.subr.bf16.mxu0 0
        %5339 = vmatpush1.bf16.msra.mxu0 %v5326
        %5340 = vmatprep.subr.bf16.mxu0 0
        %5341 = vmatpush1.bf16.msra.mxu0 %v5327
        %5342 = vmatprep.subr.bf16.mxu0 0
        %5343 = vmatpush1.bf16.msra.mxu0 %v5328
        %5344 = vmatprep.subr.bf16.mxu0 0
        %5345 = vmatpush1.bf16.msra.mxu0 0
        %5346 = vmatprep.subr.bf16.mxu0 0
        %5347 = vmatpush1.bf16.msra.mxu0 0
        %5348 = vmatprep.subr.bf16.mxu0 0
        %5349 = vmatpush1.bf16.msra.mxu0 0
        %5350 = vmatprep.subr.bf16.mxu0 0
        %5351 = vmatpush1.bf16.msra.mxu0 0
        %5352 = vmatprep.subr.bf16.mxu0 0
        %5353 = vmatpush1.bf16.msra.mxu0 0
        %5354 = vmatprep.subr.bf16.mxu0 0
        %5355 = vmatpush1.bf16.msra.mxu0 0
        %5356 = vmatprep.subr.bf16.mxu0 0
        %5357 = vmatpush1.bf16.msra.mxu0 0
        %5358 = vmatprep.subr.bf16.mxu0 0
        %5359 = vmatpush1.bf16.msra.mxu0 0
        %5360 = vmatprep.subr.bf16.mxu0 0
        %5361 = vmatpush1.bf16.msra.mxu0 0
        %5362 = vmatprep.subr.bf16.mxu0 0
        %5363 = vmatpush1.bf16.msra.mxu0 0
        %5364 = vmatprep.subr.bf16.mxu0 0
        %5365 = vmatpush1.bf16.msra.mxu0 0
        %5366 = vmatprep.subr.bf16.mxu0 0
        %5367 = vmatpush1.bf16.msra.mxu0 0
        %5368 = vmatprep.mubr.bf16.mxu0 0
        %5369 = vmatmul.mubr.bf16.gmra.mrb[0].mxu0 %v5334
        %v5370 = vpop.f32.mrb[0].mxu0
        %v5371 = vadd.f32 0.0, %v5370
        %v5372 = vpop.f32.mrb[0].mxu0
        %v5373 = vpop.f32.mrb[0].mxu0
        %v5374 = vpop.f32.mrb[0].mxu0
        %5375 = vdwg.mxu0
        %v5376 = vadd.f32 %v5297, %v5371
        %s5377 = scalar_lea.vmem %s7, 96
        %v5378 = vld [vmem:[%s5377] sm:$0xf]
        %v5379 = vld [vmem:[%s5377 + $0x4] sm:$0xf]
        %v5380 = vld [vmem:[%s5377 + $0x8] sm:$0xf]
        %v5381 = vld [vmem:[%s5377 + $0xc] sm:$0xf]
        %v5382 = vld [vmem:[%s5377 + $0x10] sm:$0xf]
        %v5383 = vld [vmem:[%s5377 + $0x14] sm:$0xf]
        %v5384 = vld [vmem:[%s5377 + $0x18] sm:$0xf]
        %v5385 = vld [vmem:[%s5377 + $0x1c] sm:$0xf]
        %v5386 = vrot.slane %v5228, 1
        %v5395 = vunpack.c.l.b16 %v5378
        %v5396 = vunpack.c.l.b16 %v5379
        %v5397 = vunpack.c.l.b16 %v5380
        %v5398 = vunpack.c.l.b16 %v5381
        %v5399 = vunpack.c.l.b16 %v5382
        %v5400 = vunpack.c.l.b16 %v5383
        %v5401 = vunpack.c.l.b16 %v5384
        %v5402 = vunpack.c.l.b16 %v5385
        %v5403 = vpack.c.b16 %v5396, %v5395
        %v5404 = vpack.c.b16 %v5398, %v5397
        %v5405 = vpack.c.b16 %v5400, %v5399
        %v5406 = vpack.c.b16 %v5402, %v5401
        %v5412 = vsel %vm4721, %v5386, 0
        %5414 = vmatprep.subr.bf16.mxu0 0
        %5415 = vmatpush1.bf16.msra.mxu0 %v5403
        %5416 = vmatprep.subr.bf16.mxu0 0
        %5417 = vmatpush1.bf16.msra.mxu0 %v5404
        %5418 = vmatprep.subr.bf16.mxu0 0
        %5419 = vmatpush1.bf16.msra.mxu0 %v5405
        %5420 = vmatprep.subr.bf16.mxu0 0
        %5421 = vmatpush1.bf16.msra.mxu0 %v5406
        %5422 = vmatprep.subr.bf16.mxu0 0
        %5423 = vmatpush1.bf16.msra.mxu0 0
        %5424 = vmatprep.subr.bf16.mxu0 0
        %5425 = vmatpush1.bf16.msra.mxu0 0
        %5426 = vmatprep.subr.bf16.mxu0 0
        %5427 = vmatpush1.bf16.msra.mxu0 0
        %5428 = vmatprep.subr.bf16.mxu0 0
        %5429 = vmatpush1.bf16.msra.mxu0 0
        %5430 = vmatprep.subr.bf16.mxu0 0
        %5431 = vmatpush1.bf16.msra.mxu0 0
        %5432 = vmatprep.subr.bf16.mxu0 0
        %5433 = vmatpush1.bf16.msra.mxu0 0
        %5434 = vmatprep.subr.bf16.mxu0 0
        %5435 = vmatpush1.bf16.msra.mxu0 0
        %5436 = vmatprep.subr.bf16.mxu0 0
        %5437 = vmatpush1.bf16.msra.mxu0 0
        %5438 = vmatprep.subr.bf16.mxu0 0
        %5439 = vmatpush1.bf16.msra.mxu0 0
        %5440 = vmatprep.subr.bf16.mxu0 0
        %5441 = vmatpush1.bf16.msra.mxu0 0
        %5442 = vmatprep.subr.bf16.mxu0 0
        %5443 = vmatpush1.bf16.msra.mxu0 0
        %5444 = vmatprep.subr.bf16.mxu0 0
        %5445 = vmatpush1.bf16.msra.mxu0 0
        %5446 = vmatprep.mubr.bf16.mxu0 0
        %5447 = vmatmul.mubr.bf16.gmra.mrb[0].mxu0 %v5412
        %v5448 = vpop.f32.mrb[0].mxu0
        %v5449 = vadd.f32 0.0, %v5448
        %v5450 = vpop.f32.mrb[0].mxu0
        %v5451 = vpop.f32.mrb[0].mxu0
        %v5452 = vpop.f32.mrb[0].mxu0
        %5453 = vdwg.mxu0
        %v5454 = vadd.f32 %v5376, %v5449
        %v5455 = vpack.c.bf16 %v5138, %v5138
        %s5456 = scalar_lea.vmem %s7, 128
        %v5457 = vld [vmem:[%s5456] sm:$0xf]
        %v5458 = vld [vmem:[%s5456 + $0x4] sm:$0xf]
        %v5459 = vld [vmem:[%s5456 + $0x8] sm:$0xf]
        %v5460 = vld [vmem:[%s5456 + $0xc] sm:$0xf]
        %v5461 = vld [vmem:[%s5456 + $0x10] sm:$0xf]
        %v5462 = vld [vmem:[%s5456 + $0x14] sm:$0xf]
        %v5463 = vld [vmem:[%s5456 + $0x18] sm:$0xf]
        %v5464 = vld [vmem:[%s5456 + $0x1c] sm:$0xf]
        %v5473 = vunpack.c.l.b16 %v5457
        %v5474 = vunpack.c.l.b16 %v5458
        %v5475 = vunpack.c.l.b16 %v5459
        %v5476 = vunpack.c.l.b16 %v5460
        %v5477 = vunpack.c.l.b16 %v5461
        %v5478 = vunpack.c.l.b16 %v5462
        %v5479 = vunpack.c.l.b16 %v5463
        %v5480 = vunpack.c.l.b16 %v5464
        %v5481 = vpack.c.b16 %v5474, %v5473
        %v5482 = vpack.c.b16 %v5476, %v5475
        %v5483 = vpack.c.b16 %v5478, %v5477
        %v5484 = vpack.c.b16 %v5480, %v5479
        %v5490 = vsel %vm4721, %v5455, 0
        %5492 = vmatprep.subr.bf16.mxu0 0
        %5493 = vmatpush1.bf16.msra.mxu0 %v5481
        %5494 = vmatprep.subr.bf16.mxu0 0
        %5495 = vmatpush1.bf16.msra.mxu0 %v5482
        %5496 = vmatprep.subr.bf16.mxu0 0
        %5497 = vmatpush1.bf16.msra.mxu0 %v5483
        %5498 = vmatprep.subr.bf16.mxu0 0
        %5499 = vmatpush1.bf16.msra.mxu0 %v5484
        %5500 = vmatprep.subr.bf16.mxu0 0
        %5501 = vmatpush1.bf16.msra.mxu0 0
        %5502 = vmatprep.subr.bf16.mxu0 0
        %5503 = vmatpush1.bf16.msra.mxu0 0
        %5504 = vmatprep.subr.bf16.mxu0 0
        %5505 = vmatpush1.bf16.msra.mxu0 0
        %5506 = vmatprep.subr.bf16.mxu0 0
        %5507 = vmatpush1.bf16.msra.mxu0 0
        %5508 = vmatprep.subr.bf16.mxu0 0
        %5509 = vmatpush1.bf16.msra.mxu0 0
        %5510 = vmatprep.subr.bf16.mxu0 0
        %5511 = vmatpush1.bf16.msra.mxu0 0
        %5512 = vmatprep.subr.bf16.mxu0 0
        %5513 = vmatpush1.bf16.msra.mxu0 0
        %5514 = vmatprep.subr.bf16.mxu0 0
        %5515 = vmatpush1.bf16.msra.mxu0 0
        %5516 = vmatprep.subr.bf16.mxu0 0
        %5517 = vmatpush1.bf16.msra.mxu0 0
        %5518 = vmatprep.subr.bf16.mxu0 0
        %5519 = vmatpush1.bf16.msra.mxu0 0
        %5520 = vmatprep.subr.bf16.mxu0 0
        %5521 = vmatpush1.bf16.msra.mxu0 0
        %5522 = vmatprep.subr.bf16.mxu0 0
        %5523 = vmatpush1.bf16.msra.mxu0 0
        %5524 = vmatprep.mubr.bf16.mxu0 0
        %5525 = vmatmul.mubr.bf16.gmra.mrb[0].mxu0 %v5490
        %v5526 = vpop.f32.mrb[0].mxu0
        %v5527 = vadd.f32 0.0, %v5526
        %v5528 = vpop.f32.mrb[0].mxu0
        %v5529 = vpop.f32.mrb[0].mxu0
        %v5530 = vpop.f32.mrb[0].mxu0
        %5531 = vdwg.mxu0
        %v5532 = vadd.f32 %v5454, %v5527
        %s5533 = scalar_lea.vmem %s7, 160
        %v5534 = vld [vmem:[%s5533] sm:$0xf]
        %v5535 = vld [vmem:[%s5533 + $0x4] sm:$0xf]
        %v5536 = vld [vmem:[%s5533 + $0x8] sm:$0xf]
        %v5537 = vld [vmem:[%s5533 + $0xc] sm:$0xf]
        %v5538 = vld [vmem:[%s5533 + $0x10] sm:$0xf]
        %v5539 = vld [vmem:[%s5533 + $0x14] sm:$0xf]
        %v5540 = vld [vmem:[%s5533 + $0x18] sm:$0xf]
        %v5541 = vld [vmem:[%s5533 + $0x1c] sm:$0xf]
        %v5542 = vshrl.u32 %v5455, 16
        %v5552 = vunpack.c.l.b16 %v5534
        %v5553 = vunpack.c.l.b16 %v5535
        %v5554 = vunpack.c.l.b16 %v5536
        %v5555 = vunpack.c.l.b16 %v5537
        %v5556 = vunpack.c.l.b16 %v5538
        %v5557 = vunpack.c.l.b16 %v5539
        %v5558 = vunpack.c.l.b16 %v5540
        %v5559 = vunpack.c.l.b16 %v5541
        %v5560 = vpack.c.b16 %v5553, %v5552
        %v5561 = vpack.c.b16 %v5555, %v5554
        %v5562 = vpack.c.b16 %v5557, %v5556
        %v5563 = vpack.c.b16 %v5559, %v5558
        %v5569 = vsel %vm4721, %v5542, 0
        %5571 = vmatprep.subr.bf16.mxu0 0
        %5572 = vmatpush1.bf16.msra.mxu0 %v5560
        %5573 = vmatprep.subr.bf16.mxu0 0
        %5574 = vmatpush1.bf16.msra.mxu0 %v5561
        %5575 = vmatprep.subr.bf16.mxu0 0
        %5576 = vmatpush1.bf16.msra.mxu0 %v5562
        %5577 = vmatprep.subr.bf16.mxu0 0
        %5578 = vmatpush1.bf16.msra.mxu0 %v5563
        %5579 = vmatprep.subr.bf16.mxu0 0
        %5580 = vmatpush1.bf16.msra.mxu0 0
        %5581 = vmatprep.subr.bf16.mxu0 0
        %5582 = vmatpush1.bf16.msra.mxu0 0
        %5583 = vmatprep.subr.bf16.mxu0 0
        %5584 = vmatpush1.bf16.msra.mxu0 0
        %5585 = vmatprep.subr.bf16.mxu0 0
        %5586 = vmatpush1.bf16.msra.mxu0 0
        %5587 = vmatprep.subr.bf16.mxu0 0
        %5588 = vmatpush1.bf16.msra.mxu0 0
        %5589 = vmatprep.subr.bf16.mxu0 0
        %5590 = vmatpush1.bf16.msra.mxu0 0
        %5591 = vmatprep.subr.bf16.mxu0 0
        %5592 = vmatpush1.bf16.msra.mxu0 0
        %5593 = vmatprep.subr.bf16.mxu0 0
        %5594 = vmatpush1.bf16.msra.mxu0 0
        %5595 = vmatprep.subr.bf16.mxu0 0
        %5596 = vmatpush1.bf16.msra.mxu0 0
        %5597 = vmatprep.subr.bf16.mxu0 0
        %5598 = vmatpush1.bf16.msra.mxu0 0
        %5599 = vmatprep.subr.bf16.mxu0 0
        %5600 = vmatpush1.bf16.msra.mxu0 0
        %5601 = vmatprep.subr.bf16.mxu0 0
        %5602 = vmatpush1.bf16.msra.mxu0 0
        %5603 = vmatprep.mubr.bf16.mxu0 0
        %5604 = vmatmul.mubr.bf16.gmra.mrb[0].mxu0 %v5569
        %v5605 = vpop.f32.mrb[0].mxu0
        %v5606 = vadd.f32 0.0, %v5605
        %v5607 = vpop.f32.mrb[0].mxu0
        %v5608 = vpop.f32.mrb[0].mxu0
        %v5609 = vpop.f32.mrb[0].mxu0
        %5610 = vdwg.mxu0
        %v5611 = vadd.f32 %v5532, %v5606
        %s5612 = scalar_lea.vmem %s7, 192
        %v5613 = vld [vmem:[%s5612] sm:$0xf]
        %v5614 = vld [vmem:[%s5612 + $0x4] sm:$0xf]
        %v5615 = vld [vmem:[%s5612 + $0x8] sm:$0xf]
        %v5616 = vld [vmem:[%s5612 + $0xc] sm:$0xf]
        %v5617 = vld [vmem:[%s5612 + $0x10] sm:$0xf]
        %v5618 = vld [vmem:[%s5612 + $0x14] sm:$0xf]
        %v5619 = vld [vmem:[%s5612 + $0x18] sm:$0xf]
        %v5620 = vld [vmem:[%s5612 + $0x1c] sm:$0xf]
        %v5622 = vrot.slane %v5455, 1
        %v5631 = vunpack.c.l.b16 %v5613
        %v5632 = vunpack.c.l.b16 %v5614
        %v5633 = vunpack.c.l.b16 %v5615
        %v5634 = vunpack.c.l.b16 %v5616
        %v5635 = vunpack.c.l.b16 %v5617
        %v5636 = vunpack.c.l.b16 %v5618
        %v5637 = vunpack.c.l.b16 %v5619
        %v5638 = vunpack.c.l.b16 %v5620
        %v5639 = vpack.c.b16 %v5632, %v5631
        %v5640 = vpack.c.b16 %v5634, %v5633
        %v5641 = vpack.c.b16 %v5636, %v5635
        %v5642 = vpack.c.b16 %v5638, %v5637
        %v5648 = vsel %vm4721, %v5622, 0
        %5650 = vmatprep.subr.bf16.mxu0 0
        %5651 = vmatpush1.bf16.msra.mxu0 %v5639
        %5652 = vmatprep.subr.bf16.mxu0 0
        %5653 = vmatpush1.bf16.msra.mxu0 %v5640
        %5654 = vmatprep.subr.bf16.mxu0 0
        %5655 = vmatpush1.bf16.msra.mxu0 %v5641
        %5656 = vmatprep.subr.bf16.mxu0 0
        %5657 = vmatpush1.bf16.msra.mxu0 %v5642
        %5658 = vmatprep.subr.bf16.mxu0 0
        %5659 = vmatpush1.bf16.msra.mxu0 0
        %5660 = vmatprep.subr.bf16.mxu0 0
        %5661 = vmatpush1.bf16.msra.mxu0 0
        %5662 = vmatprep.subr.bf16.mxu0 0
        %5663 = vmatpush1.bf16.msra.mxu0 0
        %5664 = vmatprep.subr.bf16.mxu0 0
        %5665 = vmatpush1.bf16.msra.mxu0 0
        %5666 = vmatprep.subr.bf16.mxu0 0
        %5667 = vmatpush1.bf16.msra.mxu0 0
        %5668 = vmatprep.subr.bf16.mxu0 0
        %5669 = vmatpush1.bf16.msra.mxu0 0
        %5670 = vmatprep.subr.bf16.mxu0 0
        %5671 = vmatpush1.bf16.msra.mxu0 0
        %5672 = vmatprep.subr.bf16.mxu0 0
        %5673 = vmatpush1.bf16.msra.mxu0 0
        %5674 = vmatprep.subr.bf16.mxu0 0
        %5675 = vmatpush1.bf16.msra.mxu0 0
        %5676 = vmatprep.subr.bf16.mxu0 0
        %5677 = vmatpush1.bf16.msra.mxu0 0
        %5678 = vmatprep.subr.bf16.mxu0 0
        %5679 = vmatpush1.bf16.msra.mxu0 0
        %5680 = vmatprep.subr.bf16.mxu0 0
        %5681 = vmatpush1.bf16.msra.mxu0 0
        %5682 = vmatprep.mubr.bf16.mxu0 0
        %5683 = vmatmul.mubr.bf16.gmra.mrb[0].mxu0 %v5648
        %v5684 = vpop.f32.mrb[0].mxu0
        %v5685 = vadd.f32 0.0, %v5684
        %v5686 = vpop.f32.mrb[0].mxu0
        %v5687 = vpop.f32.mrb[0].mxu0
        %v5688 = vpop.f32.mrb[0].mxu0
        %5689 = vdwg.mxu0
        %v5690 = vadd.f32 %v5611, %v5685
        %s5691 = scalar_lea.vmem %s7, 224
        %v5692 = vld [vmem:[%s5691] sm:$0xf]
        %v5693 = vld [vmem:[%s5691 + $0x4] sm:$0xf]
        %v5694 = vld [vmem:[%s5691 + $0x8] sm:$0xf]
        %v5695 = vld [vmem:[%s5691 + $0xc] sm:$0xf]
        %v5696 = vld [vmem:[%s5691 + $0x10] sm:$0xf]
        %v5697 = vld [vmem:[%s5691 + $0x14] sm:$0xf]
        %v5698 = vld [vmem:[%s5691 + $0x18] sm:$0xf]
        %v5699 = vld [vmem:[%s5691 + $0x1c] sm:$0xf]
        %v5700 = vrot.slane %v5542, 1
        %v5709 = vunpack.c.l.b16 %v5692
        %v5710 = vunpack.c.l.b16 %v5693
        %v5711 = vunpack.c.l.b16 %v5694
        %v5712 = vunpack.c.l.b16 %v5695
        %v5713 = vunpack.c.l.b16 %v5696
        %v5714 = vunpack.c.l.b16 %v5697
        %v5715 = vunpack.c.l.b16 %v5698
        %v5716 = vunpack.c.l.b16 %v5699
        %v5717 = vpack.c.b16 %v5710, %v5709
        %v5718 = vpack.c.b16 %v5712, %v5711
        %v5719 = vpack.c.b16 %v5714, %v5713
        %v5720 = vpack.c.b16 %v5716, %v5715
        %v5726 = vsel %vm4721, %v5700, 0
        %5728 = vmatprep.subr.bf16.mxu0 0
        %5729 = vmatpush1.bf16.msra.mxu0 %v5717
        %5730 = vmatprep.subr.bf16.mxu0 0
        %5731 = vmatpush1.bf16.msra.mxu0 %v5718
        %5732 = vmatprep.subr.bf16.mxu0 0
        %5733 = vmatpush1.bf16.msra.mxu0 %v5719
        %5734 = vmatprep.subr.bf16.mxu0 0
        %5735 = vmatpush1.bf16.msra.mxu0 %v5720
        %5736 = vmatprep.subr.bf16.mxu0 0
        %5737 = vmatpush1.bf16.msra.mxu0 0
        %5738 = vmatprep.subr.bf16.mxu0 0
        %5739 = vmatpush1.bf16.msra.mxu0 0
        %5740 = vmatprep.subr.bf16.mxu0 0
        %5741 = vmatpush1.bf16.msra.mxu0 0
        %5742 = vmatprep.subr.bf16.mxu0 0
        %5743 = vmatpush1.bf16.msra.mxu0 0
        %5744 = vmatprep.subr.bf16.mxu0 0
        %5745 = vmatpush1.bf16.msra.mxu0 0
        %5746 = vmatprep.subr.bf16.mxu0 0
        %5747 = vmatpush1.bf16.msra.mxu0 0
        %5748 = vmatprep.subr.bf16.mxu0 0
        %5749 = vmatpush1.bf16.msra.mxu0 0
        %5750 = vmatprep.subr.bf16.mxu0 0
        %5751 = vmatpush1.bf16.msra.mxu0 0
        %5752 = vmatprep.subr.bf16.mxu0 0
        %5753 = vmatpush1.bf16.msra.mxu0 0
        %5754 = vmatprep.subr.bf16.mxu0 0
        %5755 = vmatpush1.bf16.msra.mxu0 0
        %5756 = vmatprep.subr.bf16.mxu0 0
        %5757 = vmatpush1.bf16.msra.mxu0 0
        %5758 = vmatprep.subr.bf16.mxu0 0
        %5759 = vmatpush1.bf16.msra.mxu0 0
        %5760 = vmatprep.mubr.bf16.mxu0 0
        %5761 = vmatmul.mubr.bf16.gmra.mrb[0].mxu0 %v5726
        %v5762 = vpop.f32.mrb[0].mxu0
        %v5763 = vadd.f32 0.0, %v5762
        %v5764 = vpop.f32.mrb[0].mxu0
        %v5765 = vpop.f32.mrb[0].mxu0
        %v5766 = vpop.f32.mrb[0].mxu0
        %5767 = vdwg.mxu0
        %v5768 = vadd.f32 %v5690, %v5763
        %v5769 = vpack.c.bf16 %v5139, %v5139
        %s5770 = scalar_lea.vmem %s7, 256
        %v5771 = vld [vmem:[%s5770] sm:$0xf]
        %v5772 = vld [vmem:[%s5770 + $0x4] sm:$0xf]
        %v5773 = vld [vmem:[%s5770 + $0x8] sm:$0xf]
        %v5774 = vld [vmem:[%s5770 + $0xc] sm:$0xf]
        %v5775 = vld [vmem:[%s5770 + $0x10] sm:$0xf]
        %v5776 = vld [vmem:[%s5770 + $0x14] sm:$0xf]
        %v5777 = vld [vmem:[%s5770 + $0x18] sm:$0xf]
        %v5778 = vld [vmem:[%s5770 + $0x1c] sm:$0xf]
        %v5787 = vunpack.c.l.b16 %v5771
        %v5788 = vunpack.c.l.b16 %v5772
        %v5789 = vunpack.c.l.b16 %v5773
        %v5790 = vunpack.c.l.b16 %v5774
        %v5791 = vunpack.c.l.b16 %v5775
        %v5792 = vunpack.c.l.b16 %v5776
        %v5793 = vunpack.c.l.b16 %v5777
        %v5794 = vunpack.c.l.b16 %v5778
        %v5795 = vpack.c.b16 %v5788, %v5787
        %v5796 = vpack.c.b16 %v5790, %v5789
        %v5797 = vpack.c.b16 %v5792, %v5791
        %v5798 = vpack.c.b16 %v5794, %v5793
        %v5804 = vsel %vm4721, %v5769, 0
        %5806 = vmatprep.subr.bf16.mxu0 0
        %5807 = vmatpush1.bf16.msra.mxu0 %v5795
        %5808 = vmatprep.subr.bf16.mxu0 0
        %5809 = vmatpush1.bf16.msra.mxu0 %v5796
        %5810 = vmatprep.subr.bf16.mxu0 0
        %5811 = vmatpush1.bf16.msra.mxu0 %v5797
        %5812 = vmatprep.subr.bf16.mxu0 0
        %5813 = vmatpush1.bf16.msra.mxu0 %v5798
        %5814 = vmatprep.subr.bf16.mxu0 0
        %5815 = vmatpush1.bf16.msra.mxu0 0
        %5816 = vmatprep.subr.bf16.mxu0 0
        %5817 = vmatpush1.bf16.msra.mxu0 0
        %5818 = vmatprep.subr.bf16.mxu0 0
        %5819 = vmatpush1.bf16.msra.mxu0 0
        %5820 = vmatprep.subr.bf16.mxu0 0
        %5821 = vmatpush1.bf16.msra.mxu0 0
        %5822 = vmatprep.subr.bf16.mxu0 0
        %5823 = vmatpush1.bf16.msra.mxu0 0
        %5824 = vmatprep.subr.bf16.mxu0 0
        %5825 = vmatpush1.bf16.msra.mxu0 0
        %5826 = vmatprep.subr.bf16.mxu0 0
        %5827 = vmatpush1.bf16.msra.mxu0 0
        %5828 = vmatprep.subr.bf16.mxu0 0
        %5829 = vmatpush1.bf16.msra.mxu0 0
        %5830 = vmatprep.subr.bf16.mxu0 0
        %5831 = vmatpush1.bf16.msra.mxu0 0
        %5832 = vmatprep.subr.bf16.mxu0 0
        %5833 = vmatpush1.bf16.msra.mxu0 0
        %5834 = vmatprep.subr.bf16.mxu0 0
        %5835 = vmatpush1.bf16.msra.mxu0 0
        %5836 = vmatprep.subr.bf16.mxu0 0
        %5837 = vmatpush1.bf16.msra.mxu0 0
        %5838 = vmatprep.mubr.bf16.mxu0 0
        %5839 = vmatmul.mubr.bf16.gmra.mrb[0].mxu0 %v5804
        %v5840 = vpop.f32.mrb[0].mxu0
        %v5841 = vadd.f32 0.0, %v5840
        %v5842 = vpop.f32.mrb[0].mxu0
        %v5843 = vpop.f32.mrb[0].mxu0
        %v5844 = vpop.f32.mrb[0].mxu0
        %5845 = vdwg.mxu0
        %v5846 = vadd.f32 %v5768, %v5841
        %s5847 = scalar_lea.vmem %s7, 288
        %v5848 = vld [vmem:[%s5847] sm:$0xf]
        %v5849 = vld [vmem:[%s5847 + $0x4] sm:$0xf]
        %v5850 = vld [vmem:[%s5847 + $0x8] sm:$0xf]
        %v5851 = vld [vmem:[%s5847 + $0xc] sm:$0xf]
        %v5852 = vld [vmem:[%s5847 + $0x10] sm:$0xf]
        %v5853 = vld [vmem:[%s5847 + $0x14] sm:$0xf]
        %v5854 = vld [vmem:[%s5847 + $0x18] sm:$0xf]
        %v5855 = vld [vmem:[%s5847 + $0x1c] sm:$0xf]
        %v5856 = vshrl.u32 %v5769, 16
        %v5866 = vunpack.c.l.b16 %v5848
        %v5867 = vunpack.c.l.b16 %v5849
        %v5868 = vunpack.c.l.b16 %v5850
        %v5869 = vunpack.c.l.b16 %v5851
        %v5870 = vunpack.c.l.b16 %v5852
        %v5871 = vunpack.c.l.b16 %v5853
        %v5872 = vunpack.c.l.b16 %v5854
        %v5873 = vunpack.c.l.b16 %v5855
        %v5874 = vpack.c.b16 %v5867, %v5866
        %v5875 = vpack.c.b16 %v5869, %v5868
        %v5876 = vpack.c.b16 %v5871, %v5870
        %v5877 = vpack.c.b16 %v5873, %v5872
        %v5883 = vsel %vm4721, %v5856, 0
        %5885 = vmatprep.subr.bf16.mxu0 0
        %5886 = vmatpush1.bf16.msra.mxu0 %v5874
        %5887 = vmatprep.subr.bf16.mxu0 0
        %5888 = vmatpush1.bf16.msra.mxu0 %v5875
        %5889 = vmatprep.subr.bf16.mxu0 0
        %5890 = vmatpush1.bf16.msra.mxu0 %v5876
        %5891 = vmatprep.subr.bf16.mxu0 0
        %5892 = vmatpush1.bf16.msra.mxu0 %v5877
        %5893 = vmatprep.subr.bf16.mxu0 0
        %5894 = vmatpush1.bf16.msra.mxu0 0
        %5895 = vmatprep.subr.bf16.mxu0 0
        %5896 = vmatpush1.bf16.msra.mxu0 0
        %5897 = vmatprep.subr.bf16.mxu0 0
        %5898 = vmatpush1.bf16.msra.mxu0 0
        %5899 = vmatprep.subr.bf16.mxu0 0
        %5900 = vmatpush1.bf16.msra.mxu0 0
        %5901 = vmatprep.subr.bf16.mxu0 0
        %5902 = vmatpush1.bf16.msra.mxu0 0
        %5903 = vmatprep.subr.bf16.mxu0 0
        %5904 = vmatpush1.bf16.msra.mxu0 0
        %5905 = vmatprep.subr.bf16.mxu0 0
        %5906 = vmatpush1.bf16.msra.mxu0 0
        %5907 = vmatprep.subr.bf16.mxu0 0
        %5908 = vmatpush1.bf16.msra.mxu0 0
        %5909 = vmatprep.subr.bf16.mxu0 0
        %5910 = vmatpush1.bf16.msra.mxu0 0
        %5911 = vmatprep.subr.bf16.mxu0 0
        %5912 = vmatpush1.bf16.msra.mxu0 0
        %5913 = vmatprep.subr.bf16.mxu0 0
        %5914 = vmatpush1.bf16.msra.mxu0 0
        %5915 = vmatprep.subr.bf16.mxu0 0
        %5916 = vmatpush1.bf16.msra.mxu0 0
        %5917 = vmatprep.mubr.bf16.mxu0 0
        %5918 = vmatmul.mubr.bf16.gmra.mrb[0].mxu0 %v5883
        %v5919 = vpop.f32.mrb[0].mxu0
        %v5920 = vadd.f32 0.0, %v5919
        %v5921 = vpop.f32.mrb[0].mxu0
        %v5922 = vpop.f32.mrb[0].mxu0
        %v5923 = vpop.f32.mrb[0].mxu0
        %5924 = vdwg.mxu0
        %v5925 = vadd.f32 %v5846, %v5920
        %s5926 = scalar_lea.vmem %s7, 320
        %v5927 = vld [vmem:[%s5926] sm:$0xf]
        %v5928 = vld [vmem:[%s5926 + $0x4] sm:$0xf]
        %v5929 = vld [vmem:[%s5926 + $0x8] sm:$0xf]
        %v5930 = vld [vmem:[%s5926 + $0xc] sm:$0xf]
        %v5931 = vld [vmem:[%s5926 + $0x10] sm:$0xf]
        %v5932 = vld [vmem:[%s5926 + $0x14] sm:$0xf]
        %v5933 = vld [vmem:[%s5926 + $0x18] sm:$0xf]
        %v5934 = vld [vmem:[%s5926 + $0x1c] sm:$0xf]
        %v5936 = vrot.slane %v5769, 1
        %v5945 = vunpack.c.l.b16 %v5927
        %v5946 = vunpack.c.l.b16 %v5928
        %v5947 = vunpack.c.l.b16 %v5929
        %v5948 = vunpack.c.l.b16 %v5930
        %v5949 = vunpack.c.l.b16 %v5931
        %v5950 = vunpack.c.l.b16 %v5932
        %v5951 = vunpack.c.l.b16 %v5933
        %v5952 = vunpack.c.l.b16 %v5934
        %v5953 = vpack.c.b16 %v5946, %v5945
        %v5954 = vpack.c.b16 %v5948, %v5947
        %v5955 = vpack.c.b16 %v5950, %v5949
        %v5956 = vpack.c.b16 %v5952, %v5951
        %v5962 = vsel %vm4721, %v5936, 0
        %5964 = vmatprep.subr.bf16.mxu0 0
        %5965 = vmatpush1.bf16.msra.mxu0 %v5953
        %5966 = vmatprep.subr.bf16.mxu0 0
        %5967 = vmatpush1.bf16.msra.mxu0 %v5954
        %5968 = vmatprep.subr.bf16.mxu0 0
        %5969 = vmatpush1.bf16.msra.mxu0 %v5955
        %5970 = vmatprep.subr.bf16.mxu0 0
        %5971 = vmatpush1.bf16.msra.mxu0 %v5956
        %5972 = vmatprep.subr.bf16.mxu0 0
        %5973 = vmatpush1.bf16.msra.mxu0 0
        %5974 = vmatprep.subr.bf16.mxu0 0
        %5975 = vmatpush1.bf16.msra.mxu0 0
        %5976 = vmatprep.subr.bf16.mxu0 0
        %5977 = vmatpush1.bf16.msra.mxu0 0
        %5978 = vmatprep.subr.bf16.mxu0 0
        %5979 = vmatpush1.bf16.msra.mxu0 0
        %5980 = vmatprep.subr.bf16.mxu0 0
        %5981 = vmatpush1.bf16.msra.mxu0 0
        %5982 = vmatprep.subr.bf16.mxu0 0
        %5983 = vmatpush1.bf16.msra.mxu0 0
        %5984 = vmatprep.subr.bf16.mxu0 0
        %5985 = vmatpush1.bf16.msra.mxu0 0
        %5986 = vmatprep.subr.bf16.mxu0 0
        %5987 = vmatpush1.bf16.msra.mxu0 0
        %5988 = vmatprep.subr.bf16.mxu0 0
        %5989 = vmatpush1.bf16.msra.mxu0 0
        %5990 = vmatprep.subr.bf16.mxu0 0
        %5991 = vmatpush1.bf16.msra.mxu0 0
        %5992 = vmatprep.subr.bf16.mxu0 0
        %5993 = vmatpush1.bf16.msra.mxu0 0
        %5994 = vmatprep.subr.bf16.mxu0 0
        %5995 = vmatpush1.bf16.msra.mxu0 0
        %5996 = vmatprep.mubr.bf16.mxu0 0
        %5997 = vmatmul.mubr.bf16.gmra.mrb[0].mxu0 %v5962
        %v5998 = vpop.f32.mrb[0].mxu0
        %v5999 = vadd.f32 0.0, %v5998
        %v6000 = vpop.f32.mrb[0].mxu0
        %v6001 = vpop.f32.mrb[0].mxu0
        %v6002 = vpop.f32.mrb[0].mxu0
        %6003 = vdwg.mxu0
        %v6004 = vadd.f32 %v5925, %v5999
        %s6005 = scalar_lea.vmem %s7, 352
        %v6006 = vld [vmem:[%s6005] sm:$0xf]
        %v6007 = vld [vmem:[%s6005 + $0x4] sm:$0xf]
        %v6008 = vld [vmem:[%s6005 + $0x8] sm:$0xf]
        %v6009 = vld [vmem:[%s6005 + $0xc] sm:$0xf]
        %v6010 = vld [vmem:[%s6005 + $0x10] sm:$0xf]
        %v6011 = vld [vmem:[%s6005 + $0x14] sm:$0xf]
        %v6012 = vld [vmem:[%s6005 + $0x18] sm:$0xf]
        %v6013 = vld [vmem:[%s6005 + $0x1c] sm:$0xf]
        %v6014 = vrot.slane %v5856, 1
        %v6023 = vunpack.c.l.b16 %v6006
        %v6024 = vunpack.c.l.b16 %v6007
        %v6025 = vunpack.c.l.b16 %v6008
        %v6026 = vunpack.c.l.b16 %v6009
        %v6027 = vunpack.c.l.b16 %v6010
        %v6028 = vunpack.c.l.b16 %v6011
        %v6029 = vunpack.c.l.b16 %v6012
        %v6030 = vunpack.c.l.b16 %v6013
        %v6031 = vpack.c.b16 %v6024, %v6023
        %v6032 = vpack.c.b16 %v6026, %v6025
        %v6033 = vpack.c.b16 %v6028, %v6027
        %v6034 = vpack.c.b16 %v6030, %v6029
        %v6040 = vsel %vm4721, %v6014, 0
        %6042 = vmatprep.subr.bf16.mxu0 0
        %6043 = vmatpush1.bf16.msra.mxu0 %v6031
        %6044 = vmatprep.subr.bf16.mxu0 0
        %6045 = vmatpush1.bf16.msra.mxu0 %v6032
        %6046 = vmatprep.subr.bf16.mxu0 0
        %6047 = vmatpush1.bf16.msra.mxu0 %v6033
        %6048 = vmatprep.subr.bf16.mxu0 0
        %6049 = vmatpush1.bf16.msra.mxu0 %v6034
        %6050 = vmatprep.subr.bf16.mxu0 0
        %6051 = vmatpush1.bf16.msra.mxu0 0
        %6052 = vmatprep.subr.bf16.mxu0 0
        %6053 = vmatpush1.bf16.msra.mxu0 0
        %6054 = vmatprep.subr.bf16.mxu0 0
        %6055 = vmatpush1.bf16.msra.mxu0 0
        %6056 = vmatprep.subr.bf16.mxu0 0
        %6057 = vmatpush1.bf16.msra.mxu0 0
        %6058 = vmatprep.subr.bf16.mxu0 0
        %6059 = vmatpush1.bf16.msra.mxu0 0
        %6060 = vmatprep.subr.bf16.mxu0 0
        %6061 = vmatpush1.bf16.msra.mxu0 0
        %6062 = vmatprep.subr.bf16.mxu0 0
        %6063 = vmatpush1.bf16.msra.mxu0 0
        %6064 = vmatprep.subr.bf16.mxu0 0
        %6065 = vmatpush1.bf16.msra.mxu0 0
        %6066 = vmatprep.subr.bf16.mxu0 0
        %6067 = vmatpush1.bf16.msra.mxu0 0
        %6068 = vmatprep.subr.bf16.mxu0 0
        %6069 = vmatpush1.bf16.msra.mxu0 0
        %6070 = vmatprep.subr.bf16.mxu0 0
        %6071 = vmatpush1.bf16.msra.mxu0 0
        %6072 = vmatprep.subr.bf16.mxu0 0
        %6073 = vmatpush1.bf16.msra.mxu0 0
        %6074 = vmatprep.mubr.bf16.mxu0 0
        %6075 = vmatmul.mubr.bf16.gmra.mrb[0].mxu0 %v6040
        %v6076 = vpop.f32.mrb[0].mxu0
        %v6077 = vadd.f32 0.0, %v6076
        %v6078 = vpop.f32.mrb[0].mxu0
        %v6079 = vpop.f32.mrb[0].mxu0
        %v6080 = vpop.f32.mrb[0].mxu0
        %6081 = vdwg.mxu0
        %v6082 = vadd.f32 %v6004, %v6077
        %v6083 = vpack.c.bf16 %v5140, %v5140
        %s6084 = scalar_lea.vmem %s7, 384
        %v6085 = vld [vmem:[%s6084] sm:$0xf]
        %v6086 = vld [vmem:[%s6084 + $0x4] sm:$0xf]
        %v6087 = vld [vmem:[%s6084 + $0x8] sm:$0xf]
        %v6088 = vld [vmem:[%s6084 + $0xc] sm:$0xf]
        %v6089 = vld [vmem:[%s6084 + $0x10] sm:$0xf]
        %v6090 = vld [vmem:[%s6084 + $0x14] sm:$0xf]
        %v6091 = vld [vmem:[%s6084 + $0x18] sm:$0xf]
        %v6092 = vld [vmem:[%s6084 + $0x1c] sm:$0xf]
        %v6101 = vunpack.c.l.b16 %v6085
        %v6102 = vunpack.c.l.b16 %v6086
        %v6103 = vunpack.c.l.b16 %v6087
        %v6104 = vunpack.c.l.b16 %v6088
        %v6105 = vunpack.c.l.b16 %v6089
        %v6106 = vunpack.c.l.b16 %v6090
        %v6107 = vunpack.c.l.b16 %v6091
        %v6108 = vunpack.c.l.b16 %v6092
        %v6109 = vpack.c.b16 %v6102, %v6101
        %v6110 = vpack.c.b16 %v6104, %v6103
        %v6111 = vpack.c.b16 %v6106, %v6105
        %v6112 = vpack.c.b16 %v6108, %v6107
        %v6118 = vsel %vm4721, %v6083, 0
        %6120 = vmatprep.subr.bf16.mxu0 0
        %6121 = vmatpush1.bf16.msra.mxu0 %v6109
        %6122 = vmatprep.subr.bf16.mxu0 0
        %6123 = vmatpush1.bf16.msra.mxu0 %v6110
        %6124 = vmatprep.subr.bf16.mxu0 0
        %6125 = vmatpush1.bf16.msra.mxu0 %v6111
        %6126 = vmatprep.subr.bf16.mxu0 0
        %6127 = vmatpush1.bf16.msra.mxu0 %v6112
        %6128 = vmatprep.subr.bf16.mxu0 0
        %6129 = vmatpush1.bf16.msra.mxu0 0
        %6130 = vmatprep.subr.bf16.mxu0 0
        %6131 = vmatpush1.bf16.msra.mxu0 0
        %6132 = vmatprep.subr.bf16.mxu0 0
        %6133 = vmatpush1.bf16.msra.mxu0 0
        %6134 = vmatprep.subr.bf16.mxu0 0
        %6135 = vmatpush1.bf16.msra.mxu0 0
        %6136 = vmatprep.subr.bf16.mxu0 0
        %6137 = vmatpush1.bf16.msra.mxu0 0
        %6138 = vmatprep.subr.bf16.mxu0 0
        %6139 = vmatpush1.bf16.msra.mxu0 0
        %6140 = vmatprep.subr.bf16.mxu0 0
        %6141 = vmatpush1.bf16.msra.mxu0 0
        %6142 = vmatprep.subr.bf16.mxu0 0
        %6143 = vmatpush1.bf16.msra.mxu0 0
        %6144 = vmatprep.subr.bf16.mxu0 0
        %6145 = vmatpush1.bf16.msra.mxu0 0
        %6146 = vmatprep.subr.bf16.mxu0 0
        %6147 = vmatpush1.bf16.msra.mxu0 0
        %6148 = vmatprep.subr.bf16.mxu0 0
        %6149 = vmatpush1.bf16.msra.mxu0 0
        %6150 = vmatprep.subr.bf16.mxu0 0
        %6151 = vmatpush1.bf16.msra.mxu0 0
        %6152 = vmatprep.mubr.bf16.mxu0 0
        %6153 = vmatmul.mubr.bf16.gmra.mrb[0].mxu0 %v6118
        %v6154 = vpop.f32.mrb[0].mxu0
        %v6155 = vadd.f32 0.0, %v6154
        %v6156 = vpop.f32.mrb[0].mxu0
        %v6157 = vpop.f32.mrb[0].mxu0
        %v6158 = vpop.f32.mrb[0].mxu0
        %6159 = vdwg.mxu0
        %v6160 = vadd.f32 %v6082, %v6155
        %s6161 = scalar_lea.vmem %s7, 416
        %v6162 = vld [vmem:[%s6161] sm:$0xf]
        %v6163 = vld [vmem:[%s6161 + $0x4] sm:$0xf]
        %v6164 = vld [vmem:[%s6161 + $0x8] sm:$0xf]
        %v6165 = vld [vmem:[%s6161 + $0xc] sm:$0xf]
        %v6166 = vld [vmem:[%s6161 + $0x10] sm:$0xf]
        %v6167 = vld [vmem:[%s6161 + $0x14] sm:$0xf]
        %v6168 = vld [vmem:[%s6161 + $0x18] sm:$0xf]
        %v6169 = vld [vmem:[%s6161 + $0x1c] sm:$0xf]
        %v6170 = vshrl.u32 %v6083, 16
        %v6180 = vunpack.c.l.b16 %v6162
        %v6181 = vunpack.c.l.b16 %v6163
        %v6182 = vunpack.c.l.b16 %v6164
        %v6183 = vunpack.c.l.b16 %v6165
        %v6184 = vunpack.c.l.b16 %v6166
        %v6185 = vunpack.c.l.b16 %v6167
        %v6186 = vunpack.c.l.b16 %v6168
        %v6187 = vunpack.c.l.b16 %v6169
        %v6188 = vpack.c.b16 %v6181, %v6180
        %v6189 = vpack.c.b16 %v6183, %v6182
        %v6190 = vpack.c.b16 %v6185, %v6184
        %v6191 = vpack.c.b16 %v6187, %v6186
        %v6197 = vsel %vm4721, %v6170, 0
        %6199 = vmatprep.subr.bf16.mxu0 0
        %6200 = vmatpush1.bf16.msra.mxu0 %v6188
        %6201 = vmatprep.subr.bf16.mxu0 0
        %6202 = vmatpush1.bf16.msra.mxu0 %v6189
        %6203 = vmatprep.subr.bf16.mxu0 0
        %6204 = vmatpush1.bf16.msra.mxu0 %v6190
        %6205 = vmatprep.subr.bf16.mxu0 0
        %6206 = vmatpush1.bf16.msra.mxu0 %v6191
        %6207 = vmatprep.subr.bf16.mxu0 0
        %6208 = vmatpush1.bf16.msra.mxu0 0
        %6209 = vmatprep.subr.bf16.mxu0 0
        %6210 = vmatpush1.bf16.msra.mxu0 0
        %6211 = vmatprep.subr.bf16.mxu0 0
        %6212 = vmatpush1.bf16.msra.mxu0 0
        %6213 = vmatprep.subr.bf16.mxu0 0
        %6214 = vmatpush1.bf16.msra.mxu0 0
        %6215 = vmatprep.subr.bf16.mxu0 0
        %6216 = vmatpush1.bf16.msra.mxu0 0
        %6217 = vmatprep.subr.bf16.mxu0 0
        %6218 = vmatpush1.bf16.msra.mxu0 0
        %6219 = vmatprep.subr.bf16.mxu0 0
        %6220 = vmatpush1.bf16.msra.mxu0 0
        %6221 = vmatprep.subr.bf16.mxu0 0
        %6222 = vmatpush1.bf16.msra.mxu0 0
        %6223 = vmatprep.subr.bf16.mxu0 0
        %6224 = vmatpush1.bf16.msra.mxu0 0
        %6225 = vmatprep.subr.bf16.mxu0 0
        %6226 = vmatpush1.bf16.msra.mxu0 0
        %6227 = vmatprep.subr.bf16.mxu0 0
        %6228 = vmatpush1.bf16.msra.mxu0 0
        %6229 = vmatprep.subr.bf16.mxu0 0
        %6230 = vmatpush1.bf16.msra.mxu0 0
        %6231 = vmatprep.mubr.bf16.mxu0 0
        %6232 = vmatmul.mubr.bf16.gmra.mrb[0].mxu0 %v6197
        %v6233 = vpop.f32.mrb[0].mxu0
        %v6234 = vadd.f32 0.0, %v6233
        %v6235 = vpop.f32.mrb[0].mxu0
        %v6236 = vpop.f32.mrb[0].mxu0
        %v6237 = vpop.f32.mrb[0].mxu0
        %6238 = vdwg.mxu0
        %v6239 = vadd.f32 %v6160, %v6234
        %s6240 = scalar_lea.vmem %s7, 448
        %v6241 = vld [vmem:[%s6240] sm:$0xf]
        %v6242 = vld [vmem:[%s6240 + $0x4] sm:$0xf]
        %v6243 = vld [vmem:[%s6240 + $0x8] sm:$0xf]
        %v6244 = vld [vmem:[%s6240 + $0xc] sm:$0xf]
        %v6245 = vld [vmem:[%s6240 + $0x10] sm:$0xf]
        %v6246 = vld [vmem:[%s6240 + $0x14] sm:$0xf]
        %v6247 = vld [vmem:[%s6240 + $0x18] sm:$0xf]
        %v6248 = vld [vmem:[%s6240 + $0x1c] sm:$0xf]
        %v6250 = vrot.slane %v6083, 1
        %v6259 = vunpack.c.l.b16 %v6241
        %v6260 = vunpack.c.l.b16 %v6242
        %v6261 = vunpack.c.l.b16 %v6243
        %v6262 = vunpack.c.l.b16 %v6244
        %v6263 = vunpack.c.l.b16 %v6245
        %v6264 = vunpack.c.l.b16 %v6246
        %v6265 = vunpack.c.l.b16 %v6247
        %v6266 = vunpack.c.l.b16 %v6248
        %v6267 = vpack.c.b16 %v6260, %v6259
        %v6268 = vpack.c.b16 %v6262, %v6261
        %v6269 = vpack.c.b16 %v6264, %v6263
        %v6270 = vpack.c.b16 %v6266, %v6265
        %v6276 = vsel %vm4721, %v6250, 0
        %6278 = vmatprep.subr.bf16.mxu0 0
        %6279 = vmatpush1.bf16.msra.mxu0 %v6267
        %6280 = vmatprep.subr.bf16.mxu0 0
        %6281 = vmatpush1.bf16.msra.mxu0 %v6268
        %6282 = vmatprep.subr.bf16.mxu0 0
        %6283 = vmatpush1.bf16.msra.mxu0 %v6269
        %6284 = vmatprep.subr.bf16.mxu0 0
        %6285 = vmatpush1.bf16.msra.mxu0 %v6270
        %6286 = vmatprep.subr.bf16.mxu0 0
        %6287 = vmatpush1.bf16.msra.mxu0 0
        %6288 = vmatprep.subr.bf16.mxu0 0
        %6289 = vmatpush1.bf16.msra.mxu0 0
        %6290 = vmatprep.subr.bf16.mxu0 0
        %6291 = vmatpush1.bf16.msra.mxu0 0
        %6292 = vmatprep.subr.bf16.mxu0 0
        %6293 = vmatpush1.bf16.msra.mxu0 0
        %6294 = vmatprep.subr.bf16.mxu0 0
        %6295 = vmatpush1.bf16.msra.mxu0 0
        %6296 = vmatprep.subr.bf16.mxu0 0
        %6297 = vmatpush1.bf16.msra.mxu0 0
        %6298 = vmatprep.subr.bf16.mxu0 0
        %6299 = vmatpush1.bf16.msra.mxu0 0
        %6300 = vmatprep.subr.bf16.mxu0 0
        %6301 = vmatpush1.bf16.msra.mxu0 0
        %6302 = vmatprep.subr.bf16.mxu0 0
        %6303 = vmatpush1.bf16.msra.mxu0 0
        %6304 = vmatprep.subr.bf16.mxu0 0
        %6305 = vmatpush1.bf16.msra.mxu0 0
        %6306 = vmatprep.subr.bf16.mxu0 0
        %6307 = vmatpush1.bf16.msra.mxu0 0
        %6308 = vmatprep.subr.bf16.mxu0 0
        %6309 = vmatpush1.bf16.msra.mxu0 0
        %6310 = vmatprep.mubr.bf16.mxu0 0
        %6311 = vmatmul.mubr.bf16.gmra.mrb[0].mxu0 %v6276
        %v6312 = vpop.f32.mrb[0].mxu0
        %v6313 = vadd.f32 0.0, %v6312
        %v6314 = vpop.f32.mrb[0].mxu0
        %v6315 = vpop.f32.mrb[0].mxu0
        %v6316 = vpop.f32.mrb[0].mxu0
        %6317 = vdwg.mxu0
        %v6318 = vadd.f32 %v6239, %v6313
        %s6319 = scalar_lea.vmem %s7, 480
        %v6320 = vld [vmem:[%s6319] sm:$0xf]
        %v6321 = vld [vmem:[%s6319 + $0x4] sm:$0xf]
        %v6322 = vld [vmem:[%s6319 + $0x8] sm:$0xf]
        %v6323 = vld [vmem:[%s6319 + $0xc] sm:$0xf]
        %v6324 = vld [vmem:[%s6319 + $0x10] sm:$0xf]
        %v6325 = vld [vmem:[%s6319 + $0x14] sm:$0xf]
        %v6326 = vld [vmem:[%s6319 + $0x18] sm:$0xf]
        %v6327 = vld [vmem:[%s6319 + $0x1c] sm:$0xf]
        %v6328 = vrot.slane %v6170, 1
        %v6337 = vunpack.c.l.b16 %v6320
        %v6338 = vunpack.c.l.b16 %v6321
        %v6339 = vunpack.c.l.b16 %v6322
        %v6340 = vunpack.c.l.b16 %v6323
        %v6341 = vunpack.c.l.b16 %v6324
        %v6342 = vunpack.c.l.b16 %v6325
        %v6343 = vunpack.c.l.b16 %v6326
        %v6344 = vunpack.c.l.b16 %v6327
        %v6345 = vpack.c.b16 %v6338, %v6337
        %v6346 = vpack.c.b16 %v6340, %v6339
        %v6347 = vpack.c.b16 %v6342, %v6341
        %v6348 = vpack.c.b16 %v6344, %v6343
        %v6354 = vsel %vm4721, %v6328, 0
        %6356 = vmatprep.subr.bf16.mxu0 0
        %6357 = vmatpush1.bf16.msra.mxu0 %v6345
        %6358 = vmatprep.subr.bf16.mxu0 0
        %6359 = vmatpush1.bf16.msra.mxu0 %v6346
        %6360 = vmatprep.subr.bf16.mxu0 0
        %6361 = vmatpush1.bf16.msra.mxu0 %v6347
        %6362 = vmatprep.subr.bf16.mxu0 0
        %6363 = vmatpush1.bf16.msra.mxu0 %v6348
        %6364 = vmatprep.subr.bf16.mxu0 0
        %6365 = vmatpush1.bf16.msra.mxu0 0
        %6366 = vmatprep.subr.bf16.mxu0 0
        %6367 = vmatpush1.bf16.msra.mxu0 0
        %6368 = vmatprep.subr.bf16.mxu0 0
        %6369 = vmatpush1.bf16.msra.mxu0 0
        %6370 = vmatprep.subr.bf16.mxu0 0
        %6371 = vmatpush1.bf16.msra.mxu0 0
        %6372 = vmatprep.subr.bf16.mxu0 0
        %6373 = vmatpush1.bf16.msra.mxu0 0
        %6374 = vmatprep.subr.bf16.mxu0 0
        %6375 = vmatpush1.bf16.msra.mxu0 0
        %6376 = vmatprep.subr.bf16.mxu0 0
        %6377 = vmatpush1.bf16.msra.mxu0 0
        %6378 = vmatprep.subr.bf16.mxu0 0
        %6379 = vmatpush1.bf16.msra.mxu0 0
        %6380 = vmatprep.subr.bf16.mxu0 0
        %6381 = vmatpush1.bf16.msra.mxu0 0
        %6382 = vmatprep.subr.bf16.mxu0 0
        %6383 = vmatpush1.bf16.msra.mxu0 0
        %6384 = vmatprep.subr.bf16.mxu0 0
        %6385 = vmatpush1.bf16.msra.mxu0 0
        %6386 = vmatprep.subr.bf16.mxu0 0
        %6387 = vmatpush1.bf16.msra.mxu0 0
        %6388 = vmatprep.mubr.bf16.mxu0 0
        %6389 = vmatmul.mubr.bf16.gmra.mrb[0].mxu0 %v6354
        %v6390 = vpop.f32.mrb[0].mxu0
        %v6391 = vadd.f32 0.0, %v6390
        %v6392 = vpop.f32.mrb[0].mxu0
        %v6393 = vpop.f32.mrb[0].mxu0
        %v6394 = vpop.f32.mrb[0].mxu0
        %6395 = vdwg.mxu0
        %v6396 = vadd.f32 %v6318, %v6391
        %v6397 = vpack.c.bf16 %v6396, %v6396
        %v6398 = vld [vmem:[%s9] sm:$0xf]
        %v6399 = vld [vmem:[%s9 + $0x4] sm:$0xf]
        %v6400 = vld [vmem:[%s9 + $0x8] sm:$0xf]
        %v6401 = vld [vmem:[%s9 + $0xc] sm:$0xf]
        %v6402 = vld [vmem:[%s9 + $0x10] sm:$0xf]
        %v6403 = vld [vmem:[%s9 + $0x14] sm:$0xf]
        %v6404 = vld [vmem:[%s9 + $0x18] sm:$0xf]
        %v6405 = vld [vmem:[%s9 + $0x1c] sm:$0xf]
        %v6406 = vld [vmem:[%s10] sm:$0x1]
        %v6415 = vunpack.c.l.b16 %v6398
        %v6416 = vunpack.c.l.b16 %v6399
        %v6417 = vunpack.c.l.b16 %v6400
        %v6418 = vunpack.c.l.b16 %v6401
        %v6419 = vunpack.c.l.b16 %v6402
        %v6420 = vunpack.c.l.b16 %v6403
        %v6421 = vunpack.c.l.b16 %v6404
        %v6422 = vunpack.c.l.b16 %v6405
        %v6423 = vpack.c.b16 %v6416, %v6415
        %v6424 = vpack.c.b16 %v6418, %v6417
        %v6425 = vpack.c.b16 %v6420, %v6419
        %v6426 = vpack.c.b16 %v6422, %v6421
        %v6432 = vsel %vm4721, %v6397, 0
        %6434 = vmatprep.subr.bf16.mxu0 0
        %6435 = vmatpush1.bf16.msra.mxu0 %v6423
        %6436 = vmatprep.subr.bf16.mxu0 0
        %6437 = vmatpush1.bf16.msra.mxu0 %v6424
        %6438 = vmatprep.subr.bf16.mxu0 0
        %6439 = vmatpush1.bf16.msra.mxu0 %v6425
        %6440 = vmatprep.subr.bf16.mxu0 0
        %6441 = vmatpush1.bf16.msra.mxu0 %v6426
        %6442 = vmatprep.subr.bf16.mxu0 0
        %6443 = vmatpush1.bf16.msra.mxu0 0
        %6444 = vmatprep.subr.bf16.mxu0 0
        %6445 = vmatpush1.bf16.msra.mxu0 0
        %6446 = vmatprep.subr.bf16.mxu0 0
        %6447 = vmatpush1.bf16.msra.mxu0 0
        %6448 = vmatprep.subr.bf16.mxu0 0
        %6449 = vmatpush1.bf16.msra.mxu0 0
        %6450 = vmatprep.subr.bf16.mxu0 0
        %6451 = vmatpush1.bf16.msra.mxu0 0
        %6452 = vmatprep.subr.bf16.mxu0 0
        %6453 = vmatpush1.bf16.msra.mxu0 0
        %6454 = vmatprep.subr.bf16.mxu0 0
        %6455 = vmatpush1.bf16.msra.mxu0 0
        %6456 = vmatprep.subr.bf16.mxu0 0
        %6457 = vmatpush1.bf16.msra.mxu0 0
        %6458 = vmatprep.subr.bf16.mxu0 0
        %6459 = vmatpush1.bf16.msra.mxu0 0
        %6460 = vmatprep.subr.bf16.mxu0 0
        %6461 = vmatpush1.bf16.msra.mxu0 0
        %6462 = vmatprep.subr.bf16.mxu0 0
        %6463 = vmatpush1.bf16.msra.mxu0 0
        %6464 = vmatprep.subr.bf16.mxu0 0
        %6465 = vmatpush1.bf16.msra.mxu0 0
        %6466 = vmatprep.mubr.bf16.mxu0 0
        %6467 = vmatmul.mubr.bf16.gmra.mrb[0].mxu0 %v6432
        %v6468 = vpop.f32.mrb[0].mxu0
        %v6469 = vadd.f32 %v6406, %v6468
        %v6470 = vpop.f32.mrb[0].mxu0
        %v6471 = vpop.f32.mrb[0].mxu0
        %v6472 = vpop.f32.mrb[0].mxu0
        %6473 = vdwg.mxu0
        %vm6474 = vcmask 73728
        %6475 = vst.msk [vmem:[%s378] sm:$0x1] %vm6474, %v6469
        %s6476 = sand.u32 %s269, 1
        %s6477 = scalar_lea.sflag [#allocation12], %s6476
        %s6478 = sand.u32 %s269, 1
        %s6479 = scalar_lea.vmem [#allocation11], %s6478
        // Predicated region
        $region107: #{_tudui_forward.1} parent=63 // pred_check
          %p6480 = pneg %p279
        $region108: #{_tudui_forward.1} parent=63 // pred_check_branch
          %6482 = sbr.rel (%p6480) target = $region110
        $region109: #{_tudui_forward.1} parent=63 // pred_region
          %s6484 = ssub.s32 16, 16
          %6485 = vsyncadd %s6477, %s6484
          %s6486 = smul.addr %s25, 16
          %s6487 = scalar_lea.hbm %s11, %s6486
          %s6489 = sshll.u32 %s6479, 4
          %s6490 = int_to_ptr.vmem [resolvable:$true] %s6489
          %6492 = dma.vmem_to_hbm [thread:$0]  %s6490, 16, %s6487, %s6477
        $region110: #{_tudui_forward.1} parent=63 // pred_fallthru
          _
      $region64: #{_tudui_forward.1} parent=5 // pred_fallthru
        _
      %p6493 = scmp.le.s32.totalorder 2, %s20
      // Predicated region
      $region111: #{_tudui_forward.1} parent=5 // pred_check
        %p6494 = pneg %p6493
      $region112: #{_tudui_forward.1} parent=5 // pred_check_branch
        %6496 = sbr.rel (%p6494) target = $region114
      $region113: #{_tudui_forward.1} parent=5 // pred_region
        %s6497 = ssub.s32 %s20, 2
        // Predicated region
        $region115: #{_tudui_forward.1} parent=113 // pred_check
          %p6498 = pneg %p285
        $region116: #{_tudui_forward.1} parent=113 // pred_check_branch
          %6500 = sbr.rel (%p6498) target = $region118
        $region117: #{_tudui_forward.1} parent=113 // pred_region
          %s6501 = sand.u32 %s270, 1
          %s6502 = scalar_lea.sflag [#allocation12], %s6501
          %s6503 = sand.u32 %s270, 1
          %s6504 = scalar_lea.vmem [#allocation11], %s6503
          %6505 = dma.done %s6502, 16
        $region118: #{_tudui_forward.1} parent=113 // pred_fallthru
          _
      $region114: #{_tudui_forward.1} parent=5 // pred_fallthru
        _
    $region6: #{_tudui_forward.1} parent=1 // loop_footer
      %s24 = sadd.s32 1, %s20
    $region7: #{_tudui_forward.1} parent=1 // loop_footer_branch
      %19 = sbr.rel target = $region3
    $region8: #{_tudui_forward.1} parent=1 // loop_exit
      _
    %6506 = vsyncpa [#allocation12], 1
    %s6507 = scalar_lea.sflag [#allocation12], 1
    %6508 = vsyncpa %s6507, 1

</llo_original>
